<compile_context>
chip_gen: v5e
topology: v5e:2x2
jax: 0.10.0
libtpu: 0.0.40
codegen_flags: <defaults>
</compile_context>

<pallas_src>
import functools

import jax
import jax.numpy as jnp
from jax.experimental import pallas as pl
from jax.experimental.pallas import tpu as pltpu


# ---------------------------------------------------------------------------
# Pallas kernels
# ---------------------------------------------------------------------------
def _conv_pair_kernel(p1_ref, w1_ref, b1_ref, p2_ref, w2_ref, b2_ref,
                      o1_ref, o2_ref):
    """conv1 and convNF im2col matmuls (both tiny) in a single launch."""
    o1_ref[...] = (jnp.dot(p1_ref[...].astype(jnp.bfloat16), w1_ref[...],
                           preferred_element_type=jnp.float32)
                   + b1_ref[...]).astype(o1_ref.dtype)
    o2_ref[...] = (jnp.dot(p2_ref[...].astype(jnp.bfloat16), w2_ref[...],
                           preferred_element_type=jnp.float32)
                   + b2_ref[...]).astype(o2_ref.dtype)


def _conv_matmul_kernel(p_ref, w_ref, b_ref, o_ref):
    """Generic im2col-patch matmul + bias (used for conv2)."""
    o_ref[...] = (jnp.dot(p_ref[...].astype(jnp.bfloat16), w_ref[...],
                          preferred_element_type=jnp.float32)
                  + b_ref[...]).astype(o_ref.dtype)


def _l1_out_kernel(x_ref, w1_ref, b1_ref, wo_ref, bo_ref, out_ref, acc_ref):
    """Fused  out = ELU(x @ W1 + b1) @ Wout + bout.

    Grid axis j = N-tiles of W1 (streamed, double-buffered by BlockSpec).
    The out-layer contribution of each tile is accumulated in VMEM scratch
    (classic init/finalize accumulator pattern)."""
    j = pl.program_id(0)

    @pl.when(j == 0)
    def _():
        acc_ref[...] = jnp.zeros_like(acc_ref)

    h = jnp.dot(x_ref[...].astype(jnp.bfloat16), w1_ref[...],
                preferred_element_type=jnp.float32) + b1_ref[...]
    # ELU(alpha=1): x if x > 0 else exp(x) - 1
    h = jnp.where(h > 0.0, h, jnp.exp(jnp.minimum(h, 0.0)) - 1.0)
    acc_ref[...] += jnp.dot(h.astype(jnp.bfloat16), wo_ref[...],
                            preferred_element_type=jnp.float32)

    @pl.when(j == pl.num_programs(0) - 1)
    def _():
        out_ref[...] = (acc_ref[...] + bo_ref[...]).astype(out_ref.dtype)


# ---------------------------------------------------------------------------
# Pallas wrappers
# ---------------------------------------------------------------------------
def conv_pair(p1, w1, b1, p2, w2, b2):
    m1, n1 = p1.shape[0], w1.shape[1]
    m2, n2 = p2.shape[0], w2.shape[1]
    return pl.pallas_call(
        _conv_pair_kernel,
        out_shape=(jax.ShapeDtypeStruct((m1, n1), jnp.float32),
                   jax.ShapeDtypeStruct((m2, n2), jnp.float32)),
        in_specs=[pl.BlockSpec(p1.shape, lambda: (0, 0)),
                  pl.BlockSpec(w1.shape, lambda: (0, 0)),
                  pl.BlockSpec(b1.shape, lambda: (0, 0)),
                  pl.BlockSpec(p2.shape, lambda: (0, 0)),
                  pl.BlockSpec(w2.shape, lambda: (0, 0)),
                  pl.BlockSpec(b2.shape, lambda: (0, 0))],
        out_specs=(pl.BlockSpec((m1, n1), lambda: (0, 0)),
                   pl.BlockSpec((m2, n2), lambda: (0, 0))),
    )(p1, w1, b1, p2, w2, b2)


def conv_matmul(p, w, b):
    m, n = p.shape[0], w.shape[1]
    return pl.pallas_call(
        _conv_matmul_kernel,
        out_shape=jax.ShapeDtypeStruct((m, n), jnp.float32),
        in_specs=[pl.BlockSpec(p.shape, lambda: (0, 0)),
                  pl.BlockSpec(w.shape, lambda: (0, 0)),
                  pl.BlockSpec(b.shape, lambda: (0, 0))],
        out_specs=pl.BlockSpec((m, n), lambda: (0, 0)),
    )(p, w, b)


def l1_out(flat, w1, b1, wo, bo, *, tn=256):
    """flat: (B, K) f32, w1: (K, N) bf16, b1: (1, N) f32,
    wo: (N, NP) bf16 (lane-padded), bo: (1, NP) f32 -> (B, NP) f32."""
    B, K = flat.shape
    N = w1.shape[1]
    NP = wo.shape[1]
    assert N % tn == 0
    return pl.pallas_call(
        _l1_out_kernel,
        out_shape=jax.ShapeDtypeStruct((B, NP), jnp.float32),
        grid_spec=pltpu.PrefetchScalarGridSpec(
            num_scalar_prefetch=0,
            grid=(N // tn,),
            in_specs=[
                pl.BlockSpec((B, K), lambda j: (0, 0)),    # activations, resident
                pl.BlockSpec((K, tn), lambda j: (0, j)),   # l1 weight, streamed
                pl.BlockSpec((1, tn), lambda j: (0, j)),   # l1 bias tile
                pl.BlockSpec((tn, NP), lambda j: (j, 0)),  # out weight tile
                pl.BlockSpec((1, NP), lambda j: (0, 0)),   # out bias, resident
            ],
            out_specs=pl.BlockSpec((B, NP), lambda j: (0, 0)),  # accumulator, resident
            scratch_shapes=[pltpu.VMEM((B, NP), jnp.float32)]),
        compiler_params=pltpu.CompilerParams(
            # The fused out-layer accumulates across the N-tile axis -> reduction.
            dimension_semantics=("arbitrary",)),
    )(flat, w1, b1, wo, bo)


# ---------------------------------------------------------------------------
# Layout glue (plain JAX, lane-dense NHWC)
# ---------------------------------------------------------------------------
def _im2col_nhwc(x, k):
    """x: (B, H, W, C) -> (B*OH*OW, k*k*C), tap-major / channel-minor order."""
    B, H, W, C = x.shape
    OH, OW = H - k + 1, W - k + 1
    cols = [x[:, di:di + OH, dj:dj + OW, :] for di in range(k) for dj in range(k)]
    p = jnp.stack(cols, axis=3)                  # (B, OH, OW, k*k, C)
    return p.reshape(B * OH * OW, k * k * C), OH, OW


def _maxpool2_nhwc(x):
    """2x2 / stride-2 max pool (floor mode), NHWC, via reshape+max."""
    B, H, W, C = x.shape
    PH, PW = H // 2, W // 2
    x = x[:, :2 * PH, :2 * PW, :].reshape(B, PH, 2, PW, 2, C)
    return jnp.max(x, axis=(2, 4))


# ---------------------------------------------------------------------------
# DQN forward
# ---------------------------------------------------------------------------
def dqn_forward(params, x, *, nout):
    """x: (B, 5, 29, 29) float32, NCHW (same layout as the PyTorch module)."""
    B = x.shape[0]
    xh = jnp.transpose(x, (0, 2, 3, 1))                  # (B, 29, 29, 5) NHWC
    yh = xh[:, 12:17, 12:17, :]                          # (B, 5, 5, 5)

    p1, oh1, ow1 = _im2col_nhwc(xh, 3)                   # (B*27*27, 45)
    py, ohy, owy = _im2col_nhwc(yh, 3)                   # (B*9, 45)
    o1, oy = conv_pair(p1, params["c1_w"], params["c1_b"],
                       py, params["cn_w"], params["cn_b"])
    h = _maxpool2_nhwc(o1.reshape(B, oh1, ow1, -1))      # (B, 13, 13, 64)
    y = oy.reshape(B, ohy, owy, -1)                      # (B, 3, 3, 32)

    p2, oh2, ow2 = _im2col_nhwc(h, 3)                    # (B*121, 576)
    o2 = conv_matmul(p2, params["c2_w"], params["c2_b"])
    h = _maxpool2_nhwc(o2.reshape(B, oh2, ow2, -1))      # (B, 5, 5, 128)

    flat = jnp.concatenate([h.reshape(B, -1), y.reshape(B, -1)], axis=1)  # (B, 3488)
    out = l1_out(flat, params["l1_w"], params["l1_b"],
                 params["out_w"], params["out_b"])       # (B, 128)
    return out[:, :nout]


# ---------------------------------------------------------------------------
# Parameters
# ---------------------------------------------------------------------------
def init_params(key, output_size):
    """PyTorch-layout, torch-style uniform(+-1/sqrt(fan_in)) init, float32."""
    def uinit(k, shape, fan_in):
        bound = 1.0 / (fan_in ** 0.5)
        return jax.random.uniform(k, shape, jnp.float32, -bound, bound)

    keys = jax.random.split(key, 10)
    in_l1 = 128 * 5 * 5 + 32 * 3 * 3                     # 3488
    return {
        "conv1_w": uinit(keys[0], (64, 5, 3, 3), 5 * 9),
        "conv1_b": uinit(keys[1], (64,), 5 * 9),
        "conv2_w": uinit(keys[2], (128, 64, 3, 3), 64 * 9),
        "conv2_b": uinit(keys[3], (128,), 64 * 9),
        "convNF_w": uinit(keys[4], (32, 5, 3, 3), 5 * 9),
        "convNF_b": uinit(keys[5], (32,), 5 * 9),
        "l1_w": uinit(keys[6], (1024, in_l1), in_l1),
        "l1_b": uinit(keys[7], (1024,), in_l1),
        "out_w": uinit(keys[8], (output_size, 1024), 1024),
        "out_b": uinit(keys[9], (output_size,), 1024),
    }


def prepare_params(p, nout_pad=128):
    """One-time layout/dtype transform, done OUTSIDE the jitted forward:
      * conv weights -> (k*k*Cin, Cout) bf16 matching the NHWC im2col tap order
      * l1 weight    -> (3488, 1024) bf16, columns permuted from torch's
        NCHW-flatten order to this implementation's NHWC-flatten order, so
        PyTorch weights would load bit-compatibly
      * out weight   -> (1024, nout_pad) bf16, zero-padded to 128 lanes
      * biases as (1, N) float32 rows (out bias zero-padded)
    """
    def conv_w(w):
        cout, cin, k, _ = w.shape
        return jnp.transpose(w, (2, 3, 1, 0)).reshape(k * k * cin, cout).astype(jnp.bfloat16)

    l1 = p["l1_w"]                                       # (1024, 3488), torch NCHW-flatten cols
    l1a = l1[:, :128 * 25].reshape(-1, 128, 5, 5).transpose(0, 2, 3, 1).reshape(l1.shape[0], -1)
    l1b = l1[:, 128 * 25:].reshape(-1, 32, 3, 3).transpose(0, 2, 3, 1).reshape(l1.shape[0], -1)
    l1_w = jnp.concatenate([l1a, l1b], axis=1).T.astype(jnp.bfloat16)   # (3488, 1024)

    nout = p["out_w"].shape[0]
    out_w = jnp.zeros((p["out_w"].shape[1], nout_pad), jnp.bfloat16)
    out_w = out_w.at[:, :nout].set(p["out_w"].T.astype(jnp.bfloat16))
    out_b = jnp.zeros((1, nout_pad), jnp.float32).at[:, :nout].set(p["out_b"][None, :])

    return {
        "c1_w": conv_w(p["conv1_w"]), "c1_b": p["conv1_b"].reshape(1, -1),
        "c2_w": conv_w(p["conv2_w"]), "c2_b": p["conv2_b"].reshape(1, -1),
        "cn_w": conv_w(p["convNF_w"]), "cn_b": p["convNF_b"].reshape(1, -1),
        "l1_w": l1_w, "l1_b": p["l1_b"].reshape(1, -1),
        "out_w": out_w, "out_b": out_b,
    }


if __name__ == "__main__":
    B, output_size = 2, 6
    key = jax.random.PRNGKey(0)
    kx, kp = jax.random.split(key)
    # Spatial size 29 is the only one consistent with l1's 128*5*5 feature count.
    x = jax.random.normal(kx, (B, 5, 29, 29), dtype=jnp.float32)
    params = prepare_params(init_params(kp, output_size))

    fwd = jax.jit(functools.partial(dqn_forward, nout=output_size))
    q_values = jax.block_until_ready(fwd(params, x))
    assert q_values.shape == (B, output_size)
    assert bool(jnp.all(jnp.isfinite(q_values)))
    print("KERNEL_OK")
</pallas_src>

<mosaic_0001>
module attributes {stable_mosaic.version = 11 : i64} {
  func.func @_conv_pair_kernel(%arg0: memref<1458x45xf32, #tpu.memory_space<vmem>>, %arg1: memref<45x64xbf16, #tpu.memory_space<vmem>>, %arg2: memref<1x64xf32, #tpu.memory_space<vmem>>, %arg3: memref<18x45xf32, #tpu.memory_space<vmem>>, %arg4: memref<45x32xbf16, #tpu.memory_space<vmem>>, %arg5: memref<1x32xf32, #tpu.memory_space<vmem>>, %arg6: memref<1458x64xf32, #tpu.memory_space<vmem>>, %arg7: memref<18x32xf32, #tpu.memory_space<vmem>>) attributes {dimension_semantics = [], scalar_prefetch = 0 : i64, scratch_operands = 0 : i64, tpu.core_type = #tpu.core_type<tc>} {
    %c0 = arith.constant 0 : index
    %c0_0 = arith.constant 0 : index
    %0 = vector.load %arg0[%c0, %c0_0] : memref<1458x45xf32, #tpu.memory_space<vmem>>, vector<1458x45xf32>
    %1 = arith.truncf %0 : vector<1458x45xf32> to vector<1458x45xbf16>
    %c0_1 = arith.constant 0 : index
    %c0_2 = arith.constant 0 : index
    %2 = vector.load %arg1[%c0_1, %c0_2] : memref<45x64xbf16, #tpu.memory_space<vmem>>, vector<45x64xbf16>
    %cst = arith.constant dense<0.000000e+00> : vector<1458x64xf32>
    %3 = tpu.matmul %1, %2, %cst {dimension_numbers = #tpu.dot_dimension_numbers<[1], [0], [0], [1], [0, 0, 1, 1], [], []>} : vector<1458x45xbf16>, vector<45x64xbf16>, vector<1458x64xf32> -> vector<1458x64xf32>
    %c0_3 = arith.constant 0 : index
    %c0_4 = arith.constant 0 : index
    %4 = vector.load %arg2[%c0_3, %c0_4] : memref<1x64xf32, #tpu.memory_space<vmem>>, vector<1x64xf32>
    %5 = vector.broadcast %4 : vector<1x64xf32> to vector<1458x64xf32>
    %6 = arith.addf %3, %5 : vector<1458x64xf32>
    %c0_5 = arith.constant 0 : index
    %c0_6 = arith.constant 0 : index
    %7 = vector.load %arg6[%c0_5, %c0_6] : memref<1458x64xf32, #tpu.memory_space<vmem>>, vector<1458x64xf32>
    tpu.vector_store %arg6[%c0_5, %c0_6], %6 {strides = array<i32>} : memref<1458x64xf32, #tpu.memory_space<vmem>>, vector<1458x64xf32>,
    %c0_7 = arith.constant 0 : index
    %c0_8 = arith.constant 0 : index
    %8 = vector.load %arg3[%c0_7, %c0_8] : memref<18x45xf32, #tpu.memory_space<vmem>>, vector<18x45xf32>
    %9 = arith.truncf %8 : vector<18x45xf32> to vector<18x45xbf16>
    %c0_9 = arith.constant 0 : index
    %c0_10 = arith.constant 0 : index
    %10 = vector.load %arg4[%c0_9, %c0_10] : memref<45x32xbf16, #tpu.memory_space<vmem>>, vector<45x32xbf16>
    %cst_11 = arith.constant dense<0.000000e+00> : vector<18x32xf32>
    %11 = tpu.matmul %9, %10, %cst_11 {dimension_numbers = #tpu.dot_dimension_numbers<[1], [0], [0], [1], [0, 0, 1, 1], [], []>} : vector<18x45xbf16>, vector<45x32xbf16>, vector<18x32xf32> -> vector<18x32xf32>
    %c0_12 = arith.constant 0 : index
    %c0_13 = arith.constant 0 : index
    %12 = vector.load %arg5[%c0_12, %c0_13] : memref<1x32xf32, #tpu.memory_space<vmem>>, vector<1x32xf32>
    %13 = vector.broadcast %12 : vector<1x32xf32> to vector<18x32xf32>
    %14 = arith.addf %11, %13 : vector<18x32xf32>
    %c0_14 = arith.constant 0 : index
    %c0_15 = arith.constant 0 : index
    %15 = vector.load %arg7[%c0_14, %c0_15] : memref<18x32xf32, #tpu.memory_space<vmem>>, vector<18x32xf32>
    tpu.vector_store %arg7[%c0_14, %c0_15], %14 {strides = array<i32>} : memref<18x32xf32, #tpu.memory_space<vmem>>, vector<18x32xf32>,
    return
  }
}

module attributes {stable_mosaic.version = 11 : i64} {
  func.func @_conv_matmul_kernel(%arg0: memref<242x576xf32, #tpu.memory_space<vmem>>, %arg1: memref<576x128xbf16, #tpu.memory_space<vmem>>, %arg2: memref<1x128xf32, #tpu.memory_space<vmem>>, %arg3: memref<242x128xf32, #tpu.memory_space<vmem>>) attributes {dimension_semantics = [], scalar_prefetch = 0 : i64, scratch_operands = 0 : i64, tpu.core_type = #tpu.core_type<tc>} {
    %c0 = arith.constant 0 : index
    %c0_0 = arith.constant 0 : index
    %0 = vector.load %arg0[%c0, %c0_0] : memref<242x576xf32, #tpu.memory_space<vmem>>, vector<242x576xf32>
    %1 = arith.truncf %0 : vector<242x576xf32> to vector<242x576xbf16>
    %c0_1 = arith.constant 0 : index
    %c0_2 = arith.constant 0 : index
    %2 = vector.load %arg1[%c0_1, %c0_2] : memref<576x128xbf16, #tpu.memory_space<vmem>>, vector<576x128xbf16>
    %cst = arith.constant dense<0.000000e+00> : vector<242x128xf32>
    %3 = tpu.matmul %1, %2, %cst {dimension_numbers = #tpu.dot_dimension_numbers<[1], [0], [0], [1], [0, 0, 1, 1], [], []>} : vector<242x576xbf16>, vector<576x128xbf16>, vector<242x128xf32> -> vector<242x128xf32>
    %c0_3 = arith.constant 0 : index
    %c0_4 = arith.constant 0 : index
    %4 = vector.load %arg2[%c0_3, %c0_4] : memref<1x128xf32, #tpu.memory_space<vmem>>, vector<1x128xf32>
    %5 = vector.broadcast %4 : vector<1x128xf32> to vector<242x128xf32>
    %6 = arith.addf %3, %5 : vector<242x128xf32>
    %c0_5 = arith.constant 0 : index
    %c0_6 = arith.constant 0 : index
    %7 = vector.load %arg3[%c0_5, %c0_6] : memref<242x128xf32, #tpu.memory_space<vmem>>, vector<242x128xf32>
    tpu.vector_store %arg3[%c0_5, %c0_6], %6 {strides = array<i32>} : memref<242x128xf32, #tpu.memory_space<vmem>>, vector<242x128xf32>,
    return
  }
}

module attributes {stable_mosaic.version = 11 : i64} {
  func.func @_l1_out_kernel(%arg0: i32, %arg1: memref<2x3488xf32, #tpu.memory_space<vmem>>, %arg2: memref<3488x256xbf16, #tpu.memory_space<vmem>>, %arg3: memref<1x256xf32, #tpu.memory_space<vmem>>, %arg4: memref<256x128xbf16, #tpu.memory_space<vmem>>, %arg5: memref<1x128xf32, #tpu.memory_space<vmem>>, %arg6: memref<2x128xf32, #tpu.memory_space<vmem>>, %arg7: memref<2x128xf32, #tpu.memory_space<vmem>>) attributes {dimension_semantics = [#tpu.dimension_semantics<arbitrary>], iteration_bounds = array<i64: 4>, scalar_prefetch = 0 : i64, scratch_operands = 1 : i64, tpu.core_type = #tpu.core_type<tc>, window_params = [{pipeline_mode = #tpu.pipeline_mode<synchronous>, transform_indices = @transform_0, window_bounds = array<i64: 2, 3488>}, {transform_indices = @transform_1, window_bounds = array<i64: 3488, 256>}, {transform_indices = @transform_2, window_bounds = array<i64: 1, 256>}, {transform_indices = @transform_3, window_bounds = array<i64: 256, 128>}, {pipeline_mode = #tpu.pipeline_mode<synchronous>, transform_indices = @transform_4, window_bounds = array<i64: 1, 128>}, {pipeline_mode = #tpu.pipeline_mode<synchronous>, transform_indices = @transform_5, window_bounds = array<i64: 2, 128>}]} {
    %c0_i32 = arith.constant 0 : i32
    %0 = arith.cmpi eq, %arg0, %c0_i32 : i32
    %1 = arith.extui %0 : i1 to i32
    %c0_i32_0 = arith.constant 0 : i32
    %2 = arith.cmpi ne, %1, %c0_i32_0 : i32
    scf.if %2 {
      %cst_17 = arith.constant 0.000000e+00 : f32
      %27 = vector.broadcast %cst_17 : f32 to vector<2x128xf32>
      %c0_18 = arith.constant 0 : index
      %c0_19 = arith.constant 0 : index
      %28 = vector.load %arg7[%c0_18, %c0_19] : memref<2x128xf32, #tpu.memory_space<vmem>>, vector<2x128xf32>
      tpu.vector_store %arg7[%c0_18, %c0_19], %27 {strides = array<i32>} : memref<2x128xf32, #tpu.memory_space<vmem>>, vector<2x128xf32>,
    } else {
    }
    %c0 = arith.constant 0 : index
    %c0_1 = arith.constant 0 : index
    %3 = vector.load %arg1[%c0, %c0_1] : memref<2x3488xf32, #tpu.memory_space<vmem>>, vector<2x3488xf32>
    %4 = arith.truncf %3 : vector<2x3488xf32> to vector<2x3488xbf16>
    %c0_2 = arith.constant 0 : index
    %c0_3 = arith.constant 0 : index
    %5 = vector.load %arg2[%c0_2, %c0_3] : memref<3488x256xbf16, #tpu.memory_space<vmem>>, vector<3488x256xbf16>
    %cst = arith.constant dense<0.000000e+00> : vector<2x256xf32>
    %6 = tpu.matmul %4, %5, %cst {dimension_numbers = #tpu.dot_dimension_numbers<[1], [0], [0], [1], [0, 0, 1, 1], [], []>} : vector<2x3488xbf16>, vector<3488x256xbf16>, vector<2x256xf32> -> vector<2x256xf32>
    %c0_4 = arith.constant 0 : index
    %c0_5 = arith.constant 0 : index
    %7 = vector.load %arg3[%c0_4, %c0_5] : memref<1x256xf32, #tpu.memory_space<vmem>>, vector<1x256xf32>
    %8 = vector.broadcast %7 : vector<1x256xf32> to vector<2x256xf32>
    %9 = arith.addf %6, %8 : vector<2x256xf32>
    %cst_6 = arith.constant 0.000000e+00 : f32
    %10 = vector.broadcast %cst_6 : f32 to vector<2x256xf32>
    %11 = arith.cmpf ogt, %9, %10 : vector<2x256xf32>
    %cst_7 = arith.constant 0.000000e+00 : f32
    %12 = vector.broadcast %cst_7 : f32 to vector<2x256xf32>
    %13 = arith.minimumf %9, %12 : vector<2x256xf32>
    %14 = math.exp %13 : vector<2x256xf32>
    %cst_8 = arith.constant 1.000000e+00 : f32
    %15 = vector.broadcast %cst_8 : f32 to vector<2x256xf32>
    %16 = arith.subf %14, %15 : vector<2x256xf32>
    %17 = arith.select %11, %9, %16 : vector<2x256xi1>, vector<2x256xf32>
    %c0_9 = arith.constant 0 : index
    %c0_10 = arith.constant 0 : index
    %18 = vector.load %arg7[%c0_9, %c0_10] : memref<2x128xf32, #tpu.memory_space<vmem>>, vector<2x128xf32>
    %19 = arith.truncf %17 : vector<2x256xf32> to vector<2x256xbf16>
    %c0_11 = arith.constant 0 : index
    %c0_12 = arith.constant 0 : index
    %20 = vector.load %arg4[%c0_11, %c0_12] : memref<256x128xbf16, #tpu.memory_space<vmem>>, vector<256x128xbf16>
    %cst_13 = arith.constant dense<0.000000e+00> : vector<2x128xf32>
    %21 = tpu.matmul %19, %20, %cst_13 {dimension_numbers = #tpu.dot_dimension_numbers<[1], [0], [0], [1], [0, 0, 1, 1], [], []>} : vector<2x256xbf16>, vector<256x128xbf16>, vector<2x128xf32> -> vector<2x128xf32>
    %22 = arith.addf %18, %21 : vector<2x128xf32>
    %c0_14 = arith.constant 0 : index
    %c0_15 = arith.constant 0 : index
    %23 = vector.load %arg7[%c0_14, %c0_15] : memref<2x128xf32, #tpu.memory_space<vmem>>, vector<2x128xf32>
    tpu.vector_store %arg7[%c0_14, %c0_15], %22 {strides = array<i32>} : memref<2x128xf32, #tpu.memory_space<vmem>>, vector<2x128xf32>,
    %c3_i32 = arith.constant 3 : i32
    %24 = arith.cmpi eq, %arg0, %c3_i32 : i32
    %25 = arith.extui %24 : i1 to i32
    %c0_i32_16 = arith.constant 0 : i32
    %26 = arith.cmpi ne, %25, %c0_i32_16 : i32
    scf.if %26 {
      %c0_17 = arith.constant 0 : index
      %c0_18 = arith.constant 0 : index
      %27 = vector.load %arg7[%c0_17, %c0_18] : memref<2x128xf32, #tpu.memory_space<vmem>>, vector<2x128xf32>
      %c0_19 = arith.constant 0 : index
      %c0_20 = arith.constant 0 : index
      %28 = vector.load %arg5[%c0_19, %c0_20] : memref<1x128xf32, #tpu.memory_space<vmem>>, vector<1x128xf32>
      %29 = vector.broadcast %28 : vector<1x128xf32> to vector<2x128xf32>
      %30 = arith.addf %27, %29 : vector<2x128xf32>
      %c0_21 = arith.constant 0 : index
      %c0_22 = arith.constant 0 : index
      %31 = vector.load %arg6[%c0_21, %c0_22] : memref<2x128xf32, #tpu.memory_space<vmem>>, vector<2x128xf32>
      tpu.vector_store %arg6[%c0_21, %c0_22], %30 {strides = array<i32>} : memref<2x128xf32, #tpu.memory_space<vmem>>, vector<2x128xf32>,
    } else {
    }
    return
  }
  func.func @transform_0(%arg0: i32) -> (i32, i32) {
    %c0_i32 = arith.constant 0 : i32
    %c0_i32_0 = arith.constant 0 : i32
    %c0_i32_1 = arith.constant 0 : i32
    return %c0_i32, %c0_i32_0 : i32, i32
  }
  func.func @transform_1(%arg0: i32) -> (i32, i32) {
    %c0_i32 = arith.constant 0 : i32
    %c0_i32_0 = arith.constant 0 : i32
    return %c0_i32, %arg0 : i32, i32
  }
  func.func @transform_2(%arg0: i32) -> (i32, i32) {
    %c0_i32 = arith.constant 0 : i32
    %c0_i32_0 = arith.constant 0 : i32
    return %c0_i32, %arg0 : i32, i32
  }
  func.func @transform_3(%arg0: i32) -> (i32, i32) {
    %c0_i32 = arith.constant 0 : i32
    %c0_i32_0 = arith.constant 0 : i32
    return %arg0, %c0_i32 : i32, i32
  }
  func.func @transform_4(%arg0: i32) -> (i32, i32) {
    %c0_i32 = arith.constant 0 : i32
    %c0_i32_0 = arith.constant 0 : i32
    %c0_i32_1 = arith.constant 0 : i32
    return %c0_i32, %c0_i32_0 : i32, i32
  }
  func.func @transform_5(%arg0: i32) -> (i32, i32) {
    %c0_i32 = arith.constant 0 : i32
    %c0_i32_0 = arith.constant 0 : i32
    %c0_i32_1 = arith.constant 0 : i32
    return %c0_i32, %c0_i32_0 : i32, i32
  }
}

</mosaic_0001>

<llo_original>
// kernel: dqn_forward.3
$region0: #{dqn_forward.3}
  #allocation0 [shape = 'u32[]', space=smem, size = 0x4, offset = 0x4, fixed_abs, tag = 'smem constant byte address 0x4 - core index']
  #allocation1 [shape = 'u32[72,128]{1,0:T(1,128)}', space=vmem, size = 0x9000, scoped, tag = 'internal scratch']
  %s0 = inlined_call_operand.vmem [shape: f32[1458,45], index: 0, kind: input, shape index: {}]
  %s1 = inlined_call_operand.vmem [shape: bf16[45,64], index: 1, kind: input, shape index: {}]
  %s2 = inlined_call_operand.vmem [shape: f32[1,64], index: 2, kind: input, shape index: {}]
  %s3 = inlined_call_operand.vmem [shape: f32[18,45], index: 3, kind: input, shape index: {}]
  %s4 = inlined_call_operand.vmem [shape: bf16[45,32], index: 4, kind: input, shape index: {}]
  %s5 = inlined_call_operand.vmem [shape: f32[1,32], index: 5, kind: input, shape index: {}]
  %s6 = inlined_call_operand.vmem [shape: f32[1458,64], index: 6, kind: output, shape index: {0}]
  %s7 = inlined_call_operand.vmem [shape: f32[18,32], index: 7, kind: output, shape index: {1}]
  %8 = xla_tuple %s6, %s7
  %s9 = sld [smem:[#allocation0]]
  $region42: #{dqn_forward.3} parent=0
    _
  %s11 = ssub.s32 1, %s9
  %s12 = scalar_select 0, %s11, %s9
  // Predicated region
  $region2: #{dqn_forward.3} parent=0 // pred_check
    _
  $region3: #{dqn_forward.3} parent=0 // pred_check_branch
    %14 = sbr.rel (0) target = $region5
  $region4: #{dqn_forward.3} parent=0 // pred_region
    _
  $region5: #{dqn_forward.3} parent=0 // pred_fallthru
    _
  // Predicated region
  $region6: #{dqn_forward.3} parent=0 // pred_check
    _
  $region7: #{dqn_forward.3} parent=0 // pred_check_branch
    %16 = sbr.rel (0) target = $region9
  $region8: #{dqn_forward.3} parent=0 // pred_region
    _
  $region9: #{dqn_forward.3} parent=0 // pred_fallthru
    _
  // Predicated region
  $region10: #{dqn_forward.3} parent=0 // pred_check
    _
  $region11: #{dqn_forward.3} parent=0 // pred_check_branch
    %18 = sbr.rel (0) target = $region13
  $region12: #{dqn_forward.3} parent=0 // pred_region
    _
  $region13: #{dqn_forward.3} parent=0 // pred_fallthru
    _
  // Predicated region
  $region14: #{dqn_forward.3} parent=0 // pred_check
    _
  $region15: #{dqn_forward.3} parent=0 // pred_check_branch
    %20 = sbr.rel (0) target = $region17
  $region16: #{dqn_forward.3} parent=0 // pred_region
    _
  $region17: #{dqn_forward.3} parent=0 // pred_fallthru
    _
  // Predicated region
  $region18: #{dqn_forward.3} parent=0 // pred_check
    _
  $region19: #{dqn_forward.3} parent=0 // pred_check_branch
    %22 = sbr.rel (0) target = $region21
  $region20: #{dqn_forward.3} parent=0 // pred_region
    _
  $region21: #{dqn_forward.3} parent=0 // pred_fallthru
    _
  // Predicated region
  $region22: #{dqn_forward.3} parent=0 // pred_check
    _
  $region23: #{dqn_forward.3} parent=0 // pred_check_branch
    %24 = sbr.rel (0) target = $region25
  $region24: #{dqn_forward.3} parent=0 // pred_region
    _
  $region25: #{dqn_forward.3} parent=0 // pred_fallthru
    _
  %v26 = vld [vmem:[%s0] sm:$0xff]
  %v27 = vld [vmem:[%s0 + $0x8] sm:$0xff]
  %v28 = vld [vmem:[%s0 + $0x10] sm:$0xff]
  %v29 = vld [vmem:[%s0 + $0x18] sm:$0xff]
  %v30 = vld [vmem:[%s0 + $0x20] sm:$0xff]
  %v31 = vld [vmem:[%s0 + $0x28] sm:$0xff]
  %v32 = vld [vmem:[%s0 + $0x30] sm:$0xff]
  %v33 = vld [vmem:[%s0 + $0x38] sm:$0xff]
  %v34 = vld [vmem:[%s0 + $0x40] sm:$0xff]
  %v35 = vld [vmem:[%s0 + $0x48] sm:$0xff]
  %v36 = vld [vmem:[%s0 + $0x50] sm:$0xff]
  %v37 = vld [vmem:[%s0 + $0x58] sm:$0xff]
  %v38 = vld [vmem:[%s0 + $0x60] sm:$0xff]
  %v39 = vld [vmem:[%s0 + $0x68] sm:$0xff]
  %v40 = vld [vmem:[%s0 + $0x70] sm:$0xff]
  %v41 = vld [vmem:[%s0 + $0x78] sm:$0xff]
  %v42 = vld [vmem:[%s0 + $0x80] sm:$0xff]
  %v43 = vld [vmem:[%s0 + $0x88] sm:$0xff]
  %v44 = vld [vmem:[%s0 + $0x90] sm:$0xff]
  %v45 = vld [vmem:[%s0 + $0x98] sm:$0xff]
  %v46 = vld [vmem:[%s0 + $0xa0] sm:$0xff]
  %v47 = vld [vmem:[%s0 + $0xa8] sm:$0xff]
  %v48 = vld [vmem:[%s0 + $0xb0] sm:$0xff]
  %v49 = vld [vmem:[%s0 + $0xb8] sm:$0xff]
  %v50 = vld [vmem:[%s0 + $0xc0] sm:$0xff]
  %v51 = vld [vmem:[%s0 + $0xc8] sm:$0xff]
  %v52 = vld [vmem:[%s0 + $0xd0] sm:$0xff]
  %v53 = vld [vmem:[%s0 + $0xd8] sm:$0xff]
  %v54 = vld [vmem:[%s0 + $0xe0] sm:$0xff]
  %v55 = vld [vmem:[%s0 + $0xe8] sm:$0xff]
  %v56 = vld [vmem:[%s0 + $0xf0] sm:$0xff]
  %v57 = vld [vmem:[%s0 + $0xf8] sm:$0xff]
  %v58 = vld [vmem:[%s0 + $0x100] sm:$0xff]
  %v59 = vld [vmem:[%s0 + $0x108] sm:$0xff]
  %v60 = vld [vmem:[%s0 + $0x110] sm:$0xff]
  %v61 = vld [vmem:[%s0 + $0x118] sm:$0xff]
  %v62 = vld [vmem:[%s0 + $0x120] sm:$0xff]
  %v63 = vld [vmem:[%s0 + $0x128] sm:$0xff]
  %v64 = vld [vmem:[%s0 + $0x130] sm:$0xff]
  %v65 = vld [vmem:[%s0 + $0x138] sm:$0xff]
  %v66 = vld [vmem:[%s0 + $0x140] sm:$0xff]
  %v67 = vld [vmem:[%s0 + $0x148] sm:$0xff]
  %v68 = vld [vmem:[%s0 + $0x150] sm:$0xff]
  %v69 = vld [vmem:[%s0 + $0x158] sm:$0xff]
  %v70 = vld [vmem:[%s0 + $0x160] sm:$0xff]
  %v71 = vld [vmem:[%s0 + $0x168] sm:$0xff]
  %v72 = vld [vmem:[%s0 + $0x170] sm:$0xff]
  %v73 = vld [vmem:[%s0 + $0x178] sm:$0xff]
  %v74 = vld [vmem:[%s0 + $0x180] sm:$0xff]
  %v75 = vld [vmem:[%s0 + $0x188] sm:$0xff]
  %v76 = vld [vmem:[%s0 + $0x190] sm:$0xff]
  %v77 = vld [vmem:[%s0 + $0x198] sm:$0xff]
  %v78 = vld [vmem:[%s0 + $0x1a0] sm:$0xff]
  %v79 = vld [vmem:[%s0 + $0x1a8] sm:$0xff]
  %v80 = vld [vmem:[%s0 + $0x1b0] sm:$0xff]
  %v81 = vld [vmem:[%s0 + $0x1b8] sm:$0xff]
  %v82 = vld [vmem:[%s0 + $0x1c0] sm:$0xff]
  %v83 = vld [vmem:[%s0 + $0x1c8] sm:$0xff]
  %v84 = vld [vmem:[%s0 + $0x1d0] sm:$0xff]
  %v85 = vld [vmem:[%s0 + $0x1d8] sm:$0xff]
  %v86 = vld [vmem:[%s0 + $0x1e0] sm:$0xff]
  %v87 = vld [vmem:[%s0 + $0x1e8] sm:$0xff]
  %v88 = vld [vmem:[%s0 + $0x1f0] sm:$0xff]
  %v89 = vld [vmem:[%s0 + $0x1f8] sm:$0xff]
  %v90 = vld [vmem:[%s0 + $0x200] sm:$0xff]
  %v91 = vld [vmem:[%s0 + $0x208] sm:$0xff]
  %v92 = vld [vmem:[%s0 + $0x210] sm:$0xff]
  %v93 = vld [vmem:[%s0 + $0x218] sm:$0xff]
  %v94 = vld [vmem:[%s0 + $0x220] sm:$0xff]
  %v95 = vld [vmem:[%s0 + $0x228] sm:$0xff]
  %v96 = vld [vmem:[%s0 + $0x230] sm:$0xff]
  %v97 = vld [vmem:[%s0 + $0x238] sm:$0xff]
  %v98 = vld [vmem:[%s0 + $0x240] sm:$0xff]
  %v99 = vld [vmem:[%s0 + $0x248] sm:$0xff]
  %v100 = vld [vmem:[%s0 + $0x250] sm:$0xff]
  %v101 = vld [vmem:[%s0 + $0x258] sm:$0xff]
  %v102 = vld [vmem:[%s0 + $0x260] sm:$0xff]
  %v103 = vld [vmem:[%s0 + $0x268] sm:$0xff]
  %v104 = vld [vmem:[%s0 + $0x270] sm:$0xff]
  %v105 = vld [vmem:[%s0 + $0x278] sm:$0xff]
  %v106 = vld [vmem:[%s0 + $0x280] sm:$0xff]
  %v107 = vld [vmem:[%s0 + $0x288] sm:$0xff]
  %v108 = vld [vmem:[%s0 + $0x290] sm:$0xff]
  %v109 = vld [vmem:[%s0 + $0x298] sm:$0xff]
  %v110 = vld [vmem:[%s0 + $0x2a0] sm:$0xff]
  %v111 = vld [vmem:[%s0 + $0x2a8] sm:$0xff]
  %v112 = vld [vmem:[%s0 + $0x2b0] sm:$0xff]
  %v113 = vld [vmem:[%s0 + $0x2b8] sm:$0xff]
  %v114 = vld [vmem:[%s0 + $0x2c0] sm:$0xff]
  %v115 = vld [vmem:[%s0 + $0x2c8] sm:$0xff]
  %v116 = vld [vmem:[%s0 + $0x2d0] sm:$0xff]
  %v117 = vld [vmem:[%s0 + $0x2d8] sm:$0xff]
  %v118 = vld [vmem:[%s0 + $0x2e0] sm:$0xff]
  %v119 = vld [vmem:[%s0 + $0x2e8] sm:$0xff]
  %v120 = vld [vmem:[%s0 + $0x2f0] sm:$0xff]
  %v121 = vld [vmem:[%s0 + $0x2f8] sm:$0xff]
  %v122 = vld [vmem:[%s0 + $0x300] sm:$0xff]
  %v123 = vld [vmem:[%s0 + $0x308] sm:$0xff]
  %v124 = vld [vmem:[%s0 + $0x310] sm:$0xff]
  %v125 = vld [vmem:[%s0 + $0x318] sm:$0xff]
  %v126 = vld [vmem:[%s0 + $0x320] sm:$0xff]
  %v127 = vld [vmem:[%s0 + $0x328] sm:$0xff]
  %v128 = vld [vmem:[%s0 + $0x330] sm:$0xff]
  %v129 = vld [vmem:[%s0 + $0x338] sm:$0xff]
  %v130 = vld [vmem:[%s0 + $0x340] sm:$0xff]
  %v131 = vld [vmem:[%s0 + $0x348] sm:$0xff]
  %v132 = vld [vmem:[%s0 + $0x350] sm:$0xff]
  %v133 = vld [vmem:[%s0 + $0x358] sm:$0xff]
  %v134 = vld [vmem:[%s0 + $0x360] sm:$0xff]
  %v135 = vld [vmem:[%s0 + $0x368] sm:$0xff]
  %v136 = vld [vmem:[%s0 + $0x370] sm:$0xff]
  %v137 = vld [vmem:[%s0 + $0x378] sm:$0xff]
  %v138 = vld [vmem:[%s0 + $0x380] sm:$0xff]
  %v139 = vld [vmem:[%s0 + $0x388] sm:$0xff]
  %v140 = vld [vmem:[%s0 + $0x390] sm:$0xff]
  %v141 = vld [vmem:[%s0 + $0x398] sm:$0xff]
  %v142 = vld [vmem:[%s0 + $0x3a0] sm:$0xff]
  %v143 = vld [vmem:[%s0 + $0x3a8] sm:$0xff]
  %v144 = vld [vmem:[%s0 + $0x3b0] sm:$0xff]
  %v145 = vld [vmem:[%s0 + $0x3b8] sm:$0xff]
  %v146 = vld [vmem:[%s0 + $0x3c0] sm:$0xff]
  %v147 = vld [vmem:[%s0 + $0x3c8] sm:$0xff]
  %v148 = vld [vmem:[%s0 + $0x3d0] sm:$0xff]
  %v149 = vld [vmem:[%s0 + $0x3d8] sm:$0xff]
  %v150 = vld [vmem:[%s0 + $0x3e0] sm:$0xff]
  %v151 = vld [vmem:[%s0 + $0x3e8] sm:$0xff]
  %v152 = vld [vmem:[%s0 + $0x3f0] sm:$0xff]
  %v153 = vld [vmem:[%s0 + $0x3f8] sm:$0xff]
  %v154 = vld [vmem:[%s0 + $0x400] sm:$0xff]
  %v155 = vld [vmem:[%s0 + $0x408] sm:$0xff]
  %v156 = vld [vmem:[%s0 + $0x410] sm:$0xff]
  %v157 = vld [vmem:[%s0 + $0x418] sm:$0xff]
  %v158 = vld [vmem:[%s0 + $0x420] sm:$0xff]
  %v159 = vld [vmem:[%s0 + $0x428] sm:$0xff]
  %v160 = vld [vmem:[%s0 + $0x430] sm:$0xff]
  %v161 = vld [vmem:[%s0 + $0x438] sm:$0xff]
  %v162 = vld [vmem:[%s0 + $0x440] sm:$0xff]
  %v163 = vld [vmem:[%s0 + $0x448] sm:$0xff]
  %v164 = vld [vmem:[%s0 + $0x450] sm:$0xff]
  %v165 = vld [vmem:[%s0 + $0x458] sm:$0xff]
  %v166 = vld [vmem:[%s0 + $0x460] sm:$0xff]
  %v167 = vld [vmem:[%s0 + $0x468] sm:$0xff]
  %v168 = vld [vmem:[%s0 + $0x470] sm:$0xff]
  %v169 = vld [vmem:[%s0 + $0x478] sm:$0xff]
  %v170 = vld [vmem:[%s0 + $0x480] sm:$0xff]
  %v171 = vld [vmem:[%s0 + $0x488] sm:$0xff]
  %v172 = vld [vmem:[%s0 + $0x490] sm:$0xff]
  %v173 = vld [vmem:[%s0 + $0x498] sm:$0xff]
  %v174 = vld [vmem:[%s0 + $0x4a0] sm:$0xff]
  %v175 = vld [vmem:[%s0 + $0x4a8] sm:$0xff]
  %v176 = vld [vmem:[%s0 + $0x4b0] sm:$0xff]
  %v177 = vld [vmem:[%s0 + $0x4b8] sm:$0xff]
  %v178 = vld [vmem:[%s0 + $0x4c0] sm:$0xff]
  %v179 = vld [vmem:[%s0 + $0x4c8] sm:$0xff]
  %v180 = vld [vmem:[%s0 + $0x4d0] sm:$0xff]
  %v181 = vld [vmem:[%s0 + $0x4d8] sm:$0xff]
  %v182 = vld [vmem:[%s0 + $0x4e0] sm:$0xff]
  %v183 = vld [vmem:[%s0 + $0x4e8] sm:$0xff]
  %v184 = vld [vmem:[%s0 + $0x4f0] sm:$0xff]
  %v185 = vld [vmem:[%s0 + $0x4f8] sm:$0xff]
  %v186 = vld [vmem:[%s0 + $0x500] sm:$0xff]
  %v187 = vld [vmem:[%s0 + $0x508] sm:$0xff]
  %v188 = vld [vmem:[%s0 + $0x510] sm:$0xff]
  %v189 = vld [vmem:[%s0 + $0x518] sm:$0xff]
  %v190 = vld [vmem:[%s0 + $0x520] sm:$0xff]
  %v191 = vld [vmem:[%s0 + $0x528] sm:$0xff]
  %v192 = vld [vmem:[%s0 + $0x530] sm:$0xff]
  %v193 = vld [vmem:[%s0 + $0x538] sm:$0xff]
  %v194 = vld [vmem:[%s0 + $0x540] sm:$0xff]
  %v195 = vld [vmem:[%s0 + $0x548] sm:$0xff]
  %v196 = vld [vmem:[%s0 + $0x550] sm:$0xff]
  %v197 = vld [vmem:[%s0 + $0x558] sm:$0xff]
  %v198 = vld [vmem:[%s0 + $0x560] sm:$0xff]
  %v199 = vld [vmem:[%s0 + $0x568] sm:$0xff]
  %v200 = vld [vmem:[%s0 + $0x570] sm:$0xff]
  %v201 = vld [vmem:[%s0 + $0x578] sm:$0xff]
  %v202 = vld [vmem:[%s0 + $0x580] sm:$0xff]
  %v203 = vld [vmem:[%s0 + $0x588] sm:$0xff]
  %v204 = vld [vmem:[%s0 + $0x590] sm:$0xff]
  %v205 = vld [vmem:[%s0 + $0x598] sm:$0xff]
  %v206 = vld [vmem:[%s0 + $0x5a0] sm:$0xff]
  %v207 = vld [vmem:[%s0 + $0x5a8] sm:$0xff]
  %v208 = vld [vmem:[%s0 + $0x5b0] sm:$0x3]
  %v209 = vpack.c.bf16 %v27, %v26
  %v210 = vpack.c.bf16 %v29, %v28
  %v211 = vpack.c.bf16 %v31, %v30
  %v212 = vpack.c.bf16 %v33, %v32
  %v213 = vpack.c.bf16 %v35, %v34
  %v214 = vpack.c.bf16 %v37, %v36
  %v215 = vpack.c.bf16 %v39, %v38
  %v216 = vpack.c.bf16 %v41, %v40
  %v217 = vpack.c.bf16 %v43, %v42
  %v218 = vpack.c.bf16 %v45, %v44
  %v219 = vpack.c.bf16 %v47, %v46
  %v220 = vpack.c.bf16 %v49, %v48
  %v221 = vpack.c.bf16 %v51, %v50
  %v222 = vpack.c.bf16 %v53, %v52
  %v223 = vpack.c.bf16 %v55, %v54
  %v224 = vpack.c.bf16 %v57, %v56
  %v225 = vpack.c.bf16 %v59, %v58
  %v226 = vpack.c.bf16 %v61, %v60
  %v227 = vpack.c.bf16 %v63, %v62
  %v228 = vpack.c.bf16 %v65, %v64
  %v229 = vpack.c.bf16 %v67, %v66
  %v230 = vpack.c.bf16 %v69, %v68
  %v231 = vpack.c.bf16 %v71, %v70
  %v232 = vpack.c.bf16 %v73, %v72
  %v233 = vpack.c.bf16 %v75, %v74
  %v234 = vpack.c.bf16 %v77, %v76
  %v235 = vpack.c.bf16 %v79, %v78
  %v236 = vpack.c.bf16 %v81, %v80
  %v237 = vpack.c.bf16 %v83, %v82
  %v238 = vpack.c.bf16 %v85, %v84
  %v239 = vpack.c.bf16 %v87, %v86
  %v240 = vpack.c.bf16 %v89, %v88
  %v241 = vpack.c.bf16 %v91, %v90
  %v242 = vpack.c.bf16 %v93, %v92
  %v243 = vpack.c.bf16 %v95, %v94
  %v244 = vpack.c.bf16 %v97, %v96
  %v245 = vpack.c.bf16 %v99, %v98
  %v246 = vpack.c.bf16 %v101, %v100
  %v247 = vpack.c.bf16 %v103, %v102
  %v248 = vpack.c.bf16 %v105, %v104
  %v249 = vpack.c.bf16 %v107, %v106
  %v250 = vpack.c.bf16 %v109, %v108
  %v251 = vpack.c.bf16 %v111, %v110
  %v252 = vpack.c.bf16 %v113, %v112
  %v253 = vpack.c.bf16 %v115, %v114
  %v254 = vpack.c.bf16 %v117, %v116
  %v255 = vpack.c.bf16 %v119, %v118
  %v256 = vpack.c.bf16 %v121, %v120
  %v257 = vpack.c.bf16 %v123, %v122
  %v258 = vpack.c.bf16 %v125, %v124
  %v259 = vpack.c.bf16 %v127, %v126
  %v260 = vpack.c.bf16 %v129, %v128
  %v261 = vpack.c.bf16 %v131, %v130
  %v262 = vpack.c.bf16 %v133, %v132
  %v263 = vpack.c.bf16 %v135, %v134
  %v264 = vpack.c.bf16 %v137, %v136
  %v265 = vpack.c.bf16 %v139, %v138
  %v266 = vpack.c.bf16 %v141, %v140
  %v267 = vpack.c.bf16 %v143, %v142
  %v268 = vpack.c.bf16 %v145, %v144
  %v269 = vpack.c.bf16 %v147, %v146
  %v270 = vpack.c.bf16 %v149, %v148
  %v271 = vpack.c.bf16 %v151, %v150
  %v272 = vpack.c.bf16 %v153, %v152
  %v273 = vpack.c.bf16 %v155, %v154
  %v274 = vpack.c.bf16 %v157, %v156
  %v275 = vpack.c.bf16 %v159, %v158
  %v276 = vpack.c.bf16 %v161, %v160
  %v277 = vpack.c.bf16 %v163, %v162
  %v278 = vpack.c.bf16 %v165, %v164
  %v279 = vpack.c.bf16 %v167, %v166
  %v280 = vpack.c.bf16 %v169, %v168
  %v281 = vpack.c.bf16 %v171, %v170
  %v282 = vpack.c.bf16 %v173, %v172
  %v283 = vpack.c.bf16 %v175, %v174
  %v284 = vpack.c.bf16 %v177, %v176
  %v285 = vpack.c.bf16 %v179, %v178
  %v286 = vpack.c.bf16 %v181, %v180
  %v287 = vpack.c.bf16 %v183, %v182
  %v288 = vpack.c.bf16 %v185, %v184
  %v289 = vpack.c.bf16 %v187, %v186
  %v290 = vpack.c.bf16 %v189, %v188
  %v291 = vpack.c.bf16 %v191, %v190
  %v292 = vpack.c.bf16 %v193, %v192
  %v293 = vpack.c.bf16 %v195, %v194
  %v294 = vpack.c.bf16 %v197, %v196
  %v295 = vpack.c.bf16 %v199, %v198
  %v296 = vpack.c.bf16 %v201, %v200
  %v297 = vpack.c.bf16 %v203, %v202
  %v298 = vpack.c.bf16 %v205, %v204
  %v299 = vpack.c.bf16 %v207, %v206
  %v300 = vpack.c.bf16 %v208, %v208
  %v301 = vld [vmem:[%s1] sm:$0xf]
  %v302 = vld [vmem:[%s1 + $0x4] sm:$0xf]
  %v303 = vld [vmem:[%s1 + $0x8] sm:$0xf]
  %v304 = vld [vmem:[%s1 + $0xc] sm:$0xf]
  %v305 = vld [vmem:[%s1 + $0x10] sm:$0xf]
  %v306 = vld [vmem:[%s1 + $0x14] sm:$0x7]
  %v307 = vld [vmem:[%s2] sm:$0x1]
  %v309 = vperm.slane %v307, 0
  %v317 = vunpack.c.l.b16 %v301
  %v318 = vunpack.c.l.b16 %v302
  %v319 = vunpack.c.l.b16 %v303
  %v320 = vunpack.c.l.b16 %v304
  %v321 = vunpack.c.l.b16 %v305
  %v322 = vunpack.c.l.b16 %v306
  %v323 = vpack.c.b16 %v318, %v317
  %v324 = vpack.c.b16 %v320, %v319
  %v325 = vpack.c.b16 %v322, %v321
  %vm328 = vcmask 367616
  %v330 = vsel %vm328, %v209, 0
  %v333 = vsel %vm328, %v210, 0
  %v336 = vsel %vm328, %v211, 0
  %v339 = vsel %vm328, %v212, 0
  %v342 = vsel %vm328, %v213, 0
  %v345 = vsel %vm328, %v214, 0
  %v348 = vsel %vm328, %v215, 0
  %v351 = vsel %vm328, %v216, 0
  %v354 = vsel %vm328, %v217, 0
  %v357 = vsel %vm328, %v218, 0
  %v360 = vsel %vm328, %v219, 0
  %v363 = vsel %vm328, %v220, 0
  %v366 = vsel %vm328, %v221, 0
  %v369 = vsel %vm328, %v222, 0
  %v372 = vsel %vm328, %v223, 0
  %v375 = vsel %vm328, %v224, 0
  %v378 = vsel %vm328, %v225, 0
  %v381 = vsel %vm328, %v226, 0
  %v384 = vsel %vm328, %v227, 0
  %v387 = vsel %vm328, %v228, 0
  %v390 = vsel %vm328, %v229, 0
  %v393 = vsel %vm328, %v230, 0
  %v396 = vsel %vm328, %v231, 0
  %v399 = vsel %vm328, %v232, 0
  %v402 = vsel %vm328, %v233, 0
  %v405 = vsel %vm328, %v234, 0
  %v408 = vsel %vm328, %v235, 0
  %v411 = vsel %vm328, %v236, 0
  %v414 = vsel %vm328, %v237, 0
  %v417 = vsel %vm328, %v238, 0
  %v420 = vsel %vm328, %v239, 0
  %v423 = vsel %vm328, %v240, 0
  %v426 = vsel %vm328, %v241, 0
  %v429 = vsel %vm328, %v242, 0
  %v432 = vsel %vm328, %v243, 0
  %v435 = vsel %vm328, %v244, 0
  %v438 = vsel %vm328, %v245, 0
  %v441 = vsel %vm328, %v246, 0
  %v444 = vsel %vm328, %v247, 0
  %v447 = vsel %vm328, %v248, 0
  %v450 = vsel %vm328, %v249, 0
  %v453 = vsel %vm328, %v250, 0
  %v456 = vsel %vm328, %v251, 0
  %v459 = vsel %vm328, %v252, 0
  %v462 = vsel %vm328, %v253, 0
  %v465 = vsel %vm328, %v254, 0
  %v468 = vsel %vm328, %v255, 0
  %v471 = vsel %vm328, %v256, 0
  %v474 = vsel %vm328, %v257, 0
  %v477 = vsel %vm328, %v258, 0
  %v480 = vsel %vm328, %v259, 0
  %v483 = vsel %vm328, %v260, 0
  %v486 = vsel %vm328, %v261, 0
  %v489 = vsel %vm328, %v262, 0
  %v492 = vsel %vm328, %v263, 0
  %v495 = vsel %vm328, %v264, 0
  %v498 = vsel %vm328, %v265, 0
  %v501 = vsel %vm328, %v266, 0
  %v504 = vsel %vm328, %v267, 0
  %v507 = vsel %vm328, %v268, 0
  %v510 = vsel %vm328, %v269, 0
  %v513 = vsel %vm328, %v270, 0
  %v516 = vsel %vm328, %v271, 0
  %v519 = vsel %vm328, %v272, 0
  %v522 = vsel %vm328, %v273, 0
  %v525 = vsel %vm328, %v274, 0
  %v528 = vsel %vm328, %v275, 0
  %v531 = vsel %vm328, %v276, 0
  %v534 = vsel %vm328, %v277, 0
  %v537 = vsel %vm328, %v278, 0
  %v540 = vsel %vm328, %v279, 0
  %v543 = vsel %vm328, %v280, 0
  %v546 = vsel %vm328, %v281, 0
  %v549 = vsel %vm328, %v282, 0
  %v552 = vsel %vm328, %v283, 0
  %v555 = vsel %vm328, %v284, 0
  %v558 = vsel %vm328, %v285, 0
  %v561 = vsel %vm328, %v286, 0
  %v564 = vsel %vm328, %v287, 0
  %v567 = vsel %vm328, %v288, 0
  %v570 = vsel %vm328, %v289, 0
  %v573 = vsel %vm328, %v290, 0
  %v576 = vsel %vm328, %v291, 0
  %v579 = vsel %vm328, %v292, 0
  %v582 = vsel %vm328, %v293, 0
  %v585 = vsel %vm328, %v294, 0
  %v588 = vsel %vm328, %v295, 0
  %v591 = vsel %vm328, %v296, 0
  %v594 = vsel %vm328, %v297, 0
  %v597 = vsel %vm328, %v298, 0
  %v600 = vsel %vm328, %v299, 0
  %v603 = vsel %vm328, %v300, 0
  %vm605 = vcmask 1045504
  %vm606 = vcmask 1046528
  %v607 = vsel %vm605, 4294967295, 65535
  %v608 = vsel %vm606, %v607, 0
  %v610 = vand.u32 %v325, %v608
  %612 = vmatpush.bf16.msra.mxu0 0
  %613 = vmatpush.bf16.msra.mxu0 0
  %614 = vmatpush.bf16.msra.mxu0 0
  %615 = vmatpush.bf16.msra.mxu0 0
  %616 = vmatpush.bf16.msra.mxu0 0
  %617 = vmatpush.bf16.msra.mxu0 %v610
  %618 = vmatpush.bf16.msra.mxu0 %v324
  %619 = vmatpush.bf16.msra.mxu0 %v323
  %620 = vmatmul.bf16.gmra.mxu0 %v330
  %v621 = vpop.f32.mrf.mxu0
  %v622 = vadd.f32 %v309, %v621
  %v623 = vpop.f32.mrf.mxu0
  %v624 = vadd.f32 %v309, %v623
  %625 = vmatmul.bf16.gmra.mxu0 %v333
  %v626 = vpop.f32.mrf.mxu0
  %v627 = vadd.f32 %v309, %v626
  %v628 = vpop.f32.mrf.mxu0
  %v629 = vadd.f32 %v309, %v628
  %630 = vmatmul.bf16.gmra.mxu0 %v336
  %v631 = vpop.f32.mrf.mxu0
  %v632 = vadd.f32 %v309, %v631
  %v633 = vpop.f32.mrf.mxu0
  %v634 = vadd.f32 %v309, %v633
  %635 = vmatmul.bf16.gmra.mxu0 %v339
  %v636 = vpop.f32.mrf.mxu0
  %v637 = vadd.f32 %v309, %v636
  %v638 = vpop.f32.mrf.mxu0
  %v639 = vadd.f32 %v309, %v638
  %640 = vmatmul.bf16.gmra.mxu0 %v342
  %v641 = vpop.f32.mrf.mxu0
  %v642 = vadd.f32 %v309, %v641
  %v643 = vpop.f32.mrf.mxu0
  %v644 = vadd.f32 %v309, %v643
  %645 = vmatmul.bf16.gmra.mxu0 %v345
  %v646 = vpop.f32.mrf.mxu0
  %v647 = vadd.f32 %v309, %v646
  %v648 = vpop.f32.mrf.mxu0
  %v649 = vadd.f32 %v309, %v648
  %650 = vmatmul.bf16.gmra.mxu0 %v348
  %v651 = vpop.f32.mrf.mxu0
  %v652 = vadd.f32 %v309, %v651
  %v653 = vpop.f32.mrf.mxu0
  %v654 = vadd.f32 %v309, %v653
  %655 = vmatmul.bf16.gmra.mxu0 %v351
  %v656 = vpop.f32.mrf.mxu0
  %v657 = vadd.f32 %v309, %v656
  %v658 = vpop.f32.mrf.mxu0
  %v659 = vadd.f32 %v309, %v658
  %660 = vmatmul.bf16.gmra.mxu0 %v354
  %v661 = vpop.f32.mrf.mxu0
  %v662 = vadd.f32 %v309, %v661
  %v663 = vpop.f32.mrf.mxu0
  %v664 = vadd.f32 %v309, %v663
  %665 = vmatmul.bf16.gmra.mxu0 %v357
  %v666 = vpop.f32.mrf.mxu0
  %v667 = vadd.f32 %v309, %v666
  %v668 = vpop.f32.mrf.mxu0
  %v669 = vadd.f32 %v309, %v668
  %670 = vmatmul.bf16.gmra.mxu0 %v360
  %v671 = vpop.f32.mrf.mxu0
  %v672 = vadd.f32 %v309, %v671
  %v673 = vpop.f32.mrf.mxu0
  %v674 = vadd.f32 %v309, %v673
  %675 = vmatmul.bf16.gmra.mxu0 %v363
  %v676 = vpop.f32.mrf.mxu0
  %v677 = vadd.f32 %v309, %v676
  %v678 = vpop.f32.mrf.mxu0
  %v679 = vadd.f32 %v309, %v678
  %680 = vmatmul.bf16.gmra.mxu0 %v366
  %v681 = vpop.f32.mrf.mxu0
  %v682 = vadd.f32 %v309, %v681
  %v683 = vpop.f32.mrf.mxu0
  %v684 = vadd.f32 %v309, %v683
  %685 = vmatmul.bf16.gmra.mxu0 %v369
  %v686 = vpop.f32.mrf.mxu0
  %v687 = vadd.f32 %v309, %v686
  %v688 = vpop.f32.mrf.mxu0
  %v689 = vadd.f32 %v309, %v688
  %690 = vmatmul.bf16.gmra.mxu0 %v372
  %v691 = vpop.f32.mrf.mxu0
  %v692 = vadd.f32 %v309, %v691
  %v693 = vpop.f32.mrf.mxu0
  %v694 = vadd.f32 %v309, %v693
  %695 = vmatmul.bf16.gmra.mxu0 %v375
  %v696 = vpop.f32.mrf.mxu0
  %v697 = vadd.f32 %v309, %v696
  %v698 = vpop.f32.mrf.mxu0
  %v699 = vadd.f32 %v309, %v698
  %700 = vmatmul.bf16.gmra.mxu0 %v378
  %v701 = vpop.f32.mrf.mxu0
  %v702 = vadd.f32 %v309, %v701
  %v703 = vpop.f32.mrf.mxu0
  %v704 = vadd.f32 %v309, %v703
  %705 = vmatmul.bf16.gmra.mxu0 %v381
  %v706 = vpop.f32.mrf.mxu0
  %v707 = vadd.f32 %v309, %v706
  %v708 = vpop.f32.mrf.mxu0
  %v709 = vadd.f32 %v309, %v708
  %710 = vmatmul.bf16.gmra.mxu0 %v384
  %v711 = vpop.f32.mrf.mxu0
  %v712 = vadd.f32 %v309, %v711
  %v713 = vpop.f32.mrf.mxu0
  %v714 = vadd.f32 %v309, %v713
  %715 = vmatmul.bf16.gmra.mxu0 %v387
  %v716 = vpop.f32.mrf.mxu0
  %v717 = vadd.f32 %v309, %v716
  %v718 = vpop.f32.mrf.mxu0
  %v719 = vadd.f32 %v309, %v718
  %720 = vmatmul.bf16.gmra.mxu0 %v390
  %v721 = vpop.f32.mrf.mxu0
  %v722 = vadd.f32 %v309, %v721
  %v723 = vpop.f32.mrf.mxu0
  %v724 = vadd.f32 %v309, %v723
  %725 = vmatmul.bf16.gmra.mxu0 %v393
  %v726 = vpop.f32.mrf.mxu0
  %v727 = vadd.f32 %v309, %v726
  %v728 = vpop.f32.mrf.mxu0
  %v729 = vadd.f32 %v309, %v728
  %730 = vmatmul.bf16.gmra.mxu0 %v396
  %v731 = vpop.f32.mrf.mxu0
  %v732 = vadd.f32 %v309, %v731
  %v733 = vpop.f32.mrf.mxu0
  %v734 = vadd.f32 %v309, %v733
  %735 = vmatmul.bf16.gmra.mxu0 %v399
  %v736 = vpop.f32.mrf.mxu0
  %v737 = vadd.f32 %v309, %v736
  %v738 = vpop.f32.mrf.mxu0
  %v739 = vadd.f32 %v309, %v738
  %740 = vmatmul.bf16.gmra.mxu0 %v402
  %v741 = vpop.f32.mrf.mxu0
  %v742 = vadd.f32 %v309, %v741
  %v743 = vpop.f32.mrf.mxu0
  %v744 = vadd.f32 %v309, %v743
  %745 = vmatmul.bf16.gmra.mxu0 %v405
  %v746 = vpop.f32.mrf.mxu0
  %v747 = vadd.f32 %v309, %v746
  %v748 = vpop.f32.mrf.mxu0
  %v749 = vadd.f32 %v309, %v748
  %750 = vmatmul.bf16.gmra.mxu0 %v408
  %v751 = vpop.f32.mrf.mxu0
  %v752 = vadd.f32 %v309, %v751
  %v753 = vpop.f32.mrf.mxu0
  %v754 = vadd.f32 %v309, %v753
  %755 = vmatmul.bf16.gmra.mxu0 %v411
  %v756 = vpop.f32.mrf.mxu0
  %v757 = vadd.f32 %v309, %v756
  %v758 = vpop.f32.mrf.mxu0
  %v759 = vadd.f32 %v309, %v758
  %760 = vmatmul.bf16.gmra.mxu0 %v414
  %v761 = vpop.f32.mrf.mxu0
  %v762 = vadd.f32 %v309, %v761
  %v763 = vpop.f32.mrf.mxu0
  %v764 = vadd.f32 %v309, %v763
  %765 = vmatmul.bf16.gmra.mxu0 %v417
  %v766 = vpop.f32.mrf.mxu0
  %v767 = vadd.f32 %v309, %v766
  %v768 = vpop.f32.mrf.mxu0
  %v769 = vadd.f32 %v309, %v768
  %770 = vmatmul.bf16.gmra.mxu0 %v420
  %v771 = vpop.f32.mrf.mxu0
  %v772 = vadd.f32 %v309, %v771
  %v773 = vpop.f32.mrf.mxu0
  %v774 = vadd.f32 %v309, %v773
  %775 = vmatmul.bf16.gmra.mxu0 %v423
  %v776 = vpop.f32.mrf.mxu0
  %v777 = vadd.f32 %v309, %v776
  %v778 = vpop.f32.mrf.mxu0
  %v779 = vadd.f32 %v309, %v778
  %780 = vmatmul.bf16.gmra.mxu0 %v426
  %v781 = vpop.f32.mrf.mxu0
  %v782 = vadd.f32 %v309, %v781
  %v783 = vpop.f32.mrf.mxu0
  %v784 = vadd.f32 %v309, %v783
  %785 = vmatmul.bf16.gmra.mxu0 %v429
  %v786 = vpop.f32.mrf.mxu0
  %v787 = vadd.f32 %v309, %v786
  %v788 = vpop.f32.mrf.mxu0
  %v789 = vadd.f32 %v309, %v788
  %790 = vmatmul.bf16.gmra.mxu0 %v432
  %v791 = vpop.f32.mrf.mxu0
  %v792 = vadd.f32 %v309, %v791
  %v793 = vpop.f32.mrf.mxu0
  %v794 = vadd.f32 %v309, %v793
  %795 = vmatmul.bf16.gmra.mxu0 %v435
  %v796 = vpop.f32.mrf.mxu0
  %v797 = vadd.f32 %v309, %v796
  %v798 = vpop.f32.mrf.mxu0
  %v799 = vadd.f32 %v309, %v798
  %800 = vmatmul.bf16.gmra.mxu0 %v438
  %v801 = vpop.f32.mrf.mxu0
  %v802 = vadd.f32 %v309, %v801
  %v803 = vpop.f32.mrf.mxu0
  %v804 = vadd.f32 %v309, %v803
  %805 = vmatmul.bf16.gmra.mxu0 %v441
  %v806 = vpop.f32.mrf.mxu0
  %v807 = vadd.f32 %v309, %v806
  %v808 = vpop.f32.mrf.mxu0
  %v809 = vadd.f32 %v309, %v808
  %810 = vmatmul.bf16.gmra.mxu0 %v444
  %v811 = vpop.f32.mrf.mxu0
  %v812 = vadd.f32 %v309, %v811
  %v813 = vpop.f32.mrf.mxu0
  %v814 = vadd.f32 %v309, %v813
  %815 = vmatmul.bf16.gmra.mxu0 %v447
  %v816 = vpop.f32.mrf.mxu0
  %v817 = vadd.f32 %v309, %v816
  %v818 = vpop.f32.mrf.mxu0
  %v819 = vadd.f32 %v309, %v818
  %820 = vmatmul.bf16.gmra.mxu0 %v450
  %v821 = vpop.f32.mrf.mxu0
  %v822 = vadd.f32 %v309, %v821
  %v823 = vpop.f32.mrf.mxu0
  %v824 = vadd.f32 %v309, %v823
  %825 = vmatmul.bf16.gmra.mxu0 %v453
  %v826 = vpop.f32.mrf.mxu0
  %v827 = vadd.f32 %v309, %v826
  %v828 = vpop.f32.mrf.mxu0
  %v829 = vadd.f32 %v309, %v828
  %830 = vmatmul.bf16.gmra.mxu0 %v456
  %v831 = vpop.f32.mrf.mxu0
  %v832 = vadd.f32 %v309, %v831
  %v833 = vpop.f32.mrf.mxu0
  %v834 = vadd.f32 %v309, %v833
  %835 = vmatmul.bf16.gmra.mxu0 %v459
  %v836 = vpop.f32.mrf.mxu0
  %v837 = vadd.f32 %v309, %v836
  %v838 = vpop.f32.mrf.mxu0
  %v839 = vadd.f32 %v309, %v838
  %840 = vmatmul.bf16.gmra.mxu0 %v462
  %v841 = vpop.f32.mrf.mxu0
  %v842 = vadd.f32 %v309, %v841
  %v843 = vpop.f32.mrf.mxu0
  %v844 = vadd.f32 %v309, %v843
  %845 = vmatmul.bf16.gmra.mxu0 %v465
  %v846 = vpop.f32.mrf.mxu0
  %v847 = vadd.f32 %v309, %v846
  %v848 = vpop.f32.mrf.mxu0
  %v849 = vadd.f32 %v309, %v848
  %850 = vmatmul.bf16.gmra.mxu0 %v468
  %v851 = vpop.f32.mrf.mxu0
  %v852 = vadd.f32 %v309, %v851
  %v853 = vpop.f32.mrf.mxu0
  %v854 = vadd.f32 %v309, %v853
  %855 = vmatmul.bf16.gmra.mxu0 %v471
  %v856 = vpop.f32.mrf.mxu0
  %v857 = vadd.f32 %v309, %v856
  %v858 = vpop.f32.mrf.mxu0
  %v859 = vadd.f32 %v309, %v858
  %860 = vmatmul.bf16.gmra.mxu0 %v474
  %v861 = vpop.f32.mrf.mxu0
  %v862 = vadd.f32 %v309, %v861
  %v863 = vpop.f32.mrf.mxu0
  %v864 = vadd.f32 %v309, %v863
  %865 = vmatmul.bf16.gmra.mxu0 %v477
  %v866 = vpop.f32.mrf.mxu0
  %v867 = vadd.f32 %v309, %v866
  %v868 = vpop.f32.mrf.mxu0
  %v869 = vadd.f32 %v309, %v868
  %870 = vmatmul.bf16.gmra.mxu0 %v480
  %v871 = vpop.f32.mrf.mxu0
  %v872 = vadd.f32 %v309, %v871
  %v873 = vpop.f32.mrf.mxu0
  %v874 = vadd.f32 %v309, %v873
  %875 = vmatmul.bf16.gmra.mxu0 %v483
  %v876 = vpop.f32.mrf.mxu0
  %v877 = vadd.f32 %v309, %v876
  %v878 = vpop.f32.mrf.mxu0
  %v879 = vadd.f32 %v309, %v878
  %880 = vmatmul.bf16.gmra.mxu0 %v486
  %v881 = vpop.f32.mrf.mxu0
  %v882 = vadd.f32 %v309, %v881
  %v883 = vpop.f32.mrf.mxu0
  %v884 = vadd.f32 %v309, %v883
  %885 = vmatmul.bf16.gmra.mxu0 %v489
  %v886 = vpop.f32.mrf.mxu0
  %v887 = vadd.f32 %v309, %v886
  %v888 = vpop.f32.mrf.mxu0
  %v889 = vadd.f32 %v309, %v888
  %890 = vmatmul.bf16.gmra.mxu0 %v492
  %v891 = vpop.f32.mrf.mxu0
  %v892 = vadd.f32 %v309, %v891
  %v893 = vpop.f32.mrf.mxu0
  %v894 = vadd.f32 %v309, %v893
  %895 = vmatmul.bf16.gmra.mxu0 %v495
  %v896 = vpop.f32.mrf.mxu0
  %v897 = vadd.f32 %v309, %v896
  %v898 = vpop.f32.mrf.mxu0
  %v899 = vadd.f32 %v309, %v898
  %900 = vmatmul.bf16.gmra.mxu0 %v498
  %v901 = vpop.f32.mrf.mxu0
  %v902 = vadd.f32 %v309, %v901
  %v903 = vpop.f32.mrf.mxu0
  %v904 = vadd.f32 %v309, %v903
  %905 = vmatmul.bf16.gmra.mxu0 %v501
  %v906 = vpop.f32.mrf.mxu0
  %v907 = vadd.f32 %v309, %v906
  %v908 = vpop.f32.mrf.mxu0
  %v909 = vadd.f32 %v309, %v908
  %910 = vmatmul.bf16.gmra.mxu0 %v504
  %v911 = vpop.f32.mrf.mxu0
  %v912 = vadd.f32 %v309, %v911
  %v913 = vpop.f32.mrf.mxu0
  %v914 = vadd.f32 %v309, %v913
  %915 = vmatmul.bf16.gmra.mxu0 %v507
  %v916 = vpop.f32.mrf.mxu0
  %v917 = vadd.f32 %v309, %v916
  %v918 = vpop.f32.mrf.mxu0
  %v919 = vadd.f32 %v309, %v918
  %920 = vmatmul.bf16.gmra.mxu0 %v510
  %v921 = vpop.f32.mrf.mxu0
  %v922 = vadd.f32 %v309, %v921
  %v923 = vpop.f32.mrf.mxu0
  %v924 = vadd.f32 %v309, %v923
  %925 = vmatmul.bf16.gmra.mxu0 %v513
  %v926 = vpop.f32.mrf.mxu0
  %v927 = vadd.f32 %v309, %v926
  %v928 = vpop.f32.mrf.mxu0
  %v929 = vadd.f32 %v309, %v928
  %930 = vmatmul.bf16.gmra.mxu0 %v516
  %v931 = vpop.f32.mrf.mxu0
  %v932 = vadd.f32 %v309, %v931
  %v933 = vpop.f32.mrf.mxu0
  %v934 = vadd.f32 %v309, %v933
  %935 = vmatmul.bf16.gmra.mxu0 %v519
  %v936 = vpop.f32.mrf.mxu0
  %v937 = vadd.f32 %v309, %v936
  %v938 = vpop.f32.mrf.mxu0
  %v939 = vadd.f32 %v309, %v938
  %940 = vmatmul.bf16.gmra.mxu0 %v522
  %v941 = vpop.f32.mrf.mxu0
  %v942 = vadd.f32 %v309, %v941
  %v943 = vpop.f32.mrf.mxu0
  %v944 = vadd.f32 %v309, %v943
  %945 = vmatmul.bf16.gmra.mxu0 %v525
  %v946 = vpop.f32.mrf.mxu0
  %v947 = vadd.f32 %v309, %v946
  %v948 = vpop.f32.mrf.mxu0
  %v949 = vadd.f32 %v309, %v948
  %950 = vmatmul.bf16.gmra.mxu0 %v528
  %v951 = vpop.f32.mrf.mxu0
  %v952 = vadd.f32 %v309, %v951
  %v953 = vpop.f32.mrf.mxu0
  %v954 = vadd.f32 %v309, %v953
  %955 = vmatmul.bf16.gmra.mxu0 %v531
  %v956 = vpop.f32.mrf.mxu0
  %v957 = vadd.f32 %v309, %v956
  %v958 = vpop.f32.mrf.mxu0
  %v959 = vadd.f32 %v309, %v958
  %960 = vmatmul.bf16.gmra.mxu0 %v534
  %v961 = vpop.f32.mrf.mxu0
  %v962 = vadd.f32 %v309, %v961
  %v963 = vpop.f32.mrf.mxu0
  %v964 = vadd.f32 %v309, %v963
  %965 = vmatmul.bf16.gmra.mxu0 %v537
  %v966 = vpop.f32.mrf.mxu0
  %v967 = vadd.f32 %v309, %v966
  %v968 = vpop.f32.mrf.mxu0
  %v969 = vadd.f32 %v309, %v968
  %970 = vmatmul.bf16.gmra.mxu0 %v540
  %v971 = vpop.f32.mrf.mxu0
  %v972 = vadd.f32 %v309, %v971
  %v973 = vpop.f32.mrf.mxu0
  %v974 = vadd.f32 %v309, %v973
  %975 = vmatmul.bf16.gmra.mxu0 %v543
  %v976 = vpop.f32.mrf.mxu0
  %v977 = vadd.f32 %v309, %v976
  %v978 = vpop.f32.mrf.mxu0
  %v979 = vadd.f32 %v309, %v978
  %980 = vmatmul.bf16.gmra.mxu0 %v546
  %v981 = vpop.f32.mrf.mxu0
  %v982 = vadd.f32 %v309, %v981
  %v983 = vpop.f32.mrf.mxu0
  %v984 = vadd.f32 %v309, %v983
  %985 = vmatmul.bf16.gmra.mxu0 %v549
  %v986 = vpop.f32.mrf.mxu0
  %v987 = vadd.f32 %v309, %v986
  %v988 = vpop.f32.mrf.mxu0
  %v989 = vadd.f32 %v309, %v988
  %990 = vmatmul.bf16.gmra.mxu0 %v552
  %v991 = vpop.f32.mrf.mxu0
  %v992 = vadd.f32 %v309, %v991
  %v993 = vpop.f32.mrf.mxu0
  %v994 = vadd.f32 %v309, %v993
  %995 = vmatmul.bf16.gmra.mxu0 %v555
  %v996 = vpop.f32.mrf.mxu0
  %v997 = vadd.f32 %v309, %v996
  %v998 = vpop.f32.mrf.mxu0
  %v999 = vadd.f32 %v309, %v998
  %1000 = vmatmul.bf16.gmra.mxu0 %v558
  %v1001 = vpop.f32.mrf.mxu0
  %v1002 = vadd.f32 %v309, %v1001
  %v1003 = vpop.f32.mrf.mxu0
  %v1004 = vadd.f32 %v309, %v1003
  %1005 = vmatmul.bf16.gmra.mxu0 %v561
  %v1006 = vpop.f32.mrf.mxu0
  %v1007 = vadd.f32 %v309, %v1006
  %v1008 = vpop.f32.mrf.mxu0
  %v1009 = vadd.f32 %v309, %v1008
  %1010 = vmatmul.bf16.gmra.mxu0 %v564
  %v1011 = vpop.f32.mrf.mxu0
  %v1012 = vadd.f32 %v309, %v1011
  %v1013 = vpop.f32.mrf.mxu0
  %v1014 = vadd.f32 %v309, %v1013
  %1015 = vmatmul.bf16.gmra.mxu0 %v567
  %v1016 = vpop.f32.mrf.mxu0
  %v1017 = vadd.f32 %v309, %v1016
  %v1018 = vpop.f32.mrf.mxu0
  %v1019 = vadd.f32 %v309, %v1018
  %1020 = vmatmul.bf16.gmra.mxu0 %v570
  %v1021 = vpop.f32.mrf.mxu0
  %v1022 = vadd.f32 %v309, %v1021
  %v1023 = vpop.f32.mrf.mxu0
  %v1024 = vadd.f32 %v309, %v1023
  %1025 = vmatmul.bf16.gmra.mxu0 %v573
  %v1026 = vpop.f32.mrf.mxu0
  %v1027 = vadd.f32 %v309, %v1026
  %v1028 = vpop.f32.mrf.mxu0
  %v1029 = vadd.f32 %v309, %v1028
  %1030 = vmatmul.bf16.gmra.mxu0 %v576
  %v1031 = vpop.f32.mrf.mxu0
  %v1032 = vadd.f32 %v309, %v1031
  %v1033 = vpop.f32.mrf.mxu0
  %v1034 = vadd.f32 %v309, %v1033
  %1035 = vmatmul.bf16.gmra.mxu0 %v579
  %v1036 = vpop.f32.mrf.mxu0
  %v1037 = vadd.f32 %v309, %v1036
  %v1038 = vpop.f32.mrf.mxu0
  %v1039 = vadd.f32 %v309, %v1038
  %1040 = vmatmul.bf16.gmra.mxu0 %v582
  %v1041 = vpop.f32.mrf.mxu0
  %v1042 = vadd.f32 %v309, %v1041
  %v1043 = vpop.f32.mrf.mxu0
  %v1044 = vadd.f32 %v309, %v1043
  %1045 = vmatmul.bf16.gmra.mxu0 %v585
  %v1046 = vpop.f32.mrf.mxu0
  %v1047 = vadd.f32 %v309, %v1046
  %v1048 = vpop.f32.mrf.mxu0
  %v1049 = vadd.f32 %v309, %v1048
  %1050 = vmatmul.bf16.gmra.mxu0 %v588
  %v1051 = vpop.f32.mrf.mxu0
  %v1052 = vadd.f32 %v309, %v1051
  %v1053 = vpop.f32.mrf.mxu0
  %v1054 = vadd.f32 %v309, %v1053
  %1055 = vmatmul.bf16.gmra.mxu0 %v591
  %v1056 = vpop.f32.mrf.mxu0
  %v1057 = vadd.f32 %v309, %v1056
  %v1058 = vpop.f32.mrf.mxu0
  %v1059 = vadd.f32 %v309, %v1058
  %1060 = vmatmul.bf16.gmra.mxu0 %v594
  %v1061 = vpop.f32.mrf.mxu0
  %v1062 = vadd.f32 %v309, %v1061
  %v1063 = vpop.f32.mrf.mxu0
  %v1064 = vadd.f32 %v309, %v1063
  %1065 = vmatmul.bf16.gmra.mxu0 %v597
  %v1066 = vpop.f32.mrf.mxu0
  %v1067 = vadd.f32 %v309, %v1066
  %v1068 = vpop.f32.mrf.mxu0
  %v1069 = vadd.f32 %v309, %v1068
  %1070 = vmatmul.bf16.gmra.mxu0 %v600
  %v1071 = vpop.f32.mrf.mxu0
  %v1072 = vadd.f32 %v309, %v1071
  %v1073 = vpop.f32.mrf.mxu0
  %v1074 = vadd.f32 %v309, %v1073
  %1075 = vmatmul.bf16.gmra.mxu0 %v603
  %v1076 = vpop.f32.mrf.mxu0
  %v1077 = vadd.f32 %v309, %v1076
  %v1078 = vpop.f32.mrf.mxu0
  %1079 = vdwg.mxu0
  %vm1080 = vcmask 523264
  %1081 = vst.msk [vmem:[%s6] sm:$0xff] %vm1080, %v622
  %1082 = vst.msk [vmem:[%s6 + $0x8] sm:$0xff] %vm1080, %v624
  %1083 = vst.msk [vmem:[%s6 + $0x10] sm:$0xff] %vm1080, %v627
  %1084 = vst.msk [vmem:[%s6 + $0x18] sm:$0xff] %vm1080, %v629
  %1085 = vst.msk [vmem:[%s6 + $0x20] sm:$0xff] %vm1080, %v632
  %1086 = vst.msk [vmem:[%s6 + $0x28] sm:$0xff] %vm1080, %v634
  %1087 = vst.msk [vmem:[%s6 + $0x30] sm:$0xff] %vm1080, %v637
  %1088 = vst.msk [vmem:[%s6 + $0x38] sm:$0xff] %vm1080, %v639
  %1089 = vst.msk [vmem:[%s6 + $0x40] sm:$0xff] %vm1080, %v642
  %1090 = vst.msk [vmem:[%s6 + $0x48] sm:$0xff] %vm1080, %v644
  %1091 = vst.msk [vmem:[%s6 + $0x50] sm:$0xff] %vm1080, %v647
  %1092 = vst.msk [vmem:[%s6 + $0x58] sm:$0xff] %vm1080, %v649
  %1093 = vst.msk [vmem:[%s6 + $0x60] sm:$0xff] %vm1080, %v652
  %1094 = vst.msk [vmem:[%s6 + $0x68] sm:$0xff] %vm1080, %v654
  %1095 = vst.msk [vmem:[%s6 + $0x70] sm:$0xff] %vm1080, %v657
  %1096 = vst.msk [vmem:[%s6 + $0x78] sm:$0xff] %vm1080, %v659
  %1097 = vst.msk [vmem:[%s6 + $0x80] sm:$0xff] %vm1080, %v662
  %1098 = vst.msk [vmem:[%s6 + $0x88] sm:$0xff] %vm1080, %v664
  %1099 = vst.msk [vmem:[%s6 + $0x90] sm:$0xff] %vm1080, %v667
  %1100 = vst.msk [vmem:[%s6 + $0x98] sm:$0xff] %vm1080, %v669
  %1101 = vst.msk [vmem:[%s6 + $0xa0] sm:$0xff] %vm1080, %v672
  %1102 = vst.msk [vmem:[%s6 + $0xa8] sm:$0xff] %vm1080, %v674
  %1103 = vst.msk [vmem:[%s6 + $0xb0] sm:$0xff] %vm1080, %v677
  %1104 = vst.msk [vmem:[%s6 + $0xb8] sm:$0xff] %vm1080, %v679
  %1105 = vst.msk [vmem:[%s6 + $0xc0] sm:$0xff] %vm1080, %v682
  %1106 = vst.msk [vmem:[%s6 + $0xc8] sm:$0xff] %vm1080, %v684
  %1107 = vst.msk [vmem:[%s6 + $0xd0] sm:$0xff] %vm1080, %v687
  %1108 = vst.msk [vmem:[%s6 + $0xd8] sm:$0xff] %vm1080, %v689
  %1109 = vst.msk [vmem:[%s6 + $0xe0] sm:$0xff] %vm1080, %v692
  %1110 = vst.msk [vmem:[%s6 + $0xe8] sm:$0xff] %vm1080, %v694
  %1111 = vst.msk [vmem:[%s6 + $0xf0] sm:$0xff] %vm1080, %v697
  %1112 = vst.msk [vmem:[%s6 + $0xf8] sm:$0xff] %vm1080, %v699
  %1113 = vst.msk [vmem:[%s6 + $0x100] sm:$0xff] %vm1080, %v702
  %1114 = vst.msk [vmem:[%s6 + $0x108] sm:$0xff] %vm1080, %v704
  %1115 = vst.msk [vmem:[%s6 + $0x110] sm:$0xff] %vm1080, %v707
  %1116 = vst.msk [vmem:[%s6 + $0x118] sm:$0xff] %vm1080, %v709
  %1117 = vst.msk [vmem:[%s6 + $0x120] sm:$0xff] %vm1080, %v712
  %1118 = vst.msk [vmem:[%s6 + $0x128] sm:$0xff] %vm1080, %v714
  %1119 = vst.msk [vmem:[%s6 + $0x130] sm:$0xff] %vm1080, %v717
  %1120 = vst.msk [vmem:[%s6 + $0x138] sm:$0xff] %vm1080, %v719
  %1121 = vst.msk [vmem:[%s6 + $0x140] sm:$0xff] %vm1080, %v722
  %1122 = vst.msk [vmem:[%s6 + $0x148] sm:$0xff] %vm1080, %v724
  %1123 = vst.msk [vmem:[%s6 + $0x150] sm:$0xff] %vm1080, %v727
  %1124 = vst.msk [vmem:[%s6 + $0x158] sm:$0xff] %vm1080, %v729
  %1125 = vst.msk [vmem:[%s6 + $0x160] sm:$0xff] %vm1080, %v732
  %1126 = vst.msk [vmem:[%s6 + $0x168] sm:$0xff] %vm1080, %v734
  %1127 = vst.msk [vmem:[%s6 + $0x170] sm:$0xff] %vm1080, %v737
  %1128 = vst.msk [vmem:[%s6 + $0x178] sm:$0xff] %vm1080, %v739
  %1129 = vst.msk [vmem:[%s6 + $0x180] sm:$0xff] %vm1080, %v742
  %1130 = vst.msk [vmem:[%s6 + $0x188] sm:$0xff] %vm1080, %v744
  %1131 = vst.msk [vmem:[%s6 + $0x190] sm:$0xff] %vm1080, %v747
  %1132 = vst.msk [vmem:[%s6 + $0x198] sm:$0xff] %vm1080, %v749
  %1133 = vst.msk [vmem:[%s6 + $0x1a0] sm:$0xff] %vm1080, %v752
  %1134 = vst.msk [vmem:[%s6 + $0x1a8] sm:$0xff] %vm1080, %v754
  %1135 = vst.msk [vmem:[%s6 + $0x1b0] sm:$0xff] %vm1080, %v757
  %1136 = vst.msk [vmem:[%s6 + $0x1b8] sm:$0xff] %vm1080, %v759
  %1137 = vst.msk [vmem:[%s6 + $0x1c0] sm:$0xff] %vm1080, %v762
  %1138 = vst.msk [vmem:[%s6 + $0x1c8] sm:$0xff] %vm1080, %v764
  %1139 = vst.msk [vmem:[%s6 + $0x1d0] sm:$0xff] %vm1080, %v767
  %1140 = vst.msk [vmem:[%s6 + $0x1d8] sm:$0xff] %vm1080, %v769
  %1141 = vst.msk [vmem:[%s6 + $0x1e0] sm:$0xff] %vm1080, %v772
  %1142 = vst.msk [vmem:[%s6 + $0x1e8] sm:$0xff] %vm1080, %v774
  %1143 = vst.msk [vmem:[%s6 + $0x1f0] sm:$0xff] %vm1080, %v777
  %1144 = vst.msk [vmem:[%s6 + $0x1f8] sm:$0xff] %vm1080, %v779
  %1145 = vst.msk [vmem:[%s6 + $0x200] sm:$0xff] %vm1080, %v782
  %1146 = vst.msk [vmem:[%s6 + $0x208] sm:$0xff] %vm1080, %v784
  %1147 = vst.msk [vmem:[%s6 + $0x210] sm:$0xff] %vm1080, %v787
  %1148 = vst.msk [vmem:[%s6 + $0x218] sm:$0xff] %vm1080, %v789
  %1149 = vst.msk [vmem:[%s6 + $0x220] sm:$0xff] %vm1080, %v792
  %1150 = vst.msk [vmem:[%s6 + $0x228] sm:$0xff] %vm1080, %v794
  %1151 = vst.msk [vmem:[%s6 + $0x230] sm:$0xff] %vm1080, %v797
  %1152 = vst.msk [vmem:[%s6 + $0x238] sm:$0xff] %vm1080, %v799
  %1153 = vst.msk [vmem:[%s6 + $0x240] sm:$0xff] %vm1080, %v802
  %1154 = vst.msk [vmem:[%s6 + $0x248] sm:$0xff] %vm1080, %v804
  %1155 = vst.msk [vmem:[%s6 + $0x250] sm:$0xff] %vm1080, %v807
  %1156 = vst.msk [vmem:[%s6 + $0x258] sm:$0xff] %vm1080, %v809
  %1157 = vst.msk [vmem:[%s6 + $0x260] sm:$0xff] %vm1080, %v812
  %1158 = vst.msk [vmem:[%s6 + $0x268] sm:$0xff] %vm1080, %v814
  %1159 = vst.msk [vmem:[%s6 + $0x270] sm:$0xff] %vm1080, %v817
  %1160 = vst.msk [vmem:[%s6 + $0x278] sm:$0xff] %vm1080, %v819
  %1161 = vst.msk [vmem:[%s6 + $0x280] sm:$0xff] %vm1080, %v822
  %1162 = vst.msk [vmem:[%s6 + $0x288] sm:$0xff] %vm1080, %v824
  %1163 = vst.msk [vmem:[%s6 + $0x290] sm:$0xff] %vm1080, %v827
  %1164 = vst.msk [vmem:[%s6 + $0x298] sm:$0xff] %vm1080, %v829
  %1165 = vst.msk [vmem:[%s6 + $0x2a0] sm:$0xff] %vm1080, %v832
  %1166 = vst.msk [vmem:[%s6 + $0x2a8] sm:$0xff] %vm1080, %v834
  %1167 = vst.msk [vmem:[%s6 + $0x2b0] sm:$0xff] %vm1080, %v837
  %1168 = vst.msk [vmem:[%s6 + $0x2b8] sm:$0xff] %vm1080, %v839
  %1169 = vst.msk [vmem:[%s6 + $0x2c0] sm:$0xff] %vm1080, %v842
  %1170 = vst.msk [vmem:[%s6 + $0x2c8] sm:$0xff] %vm1080, %v844
  %1171 = vst.msk [vmem:[%s6 + $0x2d0] sm:$0xff] %vm1080, %v847
  %1172 = vst.msk [vmem:[%s6 + $0x2d8] sm:$0xff] %vm1080, %v849
  %1173 = vst.msk [vmem:[%s6 + $0x2e0] sm:$0xff] %vm1080, %v852
  %1174 = vst.msk [vmem:[%s6 + $0x2e8] sm:$0xff] %vm1080, %v854
  %1175 = vst.msk [vmem:[%s6 + $0x2f0] sm:$0xff] %vm1080, %v857
  %1176 = vst.msk [vmem:[%s6 + $0x2f8] sm:$0xff] %vm1080, %v859
  %1177 = vst.msk [vmem:[%s6 + $0x300] sm:$0xff] %vm1080, %v862
  %1178 = vst.msk [vmem:[%s6 + $0x308] sm:$0xff] %vm1080, %v864
  %1179 = vst.msk [vmem:[%s6 + $0x310] sm:$0xff] %vm1080, %v867
  %1180 = vst.msk [vmem:[%s6 + $0x318] sm:$0xff] %vm1080, %v869
  %1181 = vst.msk [vmem:[%s6 + $0x320] sm:$0xff] %vm1080, %v872
  %1182 = vst.msk [vmem:[%s6 + $0x328] sm:$0xff] %vm1080, %v874
  %1183 = vst.msk [vmem:[%s6 + $0x330] sm:$0xff] %vm1080, %v877
  %1184 = vst.msk [vmem:[%s6 + $0x338] sm:$0xff] %vm1080, %v879
  %1185 = vst.msk [vmem:[%s6 + $0x340] sm:$0xff] %vm1080, %v882
  %1186 = vst.msk [vmem:[%s6 + $0x348] sm:$0xff] %vm1080, %v884
  %1187 = vst.msk [vmem:[%s6 + $0x350] sm:$0xff] %vm1080, %v887
  %1188 = vst.msk [vmem:[%s6 + $0x358] sm:$0xff] %vm1080, %v889
  %1189 = vst.msk [vmem:[%s6 + $0x360] sm:$0xff] %vm1080, %v892
  %1190 = vst.msk [vmem:[%s6 + $0x368] sm:$0xff] %vm1080, %v894
  %1191 = vst.msk [vmem:[%s6 + $0x370] sm:$0xff] %vm1080, %v897
  %1192 = vst.msk [vmem:[%s6 + $0x378] sm:$0xff] %vm1080, %v899
  %1193 = vst.msk [vmem:[%s6 + $0x380] sm:$0xff] %vm1080, %v902
  %1194 = vst.msk [vmem:[%s6 + $0x388] sm:$0xff] %vm1080, %v904
  %1195 = vst.msk [vmem:[%s6 + $0x390] sm:$0xff] %vm1080, %v907
  %1196 = vst.msk [vmem:[%s6 + $0x398] sm:$0xff] %vm1080, %v909
  %1197 = vst.msk [vmem:[%s6 + $0x3a0] sm:$0xff] %vm1080, %v912
  %1198 = vst.msk [vmem:[%s6 + $0x3a8] sm:$0xff] %vm1080, %v914
  %1199 = vst.msk [vmem:[%s6 + $0x3b0] sm:$0xff] %vm1080, %v917
  %1200 = vst.msk [vmem:[%s6 + $0x3b8] sm:$0xff] %vm1080, %v919
  %1201 = vst.msk [vmem:[%s6 + $0x3c0] sm:$0xff] %vm1080, %v922
  %1202 = vst.msk [vmem:[%s6 + $0x3c8] sm:$0xff] %vm1080, %v924
  %1203 = vst.msk [vmem:[%s6 + $0x3d0] sm:$0xff] %vm1080, %v927
  %1204 = vst.msk [vmem:[%s6 + $0x3d8] sm:$0xff] %vm1080, %v929
  %1205 = vst.msk [vmem:[%s6 + $0x3e0] sm:$0xff] %vm1080, %v932
  %1206 = vst.msk [vmem:[%s6 + $0x3e8] sm:$0xff] %vm1080, %v934
  %1207 = vst.msk [vmem:[%s6 + $0x3f0] sm:$0xff] %vm1080, %v937
  %1208 = vst.msk [vmem:[%s6 + $0x3f8] sm:$0xff] %vm1080, %v939
  %1209 = vst.msk [vmem:[%s6 + $0x400] sm:$0xff] %vm1080, %v942
  %1210 = vst.msk [vmem:[%s6 + $0x408] sm:$0xff] %vm1080, %v944
  %1211 = vst.msk [vmem:[%s6 + $0x410] sm:$0xff] %vm1080, %v947
  %1212 = vst.msk [vmem:[%s6 + $0x418] sm:$0xff] %vm1080, %v949
  %1213 = vst.msk [vmem:[%s6 + $0x420] sm:$0xff] %vm1080, %v952
  %1214 = vst.msk [vmem:[%s6 + $0x428] sm:$0xff] %vm1080, %v954
  %1215 = vst.msk [vmem:[%s6 + $0x430] sm:$0xff] %vm1080, %v957
  %1216 = vst.msk [vmem:[%s6 + $0x438] sm:$0xff] %vm1080, %v959
  %1217 = vst.msk [vmem:[%s6 + $0x440] sm:$0xff] %vm1080, %v962
  %1218 = vst.msk [vmem:[%s6 + $0x448] sm:$0xff] %vm1080, %v964
  %1219 = vst.msk [vmem:[%s6 + $0x450] sm:$0xff] %vm1080, %v967
  %1220 = vst.msk [vmem:[%s6 + $0x458] sm:$0xff] %vm1080, %v969
  %1221 = vst.msk [vmem:[%s6 + $0x460] sm:$0xff] %vm1080, %v972
  %1222 = vst.msk [vmem:[%s6 + $0x468] sm:$0xff] %vm1080, %v974
  %1223 = vst.msk [vmem:[%s6 + $0x470] sm:$0xff] %vm1080, %v977
  %1224 = vst.msk [vmem:[%s6 + $0x478] sm:$0xff] %vm1080, %v979
  %1225 = vst.msk [vmem:[%s6 + $0x480] sm:$0xff] %vm1080, %v982
  %1226 = vst.msk [vmem:[%s6 + $0x488] sm:$0xff] %vm1080, %v984
  %1227 = vst.msk [vmem:[%s6 + $0x490] sm:$0xff] %vm1080, %v987
  %1228 = vst.msk [vmem:[%s6 + $0x498] sm:$0xff] %vm1080, %v989
  %1229 = vst.msk [vmem:[%s6 + $0x4a0] sm:$0xff] %vm1080, %v992
  %1230 = vst.msk [vmem:[%s6 + $0x4a8] sm:$0xff] %vm1080, %v994
  %1231 = vst.msk [vmem:[%s6 + $0x4b0] sm:$0xff] %vm1080, %v997
  %1232 = vst.msk [vmem:[%s6 + $0x4b8] sm:$0xff] %vm1080, %v999
  %1233 = vst.msk [vmem:[%s6 + $0x4c0] sm:$0xff] %vm1080, %v1002
  %1234 = vst.msk [vmem:[%s6 + $0x4c8] sm:$0xff] %vm1080, %v1004
  %1235 = vst.msk [vmem:[%s6 + $0x4d0] sm:$0xff] %vm1080, %v1007
  %1236 = vst.msk [vmem:[%s6 + $0x4d8] sm:$0xff] %vm1080, %v1009
  %1237 = vst.msk [vmem:[%s6 + $0x4e0] sm:$0xff] %vm1080, %v1012
  %1238 = vst.msk [vmem:[%s6 + $0x4e8] sm:$0xff] %vm1080, %v1014
  %1239 = vst.msk [vmem:[%s6 + $0x4f0] sm:$0xff] %vm1080, %v1017
  %1240 = vst.msk [vmem:[%s6 + $0x4f8] sm:$0xff] %vm1080, %v1019
  %1241 = vst.msk [vmem:[%s6 + $0x500] sm:$0xff] %vm1080, %v1022
  %1242 = vst.msk [vmem:[%s6 + $0x508] sm:$0xff] %vm1080, %v1024
  %1243 = vst.msk [vmem:[%s6 + $0x510] sm:$0xff] %vm1080, %v1027
  %1244 = vst.msk [vmem:[%s6 + $0x518] sm:$0xff] %vm1080, %v1029
  %1245 = vst.msk [vmem:[%s6 + $0x520] sm:$0xff] %vm1080, %v1032
  %1246 = vst.msk [vmem:[%s6 + $0x528] sm:$0xff] %vm1080, %v1034
  %1247 = vst.msk [vmem:[%s6 + $0x530] sm:$0xff] %vm1080, %v1037
  %1248 = vst.msk [vmem:[%s6 + $0x538] sm:$0xff] %vm1080, %v1039
  %1249 = vst.msk [vmem:[%s6 + $0x540] sm:$0xff] %vm1080, %v1042
  %1250 = vst.msk [vmem:[%s6 + $0x548] sm:$0xff] %vm1080, %v1044
  %1251 = vst.msk [vmem:[%s6 + $0x550] sm:$0xff] %vm1080, %v1047
  %1252 = vst.msk [vmem:[%s6 + $0x558] sm:$0xff] %vm1080, %v1049
  %1253 = vst.msk [vmem:[%s6 + $0x560] sm:$0xff] %vm1080, %v1052
  %1254 = vst.msk [vmem:[%s6 + $0x568] sm:$0xff] %vm1080, %v1054
  %1255 = vst.msk [vmem:[%s6 + $0x570] sm:$0xff] %vm1080, %v1057
  %1256 = vst.msk [vmem:[%s6 + $0x578] sm:$0xff] %vm1080, %v1059
  %1257 = vst.msk [vmem:[%s6 + $0x580] sm:$0xff] %vm1080, %v1062
  %1258 = vst.msk [vmem:[%s6 + $0x588] sm:$0xff] %vm1080, %v1064
  %1259 = vst.msk [vmem:[%s6 + $0x590] sm:$0xff] %vm1080, %v1067
  %1260 = vst.msk [vmem:[%s6 + $0x598] sm:$0xff] %vm1080, %v1069
  %1261 = vst.msk [vmem:[%s6 + $0x5a0] sm:$0xff] %vm1080, %v1072
  %1262 = vst.msk [vmem:[%s6 + $0x5a8] sm:$0xff] %vm1080, %v1074
  %vm1263 = vcmask 517120
  %1264 = vst.msk [vmem:[%s6 + $0x5b0] sm:$0x3] %vm1263, %v1077
  %v1265 = vld [vmem:[%s3] sm:$0xff]
  %v1266 = vld [vmem:[%s3 + $0x8] sm:$0xff]
  %v1267 = vld [vmem:[%s3 + $0x10] sm:$0x3]
  %v1268 = vpack.c.bf16 %v1266, %v1265
  %v1269 = vpack.c.bf16 %v1267, %v1267
  %v1270 = vld [vmem:[%s4] sm:$0xf]
  %v1271 = vld [vmem:[%s4 + $0x4] sm:$0xf]
  %v1272 = vld [vmem:[%s4 + $0x8] sm:$0xf]
  %v1273 = vld [vmem:[%s4 + $0xc] sm:$0xf]
  %v1274 = vld [vmem:[%s4 + $0x10] sm:$0xf]
  %v1275 = vld [vmem:[%s4 + $0x14] sm:$0x7]
  %v1276 = vld [vmem:[%s5] sm:$0x1]
  %v1278 = vperm.slane %v1276, 0
  %v1286 = vunpack.c.l.b16 %v1270
  %v1287 = vunpack.c.l.b16 %v1271
  %v1288 = vunpack.c.l.b16 %v1272
  %v1289 = vunpack.c.l.b16 %v1273
  %v1290 = vunpack.c.l.b16 %v1274
  %v1291 = vunpack.c.l.b16 %v1275
  %v1292 = vpack.c.b16 %v1287, %v1286
  %v1293 = vpack.c.b16 %v1289, %v1288
  %v1294 = vpack.c.b16 %v1291, %v1290
  %v1298 = vsel %vm328, %v1268, 0
  %v1301 = vsel %vm328, %v1269, 0
  %v1304 = vand.u32 %v1294, %v608
  %1306 = vmatpush.bf16.msra.mxu0 0
  %1307 = vmatpush.bf16.msra.mxu0 0
  %1308 = vmatpush.bf16.msra.mxu0 0
  %1309 = vmatpush.bf16.msra.mxu0 0
  %1310 = vmatpush.bf16.msra.mxu0 0
  %1311 = vmatpush.bf16.msra.mxu0 %v1304
  %1312 = vmatpush.bf16.msra.mxu0 %v1293
  %1313 = vmatpush.bf16.msra.mxu0 %v1292
  %1314 = vmatmul.bf16.gmra.mxu0 %v1298
  %v1315 = vpop.f32.mrf.mxu0
  %v1316 = vadd.f32 %v1278, %v1315
  %v1317 = vpop.f32.mrf.mxu0
  %v1318 = vadd.f32 %v1278, %v1317
  %1319 = vmatmul.bf16.gmra.mxu0 %v1301
  %v1320 = vpop.f32.mrf.mxu0
  %v1321 = vadd.f32 %v1278, %v1320
  %v1322 = vpop.f32.mrf.mxu0
  %1323 = vdwg.mxu0
  %vm1324 = vcmask 261120
  %1325 = vst.msk [vmem:[%s7] sm:$0xff] %vm1324, %v1316
  %1326 = vst.msk [vmem:[%s7 + $0x8] sm:$0xff] %vm1324, %v1318
  %vm1327 = vcmask 254976
  %1328 = vst.msk [vmem:[%s7 + $0x10] sm:$0x3] %vm1327, %v1321
  // Predicated region
  $region26: #{dqn_forward.3} parent=0 // pred_check
    _
  $region27: #{dqn_forward.3} parent=0 // pred_check_branch
    %1330 = sbr.rel (0) target = $region29
  $region28: #{dqn_forward.3} parent=0 // pred_region
    _
  $region29: #{dqn_forward.3} parent=0 // pred_fallthru
    _
  // Predicated region
  $region30: #{dqn_forward.3} parent=0 // pred_check
    _
  $region31: #{dqn_forward.3} parent=0 // pred_check_branch
    %1332 = sbr.rel (0) target = $region33
  $region32: #{dqn_forward.3} parent=0 // pred_region
    _
  $region33: #{dqn_forward.3} parent=0 // pred_fallthru
    _
  // Predicated region
  $region34: #{dqn_forward.3} parent=0 // pred_check
    _
  $region35: #{dqn_forward.3} parent=0 // pred_check_branch
    %1334 = sbr.rel (0) target = $region37
  $region36: #{dqn_forward.3} parent=0 // pred_region
    _
  $region37: #{dqn_forward.3} parent=0 // pred_fallthru
    _
  // Predicated region
  $region38: #{dqn_forward.3} parent=0 // pred_check
    _
  $region39: #{dqn_forward.3} parent=0 // pred_check_branch
    %1336 = sbr.rel (0) target = $region41
  $region40: #{dqn_forward.3} parent=0 // pred_region
    _
  $region41: #{dqn_forward.3} parent=0 // pred_fallthru
    _

// kernel: dqn_forward.4
$region0: #{dqn_forward.4}
  #allocation0 [shape = 'u32[]', space=smem, size = 0x4, offset = 0x4, fixed_abs, tag = 'smem constant byte address 0x4 - core index']
  #allocation1 [shape = 'u32[72,128]{1,0:T(1,128)}', space=vmem, size = 0x9000, scoped, tag = 'internal scratch']
  %s0 = inlined_call_operand.vmem [shape: f32[242,576], index: 0, kind: input, shape index: {}]
  %s1 = inlined_call_operand.vmem [shape: bf16[576,128], index: 1, kind: input, shape index: {}]
  %s2 = inlined_call_operand.vmem [shape: f32[1,128], index: 2, kind: input, shape index: {}]
  %s3 = inlined_call_operand.vmem [shape: f32[242,128], index: 3, kind: output, shape index: {}]
  %s4 = sld [smem:[#allocation0]]
  $region22: #{dqn_forward.4} parent=0
    _
  %s6 = ssub.s32 1, %s4
  %s7 = scalar_select 0, %s6, %s4
  // Predicated region
  $region2: #{dqn_forward.4} parent=0 // pred_check
    _
  $region3: #{dqn_forward.4} parent=0 // pred_check_branch
    %9 = sbr.rel (0) target = $region5
  $region4: #{dqn_forward.4} parent=0 // pred_region
    _
  $region5: #{dqn_forward.4} parent=0 // pred_fallthru
    _
  // Predicated region
  $region6: #{dqn_forward.4} parent=0 // pred_check
    _
  $region7: #{dqn_forward.4} parent=0 // pred_check_branch
    %11 = sbr.rel (0) target = $region9
  $region8: #{dqn_forward.4} parent=0 // pred_region
    _
  $region9: #{dqn_forward.4} parent=0 // pred_fallthru
    _
  // Predicated region
  $region10: #{dqn_forward.4} parent=0 // pred_check
    _
  $region11: #{dqn_forward.4} parent=0 // pred_check_branch
    %13 = sbr.rel (0) target = $region13
  $region12: #{dqn_forward.4} parent=0 // pred_region
    _
  $region13: #{dqn_forward.4} parent=0 // pred_fallthru
    _
  %v15 = vld [vmem:[%s0] sm:$0xff]
  %v16 = vld [vmem:[%s0 + $0x8] sm:$0xff]
  %v17 = vld [vmem:[%s0 + $0x10] sm:$0xff]
  %v18 = vld [vmem:[%s0 + $0x18] sm:$0xff]
  %v19 = vld [vmem:[%s0 + $0x20] sm:$0xff]
  %v20 = vld [vmem:[%s0 + $0x28] sm:$0xff]
  %v21 = vld [vmem:[%s0 + $0x30] sm:$0xff]
  %v22 = vld [vmem:[%s0 + $0x38] sm:$0xff]
  %v23 = vld [vmem:[%s0 + $0x40] sm:$0xff]
  %v24 = vld [vmem:[%s0 + $0x48] sm:$0xff]
  %v25 = vld [vmem:[%s0 + $0x50] sm:$0xff]
  %v26 = vld [vmem:[%s0 + $0x58] sm:$0xff]
  %v27 = vld [vmem:[%s0 + $0x60] sm:$0xff]
  %v28 = vld [vmem:[%s0 + $0x68] sm:$0xff]
  %v29 = vld [vmem:[%s0 + $0x70] sm:$0xff]
  %v30 = vld [vmem:[%s0 + $0x78] sm:$0xff]
  %v31 = vld [vmem:[%s0 + $0x80] sm:$0xff]
  %v32 = vld [vmem:[%s0 + $0x88] sm:$0xff]
  %v33 = vld [vmem:[%s0 + $0x90] sm:$0xff]
  %v34 = vld [vmem:[%s0 + $0x98] sm:$0xff]
  %v35 = vld [vmem:[%s0 + $0xa0] sm:$0xff]
  %v36 = vld [vmem:[%s0 + $0xa8] sm:$0xff]
  %v37 = vld [vmem:[%s0 + $0xb0] sm:$0xff]
  %v38 = vld [vmem:[%s0 + $0xb8] sm:$0xff]
  %v39 = vld [vmem:[%s0 + $0xc0] sm:$0xff]
  %v40 = vld [vmem:[%s0 + $0xc8] sm:$0xff]
  %v41 = vld [vmem:[%s0 + $0xd0] sm:$0xff]
  %v42 = vld [vmem:[%s0 + $0xd8] sm:$0xff]
  %v43 = vld [vmem:[%s0 + $0xe0] sm:$0xff]
  %v44 = vld [vmem:[%s0 + $0xe8] sm:$0xff]
  %v45 = vld [vmem:[%s0 + $0xf0] sm:$0xff]
  %v46 = vld [vmem:[%s0 + $0xf8] sm:$0xff]
  %v47 = vld [vmem:[%s0 + $0x100] sm:$0xff]
  %v48 = vld [vmem:[%s0 + $0x108] sm:$0xff]
  %v49 = vld [vmem:[%s0 + $0x110] sm:$0xff]
  %v50 = vld [vmem:[%s0 + $0x118] sm:$0xff]
  %v51 = vld [vmem:[%s0 + $0x120] sm:$0xff]
  %v52 = vld [vmem:[%s0 + $0x128] sm:$0xff]
  %v53 = vld [vmem:[%s0 + $0x130] sm:$0xff]
  %v54 = vld [vmem:[%s0 + $0x138] sm:$0xff]
  %v55 = vld [vmem:[%s0 + $0x140] sm:$0xff]
  %v56 = vld [vmem:[%s0 + $0x148] sm:$0xff]
  %v57 = vld [vmem:[%s0 + $0x150] sm:$0xff]
  %v58 = vld [vmem:[%s0 + $0x158] sm:$0xff]
  %v59 = vld [vmem:[%s0 + $0x160] sm:$0xff]
  %v60 = vld [vmem:[%s0 + $0x168] sm:$0xff]
  %v61 = vld [vmem:[%s0 + $0x170] sm:$0xff]
  %v62 = vld [vmem:[%s0 + $0x178] sm:$0xff]
  %v63 = vld [vmem:[%s0 + $0x180] sm:$0xff]
  %v64 = vld [vmem:[%s0 + $0x188] sm:$0xff]
  %v65 = vld [vmem:[%s0 + $0x190] sm:$0xff]
  %v66 = vld [vmem:[%s0 + $0x198] sm:$0xff]
  %v67 = vld [vmem:[%s0 + $0x1a0] sm:$0xff]
  %v68 = vld [vmem:[%s0 + $0x1a8] sm:$0xff]
  %v69 = vld [vmem:[%s0 + $0x1b0] sm:$0xff]
  %v70 = vld [vmem:[%s0 + $0x1b8] sm:$0xff]
  %v71 = vld [vmem:[%s0 + $0x1c0] sm:$0xff]
  %v72 = vld [vmem:[%s0 + $0x1c8] sm:$0xff]
  %v73 = vld [vmem:[%s0 + $0x1d0] sm:$0xff]
  %v74 = vld [vmem:[%s0 + $0x1d8] sm:$0xff]
  %v75 = vld [vmem:[%s0 + $0x1e0] sm:$0xff]
  %v76 = vld [vmem:[%s0 + $0x1e8] sm:$0xff]
  %v77 = vld [vmem:[%s0 + $0x1f0] sm:$0xff]
  %v78 = vld [vmem:[%s0 + $0x1f8] sm:$0xff]
  %v79 = vld [vmem:[%s0 + $0x200] sm:$0xff]
  %v80 = vld [vmem:[%s0 + $0x208] sm:$0xff]
  %v81 = vld [vmem:[%s0 + $0x210] sm:$0xff]
  %v82 = vld [vmem:[%s0 + $0x218] sm:$0xff]
  %v83 = vld [vmem:[%s0 + $0x220] sm:$0xff]
  %v84 = vld [vmem:[%s0 + $0x228] sm:$0xff]
  %v85 = vld [vmem:[%s0 + $0x230] sm:$0xff]
  %v86 = vld [vmem:[%s0 + $0x238] sm:$0xff]
  %v87 = vld [vmem:[%s0 + $0x240] sm:$0xff]
  %v88 = vld [vmem:[%s0 + $0x248] sm:$0xff]
  %v89 = vld [vmem:[%s0 + $0x250] sm:$0xff]
  %v90 = vld [vmem:[%s0 + $0x258] sm:$0xff]
  %v91 = vld [vmem:[%s0 + $0x260] sm:$0xff]
  %v92 = vld [vmem:[%s0 + $0x268] sm:$0xff]
  %v93 = vld [vmem:[%s0 + $0x270] sm:$0xff]
  %v94 = vld [vmem:[%s0 + $0x278] sm:$0xff]
  %v95 = vld [vmem:[%s0 + $0x280] sm:$0xff]
  %v96 = vld [vmem:[%s0 + $0x288] sm:$0xff]
  %v97 = vld [vmem:[%s0 + $0x290] sm:$0xff]
  %v98 = vld [vmem:[%s0 + $0x298] sm:$0xff]
  %v99 = vld [vmem:[%s0 + $0x2a0] sm:$0xff]
  %v100 = vld [vmem:[%s0 + $0x2a8] sm:$0xff]
  %v101 = vld [vmem:[%s0 + $0x2b0] sm:$0xff]
  %v102 = vld [vmem:[%s0 + $0x2b8] sm:$0xff]
  %v103 = vld [vmem:[%s0 + $0x2c0] sm:$0xff]
  %v104 = vld [vmem:[%s0 + $0x2c8] sm:$0xff]
  %v105 = vld [vmem:[%s0 + $0x2d0] sm:$0xff]
  %v106 = vld [vmem:[%s0 + $0x2d8] sm:$0xff]
  %v107 = vld [vmem:[%s0 + $0x2e0] sm:$0xff]
  %v108 = vld [vmem:[%s0 + $0x2e8] sm:$0xff]
  %v109 = vld [vmem:[%s0 + $0x2f0] sm:$0xff]
  %v110 = vld [vmem:[%s0 + $0x2f8] sm:$0xff]
  %v111 = vld [vmem:[%s0 + $0x300] sm:$0xff]
  %v112 = vld [vmem:[%s0 + $0x308] sm:$0xff]
  %v113 = vld [vmem:[%s0 + $0x310] sm:$0xff]
  %v114 = vld [vmem:[%s0 + $0x318] sm:$0xff]
  %v115 = vld [vmem:[%s0 + $0x320] sm:$0xff]
  %v116 = vld [vmem:[%s0 + $0x328] sm:$0xff]
  %v117 = vld [vmem:[%s0 + $0x330] sm:$0xff]
  %v118 = vld [vmem:[%s0 + $0x338] sm:$0xff]
  %v119 = vld [vmem:[%s0 + $0x340] sm:$0xff]
  %v120 = vld [vmem:[%s0 + $0x348] sm:$0xff]
  %v121 = vld [vmem:[%s0 + $0x350] sm:$0xff]
  %v122 = vld [vmem:[%s0 + $0x358] sm:$0xff]
  %v123 = vld [vmem:[%s0 + $0x360] sm:$0xff]
  %v124 = vld [vmem:[%s0 + $0x368] sm:$0xff]
  %v125 = vld [vmem:[%s0 + $0x370] sm:$0xff]
  %v126 = vld [vmem:[%s0 + $0x378] sm:$0xff]
  %v127 = vld [vmem:[%s0 + $0x380] sm:$0xff]
  %v128 = vld [vmem:[%s0 + $0x388] sm:$0xff]
  %v129 = vld [vmem:[%s0 + $0x390] sm:$0xff]
  %v130 = vld [vmem:[%s0 + $0x398] sm:$0xff]
  %v131 = vld [vmem:[%s0 + $0x3a0] sm:$0xff]
  %v132 = vld [vmem:[%s0 + $0x3a8] sm:$0xff]
  %v133 = vld [vmem:[%s0 + $0x3b0] sm:$0xff]
  %v134 = vld [vmem:[%s0 + $0x3b8] sm:$0xff]
  %v135 = vld [vmem:[%s0 + $0x3c0] sm:$0xff]
  %v136 = vld [vmem:[%s0 + $0x3c8] sm:$0xff]
  %v137 = vld [vmem:[%s0 + $0x3d0] sm:$0xff]
  %v138 = vld [vmem:[%s0 + $0x3d8] sm:$0xff]
  %v139 = vld [vmem:[%s0 + $0x3e0] sm:$0xff]
  %v140 = vld [vmem:[%s0 + $0x3e8] sm:$0xff]
  %v141 = vld [vmem:[%s0 + $0x3f0] sm:$0xff]
  %v142 = vld [vmem:[%s0 + $0x3f8] sm:$0xff]
  %v143 = vld [vmem:[%s0 + $0x400] sm:$0xff]
  %v144 = vld [vmem:[%s0 + $0x408] sm:$0xff]
  %v145 = vld [vmem:[%s0 + $0x410] sm:$0xff]
  %v146 = vld [vmem:[%s0 + $0x418] sm:$0xff]
  %v147 = vld [vmem:[%s0 + $0x420] sm:$0xff]
  %v148 = vld [vmem:[%s0 + $0x428] sm:$0xff]
  %v149 = vld [vmem:[%s0 + $0x430] sm:$0xff]
  %v150 = vld [vmem:[%s0 + $0x438] sm:$0xff]
  %v151 = vld [vmem:[%s0 + $0x440] sm:$0xff]
  %v152 = vld [vmem:[%s0 + $0x448] sm:$0xff]
  %v153 = vld [vmem:[%s0 + $0x450] sm:$0xff]
  %v154 = vld [vmem:[%s0 + $0x458] sm:$0xff]
  %v155 = vld [vmem:[%s0 + $0x460] sm:$0xff]
  %v156 = vld [vmem:[%s0 + $0x468] sm:$0xff]
  %v157 = vld [vmem:[%s0 + $0x470] sm:$0xff]
  %v158 = vld [vmem:[%s0 + $0x478] sm:$0xff]
  %v159 = vld [vmem:[%s0 + $0x480] sm:$0xff]
  %v160 = vld [vmem:[%s0 + $0x488] sm:$0xff]
  %v161 = vld [vmem:[%s0 + $0x490] sm:$0xff]
  %v162 = vld [vmem:[%s0 + $0x498] sm:$0xff]
  %v163 = vld [vmem:[%s0 + $0x4a0] sm:$0xff]
  %v164 = vld [vmem:[%s0 + $0x4a8] sm:$0xff]
  %v165 = vld [vmem:[%s0 + $0x4b0] sm:$0x3]
  %v166 = vld [vmem:[%s0 + $0x4b8] sm:$0x3]
  %v167 = vld [vmem:[%s0 + $0x4c0] sm:$0x3]
  %v168 = vld [vmem:[%s0 + $0x4c8] sm:$0x3]
  %v169 = vld [vmem:[%s0 + $0x4d0] sm:$0x3]
  %v170 = vpack.c.bf16 %v20, %v15
  %v171 = vpack.c.bf16 %v21, %v16
  %v172 = vpack.c.bf16 %v22, %v17
  %v173 = vpack.c.bf16 %v23, %v18
  %v174 = vpack.c.bf16 %v24, %v19
  %v175 = vpack.c.bf16 %v30, %v25
  %v176 = vpack.c.bf16 %v31, %v26
  %v177 = vpack.c.bf16 %v32, %v27
  %v178 = vpack.c.bf16 %v33, %v28
  %v179 = vpack.c.bf16 %v34, %v29
  %v180 = vpack.c.bf16 %v40, %v35
  %v181 = vpack.c.bf16 %v41, %v36
  %v182 = vpack.c.bf16 %v42, %v37
  %v183 = vpack.c.bf16 %v43, %v38
  %v184 = vpack.c.bf16 %v44, %v39
  %v185 = vpack.c.bf16 %v50, %v45
  %v186 = vpack.c.bf16 %v51, %v46
  %v187 = vpack.c.bf16 %v52, %v47
  %v188 = vpack.c.bf16 %v53, %v48
  %v189 = vpack.c.bf16 %v54, %v49
  %v190 = vpack.c.bf16 %v60, %v55
  %v191 = vpack.c.bf16 %v61, %v56
  %v192 = vpack.c.bf16 %v62, %v57
  %v193 = vpack.c.bf16 %v63, %v58
  %v194 = vpack.c.bf16 %v64, %v59
  %v195 = vpack.c.bf16 %v70, %v65
  %v196 = vpack.c.bf16 %v71, %v66
  %v197 = vpack.c.bf16 %v72, %v67
  %v198 = vpack.c.bf16 %v73, %v68
  %v199 = vpack.c.bf16 %v74, %v69
  %v200 = vpack.c.bf16 %v80, %v75
  %v201 = vpack.c.bf16 %v81, %v76
  %v202 = vpack.c.bf16 %v82, %v77
  %v203 = vpack.c.bf16 %v83, %v78
  %v204 = vpack.c.bf16 %v84, %v79
  %v205 = vpack.c.bf16 %v90, %v85
  %v206 = vpack.c.bf16 %v91, %v86
  %v207 = vpack.c.bf16 %v92, %v87
  %v208 = vpack.c.bf16 %v93, %v88
  %v209 = vpack.c.bf16 %v94, %v89
  %v210 = vpack.c.bf16 %v100, %v95
  %v211 = vpack.c.bf16 %v101, %v96
  %v212 = vpack.c.bf16 %v102, %v97
  %v213 = vpack.c.bf16 %v103, %v98
  %v214 = vpack.c.bf16 %v104, %v99
  %v215 = vpack.c.bf16 %v110, %v105
  %v216 = vpack.c.bf16 %v111, %v106
  %v217 = vpack.c.bf16 %v112, %v107
  %v218 = vpack.c.bf16 %v113, %v108
  %v219 = vpack.c.bf16 %v114, %v109
  %v220 = vpack.c.bf16 %v120, %v115
  %v221 = vpack.c.bf16 %v121, %v116
  %v222 = vpack.c.bf16 %v122, %v117
  %v223 = vpack.c.bf16 %v123, %v118
  %v224 = vpack.c.bf16 %v124, %v119
  %v225 = vpack.c.bf16 %v130, %v125
  %v226 = vpack.c.bf16 %v131, %v126
  %v227 = vpack.c.bf16 %v132, %v127
  %v228 = vpack.c.bf16 %v133, %v128
  %v229 = vpack.c.bf16 %v134, %v129
  %v230 = vpack.c.bf16 %v140, %v135
  %v231 = vpack.c.bf16 %v141, %v136
  %v232 = vpack.c.bf16 %v142, %v137
  %v233 = vpack.c.bf16 %v143, %v138
  %v234 = vpack.c.bf16 %v144, %v139
  %v235 = vpack.c.bf16 %v150, %v145
  %v236 = vpack.c.bf16 %v151, %v146
  %v237 = vpack.c.bf16 %v152, %v147
  %v238 = vpack.c.bf16 %v153, %v148
  %v239 = vpack.c.bf16 %v154, %v149
  %v240 = vpack.c.bf16 %v160, %v155
  %v241 = vpack.c.bf16 %v161, %v156
  %v242 = vpack.c.bf16 %v162, %v157
  %v243 = vpack.c.bf16 %v163, %v158
  %v244 = vpack.c.bf16 %v164, %v159
  %v245 = vpack.c.bf16 %v165, %v165
  %v246 = vpack.c.bf16 %v166, %v166
  %v247 = vpack.c.bf16 %v167, %v167
  %v248 = vpack.c.bf16 %v168, %v168
  %v249 = vpack.c.bf16 %v169, %v169
  %v250 = vld [vmem:[%s1] sm:$0xf]
  %v251 = vld [vmem:[%s1 + $0x4] sm:$0xf]
  %v252 = vld [vmem:[%s1 + $0x8] sm:$0xf]
  %v253 = vld [vmem:[%s1 + $0xc] sm:$0xf]
  %v254 = vld [vmem:[%s1 + $0x10] sm:$0xf]
  %v255 = vld [vmem:[%s1 + $0x14] sm:$0xf]
  %v256 = vld [vmem:[%s1 + $0x18] sm:$0xf]
  %v257 = vld [vmem:[%s1 + $0x1c] sm:$0xf]
  %v258 = vld [vmem:[%s1 + $0x20] sm:$0xf]
  %v259 = vld [vmem:[%s1 + $0x24] sm:$0xf]
  %v260 = vld [vmem:[%s1 + $0x28] sm:$0xf]
  %v261 = vld [vmem:[%s1 + $0x2c] sm:$0xf]
  %v262 = vld [vmem:[%s1 + $0x30] sm:$0xf]
  %v263 = vld [vmem:[%s1 + $0x34] sm:$0xf]
  %v264 = vld [vmem:[%s1 + $0x38] sm:$0xf]
  %v265 = vld [vmem:[%s1 + $0x3c] sm:$0xf]
  %v266 = vld [vmem:[%s1 + $0x40] sm:$0xf]
  %v267 = vld [vmem:[%s1 + $0x44] sm:$0xf]
  %v268 = vld [vmem:[%s1 + $0x48] sm:$0xf]
  %v269 = vld [vmem:[%s1 + $0x4c] sm:$0xf]
  %v270 = vld [vmem:[%s1 + $0x50] sm:$0xf]
  %v271 = vld [vmem:[%s1 + $0x54] sm:$0xf]
  %v272 = vld [vmem:[%s1 + $0x58] sm:$0xf]
  %v273 = vld [vmem:[%s1 + $0x5c] sm:$0xf]
  %v274 = vld [vmem:[%s1 + $0x60] sm:$0xf]
  %v275 = vld [vmem:[%s1 + $0x64] sm:$0xf]
  %v276 = vld [vmem:[%s1 + $0x68] sm:$0xf]
  %v277 = vld [vmem:[%s1 + $0x6c] sm:$0xf]
  %v278 = vld [vmem:[%s1 + $0x70] sm:$0xf]
  %v279 = vld [vmem:[%s1 + $0x74] sm:$0xf]
  %v280 = vld [vmem:[%s1 + $0x78] sm:$0xf]
  %v281 = vld [vmem:[%s1 + $0x7c] sm:$0xf]
  %v282 = vld [vmem:[%s1 + $0x80] sm:$0xf]
  %v283 = vld [vmem:[%s1 + $0x84] sm:$0xf]
  %v284 = vld [vmem:[%s1 + $0x88] sm:$0xf]
  %v285 = vld [vmem:[%s1 + $0x8c] sm:$0xf]
  %v286 = vld [vmem:[%s1 + $0x90] sm:$0xf]
  %v287 = vld [vmem:[%s1 + $0x94] sm:$0xf]
  %v288 = vld [vmem:[%s1 + $0x98] sm:$0xf]
  %v289 = vld [vmem:[%s1 + $0x9c] sm:$0xf]
  %v290 = vld [vmem:[%s1 + $0xa0] sm:$0xf]
  %v291 = vld [vmem:[%s1 + $0xa4] sm:$0xf]
  %v292 = vld [vmem:[%s1 + $0xa8] sm:$0xf]
  %v293 = vld [vmem:[%s1 + $0xac] sm:$0xf]
  %v294 = vld [vmem:[%s1 + $0xb0] sm:$0xf]
  %v295 = vld [vmem:[%s1 + $0xb4] sm:$0xf]
  %v296 = vld [vmem:[%s1 + $0xb8] sm:$0xf]
  %v297 = vld [vmem:[%s1 + $0xbc] sm:$0xf]
  %v298 = vld [vmem:[%s1 + $0xc0] sm:$0xf]
  %v299 = vld [vmem:[%s1 + $0xc4] sm:$0xf]
  %v300 = vld [vmem:[%s1 + $0xc8] sm:$0xf]
  %v301 = vld [vmem:[%s1 + $0xcc] sm:$0xf]
  %v302 = vld [vmem:[%s1 + $0xd0] sm:$0xf]
  %v303 = vld [vmem:[%s1 + $0xd4] sm:$0xf]
  %v304 = vld [vmem:[%s1 + $0xd8] sm:$0xf]
  %v305 = vld [vmem:[%s1 + $0xdc] sm:$0xf]
  %v306 = vld [vmem:[%s1 + $0xe0] sm:$0xf]
  %v307 = vld [vmem:[%s1 + $0xe4] sm:$0xf]
  %v308 = vld [vmem:[%s1 + $0xe8] sm:$0xf]
  %v309 = vld [vmem:[%s1 + $0xec] sm:$0xf]
  %v310 = vld [vmem:[%s1 + $0xf0] sm:$0xf]
  %v311 = vld [vmem:[%s1 + $0xf4] sm:$0xf]
  %v312 = vld [vmem:[%s1 + $0xf8] sm:$0xf]
  %v313 = vld [vmem:[%s1 + $0xfc] sm:$0xf]
  %v314 = vld [vmem:[%s1 + $0x100] sm:$0xf]
  %v315 = vld [vmem:[%s1 + $0x104] sm:$0xf]
  %v316 = vld [vmem:[%s1 + $0x108] sm:$0xf]
  %v317 = vld [vmem:[%s1 + $0x10c] sm:$0xf]
  %v318 = vld [vmem:[%s1 + $0x110] sm:$0xf]
  %v319 = vld [vmem:[%s1 + $0x114] sm:$0xf]
  %v320 = vld [vmem:[%s1 + $0x118] sm:$0xf]
  %v321 = vld [vmem:[%s1 + $0x11c] sm:$0xf]
  %v322 = vld [vmem:[%s2] sm:$0x1]
  %v324 = vperm.slane %v322, 0
  %v398 = vunpack.c.l.b16 %v250
  %v399 = vunpack.c.l.b16 %v251
  %v400 = vunpack.c.l.b16 %v252
  %v401 = vunpack.c.l.b16 %v253
  %v402 = vunpack.c.l.b16 %v254
  %v403 = vunpack.c.l.b16 %v255
  %v404 = vunpack.c.l.b16 %v256
  %v405 = vunpack.c.l.b16 %v257
  %v406 = vunpack.c.l.b16 %v258
  %v407 = vunpack.c.l.b16 %v259
  %v408 = vunpack.c.l.b16 %v260
  %v409 = vunpack.c.l.b16 %v261
  %v410 = vunpack.c.l.b16 %v262
  %v411 = vunpack.c.l.b16 %v263
  %v412 = vunpack.c.l.b16 %v264
  %v413 = vunpack.c.l.b16 %v265
  %v414 = vunpack.c.l.b16 %v266
  %v415 = vunpack.c.l.b16 %v267
  %v416 = vunpack.c.l.b16 %v268
  %v417 = vunpack.c.l.b16 %v269
  %v418 = vunpack.c.l.b16 %v270
  %v419 = vunpack.c.l.b16 %v271
  %v420 = vunpack.c.l.b16 %v272
  %v421 = vunpack.c.l.b16 %v273
  %v422 = vunpack.c.l.b16 %v274
  %v423 = vunpack.c.l.b16 %v275
  %v424 = vunpack.c.l.b16 %v276
  %v425 = vunpack.c.l.b16 %v277
  %v426 = vunpack.c.l.b16 %v278
  %v427 = vunpack.c.l.b16 %v279
  %v428 = vunpack.c.l.b16 %v280
  %v429 = vunpack.c.l.b16 %v281
  %v430 = vunpack.c.l.b16 %v282
  %v431 = vunpack.c.l.b16 %v283
  %v432 = vunpack.c.l.b16 %v284
  %v433 = vunpack.c.l.b16 %v285
  %v434 = vunpack.c.l.b16 %v286
  %v435 = vunpack.c.l.b16 %v287
  %v436 = vunpack.c.l.b16 %v288
  %v437 = vunpack.c.l.b16 %v289
  %v438 = vunpack.c.l.b16 %v290
  %v439 = vunpack.c.l.b16 %v291
  %v440 = vunpack.c.l.b16 %v292
  %v441 = vunpack.c.l.b16 %v293
  %v442 = vunpack.c.l.b16 %v294
  %v443 = vunpack.c.l.b16 %v295
  %v444 = vunpack.c.l.b16 %v296
  %v445 = vunpack.c.l.b16 %v297
  %v446 = vunpack.c.l.b16 %v298
  %v447 = vunpack.c.l.b16 %v299
  %v448 = vunpack.c.l.b16 %v300
  %v449 = vunpack.c.l.b16 %v301
  %v450 = vunpack.c.l.b16 %v302
  %v451 = vunpack.c.l.b16 %v303
  %v452 = vunpack.c.l.b16 %v304
  %v453 = vunpack.c.l.b16 %v305
  %v454 = vunpack.c.l.b16 %v306
  %v455 = vunpack.c.l.b16 %v307
  %v456 = vunpack.c.l.b16 %v308
  %v457 = vunpack.c.l.b16 %v309
  %v458 = vunpack.c.l.b16 %v310
  %v459 = vunpack.c.l.b16 %v311
  %v460 = vunpack.c.l.b16 %v312
  %v461 = vunpack.c.l.b16 %v313
  %v462 = vunpack.c.l.b16 %v314
  %v463 = vunpack.c.l.b16 %v315
  %v464 = vunpack.c.l.b16 %v316
  %v465 = vunpack.c.l.b16 %v317
  %v466 = vunpack.c.l.b16 %v318
  %v467 = vunpack.c.l.b16 %v319
  %v468 = vunpack.c.l.b16 %v320
  %v469 = vunpack.c.l.b16 %v321
  %v470 = vpack.c.b16 %v399, %v398
  %v471 = vpack.c.b16 %v401, %v400
  %v472 = vpack.c.b16 %v403, %v402
  %v473 = vpack.c.b16 %v405, %v404
  %v474 = vpack.c.b16 %v407, %v406
  %v475 = vpack.c.b16 %v409, %v408
  %v476 = vpack.c.b16 %v411, %v410
  %v477 = vpack.c.b16 %v413, %v412
  %v478 = vpack.c.b16 %v415, %v414
  %v479 = vpack.c.b16 %v417, %v416
  %v480 = vpack.c.b16 %v419, %v418
  %v481 = vpack.c.b16 %v421, %v420
  %v482 = vpack.c.b16 %v423, %v422
  %v483 = vpack.c.b16 %v425, %v424
  %v484 = vpack.c.b16 %v427, %v426
  %v485 = vpack.c.b16 %v429, %v428
  %v486 = vpack.c.b16 %v431, %v430
  %v487 = vpack.c.b16 %v433, %v432
  %v488 = vpack.c.b16 %v435, %v434
  %v489 = vpack.c.b16 %v437, %v436
  %v490 = vpack.c.b16 %v439, %v438
  %v491 = vpack.c.b16 %v441, %v440
  %v492 = vpack.c.b16 %v443, %v442
  %v493 = vpack.c.b16 %v445, %v444
  %v494 = vpack.c.b16 %v447, %v446
  %v495 = vpack.c.b16 %v449, %v448
  %v496 = vpack.c.b16 %v451, %v450
  %v497 = vpack.c.b16 %v453, %v452
  %v498 = vpack.c.b16 %v455, %v454
  %v499 = vpack.c.b16 %v457, %v456
  %v500 = vpack.c.b16 %v459, %v458
  %v501 = vpack.c.b16 %v461, %v460
  %v502 = vpack.c.b16 %v463, %v462
  %v503 = vpack.c.b16 %v465, %v464
  %v504 = vpack.c.b16 %v467, %v466
  %v505 = vpack.c.b16 %v469, %v468
  %vm542 = vcmask 523264
  %v544 = vsel %vm542, %v174, 0
  %v547 = vsel %vm542, %v179, 0
  %v550 = vsel %vm542, %v184, 0
  %v553 = vsel %vm542, %v189, 0
  %v556 = vsel %vm542, %v194, 0
  %v559 = vsel %vm542, %v199, 0
  %v562 = vsel %vm542, %v204, 0
  %v565 = vsel %vm542, %v209, 0
  %v568 = vsel %vm542, %v214, 0
  %v571 = vsel %vm542, %v219, 0
  %v574 = vsel %vm542, %v224, 0
  %v577 = vsel %vm542, %v229, 0
  %v580 = vsel %vm542, %v234, 0
  %v583 = vsel %vm542, %v239, 0
  %v586 = vsel %vm542, %v244, 0
  %v589 = vsel %vm542, %v249, 0
  %591 = vmatpush.bf16.msra.mxu0 %v477
  %592 = vmatpush.bf16.msra.mxu0 %v476
  %593 = vmatpush.bf16.msra.mxu0 %v475
  %594 = vmatpush.bf16.msra.mxu0 %v474
  %595 = vmatpush.bf16.msra.mxu0 %v473
  %596 = vmatpush.bf16.msra.mxu0 %v472
  %597 = vmatpush.bf16.msra.mxu0 %v471
  %598 = vmatpush.bf16.msra.mxu0 %v470
  %599 = vmatmul.bf16.gmra.mxu0 %v170
  %v600 = vpop.f32.mrf.mxu0
  %v601 = vadd.f32 %v324, %v600
  %v602 = vpop.f32.mrf.mxu0
  %v603 = vadd.f32 %v324, %v602
  %604 = vmatmul.bf16.gmra.mxu0 %v175
  %v605 = vpop.f32.mrf.mxu0
  %v606 = vadd.f32 %v324, %v605
  %v607 = vpop.f32.mrf.mxu0
  %v608 = vadd.f32 %v324, %v607
  %609 = vmatmul.bf16.gmra.mxu0 %v180
  %v610 = vpop.f32.mrf.mxu0
  %v611 = vadd.f32 %v324, %v610
  %v612 = vpop.f32.mrf.mxu0
  %v613 = vadd.f32 %v324, %v612
  %614 = vmatmul.bf16.gmra.mxu0 %v185
  %v615 = vpop.f32.mrf.mxu0
  %v616 = vadd.f32 %v324, %v615
  %v617 = vpop.f32.mrf.mxu0
  %v618 = vadd.f32 %v324, %v617
  %619 = vmatmul.bf16.gmra.mxu0 %v190
  %v620 = vpop.f32.mrf.mxu0
  %v621 = vadd.f32 %v324, %v620
  %v622 = vpop.f32.mrf.mxu0
  %v623 = vadd.f32 %v324, %v622
  %624 = vmatmul.bf16.gmra.mxu0 %v195
  %v625 = vpop.f32.mrf.mxu0
  %v626 = vadd.f32 %v324, %v625
  %v627 = vpop.f32.mrf.mxu0
  %v628 = vadd.f32 %v324, %v627
  %629 = vmatmul.bf16.gmra.mxu0 %v200
  %v630 = vpop.f32.mrf.mxu0
  %v631 = vadd.f32 %v324, %v630
  %v632 = vpop.f32.mrf.mxu0
  %v633 = vadd.f32 %v324, %v632
  %634 = vmatmul.bf16.gmra.mxu0 %v205
  %v635 = vpop.f32.mrf.mxu0
  %v636 = vadd.f32 %v324, %v635
  %v637 = vpop.f32.mrf.mxu0
  %v638 = vadd.f32 %v324, %v637
  %639 = vmatmul.bf16.gmra.mxu0 %v210
  %v640 = vpop.f32.mrf.mxu0
  %v641 = vadd.f32 %v324, %v640
  %v642 = vpop.f32.mrf.mxu0
  %v643 = vadd.f32 %v324, %v642
  %644 = vmatmul.bf16.gmra.mxu0 %v215
  %v645 = vpop.f32.mrf.mxu0
  %v646 = vadd.f32 %v324, %v645
  %v647 = vpop.f32.mrf.mxu0
  %v648 = vadd.f32 %v324, %v647
  %649 = vmatmul.bf16.gmra.mxu0 %v220
  %v650 = vpop.f32.mrf.mxu0
  %v651 = vadd.f32 %v324, %v650
  %v652 = vpop.f32.mrf.mxu0
  %v653 = vadd.f32 %v324, %v652
  %654 = vmatmul.bf16.gmra.mxu0 %v225
  %v655 = vpop.f32.mrf.mxu0
  %v656 = vadd.f32 %v324, %v655
  %v657 = vpop.f32.mrf.mxu0
  %v658 = vadd.f32 %v324, %v657
  %659 = vmatmul.bf16.gmra.mxu0 %v230
  %v660 = vpop.f32.mrf.mxu0
  %v661 = vadd.f32 %v324, %v660
  %v662 = vpop.f32.mrf.mxu0
  %v663 = vadd.f32 %v324, %v662
  %664 = vmatmul.bf16.gmra.mxu0 %v235
  %v665 = vpop.f32.mrf.mxu0
  %v666 = vadd.f32 %v324, %v665
  %v667 = vpop.f32.mrf.mxu0
  %v668 = vadd.f32 %v324, %v667
  %669 = vmatmul.bf16.gmra.mxu0 %v240
  %v670 = vpop.f32.mrf.mxu0
  %v671 = vadd.f32 %v324, %v670
  %v672 = vpop.f32.mrf.mxu0
  %v673 = vadd.f32 %v324, %v672
  %674 = vmatmul.bf16.gmra.mxu0 %v245
  %v675 = vpop.f32.mrf.mxu0
  %v676 = vadd.f32 %v324, %v675
  %v677 = vpop.f32.mrf.mxu0
  %678 = vdwg.mxu0
  %679 = vmatpush.bf16.msra.mxu0 %v485
  %680 = vmatpush.bf16.msra.mxu0 %v484
  %681 = vmatpush.bf16.msra.mxu0 %v483
  %682 = vmatpush.bf16.msra.mxu0 %v482
  %683 = vmatpush.bf16.msra.mxu0 %v481
  %684 = vmatpush.bf16.msra.mxu0 %v480
  %685 = vmatpush.bf16.msra.mxu0 %v479
  %686 = vmatpush.bf16.msra.mxu0 %v478
  %687 = vmatmul.bf16.gmra.mxu0 %v171
  %v688 = vpop.f32.mrf.mxu0
  %v689 = vadd.f32 %v601, %v688
  %v690 = vpop.f32.mrf.mxu0
  %v691 = vadd.f32 %v603, %v690
  %692 = vmatmul.bf16.gmra.mxu0 %v176
  %v693 = vpop.f32.mrf.mxu0
  %v694 = vadd.f32 %v606, %v693
  %v695 = vpop.f32.mrf.mxu0
  %v696 = vadd.f32 %v608, %v695
  %697 = vmatmul.bf16.gmra.mxu0 %v181
  %v698 = vpop.f32.mrf.mxu0
  %v699 = vadd.f32 %v611, %v698
  %v700 = vpop.f32.mrf.mxu0
  %v701 = vadd.f32 %v613, %v700
  %702 = vmatmul.bf16.gmra.mxu0 %v186
  %v703 = vpop.f32.mrf.mxu0
  %v704 = vadd.f32 %v616, %v703
  %v705 = vpop.f32.mrf.mxu0
  %v706 = vadd.f32 %v618, %v705
  %707 = vmatmul.bf16.gmra.mxu0 %v191
  %v708 = vpop.f32.mrf.mxu0
  %v709 = vadd.f32 %v621, %v708
  %v710 = vpop.f32.mrf.mxu0
  %v711 = vadd.f32 %v623, %v710
  %712 = vmatmul.bf16.gmra.mxu0 %v196
  %v713 = vpop.f32.mrf.mxu0
  %v714 = vadd.f32 %v626, %v713
  %v715 = vpop.f32.mrf.mxu0
  %v716 = vadd.f32 %v628, %v715
  %717 = vmatmul.bf16.gmra.mxu0 %v201
  %v718 = vpop.f32.mrf.mxu0
  %v719 = vadd.f32 %v631, %v718
  %v720 = vpop.f32.mrf.mxu0
  %v721 = vadd.f32 %v633, %v720
  %722 = vmatmul.bf16.gmra.mxu0 %v206
  %v723 = vpop.f32.mrf.mxu0
  %v724 = vadd.f32 %v636, %v723
  %v725 = vpop.f32.mrf.mxu0
  %v726 = vadd.f32 %v638, %v725
  %727 = vmatmul.bf16.gmra.mxu0 %v211
  %v728 = vpop.f32.mrf.mxu0
  %v729 = vadd.f32 %v641, %v728
  %v730 = vpop.f32.mrf.mxu0
  %v731 = vadd.f32 %v643, %v730
  %732 = vmatmul.bf16.gmra.mxu0 %v216
  %v733 = vpop.f32.mrf.mxu0
  %v734 = vadd.f32 %v646, %v733
  %v735 = vpop.f32.mrf.mxu0
  %v736 = vadd.f32 %v648, %v735
  %737 = vmatmul.bf16.gmra.mxu0 %v221
  %v738 = vpop.f32.mrf.mxu0
  %v739 = vadd.f32 %v651, %v738
  %v740 = vpop.f32.mrf.mxu0
  %v741 = vadd.f32 %v653, %v740
  %742 = vmatmul.bf16.gmra.mxu0 %v226
  %v743 = vpop.f32.mrf.mxu0
  %v744 = vadd.f32 %v656, %v743
  %v745 = vpop.f32.mrf.mxu0
  %v746 = vadd.f32 %v658, %v745
  %747 = vmatmul.bf16.gmra.mxu0 %v231
  %v748 = vpop.f32.mrf.mxu0
  %v749 = vadd.f32 %v661, %v748
  %v750 = vpop.f32.mrf.mxu0
  %v751 = vadd.f32 %v663, %v750
  %752 = vmatmul.bf16.gmra.mxu0 %v236
  %v753 = vpop.f32.mrf.mxu0
  %v754 = vadd.f32 %v666, %v753
  %v755 = vpop.f32.mrf.mxu0
  %v756 = vadd.f32 %v668, %v755
  %757 = vmatmul.bf16.gmra.mxu0 %v241
  %v758 = vpop.f32.mrf.mxu0
  %v759 = vadd.f32 %v671, %v758
  %v760 = vpop.f32.mrf.mxu0
  %v761 = vadd.f32 %v673, %v760
  %762 = vmatmul.bf16.gmra.mxu0 %v246
  %v763 = vpop.f32.mrf.mxu0
  %v764 = vadd.f32 %v676, %v763
  %v765 = vpop.f32.mrf.mxu0
  %766 = vdwg.mxu0
  %767 = vmatpush.bf16.msra.mxu0 %v493
  %768 = vmatpush.bf16.msra.mxu0 %v492
  %769 = vmatpush.bf16.msra.mxu0 %v491
  %770 = vmatpush.bf16.msra.mxu0 %v490
  %771 = vmatpush.bf16.msra.mxu0 %v489
  %772 = vmatpush.bf16.msra.mxu0 %v488
  %773 = vmatpush.bf16.msra.mxu0 %v487
  %774 = vmatpush.bf16.msra.mxu0 %v486
  %775 = vmatmul.bf16.gmra.mxu0 %v172
  %v776 = vpop.f32.mrf.mxu0
  %v777 = vadd.f32 %v689, %v776
  %v778 = vpop.f32.mrf.mxu0
  %v779 = vadd.f32 %v691, %v778
  %780 = vmatmul.bf16.gmra.mxu0 %v177
  %v781 = vpop.f32.mrf.mxu0
  %v782 = vadd.f32 %v694, %v781
  %v783 = vpop.f32.mrf.mxu0
  %v784 = vadd.f32 %v696, %v783
  %785 = vmatmul.bf16.gmra.mxu0 %v182
  %v786 = vpop.f32.mrf.mxu0
  %v787 = vadd.f32 %v699, %v786
  %v788 = vpop.f32.mrf.mxu0
  %v789 = vadd.f32 %v701, %v788
  %790 = vmatmul.bf16.gmra.mxu0 %v187
  %v791 = vpop.f32.mrf.mxu0
  %v792 = vadd.f32 %v704, %v791
  %v793 = vpop.f32.mrf.mxu0
  %v794 = vadd.f32 %v706, %v793
  %795 = vmatmul.bf16.gmra.mxu0 %v192
  %v796 = vpop.f32.mrf.mxu0
  %v797 = vadd.f32 %v709, %v796
  %v798 = vpop.f32.mrf.mxu0
  %v799 = vadd.f32 %v711, %v798
  %800 = vmatmul.bf16.gmra.mxu0 %v197
  %v801 = vpop.f32.mrf.mxu0
  %v802 = vadd.f32 %v714, %v801
  %v803 = vpop.f32.mrf.mxu0
  %v804 = vadd.f32 %v716, %v803
  %805 = vmatmul.bf16.gmra.mxu0 %v202
  %v806 = vpop.f32.mrf.mxu0
  %v807 = vadd.f32 %v719, %v806
  %v808 = vpop.f32.mrf.mxu0
  %v809 = vadd.f32 %v721, %v808
  %810 = vmatmul.bf16.gmra.mxu0 %v207
  %v811 = vpop.f32.mrf.mxu0
  %v812 = vadd.f32 %v724, %v811
  %v813 = vpop.f32.mrf.mxu0
  %v814 = vadd.f32 %v726, %v813
  %815 = vmatmul.bf16.gmra.mxu0 %v212
  %v816 = vpop.f32.mrf.mxu0
  %v817 = vadd.f32 %v729, %v816
  %v818 = vpop.f32.mrf.mxu0
  %v819 = vadd.f32 %v731, %v818
  %820 = vmatmul.bf16.gmra.mxu0 %v217
  %v821 = vpop.f32.mrf.mxu0
  %v822 = vadd.f32 %v734, %v821
  %v823 = vpop.f32.mrf.mxu0
  %v824 = vadd.f32 %v736, %v823
  %825 = vmatmul.bf16.gmra.mxu0 %v222
  %v826 = vpop.f32.mrf.mxu0
  %v827 = vadd.f32 %v739, %v826
  %v828 = vpop.f32.mrf.mxu0
  %v829 = vadd.f32 %v741, %v828
  %830 = vmatmul.bf16.gmra.mxu0 %v227
  %v831 = vpop.f32.mrf.mxu0
  %v832 = vadd.f32 %v744, %v831
  %v833 = vpop.f32.mrf.mxu0
  %v834 = vadd.f32 %v746, %v833
  %835 = vmatmul.bf16.gmra.mxu0 %v232
  %v836 = vpop.f32.mrf.mxu0
  %v837 = vadd.f32 %v749, %v836
  %v838 = vpop.f32.mrf.mxu0
  %v839 = vadd.f32 %v751, %v838
  %840 = vmatmul.bf16.gmra.mxu0 %v237
  %v841 = vpop.f32.mrf.mxu0
  %v842 = vadd.f32 %v754, %v841
  %v843 = vpop.f32.mrf.mxu0
  %v844 = vadd.f32 %v756, %v843
  %845 = vmatmul.bf16.gmra.mxu0 %v242
  %v846 = vpop.f32.mrf.mxu0
  %v847 = vadd.f32 %v759, %v846
  %v848 = vpop.f32.mrf.mxu0
  %v849 = vadd.f32 %v761, %v848
  %850 = vmatmul.bf16.gmra.mxu0 %v247
  %v851 = vpop.f32.mrf.mxu0
  %v852 = vadd.f32 %v764, %v851
  %v853 = vpop.f32.mrf.mxu0
  %854 = vdwg.mxu0
  %855 = vmatpush.bf16.msra.mxu0 %v501
  %856 = vmatpush.bf16.msra.mxu0 %v500
  %857 = vmatpush.bf16.msra.mxu0 %v499
  %858 = vmatpush.bf16.msra.mxu0 %v498
  %859 = vmatpush.bf16.msra.mxu0 %v497
  %860 = vmatpush.bf16.msra.mxu0 %v496
  %861 = vmatpush.bf16.msra.mxu0 %v495
  %862 = vmatpush.bf16.msra.mxu0 %v494
  %863 = vmatmul.bf16.gmra.mxu0 %v173
  %v864 = vpop.f32.mrf.mxu0
  %v865 = vadd.f32 %v777, %v864
  %v866 = vpop.f32.mrf.mxu0
  %v867 = vadd.f32 %v779, %v866
  %868 = vmatmul.bf16.gmra.mxu0 %v178
  %v869 = vpop.f32.mrf.mxu0
  %v870 = vadd.f32 %v782, %v869
  %v871 = vpop.f32.mrf.mxu0
  %v872 = vadd.f32 %v784, %v871
  %873 = vmatmul.bf16.gmra.mxu0 %v183
  %v874 = vpop.f32.mrf.mxu0
  %v875 = vadd.f32 %v787, %v874
  %v876 = vpop.f32.mrf.mxu0
  %v877 = vadd.f32 %v789, %v876
  %878 = vmatmul.bf16.gmra.mxu0 %v188
  %v879 = vpop.f32.mrf.mxu0
  %v880 = vadd.f32 %v792, %v879
  %v881 = vpop.f32.mrf.mxu0
  %v882 = vadd.f32 %v794, %v881
  %883 = vmatmul.bf16.gmra.mxu0 %v193
  %v884 = vpop.f32.mrf.mxu0
  %v885 = vadd.f32 %v797, %v884
  %v886 = vpop.f32.mrf.mxu0
  %v887 = vadd.f32 %v799, %v886
  %888 = vmatmul.bf16.gmra.mxu0 %v198
  %v889 = vpop.f32.mrf.mxu0
  %v890 = vadd.f32 %v802, %v889
  %v891 = vpop.f32.mrf.mxu0
  %v892 = vadd.f32 %v804, %v891
  %893 = vmatmul.bf16.gmra.mxu0 %v203
  %v894 = vpop.f32.mrf.mxu0
  %v895 = vadd.f32 %v807, %v894
  %v896 = vpop.f32.mrf.mxu0
  %v897 = vadd.f32 %v809, %v896
  %898 = vmatmul.bf16.gmra.mxu0 %v208
  %v899 = vpop.f32.mrf.mxu0
  %v900 = vadd.f32 %v812, %v899
  %v901 = vpop.f32.mrf.mxu0
  %v902 = vadd.f32 %v814, %v901
  %903 = vmatmul.bf16.gmra.mxu0 %v213
  %v904 = vpop.f32.mrf.mxu0
  %v905 = vadd.f32 %v817, %v904
  %v906 = vpop.f32.mrf.mxu0
  %v907 = vadd.f32 %v819, %v906
  %908 = vmatmul.bf16.gmra.mxu0 %v218
  %v909 = vpop.f32.mrf.mxu0
  %v910 = vadd.f32 %v822, %v909
  %v911 = vpop.f32.mrf.mxu0
  %v912 = vadd.f32 %v824, %v911
  %913 = vmatmul.bf16.gmra.mxu0 %v223
  %v914 = vpop.f32.mrf.mxu0
  %v915 = vadd.f32 %v827, %v914
  %v916 = vpop.f32.mrf.mxu0
  %v917 = vadd.f32 %v829, %v916
  %918 = vmatmul.bf16.gmra.mxu0 %v228
  %v919 = vpop.f32.mrf.mxu0
  %v920 = vadd.f32 %v832, %v919
  %v921 = vpop.f32.mrf.mxu0
  %v922 = vadd.f32 %v834, %v921
  %923 = vmatmul.bf16.gmra.mxu0 %v233
  %v924 = vpop.f32.mrf.mxu0
  %v925 = vadd.f32 %v837, %v924
  %v926 = vpop.f32.mrf.mxu0
  %v927 = vadd.f32 %v839, %v926
  %928 = vmatmul.bf16.gmra.mxu0 %v238
  %v929 = vpop.f32.mrf.mxu0
  %v930 = vadd.f32 %v842, %v929
  %v931 = vpop.f32.mrf.mxu0
  %v932 = vadd.f32 %v844, %v931
  %933 = vmatmul.bf16.gmra.mxu0 %v243
  %v934 = vpop.f32.mrf.mxu0
  %v935 = vadd.f32 %v847, %v934
  %v936 = vpop.f32.mrf.mxu0
  %v937 = vadd.f32 %v849, %v936
  %938 = vmatmul.bf16.gmra.mxu0 %v248
  %v939 = vpop.f32.mrf.mxu0
  %v940 = vadd.f32 %v852, %v939
  %v941 = vpop.f32.mrf.mxu0
  %942 = vdwg.mxu0
  %943 = vmatpush.bf16.msra.mxu0 0
  %944 = vmatpush.bf16.msra.mxu0 0
  %945 = vmatpush.bf16.msra.mxu0 0
  %946 = vmatpush.bf16.msra.mxu0 0
  %947 = vmatpush.bf16.msra.mxu0 %v505
  %948 = vmatpush.bf16.msra.mxu0 %v504
  %949 = vmatpush.bf16.msra.mxu0 %v503
  %950 = vmatpush.bf16.msra.mxu0 %v502
  %951 = vmatmul.bf16.gmra.mxu0 %v544
  %v952 = vpop.f32.mrf.mxu0
  %v953 = vadd.f32 %v865, %v952
  %v954 = vpop.f32.mrf.mxu0
  %v955 = vadd.f32 %v867, %v954
  %956 = vmatmul.bf16.gmra.mxu0 %v547
  %v957 = vpop.f32.mrf.mxu0
  %v958 = vadd.f32 %v870, %v957
  %v959 = vpop.f32.mrf.mxu0
  %v960 = vadd.f32 %v872, %v959
  %961 = vmatmul.bf16.gmra.mxu0 %v550
  %v962 = vpop.f32.mrf.mxu0
  %v963 = vadd.f32 %v875, %v962
  %v964 = vpop.f32.mrf.mxu0
  %v965 = vadd.f32 %v877, %v964
  %966 = vmatmul.bf16.gmra.mxu0 %v553
  %v967 = vpop.f32.mrf.mxu0
  %v968 = vadd.f32 %v880, %v967
  %v969 = vpop.f32.mrf.mxu0
  %v970 = vadd.f32 %v882, %v969
  %971 = vmatmul.bf16.gmra.mxu0 %v556
  %v972 = vpop.f32.mrf.mxu0
  %v973 = vadd.f32 %v885, %v972
  %v974 = vpop.f32.mrf.mxu0
  %v975 = vadd.f32 %v887, %v974
  %976 = vmatmul.bf16.gmra.mxu0 %v559
  %v977 = vpop.f32.mrf.mxu0
  %v978 = vadd.f32 %v890, %v977
  %v979 = vpop.f32.mrf.mxu0
  %v980 = vadd.f32 %v892, %v979
  %981 = vmatmul.bf16.gmra.mxu0 %v562
  %v982 = vpop.f32.mrf.mxu0
  %v983 = vadd.f32 %v895, %v982
  %v984 = vpop.f32.mrf.mxu0
  %v985 = vadd.f32 %v897, %v984
  %986 = vmatmul.bf16.gmra.mxu0 %v565
  %v987 = vpop.f32.mrf.mxu0
  %v988 = vadd.f32 %v900, %v987
  %v989 = vpop.f32.mrf.mxu0
  %v990 = vadd.f32 %v902, %v989
  %991 = vmatmul.bf16.gmra.mxu0 %v568
  %v992 = vpop.f32.mrf.mxu0
  %v993 = vadd.f32 %v905, %v992
  %v994 = vpop.f32.mrf.mxu0
  %v995 = vadd.f32 %v907, %v994
  %996 = vmatmul.bf16.gmra.mxu0 %v571
  %v997 = vpop.f32.mrf.mxu0
  %v998 = vadd.f32 %v910, %v997
  %v999 = vpop.f32.mrf.mxu0
  %v1000 = vadd.f32 %v912, %v999
  %1001 = vmatmul.bf16.gmra.mxu0 %v574
  %v1002 = vpop.f32.mrf.mxu0
  %v1003 = vadd.f32 %v915, %v1002
  %v1004 = vpop.f32.mrf.mxu0
  %v1005 = vadd.f32 %v917, %v1004
  %1006 = vmatmul.bf16.gmra.mxu0 %v577
  %v1007 = vpop.f32.mrf.mxu0
  %v1008 = vadd.f32 %v920, %v1007
  %v1009 = vpop.f32.mrf.mxu0
  %v1010 = vadd.f32 %v922, %v1009
  %1011 = vmatmul.bf16.gmra.mxu0 %v580
  %v1012 = vpop.f32.mrf.mxu0
  %v1013 = vadd.f32 %v925, %v1012
  %v1014 = vpop.f32.mrf.mxu0
  %v1015 = vadd.f32 %v927, %v1014
  %1016 = vmatmul.bf16.gmra.mxu0 %v583
  %v1017 = vpop.f32.mrf.mxu0
  %v1018 = vadd.f32 %v930, %v1017
  %v1019 = vpop.f32.mrf.mxu0
  %v1020 = vadd.f32 %v932, %v1019
  %1021 = vmatmul.bf16.gmra.mxu0 %v586
  %v1022 = vpop.f32.mrf.mxu0
  %v1023 = vadd.f32 %v935, %v1022
  %v1024 = vpop.f32.mrf.mxu0
  %v1025 = vadd.f32 %v937, %v1024
  %1026 = vmatmul.bf16.gmra.mxu0 %v589
  %v1027 = vpop.f32.mrf.mxu0
  %v1028 = vadd.f32 %v940, %v1027
  %v1029 = vpop.f32.mrf.mxu0
  %1030 = vdwg.mxu0
  %1031 = vst [vmem:[%s3] sm:$0xff] %v953
  %1032 = vst [vmem:[%s3 + $0x8] sm:$0xff] %v955
  %1033 = vst [vmem:[%s3 + $0x10] sm:$0xff] %v958
  %1034 = vst [vmem:[%s3 + $0x18] sm:$0xff] %v960
  %1035 = vst [vmem:[%s3 + $0x20] sm:$0xff] %v963
  %1036 = vst [vmem:[%s3 + $0x28] sm:$0xff] %v965
  %1037 = vst [vmem:[%s3 + $0x30] sm:$0xff] %v968
  %1038 = vst [vmem:[%s3 + $0x38] sm:$0xff] %v970
  %1039 = vst [vmem:[%s3 + $0x40] sm:$0xff] %v973
  %1040 = vst [vmem:[%s3 + $0x48] sm:$0xff] %v975
  %1041 = vst [vmem:[%s3 + $0x50] sm:$0xff] %v978
  %1042 = vst [vmem:[%s3 + $0x58] sm:$0xff] %v980
  %1043 = vst [vmem:[%s3 + $0x60] sm:$0xff] %v983
  %1044 = vst [vmem:[%s3 + $0x68] sm:$0xff] %v985
  %1045 = vst [vmem:[%s3 + $0x70] sm:$0xff] %v988
  %1046 = vst [vmem:[%s3 + $0x78] sm:$0xff] %v990
  %1047 = vst [vmem:[%s3 + $0x80] sm:$0xff] %v993
  %1048 = vst [vmem:[%s3 + $0x88] sm:$0xff] %v995
  %1049 = vst [vmem:[%s3 + $0x90] sm:$0xff] %v998
  %1050 = vst [vmem:[%s3 + $0x98] sm:$0xff] %v1000
  %1051 = vst [vmem:[%s3 + $0xa0] sm:$0xff] %v1003
  %1052 = vst [vmem:[%s3 + $0xa8] sm:$0xff] %v1005
  %1053 = vst [vmem:[%s3 + $0xb0] sm:$0xff] %v1008
  %1054 = vst [vmem:[%s3 + $0xb8] sm:$0xff] %v1010
  %1055 = vst [vmem:[%s3 + $0xc0] sm:$0xff] %v1013
  %1056 = vst [vmem:[%s3 + $0xc8] sm:$0xff] %v1015
  %1057 = vst [vmem:[%s3 + $0xd0] sm:$0xff] %v1018
  %1058 = vst [vmem:[%s3 + $0xd8] sm:$0xff] %v1020
  %1059 = vst [vmem:[%s3 + $0xe0] sm:$0xff] %v1023
  %1060 = vst [vmem:[%s3 + $0xe8] sm:$0xff] %v1025
  %1061 = vst [vmem:[%s3 + $0xf0] sm:$0x3] %v1028
  // Predicated region
  $region14: #{dqn_forward.4} parent=0 // pred_check
    _
  $region15: #{dqn_forward.4} parent=0 // pred_check_branch
    %1063 = sbr.rel (0) target = $region17
  $region16: #{dqn_forward.4} parent=0 // pred_region
    _
  $region17: #{dqn_forward.4} parent=0 // pred_fallthru
    _
  // Predicated region
  $region18: #{dqn_forward.4} parent=0 // pred_check
    _
  $region19: #{dqn_forward.4} parent=0 // pred_check_branch
    %1065 = sbr.rel (0) target = $region21
  $region20: #{dqn_forward.4} parent=0 // pred_region
    _
  $region21: #{dqn_forward.4} parent=0 // pred_fallthru
    _

// kernel: dqn_forward.5
$region0: #{dqn_forward.5}
  #allocation0 [shape = 'u32[]', space=smem, size = 0x4, offset = 0x4, fixed_abs, tag = 'smem constant byte address 0x4 - core index']
  #allocation1 [shape = 'u32[72,128]{1,0:T(1,128)}', space=vmem, size = 0x9000, scoped, tag = 'internal scratch']
  #allocation2 [shape = 'f32[2,128]{1,0:T(2,128)}', space=vmem, size = 0x400, scoped, tag = 'scratch operand']
  %s0 = inlined_call_operand.vmem [shape: f32[2,3488], index: 0, kind: input, shape index: {}]
  %s1 = inlined_call_operand.vmem [shape: bf16[3488,1024], index: 1, kind: input, shape index: {}]
  %s2 = inlined_call_operand.vmem [shape: f32[1,1024], index: 2, kind: input, shape index: {}]
  %s3 = inlined_call_operand.vmem [shape: bf16[1024,128], index: 3, kind: input, shape index: {}]
  %s4 = inlined_call_operand.vmem [shape: f32[1,128], index: 4, kind: input, shape index: {}]
  %s5 = inlined_call_operand.hbm [shape: f32[2,128], index: 5, kind: output, shape index: {}]
  %s6 = sld [smem:[#allocation0]]
  $region113: #{dqn_forward.5} parent=0
    _
  %s8 = ssub.s32 1, %s6
  %s9 = scalar_select 0, %s8, %s6
  $region1: #{dqn_forward.5} parent=0
    #allocation3 [shape = 'u8[3571712]{0}', space=vmem, size = 0x368000, scoped, tag = 'input window, operand 1']
    #allocation4 [shape = 'u8[1024]{0}', space=vmem, size = 0x400, scoped, tag = 'output window, operand 0, single buffered']
    #allocation5 [shape = 's32[2]{0}', space=sflag, size = 0x8, scoped, tag = 'scoped memory for dqn_forward.5']
    %10 = vsyncpa [#allocation5], 0
    loop: start=0, step=1, limit=6
    $region2: #{dqn_forward.5} parent=1 // loop_pre_header
      _
    $region3: #{dqn_forward.5} parent=1 // loop_header
      %s12 = sphi 0, %s16
      %p13 = scmp.ge.s32.totalorder %s12, 6
      %s20 = sphi 0, %s20
      %s22 = sphi 0, %s20
      %s23 = sphi 0, %s22
      %s37 = sphi 0, %s23
      %s43 = sphi 0, %s45
      %s46 = sphi 0, %s43
      %s47 = sphi 0, %s46
      %s63 = sphi 0, %s47
      %s69 = sphi 0, %s71
      %s72 = sphi 0, %s69
      %s73 = sphi 0, %s72
      %s89 = sphi 0, %s73
      %s95 = sphi 0, %s97
      %s98 = sphi 0, %s95
      %s99 = sphi 0, %s98
      %s115 = sphi 0, %s99
      %s119 = sphi 0, %s119
      %s121 = sphi 0, %s119
      %s122 = sphi 0, %s121
      %s136 = sphi 0, %s122
      %s140 = sphi 0, %s140
      %s142 = sphi 0, %s140
      %s143 = sphi 0, %s142
      %s157 = sphi 0, %s143
    $region4: #{dqn_forward.5} parent=1 // loop_header_branch
      %15 = sbr.rel (%p13) target = $region8
    $region5: #{dqn_forward.5} parent=1 // loop_body
      %s17 = ssub.s32 %s12, 1
      %s18 = ssub.s32 %s12, 2
      %s19 = sadd.s32 %s12, 1
      %s21 = sadd.s32 %s20, 1
      %p24 = scmp.eq.s32.totalorder %s12, 3
      %p25 = scmp.ne.s32.totalorder %s20, %s22
      %p26 = scmp.eq.s32.totalorder %s12, 0
      %p27 = por %p25, %p26
      %p28 = scmp.ne.s32.totalorder %s20, %s22
      %p29 = scmp.eq.s32.totalorder %s17, 3
      %p30 = por %p28, %p29
      %p31 = scmp.ne.s32.totalorder %s22, %s23
      %p32 = scmp.eq.s32.totalorder %s17, 0
      %p33 = por %p31, %p32
      %p34 = scmp.ne.s32.totalorder %s22, %s23
      %p35 = scmp.eq.s32.totalorder %s18, 3
      %p36 = por %p34, %p35
      %p38 = scmp.ne.s32.totalorder %s23, %s37
      %p39 = scmp.eq.s32.totalorder %s18, 0
      %p40 = por %p38, %p39
      %s41 = ssub.s32 %s12, %s19
      %p42 = scmp.eq.s32.totalorder %s41, 0
      %s44 = sadd.s32 %s43, 1
      %s45 = scalar_select %p42, %s43, %s44
      %p48 = pneg %p42
      %p49 = scmp.eq.s32.totalorder %s12, 3
      %p50 = por %p48, %p49
      %p51 = scmp.ne.s32.totalorder %s43, %s46
      %p52 = scmp.eq.s32.totalorder %s12, 0
      %p53 = por %p51, %p52
      %p54 = scmp.ne.s32.totalorder %s43, %s46
      %p55 = scmp.eq.s32.totalorder %s17, 3
      %p56 = por %p54, %p55
      %p57 = scmp.ne.s32.totalorder %s46, %s47
      %p58 = scmp.eq.s32.totalorder %s17, 0
      %p59 = por %p57, %p58
      %p60 = scmp.ne.s32.totalorder %s46, %s47
      %p61 = scmp.eq.s32.totalorder %s18, 3
      %p62 = por %p60, %p61
      %p64 = scmp.ne.s32.totalorder %s47, %s63
      %p65 = scmp.eq.s32.totalorder %s18, 0
      %p66 = por %p64, %p65
      %s67 = ssub.s32 %s12, %s19
      %p68 = scmp.eq.s32.totalorder %s67, 0
      %s70 = sadd.s32 %s69, 1
      %s71 = scalar_select %p68, %s69, %s70
      %p74 = pneg %p68
      %p75 = scmp.eq.s32.totalorder %s12, 3
      %p76 = por %p74, %p75
      %p77 = scmp.ne.s32.totalorder %s69, %s72
      %p78 = scmp.eq.s32.totalorder %s12, 0
      %p79 = por %p77, %p78
      %p80 = scmp.ne.s32.totalorder %s69, %s72
      %p81 = scmp.eq.s32.totalorder %s17, 3
      %p82 = por %p80, %p81
      %p83 = scmp.ne.s32.totalorder %s72, %s73
      %p84 = scmp.eq.s32.totalorder %s17, 0
      %p85 = por %p83, %p84
      %p86 = scmp.ne.s32.totalorder %s72, %s73
      %p87 = scmp.eq.s32.totalorder %s18, 3
      %p88 = por %p86, %p87
      %p90 = scmp.ne.s32.totalorder %s73, %s89
      %p91 = scmp.eq.s32.totalorder %s18, 0
      %p92 = por %p90, %p91
      %s93 = ssub.s32 %s12, %s19
      %p94 = scmp.eq.s32.totalorder %s93, 0
      %s96 = sadd.s32 %s95, 1
      %s97 = scalar_select %p94, %s95, %s96
      %p100 = pneg %p94
      %p101 = scmp.eq.s32.totalorder %s12, 3
      %p102 = por %p100, %p101
      %p103 = scmp.ne.s32.totalorder %s95, %s98
      %p104 = scmp.eq.s32.totalorder %s12, 0
      %p105 = por %p103, %p104
      %p106 = scmp.ne.s32.totalorder %s95, %s98
      %p107 = scmp.eq.s32.totalorder %s17, 3
      %p108 = por %p106, %p107
      %p109 = scmp.ne.s32.totalorder %s98, %s99
      %p110 = scmp.eq.s32.totalorder %s17, 0
      %p111 = por %p109, %p110
      %p112 = scmp.ne.s32.totalorder %s98, %s99
      %p113 = scmp.eq.s32.totalorder %s18, 3
      %p114 = por %p112, %p113
      %p116 = scmp.ne.s32.totalorder %s99, %s115
      %p117 = scmp.eq.s32.totalorder %s18, 0
      %p118 = por %p116, %p117
      %s120 = sadd.s32 %s119, 1
      %p123 = scmp.eq.s32.totalorder %s12, 3
      %p124 = scmp.ne.s32.totalorder %s119, %s121
      %p125 = scmp.eq.s32.totalorder %s12, 0
      %p126 = por %p124, %p125
      %p127 = scmp.ne.s32.totalorder %s119, %s121
      %p128 = scmp.eq.s32.totalorder %s17, 3
      %p129 = por %p127, %p128
      %p130 = scmp.ne.s32.totalorder %s121, %s122
      %p131 = scmp.eq.s32.totalorder %s17, 0
      %p132 = por %p130, %p131
      %p133 = scmp.ne.s32.totalorder %s121, %s122
      %p134 = scmp.eq.s32.totalorder %s18, 3
      %p135 = por %p133, %p134
      %p137 = scmp.ne.s32.totalorder %s122, %s136
      %p138 = scmp.eq.s32.totalorder %s18, 0
      %p139 = por %p137, %p138
      %s141 = sadd.s32 %s140, 1
      %p144 = scmp.eq.s32.totalorder %s12, 3
      %p145 = scmp.ne.s32.totalorder %s140, %s142
      %p146 = scmp.eq.s32.totalorder %s12, 0
      %p147 = por %p145, %p146
      %p148 = scmp.ne.s32.totalorder %s140, %s142
      %p149 = scmp.eq.s32.totalorder %s17, 3
      %p150 = por %p148, %p149
      %p151 = scmp.ne.s32.totalorder %s142, %s143
      %p152 = scmp.eq.s32.totalorder %s17, 0
      %p153 = por %p151, %p152
      %p154 = scmp.ne.s32.totalorder %s142, %s143
      %p155 = scmp.eq.s32.totalorder %s18, 3
      %p156 = por %p154, %p155
      %p158 = scmp.ne.s32.totalorder %s143, %s157
      %p159 = scmp.eq.s32.totalorder %s18, 0
      %p160 = por %p158, %p159
      %p161 = scmp.le.s32.totalorder 1, %s12
      %p162 = scmp.lt.s32.totalorder %s12, 5
      %p163 = pnand %p161, %p162
      %p164 = pneg %p163
      // Predicated region
      $region9: #{dqn_forward.5} parent=5 // pred_check
        _
      $region10: #{dqn_forward.5} parent=5 // pred_check_branch
        %166 = sbr.rel (%p163) target = $region12
      $region11: #{dqn_forward.5} parent=5 // pred_region
        %s167 = ssub.s32 %s12, 1
        // Predicated region
        $region13: #{dqn_forward.5} parent=11 // pred_check
          %p168 = pneg %p33
        $region14: #{dqn_forward.5} parent=11 // pred_check_branch
          %170 = sbr.rel (%p168) target = $region16
        $region15: #{dqn_forward.5} parent=11 // pred_region
          _
        $region16: #{dqn_forward.5} parent=11 // pred_fallthru
          _
        // Predicated region
        $region17: #{dqn_forward.5} parent=11 // pred_check
          %p171 = pneg %p132
        $region18: #{dqn_forward.5} parent=11 // pred_check_branch
          %173 = sbr.rel (%p171) target = $region20
        $region19: #{dqn_forward.5} parent=11 // pred_region
          _
        $region20: #{dqn_forward.5} parent=11 // pred_fallthru
          _
      $region12: #{dqn_forward.5} parent=5 // pred_fallthru
        _
      %p174 = scmp.lt.s32.totalorder %s12, 4
      // Predicated region
      $region21: #{dqn_forward.5} parent=5 // pred_check
        %p175 = pneg %p174
      $region22: #{dqn_forward.5} parent=5 // pred_check_branch
        %177 = sbr.rel (%p175) target = $region24
      $region23: #{dqn_forward.5} parent=5 // pred_region
        // Predicated region
        $region25: #{dqn_forward.5} parent=23 // pred_check
          %p178 = pneg %p53
        $region26: #{dqn_forward.5} parent=23 // pred_check_branch
          %180 = sbr.rel (%p178) target = $region28
        $region27: #{dqn_forward.5} parent=23 // pred_region
          %s181 = sand.u32 %s43, 1
          %s182 = sand.u32 %s43, 1
          %s183 = smul.addr %s182, 3488
          %s184 = scalar_lea.vmem [#allocation3], %s183
          %s185 = smul.u32 2, %s12
          %s186 = smul.addr %s185, 4
          %s187 = scalar_lea.vmem %s1, %s186
          // Predicated region
          $region29: #{dqn_forward.5} parent=27 // pred_check
            _
          $region30: #{dqn_forward.5} parent=27 // pred_check_branch
            %189 = sbr.rel (0) target = $region32
          $region31: #{dqn_forward.5} parent=27 // pred_region
            // Predicated region
            $region33: #{dqn_forward.5} parent=31 // pred_check
              _
            $region34: #{dqn_forward.5} parent=31 // pred_check_branch
              %191 = sbr.rel (0) target = $region36
            $region35: #{dqn_forward.5} parent=31 // pred_region
              // Predicated region
              $region48: #{dqn_forward.5} parent=35 // pred_check
                _
              $region49: #{dqn_forward.5} parent=35 // pred_check_branch
                %1077 = sbr.rel (0) target = $region51
              $region50: #{dqn_forward.5} parent=35 // pred_region
                loop: start=0, step=1, limit=1
                $region52: #{dqn_forward.5} parent=50 // loop_pre_header
                  _
                $region53: #{dqn_forward.5} parent=50 // loop_header
                  %s1079 = sphi 0, %s1083
                  %p1080 = scmp.ge.s32.totalorder %s1079, 1
                  %s1084 = sphi 0, %s1961
                  %s1085 = sphi %s187, %s1964
                  %s1086 = sphi %s184, %s1965
                $region54: #{dqn_forward.5} parent=50 // loop_header_branch
                  %1082 = sbr.rel (%p1080) target = $region58
                $region55: #{dqn_forward.5} parent=50 // loop_body
                  %v1087 = vld [vmem:[%s1085] sm:$0xff]
                  %1088 = vst [vmem:[%s1086] sm:$0xff] %v1087
                  %v1089 = vld [vmem:[%s1085 + $0x20] sm:$0xff]
                  %1090 = vst [vmem:[%s1086 + $0x8] sm:$0xff] %v1089
                  %v1091 = vld [vmem:[%s1085 + $0x40] sm:$0xff]
                  %1092 = vst [vmem:[%s1086 + $0x10] sm:$0xff] %v1091
                  %v1093 = vld [vmem:[%s1085 + $0x60] sm:$0xff]
                  %1094 = vst [vmem:[%s1086 + $0x18] sm:$0xff] %v1093
                  %v1095 = vld [vmem:[%s1085 + $0x80] sm:$0xff]
                  %1096 = vst [vmem:[%s1086 + $0x20] sm:$0xff] %v1095
                  %v1097 = vld [vmem:[%s1085 + $0xa0] sm:$0xff]
                  %1098 = vst [vmem:[%s1086 + $0x28] sm:$0xff] %v1097
                  %v1099 = vld [vmem:[%s1085 + $0xc0] sm:$0xff]
                  %1100 = vst [vmem:[%s1086 + $0x30] sm:$0xff] %v1099
                  %v1101 = vld [vmem:[%s1085 + $0xe0] sm:$0xff]
                  %1102 = vst [vmem:[%s1086 + $0x38] sm:$0xff] %v1101
                  %v1103 = vld [vmem:[%s1085 + $0x100] sm:$0xff]
                  %1104 = vst [vmem:[%s1086 + $0x40] sm:$0xff] %v1103
                  %v1105 = vld [vmem:[%s1085 + $0x120] sm:$0xff]
                  %1106 = vst [vmem:[%s1086 + $0x48] sm:$0xff] %v1105
                  %v1107 = vld [vmem:[%s1085 + $0x140] sm:$0xff]
                  %1108 = vst [vmem:[%s1086 + $0x50] sm:$0xff] %v1107
                  %v1109 = vld [vmem:[%s1085 + $0x160] sm:$0xff]
                  %1110 = vst [vmem:[%s1086 + $0x58] sm:$0xff] %v1109
                  %v1111 = vld [vmem:[%s1085 + $0x180] sm:$0xff]
                  %1112 = vst [vmem:[%s1086 + $0x60] sm:$0xff] %v1111
                  %v1113 = vld [vmem:[%s1085 + $0x1a0] sm:$0xff]
                  %1114 = vst [vmem:[%s1086 + $0x68] sm:$0xff] %v1113
                  %v1115 = vld [vmem:[%s1085 + $0x1c0] sm:$0xff]
                  %1116 = vst [vmem:[%s1086 + $0x70] sm:$0xff] %v1115
                  %v1117 = vld [vmem:[%s1085 + $0x1e0] sm:$0xff]
                  %1118 = vst [vmem:[%s1086 + $0x78] sm:$0xff] %v1117
                  %v1119 = vld [vmem:[%s1085 + $0x200] sm:$0xff]
                  %1120 = vst [vmem:[%s1086 + $0x80] sm:$0xff] %v1119
                  %v1121 = vld [vmem:[%s1085 + $0x220] sm:$0xff]
                  %1122 = vst [vmem:[%s1086 + $0x88] sm:$0xff] %v1121
                  %v1123 = vld [vmem:[%s1085 + $0x240] sm:$0xff]
                  %1124 = vst [vmem:[%s1086 + $0x90] sm:$0xff] %v1123
                  %v1125 = vld [vmem:[%s1085 + $0x260] sm:$0xff]
                  %1126 = vst [vmem:[%s1086 + $0x98] sm:$0xff] %v1125
                  %v1127 = vld [vmem:[%s1085 + $0x280] sm:$0xff]
                  %1128 = vst [vmem:[%s1086 + $0xa0] sm:$0xff] %v1127
                  %v1129 = vld [vmem:[%s1085 + $0x2a0] sm:$0xff]
                  %1130 = vst [vmem:[%s1086 + $0xa8] sm:$0xff] %v1129
                  %v1131 = vld [vmem:[%s1085 + $0x2c0] sm:$0xff]
                  %1132 = vst [vmem:[%s1086 + $0xb0] sm:$0xff] %v1131
                  %v1133 = vld [vmem:[%s1085 + $0x2e0] sm:$0xff]
                  %1134 = vst [vmem:[%s1086 + $0xb8] sm:$0xff] %v1133
                  %v1135 = vld [vmem:[%s1085 + $0x300] sm:$0xff]
                  %1136 = vst [vmem:[%s1086 + $0xc0] sm:$0xff] %v1135
                  %v1137 = vld [vmem:[%s1085 + $0x320] sm:$0xff]
                  %1138 = vst [vmem:[%s1086 + $0xc8] sm:$0xff] %v1137
                  %v1139 = vld [vmem:[%s1085 + $0x340] sm:$0xff]
                  %1140 = vst [vmem:[%s1086 + $0xd0] sm:$0xff] %v1139
                  %v1141 = vld [vmem:[%s1085 + $0x360] sm:$0xff]
                  %1142 = vst [vmem:[%s1086 + $0xd8] sm:$0xff] %v1141
                  %v1143 = vld [vmem:[%s1085 + $0x380] sm:$0xff]
                  %1144 = vst [vmem:[%s1086 + $0xe0] sm:$0xff] %v1143
                  %v1145 = vld [vmem:[%s1085 + $0x3a0] sm:$0xff]
                  %1146 = vst [vmem:[%s1086 + $0xe8] sm:$0xff] %v1145
                  %v1147 = vld [vmem:[%s1085 + $0x3c0] sm:$0xff]
                  %1148 = vst [vmem:[%s1086 + $0xf0] sm:$0xff] %v1147
                  %v1149 = vld [vmem:[%s1085 + $0x3e0] sm:$0xff]
                  %1150 = vst [vmem:[%s1086 + $0xf8] sm:$0xff] %v1149
                  %v1151 = vld [vmem:[%s1085 + $0x400] sm:$0xff]
                  %1152 = vst [vmem:[%s1086 + $0x100] sm:$0xff] %v1151
                  %v1153 = vld [vmem:[%s1085 + $0x420] sm:$0xff]
                  %1154 = vst [vmem:[%s1086 + $0x108] sm:$0xff] %v1153
                  %v1155 = vld [vmem:[%s1085 + $0x440] sm:$0xff]
                  %1156 = vst [vmem:[%s1086 + $0x110] sm:$0xff] %v1155
                  %v1157 = vld [vmem:[%s1085 + $0x460] sm:$0xff]
                  %1158 = vst [vmem:[%s1086 + $0x118] sm:$0xff] %v1157
                  %v1159 = vld [vmem:[%s1085 + $0x480] sm:$0xff]
                  %1160 = vst [vmem:[%s1086 + $0x120] sm:$0xff] %v1159
                  %v1161 = vld [vmem:[%s1085 + $0x4a0] sm:$0xff]
                  %1162 = vst [vmem:[%s1086 + $0x128] sm:$0xff] %v1161
                  %v1163 = vld [vmem:[%s1085 + $0x4c0] sm:$0xff]
                  %1164 = vst [vmem:[%s1086 + $0x130] sm:$0xff] %v1163
                  %v1165 = vld [vmem:[%s1085 + $0x4e0] sm:$0xff]
                  %1166 = vst [vmem:[%s1086 + $0x138] sm:$0xff] %v1165
                  %v1167 = vld [vmem:[%s1085 + $0x500] sm:$0xff]
                  %1168 = vst [vmem:[%s1086 + $0x140] sm:$0xff] %v1167
                  %v1169 = vld [vmem:[%s1085 + $0x520] sm:$0xff]
                  %1170 = vst [vmem:[%s1086 + $0x148] sm:$0xff] %v1169
                  %v1171 = vld [vmem:[%s1085 + $0x540] sm:$0xff]
                  %1172 = vst [vmem:[%s1086 + $0x150] sm:$0xff] %v1171
                  %v1173 = vld [vmem:[%s1085 + $0x560] sm:$0xff]
                  %1174 = vst [vmem:[%s1086 + $0x158] sm:$0xff] %v1173
                  %v1175 = vld [vmem:[%s1085 + $0x580] sm:$0xff]
                  %1176 = vst [vmem:[%s1086 + $0x160] sm:$0xff] %v1175
                  %v1177 = vld [vmem:[%s1085 + $0x5a0] sm:$0xff]
                  %1178 = vst [vmem:[%s1086 + $0x168] sm:$0xff] %v1177
                  %v1179 = vld [vmem:[%s1085 + $0x5c0] sm:$0xff]
                  %1180 = vst [vmem:[%s1086 + $0x170] sm:$0xff] %v1179
                  %v1181 = vld [vmem:[%s1085 + $0x5e0] sm:$0xff]
                  %1182 = vst [vmem:[%s1086 + $0x178] sm:$0xff] %v1181
                  %v1183 = vld [vmem:[%s1085 + $0x600] sm:$0xff]
                  %1184 = vst [vmem:[%s1086 + $0x180] sm:$0xff] %v1183
                  %v1185 = vld [vmem:[%s1085 + $0x620] sm:$0xff]
                  %1186 = vst [vmem:[%s1086 + $0x188] sm:$0xff] %v1185
                  %v1187 = vld [vmem:[%s1085 + $0x640] sm:$0xff]
                  %1188 = vst [vmem:[%s1086 + $0x190] sm:$0xff] %v1187
                  %v1189 = vld [vmem:[%s1085 + $0x660] sm:$0xff]
                  %1190 = vst [vmem:[%s1086 + $0x198] sm:$0xff] %v1189
                  %v1191 = vld [vmem:[%s1085 + $0x680] sm:$0xff]
                  %1192 = vst [vmem:[%s1086 + $0x1a0] sm:$0xff] %v1191
                  %v1193 = vld [vmem:[%s1085 + $0x6a0] sm:$0xff]
                  %1194 = vst [vmem:[%s1086 + $0x1a8] sm:$0xff] %v1193
                  %v1195 = vld [vmem:[%s1085 + $0x6c0] sm:$0xff]
                  %1196 = vst [vmem:[%s1086 + $0x1b0] sm:$0xff] %v1195
                  %v1197 = vld [vmem:[%s1085 + $0x6e0] sm:$0xff]
                  %1198 = vst [vmem:[%s1086 + $0x1b8] sm:$0xff] %v1197
                  %v1199 = vld [vmem:[%s1085 + $0x700] sm:$0xff]
                  %1200 = vst [vmem:[%s1086 + $0x1c0] sm:$0xff] %v1199
                  %v1201 = vld [vmem:[%s1085 + $0x720] sm:$0xff]
                  %1202 = vst [vmem:[%s1086 + $0x1c8] sm:$0xff] %v1201
                  %v1203 = vld [vmem:[%s1085 + $0x740] sm:$0xff]
                  %1204 = vst [vmem:[%s1086 + $0x1d0] sm:$0xff] %v1203
                  %v1205 = vld [vmem:[%s1085 + $0x760] sm:$0xff]
                  %1206 = vst [vmem:[%s1086 + $0x1d8] sm:$0xff] %v1205
                  %v1207 = vld [vmem:[%s1085 + $0x780] sm:$0xff]
                  %1208 = vst [vmem:[%s1086 + $0x1e0] sm:$0xff] %v1207
                  %v1209 = vld [vmem:[%s1085 + $0x7a0] sm:$0xff]
                  %1210 = vst [vmem:[%s1086 + $0x1e8] sm:$0xff] %v1209
                  %v1211 = vld [vmem:[%s1085 + $0x7c0] sm:$0xff]
                  %1212 = vst [vmem:[%s1086 + $0x1f0] sm:$0xff] %v1211
                  %v1213 = vld [vmem:[%s1085 + $0x7e0] sm:$0xff]
                  %1214 = vst [vmem:[%s1086 + $0x1f8] sm:$0xff] %v1213
                  %v1215 = vld [vmem:[%s1085 + $0x800] sm:$0xff]
                  %1216 = vst [vmem:[%s1086 + $0x200] sm:$0xff] %v1215
                  %v1217 = vld [vmem:[%s1085 + $0x820] sm:$0xff]
                  %1218 = vst [vmem:[%s1086 + $0x208] sm:$0xff] %v1217
                  %v1219 = vld [vmem:[%s1085 + $0x840] sm:$0xff]
                  %1220 = vst [vmem:[%s1086 + $0x210] sm:$0xff] %v1219
                  %v1221 = vld [vmem:[%s1085 + $0x860] sm:$0xff]
                  %1222 = vst [vmem:[%s1086 + $0x218] sm:$0xff] %v1221
                  %v1223 = vld [vmem:[%s1085 + $0x880] sm:$0xff]
                  %1224 = vst [vmem:[%s1086 + $0x220] sm:$0xff] %v1223
                  %v1225 = vld [vmem:[%s1085 + $0x8a0] sm:$0xff]
                  %1226 = vst [vmem:[%s1086 + $0x228] sm:$0xff] %v1225
                  %v1227 = vld [vmem:[%s1085 + $0x8c0] sm:$0xff]
                  %1228 = vst [vmem:[%s1086 + $0x230] sm:$0xff] %v1227
                  %v1229 = vld [vmem:[%s1085 + $0x8e0] sm:$0xff]
                  %1230 = vst [vmem:[%s1086 + $0x238] sm:$0xff] %v1229
                  %v1231 = vld [vmem:[%s1085 + $0x900] sm:$0xff]
                  %1232 = vst [vmem:[%s1086 + $0x240] sm:$0xff] %v1231
                  %v1233 = vld [vmem:[%s1085 + $0x920] sm:$0xff]
                  %1234 = vst [vmem:[%s1086 + $0x248] sm:$0xff] %v1233
                  %v1235 = vld [vmem:[%s1085 + $0x940] sm:$0xff]
                  %1236 = vst [vmem:[%s1086 + $0x250] sm:$0xff] %v1235
                  %v1237 = vld [vmem:[%s1085 + $0x960] sm:$0xff]
                  %1238 = vst [vmem:[%s1086 + $0x258] sm:$0xff] %v1237
                  %v1239 = vld [vmem:[%s1085 + $0x980] sm:$0xff]
                  %1240 = vst [vmem:[%s1086 + $0x260] sm:$0xff] %v1239
                  %v1241 = vld [vmem:[%s1085 + $0x9a0] sm:$0xff]
                  %1242 = vst [vmem:[%s1086 + $0x268] sm:$0xff] %v1241
                  %v1243 = vld [vmem:[%s1085 + $0x9c0] sm:$0xff]
                  %1244 = vst [vmem:[%s1086 + $0x270] sm:$0xff] %v1243
                  %v1245 = vld [vmem:[%s1085 + $0x9e0] sm:$0xff]
                  %1246 = vst [vmem:[%s1086 + $0x278] sm:$0xff] %v1245
                  %v1247 = vld [vmem:[%s1085 + $0xa00] sm:$0xff]
                  %1248 = vst [vmem:[%s1086 + $0x280] sm:$0xff] %v1247
                  %v1249 = vld [vmem:[%s1085 + $0xa20] sm:$0xff]
                  %1250 = vst [vmem:[%s1086 + $0x288] sm:$0xff] %v1249
                  %v1251 = vld [vmem:[%s1085 + $0xa40] sm:$0xff]
                  %1252 = vst [vmem:[%s1086 + $0x290] sm:$0xff] %v1251
                  %v1253 = vld [vmem:[%s1085 + $0xa60] sm:$0xff]
                  %1254 = vst [vmem:[%s1086 + $0x298] sm:$0xff] %v1253
                  %v1255 = vld [vmem:[%s1085 + $0xa80] sm:$0xff]
                  %1256 = vst [vmem:[%s1086 + $0x2a0] sm:$0xff] %v1255
                  %v1257 = vld [vmem:[%s1085 + $0xaa0] sm:$0xff]
                  %1258 = vst [vmem:[%s1086 + $0x2a8] sm:$0xff] %v1257
                  %v1259 = vld [vmem:[%s1085 + $0xac0] sm:$0xff]
                  %1260 = vst [vmem:[%s1086 + $0x2b0] sm:$0xff] %v1259
                  %v1261 = vld [vmem:[%s1085 + $0xae0] sm:$0xff]
                  %1262 = vst [vmem:[%s1086 + $0x2b8] sm:$0xff] %v1261
                  %v1263 = vld [vmem:[%s1085 + $0xb00] sm:$0xff]
                  %1264 = vst [vmem:[%s1086 + $0x2c0] sm:$0xff] %v1263
                  %v1265 = vld [vmem:[%s1085 + $0xb20] sm:$0xff]
                  %1266 = vst [vmem:[%s1086 + $0x2c8] sm:$0xff] %v1265
                  %v1267 = vld [vmem:[%s1085 + $0xb40] sm:$0xff]
                  %1268 = vst [vmem:[%s1086 + $0x2d0] sm:$0xff] %v1267
                  %v1269 = vld [vmem:[%s1085 + $0xb60] sm:$0xff]
                  %1270 = vst [vmem:[%s1086 + $0x2d8] sm:$0xff] %v1269
                  %v1271 = vld [vmem:[%s1085 + $0xb80] sm:$0xff]
                  %1272 = vst [vmem:[%s1086 + $0x2e0] sm:$0xff] %v1271
                  %v1273 = vld [vmem:[%s1085 + $0xba0] sm:$0xff]
                  %1274 = vst [vmem:[%s1086 + $0x2e8] sm:$0xff] %v1273
                  %v1275 = vld [vmem:[%s1085 + $0xbc0] sm:$0xff]
                  %1276 = vst [vmem:[%s1086 + $0x2f0] sm:$0xff] %v1275
                  %v1277 = vld [vmem:[%s1085 + $0xbe0] sm:$0xff]
                  %1278 = vst [vmem:[%s1086 + $0x2f8] sm:$0xff] %v1277
                  %v1279 = vld [vmem:[%s1085 + $0xc00] sm:$0xff]
                  %1280 = vst [vmem:[%s1086 + $0x300] sm:$0xff] %v1279
                  %v1281 = vld [vmem:[%s1085 + $0xc20] sm:$0xff]
                  %1282 = vst [vmem:[%s1086 + $0x308] sm:$0xff] %v1281
                  %v1283 = vld [vmem:[%s1085 + $0xc40] sm:$0xff]
                  %1284 = vst [vmem:[%s1086 + $0x310] sm:$0xff] %v1283
                  %v1285 = vld [vmem:[%s1085 + $0xc60] sm:$0xff]
                  %1286 = vst [vmem:[%s1086 + $0x318] sm:$0xff] %v1285
                  %v1287 = vld [vmem:[%s1085 + $0xc80] sm:$0xff]
                  %1288 = vst [vmem:[%s1086 + $0x320] sm:$0xff] %v1287
                  %v1289 = vld [vmem:[%s1085 + $0xca0] sm:$0xff]
                  %1290 = vst [vmem:[%s1086 + $0x328] sm:$0xff] %v1289
                  %v1291 = vld [vmem:[%s1085 + $0xcc0] sm:$0xff]
                  %1292 = vst [vmem:[%s1086 + $0x330] sm:$0xff] %v1291
                  %v1293 = vld [vmem:[%s1085 + $0xce0] sm:$0xff]
                  %1294 = vst [vmem:[%s1086 + $0x338] sm:$0xff] %v1293
                  %v1295 = vld [vmem:[%s1085 + $0xd00] sm:$0xff]
                  %1296 = vst [vmem:[%s1086 + $0x340] sm:$0xff] %v1295
                  %v1297 = vld [vmem:[%s1085 + $0xd20] sm:$0xff]
                  %1298 = vst [vmem:[%s1086 + $0x348] sm:$0xff] %v1297
                  %v1299 = vld [vmem:[%s1085 + $0xd40] sm:$0xff]
                  %1300 = vst [vmem:[%s1086 + $0x350] sm:$0xff] %v1299
                  %v1301 = vld [vmem:[%s1085 + $0xd60] sm:$0xff]
                  %1302 = vst [vmem:[%s1086 + $0x358] sm:$0xff] %v1301
                  %v1303 = vld [vmem:[%s1085 + $0xd80] sm:$0xff]
                  %1304 = vst [vmem:[%s1086 + $0x360] sm:$0xff] %v1303
                  %v1305 = vld [vmem:[%s1085 + $0xda0] sm:$0xff]
                  %1306 = vst [vmem:[%s1086 + $0x368] sm:$0xff] %v1305
                  %v1307 = vld [vmem:[%s1085 + $0xdc0] sm:$0xff]
                  %1308 = vst [vmem:[%s1086 + $0x370] sm:$0xff] %v1307
                  %v1309 = vld [vmem:[%s1085 + $0xde0] sm:$0xff]
                  %1310 = vst [vmem:[%s1086 + $0x378] sm:$0xff] %v1309
                  %v1311 = vld [vmem:[%s1085 + $0xe00] sm:$0xff]
                  %1312 = vst [vmem:[%s1086 + $0x380] sm:$0xff] %v1311
                  %v1313 = vld [vmem:[%s1085 + $0xe20] sm:$0xff]
                  %1314 = vst [vmem:[%s1086 + $0x388] sm:$0xff] %v1313
                  %v1315 = vld [vmem:[%s1085 + $0xe40] sm:$0xff]
                  %1316 = vst [vmem:[%s1086 + $0x390] sm:$0xff] %v1315
                  %v1317 = vld [vmem:[%s1085 + $0xe60] sm:$0xff]
                  %1318 = vst [vmem:[%s1086 + $0x398] sm:$0xff] %v1317
                  %v1319 = vld [vmem:[%s1085 + $0xe80] sm:$0xff]
                  %1320 = vst [vmem:[%s1086 + $0x3a0] sm:$0xff] %v1319
                  %v1321 = vld [vmem:[%s1085 + $0xea0] sm:$0xff]
                  %1322 = vst [vmem:[%s1086 + $0x3a8] sm:$0xff] %v1321
                  %v1323 = vld [vmem:[%s1085 + $0xec0] sm:$0xff]
                  %1324 = vst [vmem:[%s1086 + $0x3b0] sm:$0xff] %v1323
                  %v1325 = vld [vmem:[%s1085 + $0xee0] sm:$0xff]
                  %1326 = vst [vmem:[%s1086 + $0x3b8] sm:$0xff] %v1325
                  %v1327 = vld [vmem:[%s1085 + $0xf00] sm:$0xff]
                  %1328 = vst [vmem:[%s1086 + $0x3c0] sm:$0xff] %v1327
                  %v1329 = vld [vmem:[%s1085 + $0xf20] sm:$0xff]
                  %1330 = vst [vmem:[%s1086 + $0x3c8] sm:$0xff] %v1329
                  %v1331 = vld [vmem:[%s1085 + $0xf40] sm:$0xff]
                  %1332 = vst [vmem:[%s1086 + $0x3d0] sm:$0xff] %v1331
                  %v1333 = vld [vmem:[%s1085 + $0xf60] sm:$0xff]
                  %1334 = vst [vmem:[%s1086 + $0x3d8] sm:$0xff] %v1333
                  %v1335 = vld [vmem:[%s1085 + $0xf80] sm:$0xff]
                  %1336 = vst [vmem:[%s1086 + $0x3e0] sm:$0xff] %v1335
                  %v1337 = vld [vmem:[%s1085 + $0xfa0] sm:$0xff]
                  %1338 = vst [vmem:[%s1086 + $0x3e8] sm:$0xff] %v1337
                  %v1339 = vld [vmem:[%s1085 + $0xfc0] sm:$0xff]
                  %1340 = vst [vmem:[%s1086 + $0x3f0] sm:$0xff] %v1339
                  %v1341 = vld [vmem:[%s1085 + $0xfe0] sm:$0xff]
                  %1342 = vst [vmem:[%s1086 + $0x3f8] sm:$0xff] %v1341
                  %v1343 = vld [vmem:[%s1085 + $0x1000] sm:$0xff]
                  %1344 = vst [vmem:[%s1086 + $0x400] sm:$0xff] %v1343
                  %v1345 = vld [vmem:[%s1085 + $0x1020] sm:$0xff]
                  %1346 = vst [vmem:[%s1086 + $0x408] sm:$0xff] %v1345
                  %v1347 = vld [vmem:[%s1085 + $0x1040] sm:$0xff]
                  %1348 = vst [vmem:[%s1086 + $0x410] sm:$0xff] %v1347
                  %v1349 = vld [vmem:[%s1085 + $0x1060] sm:$0xff]
                  %1350 = vst [vmem:[%s1086 + $0x418] sm:$0xff] %v1349
                  %v1351 = vld [vmem:[%s1085 + $0x1080] sm:$0xff]
                  %1352 = vst [vmem:[%s1086 + $0x420] sm:$0xff] %v1351
                  %v1353 = vld [vmem:[%s1085 + $0x10a0] sm:$0xff]
                  %1354 = vst [vmem:[%s1086 + $0x428] sm:$0xff] %v1353
                  %v1355 = vld [vmem:[%s1085 + $0x10c0] sm:$0xff]
                  %1356 = vst [vmem:[%s1086 + $0x430] sm:$0xff] %v1355
                  %v1357 = vld [vmem:[%s1085 + $0x10e0] sm:$0xff]
                  %1358 = vst [vmem:[%s1086 + $0x438] sm:$0xff] %v1357
                  %v1359 = vld [vmem:[%s1085 + $0x1100] sm:$0xff]
                  %1360 = vst [vmem:[%s1086 + $0x440] sm:$0xff] %v1359
                  %v1361 = vld [vmem:[%s1085 + $0x1120] sm:$0xff]
                  %1362 = vst [vmem:[%s1086 + $0x448] sm:$0xff] %v1361
                  %v1363 = vld [vmem:[%s1085 + $0x1140] sm:$0xff]
                  %1364 = vst [vmem:[%s1086 + $0x450] sm:$0xff] %v1363
                  %v1365 = vld [vmem:[%s1085 + $0x1160] sm:$0xff]
                  %1366 = vst [vmem:[%s1086 + $0x458] sm:$0xff] %v1365
                  %v1367 = vld [vmem:[%s1085 + $0x1180] sm:$0xff]
                  %1368 = vst [vmem:[%s1086 + $0x460] sm:$0xff] %v1367
                  %v1369 = vld [vmem:[%s1085 + $0x11a0] sm:$0xff]
                  %1370 = vst [vmem:[%s1086 + $0x468] sm:$0xff] %v1369
                  %v1371 = vld [vmem:[%s1085 + $0x11c0] sm:$0xff]
                  %1372 = vst [vmem:[%s1086 + $0x470] sm:$0xff] %v1371
                  %v1373 = vld [vmem:[%s1085 + $0x11e0] sm:$0xff]
                  %1374 = vst [vmem:[%s1086 + $0x478] sm:$0xff] %v1373
                  %v1375 = vld [vmem:[%s1085 + $0x1200] sm:$0xff]
                  %1376 = vst [vmem:[%s1086 + $0x480] sm:$0xff] %v1375
                  %v1377 = vld [vmem:[%s1085 + $0x1220] sm:$0xff]
                  %1378 = vst [vmem:[%s1086 + $0x488] sm:$0xff] %v1377
                  %v1379 = vld [vmem:[%s1085 + $0x1240] sm:$0xff]
                  %1380 = vst [vmem:[%s1086 + $0x490] sm:$0xff] %v1379
                  %v1381 = vld [vmem:[%s1085 + $0x1260] sm:$0xff]
                  %1382 = vst [vmem:[%s1086 + $0x498] sm:$0xff] %v1381
                  %v1383 = vld [vmem:[%s1085 + $0x1280] sm:$0xff]
                  %1384 = vst [vmem:[%s1086 + $0x4a0] sm:$0xff] %v1383
                  %v1385 = vld [vmem:[%s1085 + $0x12a0] sm:$0xff]
                  %1386 = vst [vmem:[%s1086 + $0x4a8] sm:$0xff] %v1385
                  %v1387 = vld [vmem:[%s1085 + $0x12c0] sm:$0xff]
                  %1388 = vst [vmem:[%s1086 + $0x4b0] sm:$0xff] %v1387
                  %v1389 = vld [vmem:[%s1085 + $0x12e0] sm:$0xff]
                  %1390 = vst [vmem:[%s1086 + $0x4b8] sm:$0xff] %v1389
                  %v1391 = vld [vmem:[%s1085 + $0x1300] sm:$0xff]
                  %1392 = vst [vmem:[%s1086 + $0x4c0] sm:$0xff] %v1391
                  %v1393 = vld [vmem:[%s1085 + $0x1320] sm:$0xff]
                  %1394 = vst [vmem:[%s1086 + $0x4c8] sm:$0xff] %v1393
                  %v1395 = vld [vmem:[%s1085 + $0x1340] sm:$0xff]
                  %1396 = vst [vmem:[%s1086 + $0x4d0] sm:$0xff] %v1395
                  %v1397 = vld [vmem:[%s1085 + $0x1360] sm:$0xff]
                  %1398 = vst [vmem:[%s1086 + $0x4d8] sm:$0xff] %v1397
                  %v1399 = vld [vmem:[%s1085 + $0x1380] sm:$0xff]
                  %1400 = vst [vmem:[%s1086 + $0x4e0] sm:$0xff] %v1399
                  %v1401 = vld [vmem:[%s1085 + $0x13a0] sm:$0xff]
                  %1402 = vst [vmem:[%s1086 + $0x4e8] sm:$0xff] %v1401
                  %v1403 = vld [vmem:[%s1085 + $0x13c0] sm:$0xff]
                  %1404 = vst [vmem:[%s1086 + $0x4f0] sm:$0xff] %v1403
                  %v1405 = vld [vmem:[%s1085 + $0x13e0] sm:$0xff]
                  %1406 = vst [vmem:[%s1086 + $0x4f8] sm:$0xff] %v1405
                  %v1407 = vld [vmem:[%s1085 + $0x1400] sm:$0xff]
                  %1408 = vst [vmem:[%s1086 + $0x500] sm:$0xff] %v1407
                  %v1409 = vld [vmem:[%s1085 + $0x1420] sm:$0xff]
                  %1410 = vst [vmem:[%s1086 + $0x508] sm:$0xff] %v1409
                  %v1411 = vld [vmem:[%s1085 + $0x1440] sm:$0xff]
                  %1412 = vst [vmem:[%s1086 + $0x510] sm:$0xff] %v1411
                  %v1413 = vld [vmem:[%s1085 + $0x1460] sm:$0xff]
                  %1414 = vst [vmem:[%s1086 + $0x518] sm:$0xff] %v1413
                  %v1415 = vld [vmem:[%s1085 + $0x1480] sm:$0xff]
                  %1416 = vst [vmem:[%s1086 + $0x520] sm:$0xff] %v1415
                  %v1417 = vld [vmem:[%s1085 + $0x14a0] sm:$0xff]
                  %1418 = vst [vmem:[%s1086 + $0x528] sm:$0xff] %v1417
                  %v1419 = vld [vmem:[%s1085 + $0x14c0] sm:$0xff]
                  %1420 = vst [vmem:[%s1086 + $0x530] sm:$0xff] %v1419
                  %v1421 = vld [vmem:[%s1085 + $0x14e0] sm:$0xff]
                  %1422 = vst [vmem:[%s1086 + $0x538] sm:$0xff] %v1421
                  %v1423 = vld [vmem:[%s1085 + $0x1500] sm:$0xff]
                  %1424 = vst [vmem:[%s1086 + $0x540] sm:$0xff] %v1423
                  %v1425 = vld [vmem:[%s1085 + $0x1520] sm:$0xff]
                  %1426 = vst [vmem:[%s1086 + $0x548] sm:$0xff] %v1425
                  %v1427 = vld [vmem:[%s1085 + $0x1540] sm:$0xff]
                  %1428 = vst [vmem:[%s1086 + $0x550] sm:$0xff] %v1427
                  %v1429 = vld [vmem:[%s1085 + $0x1560] sm:$0xff]
                  %1430 = vst [vmem:[%s1086 + $0x558] sm:$0xff] %v1429
                  %v1431 = vld [vmem:[%s1085 + $0x1580] sm:$0xff]
                  %1432 = vst [vmem:[%s1086 + $0x560] sm:$0xff] %v1431
                  %v1433 = vld [vmem:[%s1085 + $0x15a0] sm:$0xff]
                  %1434 = vst [vmem:[%s1086 + $0x568] sm:$0xff] %v1433
                  %v1435 = vld [vmem:[%s1085 + $0x15c0] sm:$0xff]
                  %1436 = vst [vmem:[%s1086 + $0x570] sm:$0xff] %v1435
                  %v1437 = vld [vmem:[%s1085 + $0x15e0] sm:$0xff]
                  %1438 = vst [vmem:[%s1086 + $0x578] sm:$0xff] %v1437
                  %v1439 = vld [vmem:[%s1085 + $0x1600] sm:$0xff]
                  %1440 = vst [vmem:[%s1086 + $0x580] sm:$0xff] %v1439
                  %v1441 = vld [vmem:[%s1085 + $0x1620] sm:$0xff]
                  %1442 = vst [vmem:[%s1086 + $0x588] sm:$0xff] %v1441
                  %v1443 = vld [vmem:[%s1085 + $0x1640] sm:$0xff]
                  %1444 = vst [vmem:[%s1086 + $0x590] sm:$0xff] %v1443
                  %v1445 = vld [vmem:[%s1085 + $0x1660] sm:$0xff]
                  %1446 = vst [vmem:[%s1086 + $0x598] sm:$0xff] %v1445
                  %v1447 = vld [vmem:[%s1085 + $0x1680] sm:$0xff]
                  %1448 = vst [vmem:[%s1086 + $0x5a0] sm:$0xff] %v1447
                  %v1449 = vld [vmem:[%s1085 + $0x16a0] sm:$0xff]
                  %1450 = vst [vmem:[%s1086 + $0x5a8] sm:$0xff] %v1449
                  %v1451 = vld [vmem:[%s1085 + $0x16c0] sm:$0xff]
                  %1452 = vst [vmem:[%s1086 + $0x5b0] sm:$0xff] %v1451
                  %v1453 = vld [vmem:[%s1085 + $0x16e0] sm:$0xff]
                  %1454 = vst [vmem:[%s1086 + $0x5b8] sm:$0xff] %v1453
                  %v1455 = vld [vmem:[%s1085 + $0x1700] sm:$0xff]
                  %1456 = vst [vmem:[%s1086 + $0x5c0] sm:$0xff] %v1455
                  %v1457 = vld [vmem:[%s1085 + $0x1720] sm:$0xff]
                  %1458 = vst [vmem:[%s1086 + $0x5c8] sm:$0xff] %v1457
                  %v1459 = vld [vmem:[%s1085 + $0x1740] sm:$0xff]
                  %1460 = vst [vmem:[%s1086 + $0x5d0] sm:$0xff] %v1459
                  %v1461 = vld [vmem:[%s1085 + $0x1760] sm:$0xff]
                  %1462 = vst [vmem:[%s1086 + $0x5d8] sm:$0xff] %v1461
                  %v1463 = vld [vmem:[%s1085 + $0x1780] sm:$0xff]
                  %1464 = vst [vmem:[%s1086 + $0x5e0] sm:$0xff] %v1463
                  %v1465 = vld [vmem:[%s1085 + $0x17a0] sm:$0xff]
                  %1466 = vst [vmem:[%s1086 + $0x5e8] sm:$0xff] %v1465
                  %v1467 = vld [vmem:[%s1085 + $0x17c0] sm:$0xff]
                  %1468 = vst [vmem:[%s1086 + $0x5f0] sm:$0xff] %v1467
                  %v1469 = vld [vmem:[%s1085 + $0x17e0] sm:$0xff]
                  %1470 = vst [vmem:[%s1086 + $0x5f8] sm:$0xff] %v1469
                  %v1471 = vld [vmem:[%s1085 + $0x1800] sm:$0xff]
                  %1472 = vst [vmem:[%s1086 + $0x600] sm:$0xff] %v1471
                  %v1473 = vld [vmem:[%s1085 + $0x1820] sm:$0xff]
                  %1474 = vst [vmem:[%s1086 + $0x608] sm:$0xff] %v1473
                  %v1475 = vld [vmem:[%s1085 + $0x1840] sm:$0xff]
                  %1476 = vst [vmem:[%s1086 + $0x610] sm:$0xff] %v1475
                  %v1477 = vld [vmem:[%s1085 + $0x1860] sm:$0xff]
                  %1478 = vst [vmem:[%s1086 + $0x618] sm:$0xff] %v1477
                  %v1479 = vld [vmem:[%s1085 + $0x1880] sm:$0xff]
                  %1480 = vst [vmem:[%s1086 + $0x620] sm:$0xff] %v1479
                  %v1481 = vld [vmem:[%s1085 + $0x18a0] sm:$0xff]
                  %1482 = vst [vmem:[%s1086 + $0x628] sm:$0xff] %v1481
                  %v1483 = vld [vmem:[%s1085 + $0x18c0] sm:$0xff]
                  %1484 = vst [vmem:[%s1086 + $0x630] sm:$0xff] %v1483
                  %v1485 = vld [vmem:[%s1085 + $0x18e0] sm:$0xff]
                  %1486 = vst [vmem:[%s1086 + $0x638] sm:$0xff] %v1485
                  %v1487 = vld [vmem:[%s1085 + $0x1900] sm:$0xff]
                  %1488 = vst [vmem:[%s1086 + $0x640] sm:$0xff] %v1487
                  %v1489 = vld [vmem:[%s1085 + $0x1920] sm:$0xff]
                  %1490 = vst [vmem:[%s1086 + $0x648] sm:$0xff] %v1489
                  %v1491 = vld [vmem:[%s1085 + $0x1940] sm:$0xff]
                  %1492 = vst [vmem:[%s1086 + $0x650] sm:$0xff] %v1491
                  %v1493 = vld [vmem:[%s1085 + $0x1960] sm:$0xff]
                  %1494 = vst [vmem:[%s1086 + $0x658] sm:$0xff] %v1493
                  %v1495 = vld [vmem:[%s1085 + $0x1980] sm:$0xff]
                  %1496 = vst [vmem:[%s1086 + $0x660] sm:$0xff] %v1495
                  %v1497 = vld [vmem:[%s1085 + $0x19a0] sm:$0xff]
                  %1498 = vst [vmem:[%s1086 + $0x668] sm:$0xff] %v1497
                  %v1499 = vld [vmem:[%s1085 + $0x19c0] sm:$0xff]
                  %1500 = vst [vmem:[%s1086 + $0x670] sm:$0xff] %v1499
                  %v1501 = vld [vmem:[%s1085 + $0x19e0] sm:$0xff]
                  %1502 = vst [vmem:[%s1086 + $0x678] sm:$0xff] %v1501
                  %v1503 = vld [vmem:[%s1085 + $0x1a00] sm:$0xff]
                  %1504 = vst [vmem:[%s1086 + $0x680] sm:$0xff] %v1503
                  %v1505 = vld [vmem:[%s1085 + $0x1a20] sm:$0xff]
                  %1506 = vst [vmem:[%s1086 + $0x688] sm:$0xff] %v1505
                  %v1507 = vld [vmem:[%s1085 + $0x1a40] sm:$0xff]
                  %1508 = vst [vmem:[%s1086 + $0x690] sm:$0xff] %v1507
                  %v1509 = vld [vmem:[%s1085 + $0x1a60] sm:$0xff]
                  %1510 = vst [vmem:[%s1086 + $0x698] sm:$0xff] %v1509
                  %v1511 = vld [vmem:[%s1085 + $0x1a80] sm:$0xff]
                  %1512 = vst [vmem:[%s1086 + $0x6a0] sm:$0xff] %v1511
                  %v1513 = vld [vmem:[%s1085 + $0x1aa0] sm:$0xff]
                  %1514 = vst [vmem:[%s1086 + $0x6a8] sm:$0xff] %v1513
                  %v1515 = vld [vmem:[%s1085 + $0x1ac0] sm:$0xff]
                  %1516 = vst [vmem:[%s1086 + $0x6b0] sm:$0xff] %v1515
                  %v1517 = vld [vmem:[%s1085 + $0x1ae0] sm:$0xff]
                  %1518 = vst [vmem:[%s1086 + $0x6b8] sm:$0xff] %v1517
                  %v1519 = vld [vmem:[%s1085 + $0x1b00] sm:$0xff]
                  %1520 = vst [vmem:[%s1086 + $0x6c0] sm:$0xff] %v1519
                  %v1521 = vld [vmem:[%s1085 + $0x1b20] sm:$0xff]
                  %1522 = vst [vmem:[%s1086 + $0x6c8] sm:$0xff] %v1521
                  %v1523 = vld [vmem:[%s1085 + $0x1b40] sm:$0xff]
                  %1524 = vst [vmem:[%s1086 + $0x6d0] sm:$0xff] %v1523
                  %v1525 = vld [vmem:[%s1085 + $0x1b60] sm:$0xff]
                  %1526 = vst [vmem:[%s1086 + $0x6d8] sm:$0xff] %v1525
                  %v1527 = vld [vmem:[%s1085 + $0x1b80] sm:$0xff]
                  %1528 = vst [vmem:[%s1086 + $0x6e0] sm:$0xff] %v1527
                  %v1529 = vld [vmem:[%s1085 + $0x1ba0] sm:$0xff]
                  %1530 = vst [vmem:[%s1086 + $0x6e8] sm:$0xff] %v1529
                  %v1531 = vld [vmem:[%s1085 + $0x1bc0] sm:$0xff]
                  %1532 = vst [vmem:[%s1086 + $0x6f0] sm:$0xff] %v1531
                  %v1533 = vld [vmem:[%s1085 + $0x1be0] sm:$0xff]
                  %1534 = vst [vmem:[%s1086 + $0x6f8] sm:$0xff] %v1533
                  %v1535 = vld [vmem:[%s1085 + $0x1c00] sm:$0xff]
                  %1536 = vst [vmem:[%s1086 + $0x700] sm:$0xff] %v1535
                  %v1537 = vld [vmem:[%s1085 + $0x1c20] sm:$0xff]
                  %1538 = vst [vmem:[%s1086 + $0x708] sm:$0xff] %v1537
                  %v1539 = vld [vmem:[%s1085 + $0x1c40] sm:$0xff]
                  %1540 = vst [vmem:[%s1086 + $0x710] sm:$0xff] %v1539
                  %v1541 = vld [vmem:[%s1085 + $0x1c60] sm:$0xff]
                  %1542 = vst [vmem:[%s1086 + $0x718] sm:$0xff] %v1541
                  %v1543 = vld [vmem:[%s1085 + $0x1c80] sm:$0xff]
                  %1544 = vst [vmem:[%s1086 + $0x720] sm:$0xff] %v1543
                  %v1545 = vld [vmem:[%s1085 + $0x1ca0] sm:$0xff]
                  %1546 = vst [vmem:[%s1086 + $0x728] sm:$0xff] %v1545
                  %v1547 = vld [vmem:[%s1085 + $0x1cc0] sm:$0xff]
                  %1548 = vst [vmem:[%s1086 + $0x730] sm:$0xff] %v1547
                  %v1549 = vld [vmem:[%s1085 + $0x1ce0] sm:$0xff]
                  %1550 = vst [vmem:[%s1086 + $0x738] sm:$0xff] %v1549
                  %v1551 = vld [vmem:[%s1085 + $0x1d00] sm:$0xff]
                  %1552 = vst [vmem:[%s1086 + $0x740] sm:$0xff] %v1551
                  %v1553 = vld [vmem:[%s1085 + $0x1d20] sm:$0xff]
                  %1554 = vst [vmem:[%s1086 + $0x748] sm:$0xff] %v1553
                  %v1555 = vld [vmem:[%s1085 + $0x1d40] sm:$0xff]
                  %1556 = vst [vmem:[%s1086 + $0x750] sm:$0xff] %v1555
                  %v1557 = vld [vmem:[%s1085 + $0x1d60] sm:$0xff]
                  %1558 = vst [vmem:[%s1086 + $0x758] sm:$0xff] %v1557
                  %v1559 = vld [vmem:[%s1085 + $0x1d80] sm:$0xff]
                  %1560 = vst [vmem:[%s1086 + $0x760] sm:$0xff] %v1559
                  %v1561 = vld [vmem:[%s1085 + $0x1da0] sm:$0xff]
                  %1562 = vst [vmem:[%s1086 + $0x768] sm:$0xff] %v1561
                  %v1563 = vld [vmem:[%s1085 + $0x1dc0] sm:$0xff]
                  %1564 = vst [vmem:[%s1086 + $0x770] sm:$0xff] %v1563
                  %v1565 = vld [vmem:[%s1085 + $0x1de0] sm:$0xff]
                  %1566 = vst [vmem:[%s1086 + $0x778] sm:$0xff] %v1565
                  %v1567 = vld [vmem:[%s1085 + $0x1e00] sm:$0xff]
                  %1568 = vst [vmem:[%s1086 + $0x780] sm:$0xff] %v1567
                  %v1569 = vld [vmem:[%s1085 + $0x1e20] sm:$0xff]
                  %1570 = vst [vmem:[%s1086 + $0x788] sm:$0xff] %v1569
                  %v1571 = vld [vmem:[%s1085 + $0x1e40] sm:$0xff]
                  %1572 = vst [vmem:[%s1086 + $0x790] sm:$0xff] %v1571
                  %v1573 = vld [vmem:[%s1085 + $0x1e60] sm:$0xff]
                  %1574 = vst [vmem:[%s1086 + $0x798] sm:$0xff] %v1573
                  %v1575 = vld [vmem:[%s1085 + $0x1e80] sm:$0xff]
                  %1576 = vst [vmem:[%s1086 + $0x7a0] sm:$0xff] %v1575
                  %v1577 = vld [vmem:[%s1085 + $0x1ea0] sm:$0xff]
                  %1578 = vst [vmem:[%s1086 + $0x7a8] sm:$0xff] %v1577
                  %v1579 = vld [vmem:[%s1085 + $0x1ec0] sm:$0xff]
                  %1580 = vst [vmem:[%s1086 + $0x7b0] sm:$0xff] %v1579
                  %v1581 = vld [vmem:[%s1085 + $0x1ee0] sm:$0xff]
                  %1582 = vst [vmem:[%s1086 + $0x7b8] sm:$0xff] %v1581
                  %v1583 = vld [vmem:[%s1085 + $0x1f00] sm:$0xff]
                  %1584 = vst [vmem:[%s1086 + $0x7c0] sm:$0xff] %v1583
                  %v1585 = vld [vmem:[%s1085 + $0x1f20] sm:$0xff]
                  %1586 = vst [vmem:[%s1086 + $0x7c8] sm:$0xff] %v1585
                  %v1587 = vld [vmem:[%s1085 + $0x1f40] sm:$0xff]
                  %1588 = vst [vmem:[%s1086 + $0x7d0] sm:$0xff] %v1587
                  %v1589 = vld [vmem:[%s1085 + $0x1f60] sm:$0xff]
                  %1590 = vst [vmem:[%s1086 + $0x7d8] sm:$0xff] %v1589
                  %v1591 = vld [vmem:[%s1085 + $0x1f80] sm:$0xff]
                  %1592 = vst [vmem:[%s1086 + $0x7e0] sm:$0xff] %v1591
                  %v1593 = vld [vmem:[%s1085 + $0x1fa0] sm:$0xff]
                  %1594 = vst [vmem:[%s1086 + $0x7e8] sm:$0xff] %v1593
                  %v1595 = vld [vmem:[%s1085 + $0x1fc0] sm:$0xff]
                  %1596 = vst [vmem:[%s1086 + $0x7f0] sm:$0xff] %v1595
                  %v1597 = vld [vmem:[%s1085 + $0x1fe0] sm:$0xff]
                  %1598 = vst [vmem:[%s1086 + $0x7f8] sm:$0xff] %v1597
                  %v1599 = vld [vmem:[%s1085 + $0x2000] sm:$0xff]
                  %1600 = vst [vmem:[%s1086 + $0x800] sm:$0xff] %v1599
                  %v1601 = vld [vmem:[%s1085 + $0x2020] sm:$0xff]
                  %1602 = vst [vmem:[%s1086 + $0x808] sm:$0xff] %v1601
                  %v1603 = vld [vmem:[%s1085 + $0x2040] sm:$0xff]
                  %1604 = vst [vmem:[%s1086 + $0x810] sm:$0xff] %v1603
                  %v1605 = vld [vmem:[%s1085 + $0x2060] sm:$0xff]
                  %1606 = vst [vmem:[%s1086 + $0x818] sm:$0xff] %v1605
                  %v1607 = vld [vmem:[%s1085 + $0x2080] sm:$0xff]
                  %1608 = vst [vmem:[%s1086 + $0x820] sm:$0xff] %v1607
                  %v1609 = vld [vmem:[%s1085 + $0x20a0] sm:$0xff]
                  %1610 = vst [vmem:[%s1086 + $0x828] sm:$0xff] %v1609
                  %v1611 = vld [vmem:[%s1085 + $0x20c0] sm:$0xff]
                  %1612 = vst [vmem:[%s1086 + $0x830] sm:$0xff] %v1611
                  %v1613 = vld [vmem:[%s1085 + $0x20e0] sm:$0xff]
                  %1614 = vst [vmem:[%s1086 + $0x838] sm:$0xff] %v1613
                  %v1615 = vld [vmem:[%s1085 + $0x2100] sm:$0xff]
                  %1616 = vst [vmem:[%s1086 + $0x840] sm:$0xff] %v1615
                  %v1617 = vld [vmem:[%s1085 + $0x2120] sm:$0xff]
                  %1618 = vst [vmem:[%s1086 + $0x848] sm:$0xff] %v1617
                  %v1619 = vld [vmem:[%s1085 + $0x2140] sm:$0xff]
                  %1620 = vst [vmem:[%s1086 + $0x850] sm:$0xff] %v1619
                  %v1621 = vld [vmem:[%s1085 + $0x2160] sm:$0xff]
                  %1622 = vst [vmem:[%s1086 + $0x858] sm:$0xff] %v1621
                  %v1623 = vld [vmem:[%s1085 + $0x2180] sm:$0xff]
                  %1624 = vst [vmem:[%s1086 + $0x860] sm:$0xff] %v1623
                  %v1625 = vld [vmem:[%s1085 + $0x21a0] sm:$0xff]
                  %1626 = vst [vmem:[%s1086 + $0x868] sm:$0xff] %v1625
                  %v1627 = vld [vmem:[%s1085 + $0x21c0] sm:$0xff]
                  %1628 = vst [vmem:[%s1086 + $0x870] sm:$0xff] %v1627
                  %v1629 = vld [vmem:[%s1085 + $0x21e0] sm:$0xff]
                  %1630 = vst [vmem:[%s1086 + $0x878] sm:$0xff] %v1629
                  %v1631 = vld [vmem:[%s1085 + $0x2200] sm:$0xff]
                  %1632 = vst [vmem:[%s1086 + $0x880] sm:$0xff] %v1631
                  %v1633 = vld [vmem:[%s1085 + $0x2220] sm:$0xff]
                  %1634 = vst [vmem:[%s1086 + $0x888] sm:$0xff] %v1633
                  %v1635 = vld [vmem:[%s1085 + $0x2240] sm:$0xff]
                  %1636 = vst [vmem:[%s1086 + $0x890] sm:$0xff] %v1635
                  %v1637 = vld [vmem:[%s1085 + $0x2260] sm:$0xff]
                  %1638 = vst [vmem:[%s1086 + $0x898] sm:$0xff] %v1637
                  %v1639 = vld [vmem:[%s1085 + $0x2280] sm:$0xff]
                  %1640 = vst [vmem:[%s1086 + $0x8a0] sm:$0xff] %v1639
                  %v1641 = vld [vmem:[%s1085 + $0x22a0] sm:$0xff]
                  %1642 = vst [vmem:[%s1086 + $0x8a8] sm:$0xff] %v1641
                  %v1643 = vld [vmem:[%s1085 + $0x22c0] sm:$0xff]
                  %1644 = vst [vmem:[%s1086 + $0x8b0] sm:$0xff] %v1643
                  %v1645 = vld [vmem:[%s1085 + $0x22e0] sm:$0xff]
                  %1646 = vst [vmem:[%s1086 + $0x8b8] sm:$0xff] %v1645
                  %v1647 = vld [vmem:[%s1085 + $0x2300] sm:$0xff]
                  %1648 = vst [vmem:[%s1086 + $0x8c0] sm:$0xff] %v1647
                  %v1649 = vld [vmem:[%s1085 + $0x2320] sm:$0xff]
                  %1650 = vst [vmem:[%s1086 + $0x8c8] sm:$0xff] %v1649
                  %v1651 = vld [vmem:[%s1085 + $0x2340] sm:$0xff]
                  %1652 = vst [vmem:[%s1086 + $0x8d0] sm:$0xff] %v1651
                  %v1653 = vld [vmem:[%s1085 + $0x2360] sm:$0xff]
                  %1654 = vst [vmem:[%s1086 + $0x8d8] sm:$0xff] %v1653
                  %v1655 = vld [vmem:[%s1085 + $0x2380] sm:$0xff]
                  %1656 = vst [vmem:[%s1086 + $0x8e0] sm:$0xff] %v1655
                  %v1657 = vld [vmem:[%s1085 + $0x23a0] sm:$0xff]
                  %1658 = vst [vmem:[%s1086 + $0x8e8] sm:$0xff] %v1657
                  %v1659 = vld [vmem:[%s1085 + $0x23c0] sm:$0xff]
                  %1660 = vst [vmem:[%s1086 + $0x8f0] sm:$0xff] %v1659
                  %v1661 = vld [vmem:[%s1085 + $0x23e0] sm:$0xff]
                  %1662 = vst [vmem:[%s1086 + $0x8f8] sm:$0xff] %v1661
                  %v1663 = vld [vmem:[%s1085 + $0x2400] sm:$0xff]
                  %1664 = vst [vmem:[%s1086 + $0x900] sm:$0xff] %v1663
                  %v1665 = vld [vmem:[%s1085 + $0x2420] sm:$0xff]
                  %1666 = vst [vmem:[%s1086 + $0x908] sm:$0xff] %v1665
                  %v1667 = vld [vmem:[%s1085 + $0x2440] sm:$0xff]
                  %1668 = vst [vmem:[%s1086 + $0x910] sm:$0xff] %v1667
                  %v1669 = vld [vmem:[%s1085 + $0x2460] sm:$0xff]
                  %1670 = vst [vmem:[%s1086 + $0x918] sm:$0xff] %v1669
                  %v1671 = vld [vmem:[%s1085 + $0x2480] sm:$0xff]
                  %1672 = vst [vmem:[%s1086 + $0x920] sm:$0xff] %v1671
                  %v1673 = vld [vmem:[%s1085 + $0x24a0] sm:$0xff]
                  %1674 = vst [vmem:[%s1086 + $0x928] sm:$0xff] %v1673
                  %v1675 = vld [vmem:[%s1085 + $0x24c0] sm:$0xff]
                  %1676 = vst [vmem:[%s1086 + $0x930] sm:$0xff] %v1675
                  %v1677 = vld [vmem:[%s1085 + $0x24e0] sm:$0xff]
                  %1678 = vst [vmem:[%s1086 + $0x938] sm:$0xff] %v1677
                  %v1679 = vld [vmem:[%s1085 + $0x2500] sm:$0xff]
                  %1680 = vst [vmem:[%s1086 + $0x940] sm:$0xff] %v1679
                  %v1681 = vld [vmem:[%s1085 + $0x2520] sm:$0xff]
                  %1682 = vst [vmem:[%s1086 + $0x948] sm:$0xff] %v1681
                  %v1683 = vld [vmem:[%s1085 + $0x2540] sm:$0xff]
                  %1684 = vst [vmem:[%s1086 + $0x950] sm:$0xff] %v1683
                  %v1685 = vld [vmem:[%s1085 + $0x2560] sm:$0xff]
                  %1686 = vst [vmem:[%s1086 + $0x958] sm:$0xff] %v1685
                  %v1687 = vld [vmem:[%s1085 + $0x2580] sm:$0xff]
                  %1688 = vst [vmem:[%s1086 + $0x960] sm:$0xff] %v1687
                  %v1689 = vld [vmem:[%s1085 + $0x25a0] sm:$0xff]
                  %1690 = vst [vmem:[%s1086 + $0x968] sm:$0xff] %v1689
                  %v1691 = vld [vmem:[%s1085 + $0x25c0] sm:$0xff]
                  %1692 = vst [vmem:[%s1086 + $0x970] sm:$0xff] %v1691
                  %v1693 = vld [vmem:[%s1085 + $0x25e0] sm:$0xff]
                  %1694 = vst [vmem:[%s1086 + $0x978] sm:$0xff] %v1693
                  %v1695 = vld [vmem:[%s1085 + $0x2600] sm:$0xff]
                  %1696 = vst [vmem:[%s1086 + $0x980] sm:$0xff] %v1695
                  %v1697 = vld [vmem:[%s1085 + $0x2620] sm:$0xff]
                  %1698 = vst [vmem:[%s1086 + $0x988] sm:$0xff] %v1697
                  %v1699 = vld [vmem:[%s1085 + $0x2640] sm:$0xff]
                  %1700 = vst [vmem:[%s1086 + $0x990] sm:$0xff] %v1699
                  %v1701 = vld [vmem:[%s1085 + $0x2660] sm:$0xff]
                  %1702 = vst [vmem:[%s1086 + $0x998] sm:$0xff] %v1701
                  %v1703 = vld [vmem:[%s1085 + $0x2680] sm:$0xff]
                  %1704 = vst [vmem:[%s1086 + $0x9a0] sm:$0xff] %v1703
                  %v1705 = vld [vmem:[%s1085 + $0x26a0] sm:$0xff]
                  %1706 = vst [vmem:[%s1086 + $0x9a8] sm:$0xff] %v1705
                  %v1707 = vld [vmem:[%s1085 + $0x26c0] sm:$0xff]
                  %1708 = vst [vmem:[%s1086 + $0x9b0] sm:$0xff] %v1707
                  %v1709 = vld [vmem:[%s1085 + $0x26e0] sm:$0xff]
                  %1710 = vst [vmem:[%s1086 + $0x9b8] sm:$0xff] %v1709
                  %v1711 = vld [vmem:[%s1085 + $0x2700] sm:$0xff]
                  %1712 = vst [vmem:[%s1086 + $0x9c0] sm:$0xff] %v1711
                  %v1713 = vld [vmem:[%s1085 + $0x2720] sm:$0xff]
                  %1714 = vst [vmem:[%s1086 + $0x9c8] sm:$0xff] %v1713
                  %v1715 = vld [vmem:[%s1085 + $0x2740] sm:$0xff]
                  %1716 = vst [vmem:[%s1086 + $0x9d0] sm:$0xff] %v1715
                  %v1717 = vld [vmem:[%s1085 + $0x2760] sm:$0xff]
                  %1718 = vst [vmem:[%s1086 + $0x9d8] sm:$0xff] %v1717
                  %v1719 = vld [vmem:[%s1085 + $0x2780] sm:$0xff]
                  %1720 = vst [vmem:[%s1086 + $0x9e0] sm:$0xff] %v1719
                  %v1721 = vld [vmem:[%s1085 + $0x27a0] sm:$0xff]
                  %1722 = vst [vmem:[%s1086 + $0x9e8] sm:$0xff] %v1721
                  %v1723 = vld [vmem:[%s1085 + $0x27c0] sm:$0xff]
                  %1724 = vst [vmem:[%s1086 + $0x9f0] sm:$0xff] %v1723
                  %v1725 = vld [vmem:[%s1085 + $0x27e0] sm:$0xff]
                  %1726 = vst [vmem:[%s1086 + $0x9f8] sm:$0xff] %v1725
                  %v1727 = vld [vmem:[%s1085 + $0x2800] sm:$0xff]
                  %1728 = vst [vmem:[%s1086 + $0xa00] sm:$0xff] %v1727
                  %v1729 = vld [vmem:[%s1085 + $0x2820] sm:$0xff]
                  %1730 = vst [vmem:[%s1086 + $0xa08] sm:$0xff] %v1729
                  %v1731 = vld [vmem:[%s1085 + $0x2840] sm:$0xff]
                  %1732 = vst [vmem:[%s1086 + $0xa10] sm:$0xff] %v1731
                  %v1733 = vld [vmem:[%s1085 + $0x2860] sm:$0xff]
                  %1734 = vst [vmem:[%s1086 + $0xa18] sm:$0xff] %v1733
                  %v1735 = vld [vmem:[%s1085 + $0x2880] sm:$0xff]
                  %1736 = vst [vmem:[%s1086 + $0xa20] sm:$0xff] %v1735
                  %v1737 = vld [vmem:[%s1085 + $0x28a0] sm:$0xff]
                  %1738 = vst [vmem:[%s1086 + $0xa28] sm:$0xff] %v1737
                  %v1739 = vld [vmem:[%s1085 + $0x28c0] sm:$0xff]
                  %1740 = vst [vmem:[%s1086 + $0xa30] sm:$0xff] %v1739
                  %v1741 = vld [vmem:[%s1085 + $0x28e0] sm:$0xff]
                  %1742 = vst [vmem:[%s1086 + $0xa38] sm:$0xff] %v1741
                  %v1743 = vld [vmem:[%s1085 + $0x2900] sm:$0xff]
                  %1744 = vst [vmem:[%s1086 + $0xa40] sm:$0xff] %v1743
                  %v1745 = vld [vmem:[%s1085 + $0x2920] sm:$0xff]
                  %1746 = vst [vmem:[%s1086 + $0xa48] sm:$0xff] %v1745
                  %v1747 = vld [vmem:[%s1085 + $0x2940] sm:$0xff]
                  %1748 = vst [vmem:[%s1086 + $0xa50] sm:$0xff] %v1747
                  %v1749 = vld [vmem:[%s1085 + $0x2960] sm:$0xff]
                  %1750 = vst [vmem:[%s1086 + $0xa58] sm:$0xff] %v1749
                  %v1751 = vld [vmem:[%s1085 + $0x2980] sm:$0xff]
                  %1752 = vst [vmem:[%s1086 + $0xa60] sm:$0xff] %v1751
                  %v1753 = vld [vmem:[%s1085 + $0x29a0] sm:$0xff]
                  %1754 = vst [vmem:[%s1086 + $0xa68] sm:$0xff] %v1753
                  %v1755 = vld [vmem:[%s1085 + $0x29c0] sm:$0xff]
                  %1756 = vst [vmem:[%s1086 + $0xa70] sm:$0xff] %v1755
                  %v1757 = vld [vmem:[%s1085 + $0x29e0] sm:$0xff]
                  %1758 = vst [vmem:[%s1086 + $0xa78] sm:$0xff] %v1757
                  %v1759 = vld [vmem:[%s1085 + $0x2a00] sm:$0xff]
                  %1760 = vst [vmem:[%s1086 + $0xa80] sm:$0xff] %v1759
                  %v1761 = vld [vmem:[%s1085 + $0x2a20] sm:$0xff]
                  %1762 = vst [vmem:[%s1086 + $0xa88] sm:$0xff] %v1761
                  %v1763 = vld [vmem:[%s1085 + $0x2a40] sm:$0xff]
                  %1764 = vst [vmem:[%s1086 + $0xa90] sm:$0xff] %v1763
                  %v1765 = vld [vmem:[%s1085 + $0x2a60] sm:$0xff]
                  %1766 = vst [vmem:[%s1086 + $0xa98] sm:$0xff] %v1765
                  %v1767 = vld [vmem:[%s1085 + $0x2a80] sm:$0xff]
                  %1768 = vst [vmem:[%s1086 + $0xaa0] sm:$0xff] %v1767
                  %v1769 = vld [vmem:[%s1085 + $0x2aa0] sm:$0xff]
                  %1770 = vst [vmem:[%s1086 + $0xaa8] sm:$0xff] %v1769
                  %v1771 = vld [vmem:[%s1085 + $0x2ac0] sm:$0xff]
                  %1772 = vst [vmem:[%s1086 + $0xab0] sm:$0xff] %v1771
                  %v1773 = vld [vmem:[%s1085 + $0x2ae0] sm:$0xff]
                  %1774 = vst [vmem:[%s1086 + $0xab8] sm:$0xff] %v1773
                  %v1775 = vld [vmem:[%s1085 + $0x2b00] sm:$0xff]
                  %1776 = vst [vmem:[%s1086 + $0xac0] sm:$0xff] %v1775
                  %v1777 = vld [vmem:[%s1085 + $0x2b20] sm:$0xff]
                  %1778 = vst [vmem:[%s1086 + $0xac8] sm:$0xff] %v1777
                  %v1779 = vld [vmem:[%s1085 + $0x2b40] sm:$0xff]
                  %1780 = vst [vmem:[%s1086 + $0xad0] sm:$0xff] %v1779
                  %v1781 = vld [vmem:[%s1085 + $0x2b60] sm:$0xff]
                  %1782 = vst [vmem:[%s1086 + $0xad8] sm:$0xff] %v1781
                  %v1783 = vld [vmem:[%s1085 + $0x2b80] sm:$0xff]
                  %1784 = vst [vmem:[%s1086 + $0xae0] sm:$0xff] %v1783
                  %v1785 = vld [vmem:[%s1085 + $0x2ba0] sm:$0xff]
                  %1786 = vst [vmem:[%s1086 + $0xae8] sm:$0xff] %v1785
                  %v1787 = vld [vmem:[%s1085 + $0x2bc0] sm:$0xff]
                  %1788 = vst [vmem:[%s1086 + $0xaf0] sm:$0xff] %v1787
                  %v1789 = vld [vmem:[%s1085 + $0x2be0] sm:$0xff]
                  %1790 = vst [vmem:[%s1086 + $0xaf8] sm:$0xff] %v1789
                  %v1791 = vld [vmem:[%s1085 + $0x2c00] sm:$0xff]
                  %1792 = vst [vmem:[%s1086 + $0xb00] sm:$0xff] %v1791
                  %v1793 = vld [vmem:[%s1085 + $0x2c20] sm:$0xff]
                  %1794 = vst [vmem:[%s1086 + $0xb08] sm:$0xff] %v1793
                  %v1795 = vld [vmem:[%s1085 + $0x2c40] sm:$0xff]
                  %1796 = vst [vmem:[%s1086 + $0xb10] sm:$0xff] %v1795
                  %v1797 = vld [vmem:[%s1085 + $0x2c60] sm:$0xff]
                  %1798 = vst [vmem:[%s1086 + $0xb18] sm:$0xff] %v1797
                  %v1799 = vld [vmem:[%s1085 + $0x2c80] sm:$0xff]
                  %1800 = vst [vmem:[%s1086 + $0xb20] sm:$0xff] %v1799
                  %v1801 = vld [vmem:[%s1085 + $0x2ca0] sm:$0xff]
                  %1802 = vst [vmem:[%s1086 + $0xb28] sm:$0xff] %v1801
                  %v1803 = vld [vmem:[%s1085 + $0x2cc0] sm:$0xff]
                  %1804 = vst [vmem:[%s1086 + $0xb30] sm:$0xff] %v1803
                  %v1805 = vld [vmem:[%s1085 + $0x2ce0] sm:$0xff]
                  %1806 = vst [vmem:[%s1086 + $0xb38] sm:$0xff] %v1805
                  %v1807 = vld [vmem:[%s1085 + $0x2d00] sm:$0xff]
                  %1808 = vst [vmem:[%s1086 + $0xb40] sm:$0xff] %v1807
                  %v1809 = vld [vmem:[%s1085 + $0x2d20] sm:$0xff]
                  %1810 = vst [vmem:[%s1086 + $0xb48] sm:$0xff] %v1809
                  %v1811 = vld [vmem:[%s1085 + $0x2d40] sm:$0xff]
                  %1812 = vst [vmem:[%s1086 + $0xb50] sm:$0xff] %v1811
                  %v1813 = vld [vmem:[%s1085 + $0x2d60] sm:$0xff]
                  %1814 = vst [vmem:[%s1086 + $0xb58] sm:$0xff] %v1813
                  %v1815 = vld [vmem:[%s1085 + $0x2d80] sm:$0xff]
                  %1816 = vst [vmem:[%s1086 + $0xb60] sm:$0xff] %v1815
                  %v1817 = vld [vmem:[%s1085 + $0x2da0] sm:$0xff]
                  %1818 = vst [vmem:[%s1086 + $0xb68] sm:$0xff] %v1817
                  %v1819 = vld [vmem:[%s1085 + $0x2dc0] sm:$0xff]
                  %1820 = vst [vmem:[%s1086 + $0xb70] sm:$0xff] %v1819
                  %v1821 = vld [vmem:[%s1085 + $0x2de0] sm:$0xff]
                  %1822 = vst [vmem:[%s1086 + $0xb78] sm:$0xff] %v1821
                  %v1823 = vld [vmem:[%s1085 + $0x2e00] sm:$0xff]
                  %1824 = vst [vmem:[%s1086 + $0xb80] sm:$0xff] %v1823
                  %v1825 = vld [vmem:[%s1085 + $0x2e20] sm:$0xff]
                  %1826 = vst [vmem:[%s1086 + $0xb88] sm:$0xff] %v1825
                  %v1827 = vld [vmem:[%s1085 + $0x2e40] sm:$0xff]
                  %1828 = vst [vmem:[%s1086 + $0xb90] sm:$0xff] %v1827
                  %v1829 = vld [vmem:[%s1085 + $0x2e60] sm:$0xff]
                  %1830 = vst [vmem:[%s1086 + $0xb98] sm:$0xff] %v1829
                  %v1831 = vld [vmem:[%s1085 + $0x2e80] sm:$0xff]
                  %1832 = vst [vmem:[%s1086 + $0xba0] sm:$0xff] %v1831
                  %v1833 = vld [vmem:[%s1085 + $0x2ea0] sm:$0xff]
                  %1834 = vst [vmem:[%s1086 + $0xba8] sm:$0xff] %v1833
                  %v1835 = vld [vmem:[%s1085 + $0x2ec0] sm:$0xff]
                  %1836 = vst [vmem:[%s1086 + $0xbb0] sm:$0xff] %v1835
                  %v1837 = vld [vmem:[%s1085 + $0x2ee0] sm:$0xff]
                  %1838 = vst [vmem:[%s1086 + $0xbb8] sm:$0xff] %v1837
                  %v1839 = vld [vmem:[%s1085 + $0x2f00] sm:$0xff]
                  %1840 = vst [vmem:[%s1086 + $0xbc0] sm:$0xff] %v1839
                  %v1841 = vld [vmem:[%s1085 + $0x2f20] sm:$0xff]
                  %1842 = vst [vmem:[%s1086 + $0xbc8] sm:$0xff] %v1841
                  %v1843 = vld [vmem:[%s1085 + $0x2f40] sm:$0xff]
                  %1844 = vst [vmem:[%s1086 + $0xbd0] sm:$0xff] %v1843
                  %v1845 = vld [vmem:[%s1085 + $0x2f60] sm:$0xff]
                  %1846 = vst [vmem:[%s1086 + $0xbd8] sm:$0xff] %v1845
                  %v1847 = vld [vmem:[%s1085 + $0x2f80] sm:$0xff]
                  %1848 = vst [vmem:[%s1086 + $0xbe0] sm:$0xff] %v1847
                  %v1849 = vld [vmem:[%s1085 + $0x2fa0] sm:$0xff]
                  %1850 = vst [vmem:[%s1086 + $0xbe8] sm:$0xff] %v1849
                  %v1851 = vld [vmem:[%s1085 + $0x2fc0] sm:$0xff]
                  %1852 = vst [vmem:[%s1086 + $0xbf0] sm:$0xff] %v1851
                  %v1853 = vld [vmem:[%s1085 + $0x2fe0] sm:$0xff]
                  %1854 = vst [vmem:[%s1086 + $0xbf8] sm:$0xff] %v1853
                  %v1855 = vld [vmem:[%s1085 + $0x3000] sm:$0xff]
                  %1856 = vst [vmem:[%s1086 + $0xc00] sm:$0xff] %v1855
                  %v1857 = vld [vmem:[%s1085 + $0x3020] sm:$0xff]
                  %1858 = vst [vmem:[%s1086 + $0xc08] sm:$0xff] %v1857
                  %v1859 = vld [vmem:[%s1085 + $0x3040] sm:$0xff]
                  %1860 = vst [vmem:[%s1086 + $0xc10] sm:$0xff] %v1859
                  %v1861 = vld [vmem:[%s1085 + $0x3060] sm:$0xff]
                  %1862 = vst [vmem:[%s1086 + $0xc18] sm:$0xff] %v1861
                  %v1863 = vld [vmem:[%s1085 + $0x3080] sm:$0xff]
                  %1864 = vst [vmem:[%s1086 + $0xc20] sm:$0xff] %v1863
                  %v1865 = vld [vmem:[%s1085 + $0x30a0] sm:$0xff]
                  %1866 = vst [vmem:[%s1086 + $0xc28] sm:$0xff] %v1865
                  %v1867 = vld [vmem:[%s1085 + $0x30c0] sm:$0xff]
                  %1868 = vst [vmem:[%s1086 + $0xc30] sm:$0xff] %v1867
                  %v1869 = vld [vmem:[%s1085 + $0x30e0] sm:$0xff]
                  %1870 = vst [vmem:[%s1086 + $0xc38] sm:$0xff] %v1869
                  %v1871 = vld [vmem:[%s1085 + $0x3100] sm:$0xff]
                  %1872 = vst [vmem:[%s1086 + $0xc40] sm:$0xff] %v1871
                  %v1873 = vld [vmem:[%s1085 + $0x3120] sm:$0xff]
                  %1874 = vst [vmem:[%s1086 + $0xc48] sm:$0xff] %v1873
                  %v1875 = vld [vmem:[%s1085 + $0x3140] sm:$0xff]
                  %1876 = vst [vmem:[%s1086 + $0xc50] sm:$0xff] %v1875
                  %v1877 = vld [vmem:[%s1085 + $0x3160] sm:$0xff]
                  %1878 = vst [vmem:[%s1086 + $0xc58] sm:$0xff] %v1877
                  %v1879 = vld [vmem:[%s1085 + $0x3180] sm:$0xff]
                  %1880 = vst [vmem:[%s1086 + $0xc60] sm:$0xff] %v1879
                  %v1881 = vld [vmem:[%s1085 + $0x31a0] sm:$0xff]
                  %1882 = vst [vmem:[%s1086 + $0xc68] sm:$0xff] %v1881
                  %v1883 = vld [vmem:[%s1085 + $0x31c0] sm:$0xff]
                  %1884 = vst [vmem:[%s1086 + $0xc70] sm:$0xff] %v1883
                  %v1885 = vld [vmem:[%s1085 + $0x31e0] sm:$0xff]
                  %1886 = vst [vmem:[%s1086 + $0xc78] sm:$0xff] %v1885
                  %v1887 = vld [vmem:[%s1085 + $0x3200] sm:$0xff]
                  %1888 = vst [vmem:[%s1086 + $0xc80] sm:$0xff] %v1887
                  %v1889 = vld [vmem:[%s1085 + $0x3220] sm:$0xff]
                  %1890 = vst [vmem:[%s1086 + $0xc88] sm:$0xff] %v1889
                  %v1891 = vld [vmem:[%s1085 + $0x3240] sm:$0xff]
                  %1892 = vst [vmem:[%s1086 + $0xc90] sm:$0xff] %v1891
                  %v1893 = vld [vmem:[%s1085 + $0x3260] sm:$0xff]
                  %1894 = vst [vmem:[%s1086 + $0xc98] sm:$0xff] %v1893
                  %v1895 = vld [vmem:[%s1085 + $0x3280] sm:$0xff]
                  %1896 = vst [vmem:[%s1086 + $0xca0] sm:$0xff] %v1895
                  %v1897 = vld [vmem:[%s1085 + $0x32a0] sm:$0xff]
                  %1898 = vst [vmem:[%s1086 + $0xca8] sm:$0xff] %v1897
                  %v1899 = vld [vmem:[%s1085 + $0x32c0] sm:$0xff]
                  %1900 = vst [vmem:[%s1086 + $0xcb0] sm:$0xff] %v1899
                  %v1901 = vld [vmem:[%s1085 + $0x32e0] sm:$0xff]
                  %1902 = vst [vmem:[%s1086 + $0xcb8] sm:$0xff] %v1901
                  %v1903 = vld [vmem:[%s1085 + $0x3300] sm:$0xff]
                  %1904 = vst [vmem:[%s1086 + $0xcc0] sm:$0xff] %v1903
                  %v1905 = vld [vmem:[%s1085 + $0x3320] sm:$0xff]
                  %1906 = vst [vmem:[%s1086 + $0xcc8] sm:$0xff] %v1905
                  %v1907 = vld [vmem:[%s1085 + $0x3340] sm:$0xff]
                  %1908 = vst [vmem:[%s1086 + $0xcd0] sm:$0xff] %v1907
                  %v1909 = vld [vmem:[%s1085 + $0x3360] sm:$0xff]
                  %1910 = vst [vmem:[%s1086 + $0xcd8] sm:$0xff] %v1909
                  %v1911 = vld [vmem:[%s1085 + $0x3380] sm:$0xff]
                  %1912 = vst [vmem:[%s1086 + $0xce0] sm:$0xff] %v1911
                  %v1913 = vld [vmem:[%s1085 + $0x33a0] sm:$0xff]
                  %1914 = vst [vmem:[%s1086 + $0xce8] sm:$0xff] %v1913
                  %v1915 = vld [vmem:[%s1085 + $0x33c0] sm:$0xff]
                  %1916 = vst [vmem:[%s1086 + $0xcf0] sm:$0xff] %v1915
                  %v1917 = vld [vmem:[%s1085 + $0x33e0] sm:$0xff]
                  %1918 = vst [vmem:[%s1086 + $0xcf8] sm:$0xff] %v1917
                  %v1919 = vld [vmem:[%s1085 + $0x3400] sm:$0xff]
                  %1920 = vst [vmem:[%s1086 + $0xd00] sm:$0xff] %v1919
                  %v1921 = vld [vmem:[%s1085 + $0x3420] sm:$0xff]
                  %1922 = vst [vmem:[%s1086 + $0xd08] sm:$0xff] %v1921
                  %v1923 = vld [vmem:[%s1085 + $0x3440] sm:$0xff]
                  %1924 = vst [vmem:[%s1086 + $0xd10] sm:$0xff] %v1923
                  %v1925 = vld [vmem:[%s1085 + $0x3460] sm:$0xff]
                  %1926 = vst [vmem:[%s1086 + $0xd18] sm:$0xff] %v1925
                  %v1927 = vld [vmem:[%s1085 + $0x3480] sm:$0xff]
                  %1928 = vst [vmem:[%s1086 + $0xd20] sm:$0xff] %v1927
                  %v1929 = vld [vmem:[%s1085 + $0x34a0] sm:$0xff]
                  %1930 = vst [vmem:[%s1086 + $0xd28] sm:$0xff] %v1929
                  %v1931 = vld [vmem:[%s1085 + $0x34c0] sm:$0xff]
                  %1932 = vst [vmem:[%s1086 + $0xd30] sm:$0xff] %v1931
                  %v1933 = vld [vmem:[%s1085 + $0x34e0] sm:$0xff]
                  %1934 = vst [vmem:[%s1086 + $0xd38] sm:$0xff] %v1933
                  %v1935 = vld [vmem:[%s1085 + $0x3500] sm:$0xff]
                  %1936 = vst [vmem:[%s1086 + $0xd40] sm:$0xff] %v1935
                  %v1937 = vld [vmem:[%s1085 + $0x3520] sm:$0xff]
                  %1938 = vst [vmem:[%s1086 + $0xd48] sm:$0xff] %v1937
                  %v1939 = vld [vmem:[%s1085 + $0x3540] sm:$0xff]
                  %1940 = vst [vmem:[%s1086 + $0xd50] sm:$0xff] %v1939
                  %v1941 = vld [vmem:[%s1085 + $0x3560] sm:$0xff]
                  %1942 = vst [vmem:[%s1086 + $0xd58] sm:$0xff] %v1941
                  %v1943 = vld [vmem:[%s1085 + $0x3580] sm:$0xff]
                  %1944 = vst [vmem:[%s1086 + $0xd60] sm:$0xff] %v1943
                  %v1945 = vld [vmem:[%s1085 + $0x35a0] sm:$0xff]
                  %1946 = vst [vmem:[%s1086 + $0xd68] sm:$0xff] %v1945
                  %v1947 = vld [vmem:[%s1085 + $0x35c0] sm:$0xff]
                  %1948 = vst [vmem:[%s1086 + $0xd70] sm:$0xff] %v1947
                  %v1949 = vld [vmem:[%s1085 + $0x35e0] sm:$0xff]
                  %1950 = vst [vmem:[%s1086 + $0xd78] sm:$0xff] %v1949
                  %v1951 = vld [vmem:[%s1085 + $0x3600] sm:$0xff]
                  %1952 = vst [vmem:[%s1086 + $0xd80] sm:$0xff] %v1951
                  %v1953 = vld [vmem:[%s1085 + $0x3620] sm:$0xff]
                  %1954 = vst [vmem:[%s1086 + $0xd88] sm:$0xff] %v1953
                  %v1955 = vld [vmem:[%s1085 + $0x3640] sm:$0xff]
                  %1956 = vst [vmem:[%s1086 + $0xd90] sm:$0xff] %v1955
                  %v1957 = vld [vmem:[%s1085 + $0x3660] sm:$0xff]
                  %1958 = vst [vmem:[%s1086 + $0xd98] sm:$0xff] %v1957
                  %s1959 = sadd.s32 1, %s1084
                  %p1960 = scmp.ge.s32.totalorder %s1959, 1
                  %s1961 = scalar_select %p1960, 0, %s1959
                  %s1962 = smul.u32 %s1961, 8
                  %s1963 = smul.u32 %s1961, 8
                  %s1964 = scalar_lea.vmem %s187, %s1962
                  %s1965 = scalar_lea.vmem %s184, %s1963 [#allocation3]
                $region56: #{dqn_forward.5} parent=50 // loop_footer
                  %s1083 = sadd.s32 1, %s1079
                $region57: #{dqn_forward.5} parent=50 // loop_footer_branch
                  %1078 = sbr.rel target = $region53
                $region58: #{dqn_forward.5} parent=50 // loop_exit
                  _
              $region51: #{dqn_forward.5} parent=35 // pred_fallthru
                _
              // Predicated region
              $region59: #{dqn_forward.5} parent=35 // pred_check
                _
              $region60: #{dqn_forward.5} parent=35 // pred_check_branch
                %1967 = sbr.rel target = $region62
              $region61: #{dqn_forward.5} parent=35 // pred_region
                %s1968 = scalar_lea.vmem %s187, 8
                %s1969 = scalar_lea.vmem %s184, 8 [#allocation3]
                loop: start=0, step=1, limit=1
                $region63: #{dqn_forward.5} parent=61 // loop_pre_header
                  _
                $region64: #{dqn_forward.5} parent=61 // loop_header
                  %s1971 = sphi 0, %s1975
                  %p1972 = scmp.ge.s32.totalorder %s1971, 1
                  %s1976 = sphi 0, %s2853
                  %s1977 = sphi %s187, %s2856
                  %s1978 = sphi %s184, %s2857
                $region65: #{dqn_forward.5} parent=61 // loop_header_branch
                  %1974 = sbr.rel (%p1972) target = $region69
                $region66: #{dqn_forward.5} parent=61 // loop_body
                  %v1979 = vld [vmem:[%s1977] sm:$0xff]
                  %1980 = vst [vmem:[%s1978] sm:$0xff] %v1979
                  %v1981 = vld [vmem:[%s1977 + $0x20] sm:$0xff]
                  %1982 = vst [vmem:[%s1978 + $0x8] sm:$0xff] %v1981
                  %v1983 = vld [vmem:[%s1977 + $0x40] sm:$0xff]
                  %1984 = vst [vmem:[%s1978 + $0x10] sm:$0xff] %v1983
                  %v1985 = vld [vmem:[%s1977 + $0x60] sm:$0xff]
                  %1986 = vst [vmem:[%s1978 + $0x18] sm:$0xff] %v1985
                  %v1987 = vld [vmem:[%s1977 + $0x80] sm:$0xff]
                  %1988 = vst [vmem:[%s1978 + $0x20] sm:$0xff] %v1987
                  %v1989 = vld [vmem:[%s1977 + $0xa0] sm:$0xff]
                  %1990 = vst [vmem:[%s1978 + $0x28] sm:$0xff] %v1989
                  %v1991 = vld [vmem:[%s1977 + $0xc0] sm:$0xff]
                  %1992 = vst [vmem:[%s1978 + $0x30] sm:$0xff] %v1991
                  %v1993 = vld [vmem:[%s1977 + $0xe0] sm:$0xff]
                  %1994 = vst [vmem:[%s1978 + $0x38] sm:$0xff] %v1993
                  %v1995 = vld [vmem:[%s1977 + $0x100] sm:$0xff]
                  %1996 = vst [vmem:[%s1978 + $0x40] sm:$0xff] %v1995
                  %v1997 = vld [vmem:[%s1977 + $0x120] sm:$0xff]
                  %1998 = vst [vmem:[%s1978 + $0x48] sm:$0xff] %v1997
                  %v1999 = vld [vmem:[%s1977 + $0x140] sm:$0xff]
                  %2000 = vst [vmem:[%s1978 + $0x50] sm:$0xff] %v1999
                  %v2001 = vld [vmem:[%s1977 + $0x160] sm:$0xff]
                  %2002 = vst [vmem:[%s1978 + $0x58] sm:$0xff] %v2001
                  %v2003 = vld [vmem:[%s1977 + $0x180] sm:$0xff]
                  %2004 = vst [vmem:[%s1978 + $0x60] sm:$0xff] %v2003
                  %v2005 = vld [vmem:[%s1977 + $0x1a0] sm:$0xff]
                  %2006 = vst [vmem:[%s1978 + $0x68] sm:$0xff] %v2005
                  %v2007 = vld [vmem:[%s1977 + $0x1c0] sm:$0xff]
                  %2008 = vst [vmem:[%s1978 + $0x70] sm:$0xff] %v2007
                  %v2009 = vld [vmem:[%s1977 + $0x1e0] sm:$0xff]
                  %2010 = vst [vmem:[%s1978 + $0x78] sm:$0xff] %v2009
                  %v2011 = vld [vmem:[%s1977 + $0x200] sm:$0xff]
                  %2012 = vst [vmem:[%s1978 + $0x80] sm:$0xff] %v2011
                  %v2013 = vld [vmem:[%s1977 + $0x220] sm:$0xff]
                  %2014 = vst [vmem:[%s1978 + $0x88] sm:$0xff] %v2013
                  %v2015 = vld [vmem:[%s1977 + $0x240] sm:$0xff]
                  %2016 = vst [vmem:[%s1978 + $0x90] sm:$0xff] %v2015
                  %v2017 = vld [vmem:[%s1977 + $0x260] sm:$0xff]
                  %2018 = vst [vmem:[%s1978 + $0x98] sm:$0xff] %v2017
                  %v2019 = vld [vmem:[%s1977 + $0x280] sm:$0xff]
                  %2020 = vst [vmem:[%s1978 + $0xa0] sm:$0xff] %v2019
                  %v2021 = vld [vmem:[%s1977 + $0x2a0] sm:$0xff]
                  %2022 = vst [vmem:[%s1978 + $0xa8] sm:$0xff] %v2021
                  %v2023 = vld [vmem:[%s1977 + $0x2c0] sm:$0xff]
                  %2024 = vst [vmem:[%s1978 + $0xb0] sm:$0xff] %v2023
                  %v2025 = vld [vmem:[%s1977 + $0x2e0] sm:$0xff]
                  %2026 = vst [vmem:[%s1978 + $0xb8] sm:$0xff] %v2025
                  %v2027 = vld [vmem:[%s1977 + $0x300] sm:$0xff]
                  %2028 = vst [vmem:[%s1978 + $0xc0] sm:$0xff] %v2027
                  %v2029 = vld [vmem:[%s1977 + $0x320] sm:$0xff]
                  %2030 = vst [vmem:[%s1978 + $0xc8] sm:$0xff] %v2029
                  %v2031 = vld [vmem:[%s1977 + $0x340] sm:$0xff]
                  %2032 = vst [vmem:[%s1978 + $0xd0] sm:$0xff] %v2031
                  %v2033 = vld [vmem:[%s1977 + $0x360] sm:$0xff]
                  %2034 = vst [vmem:[%s1978 + $0xd8] sm:$0xff] %v2033
                  %v2035 = vld [vmem:[%s1977 + $0x380] sm:$0xff]
                  %2036 = vst [vmem:[%s1978 + $0xe0] sm:$0xff] %v2035
                  %v2037 = vld [vmem:[%s1977 + $0x3a0] sm:$0xff]
                  %2038 = vst [vmem:[%s1978 + $0xe8] sm:$0xff] %v2037
                  %v2039 = vld [vmem:[%s1977 + $0x3c0] sm:$0xff]
                  %2040 = vst [vmem:[%s1978 + $0xf0] sm:$0xff] %v2039
                  %v2041 = vld [vmem:[%s1977 + $0x3e0] sm:$0xff]
                  %2042 = vst [vmem:[%s1978 + $0xf8] sm:$0xff] %v2041
                  %v2043 = vld [vmem:[%s1977 + $0x400] sm:$0xff]
                  %2044 = vst [vmem:[%s1978 + $0x100] sm:$0xff] %v2043
                  %v2045 = vld [vmem:[%s1977 + $0x420] sm:$0xff]
                  %2046 = vst [vmem:[%s1978 + $0x108] sm:$0xff] %v2045
                  %v2047 = vld [vmem:[%s1977 + $0x440] sm:$0xff]
                  %2048 = vst [vmem:[%s1978 + $0x110] sm:$0xff] %v2047
                  %v2049 = vld [vmem:[%s1977 + $0x460] sm:$0xff]
                  %2050 = vst [vmem:[%s1978 + $0x118] sm:$0xff] %v2049
                  %v2051 = vld [vmem:[%s1977 + $0x480] sm:$0xff]
                  %2052 = vst [vmem:[%s1978 + $0x120] sm:$0xff] %v2051
                  %v2053 = vld [vmem:[%s1977 + $0x4a0] sm:$0xff]
                  %2054 = vst [vmem:[%s1978 + $0x128] sm:$0xff] %v2053
                  %v2055 = vld [vmem:[%s1977 + $0x4c0] sm:$0xff]
                  %2056 = vst [vmem:[%s1978 + $0x130] sm:$0xff] %v2055
                  %v2057 = vld [vmem:[%s1977 + $0x4e0] sm:$0xff]
                  %2058 = vst [vmem:[%s1978 + $0x138] sm:$0xff] %v2057
                  %v2059 = vld [vmem:[%s1977 + $0x500] sm:$0xff]
                  %2060 = vst [vmem:[%s1978 + $0x140] sm:$0xff] %v2059
                  %v2061 = vld [vmem:[%s1977 + $0x520] sm:$0xff]
                  %2062 = vst [vmem:[%s1978 + $0x148] sm:$0xff] %v2061
                  %v2063 = vld [vmem:[%s1977 + $0x540] sm:$0xff]
                  %2064 = vst [vmem:[%s1978 + $0x150] sm:$0xff] %v2063
                  %v2065 = vld [vmem:[%s1977 + $0x560] sm:$0xff]
                  %2066 = vst [vmem:[%s1978 + $0x158] sm:$0xff] %v2065
                  %v2067 = vld [vmem:[%s1977 + $0x580] sm:$0xff]
                  %2068 = vst [vmem:[%s1978 + $0x160] sm:$0xff] %v2067
                  %v2069 = vld [vmem:[%s1977 + $0x5a0] sm:$0xff]
                  %2070 = vst [vmem:[%s1978 + $0x168] sm:$0xff] %v2069
                  %v2071 = vld [vmem:[%s1977 + $0x5c0] sm:$0xff]
                  %2072 = vst [vmem:[%s1978 + $0x170] sm:$0xff] %v2071
                  %v2073 = vld [vmem:[%s1977 + $0x5e0] sm:$0xff]
                  %2074 = vst [vmem:[%s1978 + $0x178] sm:$0xff] %v2073
                  %v2075 = vld [vmem:[%s1977 + $0x600] sm:$0xff]
                  %2076 = vst [vmem:[%s1978 + $0x180] sm:$0xff] %v2075
                  %v2077 = vld [vmem:[%s1977 + $0x620] sm:$0xff]
                  %2078 = vst [vmem:[%s1978 + $0x188] sm:$0xff] %v2077
                  %v2079 = vld [vmem:[%s1977 + $0x640] sm:$0xff]
                  %2080 = vst [vmem:[%s1978 + $0x190] sm:$0xff] %v2079
                  %v2081 = vld [vmem:[%s1977 + $0x660] sm:$0xff]
                  %2082 = vst [vmem:[%s1978 + $0x198] sm:$0xff] %v2081
                  %v2083 = vld [vmem:[%s1977 + $0x680] sm:$0xff]
                  %2084 = vst [vmem:[%s1978 + $0x1a0] sm:$0xff] %v2083
                  %v2085 = vld [vmem:[%s1977 + $0x6a0] sm:$0xff]
                  %2086 = vst [vmem:[%s1978 + $0x1a8] sm:$0xff] %v2085
                  %v2087 = vld [vmem:[%s1977 + $0x6c0] sm:$0xff]
                  %2088 = vst [vmem:[%s1978 + $0x1b0] sm:$0xff] %v2087
                  %v2089 = vld [vmem:[%s1977 + $0x6e0] sm:$0xff]
                  %2090 = vst [vmem:[%s1978 + $0x1b8] sm:$0xff] %v2089
                  %v2091 = vld [vmem:[%s1977 + $0x700] sm:$0xff]
                  %2092 = vst [vmem:[%s1978 + $0x1c0] sm:$0xff] %v2091
                  %v2093 = vld [vmem:[%s1977 + $0x720] sm:$0xff]
                  %2094 = vst [vmem:[%s1978 + $0x1c8] sm:$0xff] %v2093
                  %v2095 = vld [vmem:[%s1977 + $0x740] sm:$0xff]
                  %2096 = vst [vmem:[%s1978 + $0x1d0] sm:$0xff] %v2095
                  %v2097 = vld [vmem:[%s1977 + $0x760] sm:$0xff]
                  %2098 = vst [vmem:[%s1978 + $0x1d8] sm:$0xff] %v2097
                  %v2099 = vld [vmem:[%s1977 + $0x780] sm:$0xff]
                  %2100 = vst [vmem:[%s1978 + $0x1e0] sm:$0xff] %v2099
                  %v2101 = vld [vmem:[%s1977 + $0x7a0] sm:$0xff]
                  %2102 = vst [vmem:[%s1978 + $0x1e8] sm:$0xff] %v2101
                  %v2103 = vld [vmem:[%s1977 + $0x7c0] sm:$0xff]
                  %2104 = vst [vmem:[%s1978 + $0x1f0] sm:$0xff] %v2103
                  %v2105 = vld [vmem:[%s1977 + $0x7e0] sm:$0xff]
                  %2106 = vst [vmem:[%s1978 + $0x1f8] sm:$0xff] %v2105
                  %v2107 = vld [vmem:[%s1977 + $0x800] sm:$0xff]
                  %2108 = vst [vmem:[%s1978 + $0x200] sm:$0xff] %v2107
                  %v2109 = vld [vmem:[%s1977 + $0x820] sm:$0xff]
                  %2110 = vst [vmem:[%s1978 + $0x208] sm:$0xff] %v2109
                  %v2111 = vld [vmem:[%s1977 + $0x840] sm:$0xff]
                  %2112 = vst [vmem:[%s1978 + $0x210] sm:$0xff] %v2111
                  %v2113 = vld [vmem:[%s1977 + $0x860] sm:$0xff]
                  %2114 = vst [vmem:[%s1978 + $0x218] sm:$0xff] %v2113
                  %v2115 = vld [vmem:[%s1977 + $0x880] sm:$0xff]
                  %2116 = vst [vmem:[%s1978 + $0x220] sm:$0xff] %v2115
                  %v2117 = vld [vmem:[%s1977 + $0x8a0] sm:$0xff]
                  %2118 = vst [vmem:[%s1978 + $0x228] sm:$0xff] %v2117
                  %v2119 = vld [vmem:[%s1977 + $0x8c0] sm:$0xff]
                  %2120 = vst [vmem:[%s1978 + $0x230] sm:$0xff] %v2119
                  %v2121 = vld [vmem:[%s1977 + $0x8e0] sm:$0xff]
                  %2122 = vst [vmem:[%s1978 + $0x238] sm:$0xff] %v2121
                  %v2123 = vld [vmem:[%s1977 + $0x900] sm:$0xff]
                  %2124 = vst [vmem:[%s1978 + $0x240] sm:$0xff] %v2123
                  %v2125 = vld [vmem:[%s1977 + $0x920] sm:$0xff]
                  %2126 = vst [vmem:[%s1978 + $0x248] sm:$0xff] %v2125
                  %v2127 = vld [vmem:[%s1977 + $0x940] sm:$0xff]
                  %2128 = vst [vmem:[%s1978 + $0x250] sm:$0xff] %v2127
                  %v2129 = vld [vmem:[%s1977 + $0x960] sm:$0xff]
                  %2130 = vst [vmem:[%s1978 + $0x258] sm:$0xff] %v2129
                  %v2131 = vld [vmem:[%s1977 + $0x980] sm:$0xff]
                  %2132 = vst [vmem:[%s1978 + $0x260] sm:$0xff] %v2131
                  %v2133 = vld [vmem:[%s1977 + $0x9a0] sm:$0xff]
                  %2134 = vst [vmem:[%s1978 + $0x268] sm:$0xff] %v2133
                  %v2135 = vld [vmem:[%s1977 + $0x9c0] sm:$0xff]
                  %2136 = vst [vmem:[%s1978 + $0x270] sm:$0xff] %v2135
                  %v2137 = vld [vmem:[%s1977 + $0x9e0] sm:$0xff]
                  %2138 = vst [vmem:[%s1978 + $0x278] sm:$0xff] %v2137
                  %v2139 = vld [vmem:[%s1977 + $0xa00] sm:$0xff]
                  %2140 = vst [vmem:[%s1978 + $0x280] sm:$0xff] %v2139
                  %v2141 = vld [vmem:[%s1977 + $0xa20] sm:$0xff]
                  %2142 = vst [vmem:[%s1978 + $0x288] sm:$0xff] %v2141
                  %v2143 = vld [vmem:[%s1977 + $0xa40] sm:$0xff]
                  %2144 = vst [vmem:[%s1978 + $0x290] sm:$0xff] %v2143
                  %v2145 = vld [vmem:[%s1977 + $0xa60] sm:$0xff]
                  %2146 = vst [vmem:[%s1978 + $0x298] sm:$0xff] %v2145
                  %v2147 = vld [vmem:[%s1977 + $0xa80] sm:$0xff]
                  %2148 = vst [vmem:[%s1978 + $0x2a0] sm:$0xff] %v2147
                  %v2149 = vld [vmem:[%s1977 + $0xaa0] sm:$0xff]
                  %2150 = vst [vmem:[%s1978 + $0x2a8] sm:$0xff] %v2149
                  %v2151 = vld [vmem:[%s1977 + $0xac0] sm:$0xff]
                  %2152 = vst [vmem:[%s1978 + $0x2b0] sm:$0xff] %v2151
                  %v2153 = vld [vmem:[%s1977 + $0xae0] sm:$0xff]
                  %2154 = vst [vmem:[%s1978 + $0x2b8] sm:$0xff] %v2153
                  %v2155 = vld [vmem:[%s1977 + $0xb00] sm:$0xff]
                  %2156 = vst [vmem:[%s1978 + $0x2c0] sm:$0xff] %v2155
                  %v2157 = vld [vmem:[%s1977 + $0xb20] sm:$0xff]
                  %2158 = vst [vmem:[%s1978 + $0x2c8] sm:$0xff] %v2157
                  %v2159 = vld [vmem:[%s1977 + $0xb40] sm:$0xff]
                  %2160 = vst [vmem:[%s1978 + $0x2d0] sm:$0xff] %v2159
                  %v2161 = vld [vmem:[%s1977 + $0xb60] sm:$0xff]
                  %2162 = vst [vmem:[%s1978 + $0x2d8] sm:$0xff] %v2161
                  %v2163 = vld [vmem:[%s1977 + $0xb80] sm:$0xff]
                  %2164 = vst [vmem:[%s1978 + $0x2e0] sm:$0xff] %v2163
                  %v2165 = vld [vmem:[%s1977 + $0xba0] sm:$0xff]
                  %2166 = vst [vmem:[%s1978 + $0x2e8] sm:$0xff] %v2165
                  %v2167 = vld [vmem:[%s1977 + $0xbc0] sm:$0xff]
                  %2168 = vst [vmem:[%s1978 + $0x2f0] sm:$0xff] %v2167
                  %v2169 = vld [vmem:[%s1977 + $0xbe0] sm:$0xff]
                  %2170 = vst [vmem:[%s1978 + $0x2f8] sm:$0xff] %v2169
                  %v2171 = vld [vmem:[%s1977 + $0xc00] sm:$0xff]
                  %2172 = vst [vmem:[%s1978 + $0x300] sm:$0xff] %v2171
                  %v2173 = vld [vmem:[%s1977 + $0xc20] sm:$0xff]
                  %2174 = vst [vmem:[%s1978 + $0x308] sm:$0xff] %v2173
                  %v2175 = vld [vmem:[%s1977 + $0xc40] sm:$0xff]
                  %2176 = vst [vmem:[%s1978 + $0x310] sm:$0xff] %v2175
                  %v2177 = vld [vmem:[%s1977 + $0xc60] sm:$0xff]
                  %2178 = vst [vmem:[%s1978 + $0x318] sm:$0xff] %v2177
                  %v2179 = vld [vmem:[%s1977 + $0xc80] sm:$0xff]
                  %2180 = vst [vmem:[%s1978 + $0x320] sm:$0xff] %v2179
                  %v2181 = vld [vmem:[%s1977 + $0xca0] sm:$0xff]
                  %2182 = vst [vmem:[%s1978 + $0x328] sm:$0xff] %v2181
                  %v2183 = vld [vmem:[%s1977 + $0xcc0] sm:$0xff]
                  %2184 = vst [vmem:[%s1978 + $0x330] sm:$0xff] %v2183
                  %v2185 = vld [vmem:[%s1977 + $0xce0] sm:$0xff]
                  %2186 = vst [vmem:[%s1978 + $0x338] sm:$0xff] %v2185
                  %v2187 = vld [vmem:[%s1977 + $0xd00] sm:$0xff]
                  %2188 = vst [vmem:[%s1978 + $0x340] sm:$0xff] %v2187
                  %v2189 = vld [vmem:[%s1977 + $0xd20] sm:$0xff]
                  %2190 = vst [vmem:[%s1978 + $0x348] sm:$0xff] %v2189
                  %v2191 = vld [vmem:[%s1977 + $0xd40] sm:$0xff]
                  %2192 = vst [vmem:[%s1978 + $0x350] sm:$0xff] %v2191
                  %v2193 = vld [vmem:[%s1977 + $0xd60] sm:$0xff]
                  %2194 = vst [vmem:[%s1978 + $0x358] sm:$0xff] %v2193
                  %v2195 = vld [vmem:[%s1977 + $0xd80] sm:$0xff]
                  %2196 = vst [vmem:[%s1978 + $0x360] sm:$0xff] %v2195
                  %v2197 = vld [vmem:[%s1977 + $0xda0] sm:$0xff]
                  %2198 = vst [vmem:[%s1978 + $0x368] sm:$0xff] %v2197
                  %v2199 = vld [vmem:[%s1977 + $0xdc0] sm:$0xff]
                  %2200 = vst [vmem:[%s1978 + $0x370] sm:$0xff] %v2199
                  %v2201 = vld [vmem:[%s1977 + $0xde0] sm:$0xff]
                  %2202 = vst [vmem:[%s1978 + $0x378] sm:$0xff] %v2201
                  %v2203 = vld [vmem:[%s1977 + $0xe00] sm:$0xff]
                  %2204 = vst [vmem:[%s1978 + $0x380] sm:$0xff] %v2203
                  %v2205 = vld [vmem:[%s1977 + $0xe20] sm:$0xff]
                  %2206 = vst [vmem:[%s1978 + $0x388] sm:$0xff] %v2205
                  %v2207 = vld [vmem:[%s1977 + $0xe40] sm:$0xff]
                  %2208 = vst [vmem:[%s1978 + $0x390] sm:$0xff] %v2207
                  %v2209 = vld [vmem:[%s1977 + $0xe60] sm:$0xff]
                  %2210 = vst [vmem:[%s1978 + $0x398] sm:$0xff] %v2209
                  %v2211 = vld [vmem:[%s1977 + $0xe80] sm:$0xff]
                  %2212 = vst [vmem:[%s1978 + $0x3a0] sm:$0xff] %v2211
                  %v2213 = vld [vmem:[%s1977 + $0xea0] sm:$0xff]
                  %2214 = vst [vmem:[%s1978 + $0x3a8] sm:$0xff] %v2213
                  %v2215 = vld [vmem:[%s1977 + $0xec0] sm:$0xff]
                  %2216 = vst [vmem:[%s1978 + $0x3b0] sm:$0xff] %v2215
                  %v2217 = vld [vmem:[%s1977 + $0xee0] sm:$0xff]
                  %2218 = vst [vmem:[%s1978 + $0x3b8] sm:$0xff] %v2217
                  %v2219 = vld [vmem:[%s1977 + $0xf00] sm:$0xff]
                  %2220 = vst [vmem:[%s1978 + $0x3c0] sm:$0xff] %v2219
                  %v2221 = vld [vmem:[%s1977 + $0xf20] sm:$0xff]
                  %2222 = vst [vmem:[%s1978 + $0x3c8] sm:$0xff] %v2221
                  %v2223 = vld [vmem:[%s1977 + $0xf40] sm:$0xff]
                  %2224 = vst [vmem:[%s1978 + $0x3d0] sm:$0xff] %v2223
                  %v2225 = vld [vmem:[%s1977 + $0xf60] sm:$0xff]
                  %2226 = vst [vmem:[%s1978 + $0x3d8] sm:$0xff] %v2225
                  %v2227 = vld [vmem:[%s1977 + $0xf80] sm:$0xff]
                  %2228 = vst [vmem:[%s1978 + $0x3e0] sm:$0xff] %v2227
                  %v2229 = vld [vmem:[%s1977 + $0xfa0] sm:$0xff]
                  %2230 = vst [vmem:[%s1978 + $0x3e8] sm:$0xff] %v2229
                  %v2231 = vld [vmem:[%s1977 + $0xfc0] sm:$0xff]
                  %2232 = vst [vmem:[%s1978 + $0x3f0] sm:$0xff] %v2231
                  %v2233 = vld [vmem:[%s1977 + $0xfe0] sm:$0xff]
                  %2234 = vst [vmem:[%s1978 + $0x3f8] sm:$0xff] %v2233
                  %v2235 = vld [vmem:[%s1977 + $0x1000] sm:$0xff]
                  %2236 = vst [vmem:[%s1978 + $0x400] sm:$0xff] %v2235
                  %v2237 = vld [vmem:[%s1977 + $0x1020] sm:$0xff]
                  %2238 = vst [vmem:[%s1978 + $0x408] sm:$0xff] %v2237
                  %v2239 = vld [vmem:[%s1977 + $0x1040] sm:$0xff]
                  %2240 = vst [vmem:[%s1978 + $0x410] sm:$0xff] %v2239
                  %v2241 = vld [vmem:[%s1977 + $0x1060] sm:$0xff]
                  %2242 = vst [vmem:[%s1978 + $0x418] sm:$0xff] %v2241
                  %v2243 = vld [vmem:[%s1977 + $0x1080] sm:$0xff]
                  %2244 = vst [vmem:[%s1978 + $0x420] sm:$0xff] %v2243
                  %v2245 = vld [vmem:[%s1977 + $0x10a0] sm:$0xff]
                  %2246 = vst [vmem:[%s1978 + $0x428] sm:$0xff] %v2245
                  %v2247 = vld [vmem:[%s1977 + $0x10c0] sm:$0xff]
                  %2248 = vst [vmem:[%s1978 + $0x430] sm:$0xff] %v2247
                  %v2249 = vld [vmem:[%s1977 + $0x10e0] sm:$0xff]
                  %2250 = vst [vmem:[%s1978 + $0x438] sm:$0xff] %v2249
                  %v2251 = vld [vmem:[%s1977 + $0x1100] sm:$0xff]
                  %2252 = vst [vmem:[%s1978 + $0x440] sm:$0xff] %v2251
                  %v2253 = vld [vmem:[%s1977 + $0x1120] sm:$0xff]
                  %2254 = vst [vmem:[%s1978 + $0x448] sm:$0xff] %v2253
                  %v2255 = vld [vmem:[%s1977 + $0x1140] sm:$0xff]
                  %2256 = vst [vmem:[%s1978 + $0x450] sm:$0xff] %v2255
                  %v2257 = vld [vmem:[%s1977 + $0x1160] sm:$0xff]
                  %2258 = vst [vmem:[%s1978 + $0x458] sm:$0xff] %v2257
                  %v2259 = vld [vmem:[%s1977 + $0x1180] sm:$0xff]
                  %2260 = vst [vmem:[%s1978 + $0x460] sm:$0xff] %v2259
                  %v2261 = vld [vmem:[%s1977 + $0x11a0] sm:$0xff]
                  %2262 = vst [vmem:[%s1978 + $0x468] sm:$0xff] %v2261
                  %v2263 = vld [vmem:[%s1977 + $0x11c0] sm:$0xff]
                  %2264 = vst [vmem:[%s1978 + $0x470] sm:$0xff] %v2263
                  %v2265 = vld [vmem:[%s1977 + $0x11e0] sm:$0xff]
                  %2266 = vst [vmem:[%s1978 + $0x478] sm:$0xff] %v2265
                  %v2267 = vld [vmem:[%s1977 + $0x1200] sm:$0xff]
                  %2268 = vst [vmem:[%s1978 + $0x480] sm:$0xff] %v2267
                  %v2269 = vld [vmem:[%s1977 + $0x1220] sm:$0xff]
                  %2270 = vst [vmem:[%s1978 + $0x488] sm:$0xff] %v2269
                  %v2271 = vld [vmem:[%s1977 + $0x1240] sm:$0xff]
                  %2272 = vst [vmem:[%s1978 + $0x490] sm:$0xff] %v2271
                  %v2273 = vld [vmem:[%s1977 + $0x1260] sm:$0xff]
                  %2274 = vst [vmem:[%s1978 + $0x498] sm:$0xff] %v2273
                  %v2275 = vld [vmem:[%s1977 + $0x1280] sm:$0xff]
                  %2276 = vst [vmem:[%s1978 + $0x4a0] sm:$0xff] %v2275
                  %v2277 = vld [vmem:[%s1977 + $0x12a0] sm:$0xff]
                  %2278 = vst [vmem:[%s1978 + $0x4a8] sm:$0xff] %v2277
                  %v2279 = vld [vmem:[%s1977 + $0x12c0] sm:$0xff]
                  %2280 = vst [vmem:[%s1978 + $0x4b0] sm:$0xff] %v2279
                  %v2281 = vld [vmem:[%s1977 + $0x12e0] sm:$0xff]
                  %2282 = vst [vmem:[%s1978 + $0x4b8] sm:$0xff] %v2281
                  %v2283 = vld [vmem:[%s1977 + $0x1300] sm:$0xff]
                  %2284 = vst [vmem:[%s1978 + $0x4c0] sm:$0xff] %v2283
                  %v2285 = vld [vmem:[%s1977 + $0x1320] sm:$0xff]
                  %2286 = vst [vmem:[%s1978 + $0x4c8] sm:$0xff] %v2285
                  %v2287 = vld [vmem:[%s1977 + $0x1340] sm:$0xff]
                  %2288 = vst [vmem:[%s1978 + $0x4d0] sm:$0xff] %v2287
                  %v2289 = vld [vmem:[%s1977 + $0x1360] sm:$0xff]
                  %2290 = vst [vmem:[%s1978 + $0x4d8] sm:$0xff] %v2289
                  %v2291 = vld [vmem:[%s1977 + $0x1380] sm:$0xff]
                  %2292 = vst [vmem:[%s1978 + $0x4e0] sm:$0xff] %v2291
                  %v2293 = vld [vmem:[%s1977 + $0x13a0] sm:$0xff]
                  %2294 = vst [vmem:[%s1978 + $0x4e8] sm:$0xff] %v2293
                  %v2295 = vld [vmem:[%s1977 + $0x13c0] sm:$0xff]
                  %2296 = vst [vmem:[%s1978 + $0x4f0] sm:$0xff] %v2295
                  %v2297 = vld [vmem:[%s1977 + $0x13e0] sm:$0xff]
                  %2298 = vst [vmem:[%s1978 + $0x4f8] sm:$0xff] %v2297
                  %v2299 = vld [vmem:[%s1977 + $0x1400] sm:$0xff]
                  %2300 = vst [vmem:[%s1978 + $0x500] sm:$0xff] %v2299
                  %v2301 = vld [vmem:[%s1977 + $0x1420] sm:$0xff]
                  %2302 = vst [vmem:[%s1978 + $0x508] sm:$0xff] %v2301
                  %v2303 = vld [vmem:[%s1977 + $0x1440] sm:$0xff]
                  %2304 = vst [vmem:[%s1978 + $0x510] sm:$0xff] %v2303
                  %v2305 = vld [vmem:[%s1977 + $0x1460] sm:$0xff]
                  %2306 = vst [vmem:[%s1978 + $0x518] sm:$0xff] %v2305
                  %v2307 = vld [vmem:[%s1977 + $0x1480] sm:$0xff]
                  %2308 = vst [vmem:[%s1978 + $0x520] sm:$0xff] %v2307
                  %v2309 = vld [vmem:[%s1977 + $0x14a0] sm:$0xff]
                  %2310 = vst [vmem:[%s1978 + $0x528] sm:$0xff] %v2309
                  %v2311 = vld [vmem:[%s1977 + $0x14c0] sm:$0xff]
                  %2312 = vst [vmem:[%s1978 + $0x530] sm:$0xff] %v2311
                  %v2313 = vld [vmem:[%s1977 + $0x14e0] sm:$0xff]
                  %2314 = vst [vmem:[%s1978 + $0x538] sm:$0xff] %v2313
                  %v2315 = vld [vmem:[%s1977 + $0x1500] sm:$0xff]
                  %2316 = vst [vmem:[%s1978 + $0x540] sm:$0xff] %v2315
                  %v2317 = vld [vmem:[%s1977 + $0x1520] sm:$0xff]
                  %2318 = vst [vmem:[%s1978 + $0x548] sm:$0xff] %v2317
                  %v2319 = vld [vmem:[%s1977 + $0x1540] sm:$0xff]
                  %2320 = vst [vmem:[%s1978 + $0x550] sm:$0xff] %v2319
                  %v2321 = vld [vmem:[%s1977 + $0x1560] sm:$0xff]
                  %2322 = vst [vmem:[%s1978 + $0x558] sm:$0xff] %v2321
                  %v2323 = vld [vmem:[%s1977 + $0x1580] sm:$0xff]
                  %2324 = vst [vmem:[%s1978 + $0x560] sm:$0xff] %v2323
                  %v2325 = vld [vmem:[%s1977 + $0x15a0] sm:$0xff]
                  %2326 = vst [vmem:[%s1978 + $0x568] sm:$0xff] %v2325
                  %v2327 = vld [vmem:[%s1977 + $0x15c0] sm:$0xff]
                  %2328 = vst [vmem:[%s1978 + $0x570] sm:$0xff] %v2327
                  %v2329 = vld [vmem:[%s1977 + $0x15e0] sm:$0xff]
                  %2330 = vst [vmem:[%s1978 + $0x578] sm:$0xff] %v2329
                  %v2331 = vld [vmem:[%s1977 + $0x1600] sm:$0xff]
                  %2332 = vst [vmem:[%s1978 + $0x580] sm:$0xff] %v2331
                  %v2333 = vld [vmem:[%s1977 + $0x1620] sm:$0xff]
                  %2334 = vst [vmem:[%s1978 + $0x588] sm:$0xff] %v2333
                  %v2335 = vld [vmem:[%s1977 + $0x1640] sm:$0xff]
                  %2336 = vst [vmem:[%s1978 + $0x590] sm:$0xff] %v2335
                  %v2337 = vld [vmem:[%s1977 + $0x1660] sm:$0xff]
                  %2338 = vst [vmem:[%s1978 + $0x598] sm:$0xff] %v2337
                  %v2339 = vld [vmem:[%s1977 + $0x1680] sm:$0xff]
                  %2340 = vst [vmem:[%s1978 + $0x5a0] sm:$0xff] %v2339
                  %v2341 = vld [vmem:[%s1977 + $0x16a0] sm:$0xff]
                  %2342 = vst [vmem:[%s1978 + $0x5a8] sm:$0xff] %v2341
                  %v2343 = vld [vmem:[%s1977 + $0x16c0] sm:$0xff]
                  %2344 = vst [vmem:[%s1978 + $0x5b0] sm:$0xff] %v2343
                  %v2345 = vld [vmem:[%s1977 + $0x16e0] sm:$0xff]
                  %2346 = vst [vmem:[%s1978 + $0x5b8] sm:$0xff] %v2345
                  %v2347 = vld [vmem:[%s1977 + $0x1700] sm:$0xff]
                  %2348 = vst [vmem:[%s1978 + $0x5c0] sm:$0xff] %v2347
                  %v2349 = vld [vmem:[%s1977 + $0x1720] sm:$0xff]
                  %2350 = vst [vmem:[%s1978 + $0x5c8] sm:$0xff] %v2349
                  %v2351 = vld [vmem:[%s1977 + $0x1740] sm:$0xff]
                  %2352 = vst [vmem:[%s1978 + $0x5d0] sm:$0xff] %v2351
                  %v2353 = vld [vmem:[%s1977 + $0x1760] sm:$0xff]
                  %2354 = vst [vmem:[%s1978 + $0x5d8] sm:$0xff] %v2353
                  %v2355 = vld [vmem:[%s1977 + $0x1780] sm:$0xff]
                  %2356 = vst [vmem:[%s1978 + $0x5e0] sm:$0xff] %v2355
                  %v2357 = vld [vmem:[%s1977 + $0x17a0] sm:$0xff]
                  %2358 = vst [vmem:[%s1978 + $0x5e8] sm:$0xff] %v2357
                  %v2359 = vld [vmem:[%s1977 + $0x17c0] sm:$0xff]
                  %2360 = vst [vmem:[%s1978 + $0x5f0] sm:$0xff] %v2359
                  %v2361 = vld [vmem:[%s1977 + $0x17e0] sm:$0xff]
                  %2362 = vst [vmem:[%s1978 + $0x5f8] sm:$0xff] %v2361
                  %v2363 = vld [vmem:[%s1977 + $0x1800] sm:$0xff]
                  %2364 = vst [vmem:[%s1978 + $0x600] sm:$0xff] %v2363
                  %v2365 = vld [vmem:[%s1977 + $0x1820] sm:$0xff]
                  %2366 = vst [vmem:[%s1978 + $0x608] sm:$0xff] %v2365
                  %v2367 = vld [vmem:[%s1977 + $0x1840] sm:$0xff]
                  %2368 = vst [vmem:[%s1978 + $0x610] sm:$0xff] %v2367
                  %v2369 = vld [vmem:[%s1977 + $0x1860] sm:$0xff]
                  %2370 = vst [vmem:[%s1978 + $0x618] sm:$0xff] %v2369
                  %v2371 = vld [vmem:[%s1977 + $0x1880] sm:$0xff]
                  %2372 = vst [vmem:[%s1978 + $0x620] sm:$0xff] %v2371
                  %v2373 = vld [vmem:[%s1977 + $0x18a0] sm:$0xff]
                  %2374 = vst [vmem:[%s1978 + $0x628] sm:$0xff] %v2373
                  %v2375 = vld [vmem:[%s1977 + $0x18c0] sm:$0xff]
                  %2376 = vst [vmem:[%s1978 + $0x630] sm:$0xff] %v2375
                  %v2377 = vld [vmem:[%s1977 + $0x18e0] sm:$0xff]
                  %2378 = vst [vmem:[%s1978 + $0x638] sm:$0xff] %v2377
                  %v2379 = vld [vmem:[%s1977 + $0x1900] sm:$0xff]
                  %2380 = vst [vmem:[%s1978 + $0x640] sm:$0xff] %v2379
                  %v2381 = vld [vmem:[%s1977 + $0x1920] sm:$0xff]
                  %2382 = vst [vmem:[%s1978 + $0x648] sm:$0xff] %v2381
                  %v2383 = vld [vmem:[%s1977 + $0x1940] sm:$0xff]
                  %2384 = vst [vmem:[%s1978 + $0x650] sm:$0xff] %v2383
                  %v2385 = vld [vmem:[%s1977 + $0x1960] sm:$0xff]
                  %2386 = vst [vmem:[%s1978 + $0x658] sm:$0xff] %v2385
                  %v2387 = vld [vmem:[%s1977 + $0x1980] sm:$0xff]
                  %2388 = vst [vmem:[%s1978 + $0x660] sm:$0xff] %v2387
                  %v2389 = vld [vmem:[%s1977 + $0x19a0] sm:$0xff]
                  %2390 = vst [vmem:[%s1978 + $0x668] sm:$0xff] %v2389
                  %v2391 = vld [vmem:[%s1977 + $0x19c0] sm:$0xff]
                  %2392 = vst [vmem:[%s1978 + $0x670] sm:$0xff] %v2391
                  %v2393 = vld [vmem:[%s1977 + $0x19e0] sm:$0xff]
                  %2394 = vst [vmem:[%s1978 + $0x678] sm:$0xff] %v2393
                  %v2395 = vld [vmem:[%s1977 + $0x1a00] sm:$0xff]
                  %2396 = vst [vmem:[%s1978 + $0x680] sm:$0xff] %v2395
                  %v2397 = vld [vmem:[%s1977 + $0x1a20] sm:$0xff]
                  %2398 = vst [vmem:[%s1978 + $0x688] sm:$0xff] %v2397
                  %v2399 = vld [vmem:[%s1977 + $0x1a40] sm:$0xff]
                  %2400 = vst [vmem:[%s1978 + $0x690] sm:$0xff] %v2399
                  %v2401 = vld [vmem:[%s1977 + $0x1a60] sm:$0xff]
                  %2402 = vst [vmem:[%s1978 + $0x698] sm:$0xff] %v2401
                  %v2403 = vld [vmem:[%s1977 + $0x1a80] sm:$0xff]
                  %2404 = vst [vmem:[%s1978 + $0x6a0] sm:$0xff] %v2403
                  %v2405 = vld [vmem:[%s1977 + $0x1aa0] sm:$0xff]
                  %2406 = vst [vmem:[%s1978 + $0x6a8] sm:$0xff] %v2405
                  %v2407 = vld [vmem:[%s1977 + $0x1ac0] sm:$0xff]
                  %2408 = vst [vmem:[%s1978 + $0x6b0] sm:$0xff] %v2407
                  %v2409 = vld [vmem:[%s1977 + $0x1ae0] sm:$0xff]
                  %2410 = vst [vmem:[%s1978 + $0x6b8] sm:$0xff] %v2409
                  %v2411 = vld [vmem:[%s1977 + $0x1b00] sm:$0xff]
                  %2412 = vst [vmem:[%s1978 + $0x6c0] sm:$0xff] %v2411
                  %v2413 = vld [vmem:[%s1977 + $0x1b20] sm:$0xff]
                  %2414 = vst [vmem:[%s1978 + $0x6c8] sm:$0xff] %v2413
                  %v2415 = vld [vmem:[%s1977 + $0x1b40] sm:$0xff]
                  %2416 = vst [vmem:[%s1978 + $0x6d0] sm:$0xff] %v2415
                  %v2417 = vld [vmem:[%s1977 + $0x1b60] sm:$0xff]
                  %2418 = vst [vmem:[%s1978 + $0x6d8] sm:$0xff] %v2417
                  %v2419 = vld [vmem:[%s1977 + $0x1b80] sm:$0xff]
                  %2420 = vst [vmem:[%s1978 + $0x6e0] sm:$0xff] %v2419
                  %v2421 = vld [vmem:[%s1977 + $0x1ba0] sm:$0xff]
                  %2422 = vst [vmem:[%s1978 + $0x6e8] sm:$0xff] %v2421
                  %v2423 = vld [vmem:[%s1977 + $0x1bc0] sm:$0xff]
                  %2424 = vst [vmem:[%s1978 + $0x6f0] sm:$0xff] %v2423
                  %v2425 = vld [vmem:[%s1977 + $0x1be0] sm:$0xff]
                  %2426 = vst [vmem:[%s1978 + $0x6f8] sm:$0xff] %v2425
                  %v2427 = vld [vmem:[%s1977 + $0x1c00] sm:$0xff]
                  %2428 = vst [vmem:[%s1978 + $0x700] sm:$0xff] %v2427
                  %v2429 = vld [vmem:[%s1977 + $0x1c20] sm:$0xff]
                  %2430 = vst [vmem:[%s1978 + $0x708] sm:$0xff] %v2429
                  %v2431 = vld [vmem:[%s1977 + $0x1c40] sm:$0xff]
                  %2432 = vst [vmem:[%s1978 + $0x710] sm:$0xff] %v2431
                  %v2433 = vld [vmem:[%s1977 + $0x1c60] sm:$0xff]
                  %2434 = vst [vmem:[%s1978 + $0x718] sm:$0xff] %v2433
                  %v2435 = vld [vmem:[%s1977 + $0x1c80] sm:$0xff]
                  %2436 = vst [vmem:[%s1978 + $0x720] sm:$0xff] %v2435
                  %v2437 = vld [vmem:[%s1977 + $0x1ca0] sm:$0xff]
                  %2438 = vst [vmem:[%s1978 + $0x728] sm:$0xff] %v2437
                  %v2439 = vld [vmem:[%s1977 + $0x1cc0] sm:$0xff]
                  %2440 = vst [vmem:[%s1978 + $0x730] sm:$0xff] %v2439
                  %v2441 = vld [vmem:[%s1977 + $0x1ce0] sm:$0xff]
                  %2442 = vst [vmem:[%s1978 + $0x738] sm:$0xff] %v2441
                  %v2443 = vld [vmem:[%s1977 + $0x1d00] sm:$0xff]
                  %2444 = vst [vmem:[%s1978 + $0x740] sm:$0xff] %v2443
                  %v2445 = vld [vmem:[%s1977 + $0x1d20] sm:$0xff]
                  %2446 = vst [vmem:[%s1978 + $0x748] sm:$0xff] %v2445
                  %v2447 = vld [vmem:[%s1977 + $0x1d40] sm:$0xff]
                  %2448 = vst [vmem:[%s1978 + $0x750] sm:$0xff] %v2447
                  %v2449 = vld [vmem:[%s1977 + $0x1d60] sm:$0xff]
                  %2450 = vst [vmem:[%s1978 + $0x758] sm:$0xff] %v2449
                  %v2451 = vld [vmem:[%s1977 + $0x1d80] sm:$0xff]
                  %2452 = vst [vmem:[%s1978 + $0x760] sm:$0xff] %v2451
                  %v2453 = vld [vmem:[%s1977 + $0x1da0] sm:$0xff]
                  %2454 = vst [vmem:[%s1978 + $0x768] sm:$0xff] %v2453
                  %v2455 = vld [vmem:[%s1977 + $0x1dc0] sm:$0xff]
                  %2456 = vst [vmem:[%s1978 + $0x770] sm:$0xff] %v2455
                  %v2457 = vld [vmem:[%s1977 + $0x1de0] sm:$0xff]
                  %2458 = vst [vmem:[%s1978 + $0x778] sm:$0xff] %v2457
                  %v2459 = vld [vmem:[%s1977 + $0x1e00] sm:$0xff]
                  %2460 = vst [vmem:[%s1978 + $0x780] sm:$0xff] %v2459
                  %v2461 = vld [vmem:[%s1977 + $0x1e20] sm:$0xff]
                  %2462 = vst [vmem:[%s1978 + $0x788] sm:$0xff] %v2461
                  %v2463 = vld [vmem:[%s1977 + $0x1e40] sm:$0xff]
                  %2464 = vst [vmem:[%s1978 + $0x790] sm:$0xff] %v2463
                  %v2465 = vld [vmem:[%s1977 + $0x1e60] sm:$0xff]
                  %2466 = vst [vmem:[%s1978 + $0x798] sm:$0xff] %v2465
                  %v2467 = vld [vmem:[%s1977 + $0x1e80] sm:$0xff]
                  %2468 = vst [vmem:[%s1978 + $0x7a0] sm:$0xff] %v2467
                  %v2469 = vld [vmem:[%s1977 + $0x1ea0] sm:$0xff]
                  %2470 = vst [vmem:[%s1978 + $0x7a8] sm:$0xff] %v2469
                  %v2471 = vld [vmem:[%s1977 + $0x1ec0] sm:$0xff]
                  %2472 = vst [vmem:[%s1978 + $0x7b0] sm:$0xff] %v2471
                  %v2473 = vld [vmem:[%s1977 + $0x1ee0] sm:$0xff]
                  %2474 = vst [vmem:[%s1978 + $0x7b8] sm:$0xff] %v2473
                  %v2475 = vld [vmem:[%s1977 + $0x1f00] sm:$0xff]
                  %2476 = vst [vmem:[%s1978 + $0x7c0] sm:$0xff] %v2475
                  %v2477 = vld [vmem:[%s1977 + $0x1f20] sm:$0xff]
                  %2478 = vst [vmem:[%s1978 + $0x7c8] sm:$0xff] %v2477
                  %v2479 = vld [vmem:[%s1977 + $0x1f40] sm:$0xff]
                  %2480 = vst [vmem:[%s1978 + $0x7d0] sm:$0xff] %v2479
                  %v2481 = vld [vmem:[%s1977 + $0x1f60] sm:$0xff]
                  %2482 = vst [vmem:[%s1978 + $0x7d8] sm:$0xff] %v2481
                  %v2483 = vld [vmem:[%s1977 + $0x1f80] sm:$0xff]
                  %2484 = vst [vmem:[%s1978 + $0x7e0] sm:$0xff] %v2483
                  %v2485 = vld [vmem:[%s1977 + $0x1fa0] sm:$0xff]
                  %2486 = vst [vmem:[%s1978 + $0x7e8] sm:$0xff] %v2485
                  %v2487 = vld [vmem:[%s1977 + $0x1fc0] sm:$0xff]
                  %2488 = vst [vmem:[%s1978 + $0x7f0] sm:$0xff] %v2487
                  %v2489 = vld [vmem:[%s1977 + $0x1fe0] sm:$0xff]
                  %2490 = vst [vmem:[%s1978 + $0x7f8] sm:$0xff] %v2489
                  %v2491 = vld [vmem:[%s1977 + $0x2000] sm:$0xff]
                  %2492 = vst [vmem:[%s1978 + $0x800] sm:$0xff] %v2491
                  %v2493 = vld [vmem:[%s1977 + $0x2020] sm:$0xff]
                  %2494 = vst [vmem:[%s1978 + $0x808] sm:$0xff] %v2493
                  %v2495 = vld [vmem:[%s1977 + $0x2040] sm:$0xff]
                  %2496 = vst [vmem:[%s1978 + $0x810] sm:$0xff] %v2495
                  %v2497 = vld [vmem:[%s1977 + $0x2060] sm:$0xff]
                  %2498 = vst [vmem:[%s1978 + $0x818] sm:$0xff] %v2497
                  %v2499 = vld [vmem:[%s1977 + $0x2080] sm:$0xff]
                  %2500 = vst [vmem:[%s1978 + $0x820] sm:$0xff] %v2499
                  %v2501 = vld [vmem:[%s1977 + $0x20a0] sm:$0xff]
                  %2502 = vst [vmem:[%s1978 + $0x828] sm:$0xff] %v2501
                  %v2503 = vld [vmem:[%s1977 + $0x20c0] sm:$0xff]
                  %2504 = vst [vmem:[%s1978 + $0x830] sm:$0xff] %v2503
                  %v2505 = vld [vmem:[%s1977 + $0x20e0] sm:$0xff]
                  %2506 = vst [vmem:[%s1978 + $0x838] sm:$0xff] %v2505
                  %v2507 = vld [vmem:[%s1977 + $0x2100] sm:$0xff]
                  %2508 = vst [vmem:[%s1978 + $0x840] sm:$0xff] %v2507
                  %v2509 = vld [vmem:[%s1977 + $0x2120] sm:$0xff]
                  %2510 = vst [vmem:[%s1978 + $0x848] sm:$0xff] %v2509
                  %v2511 = vld [vmem:[%s1977 + $0x2140] sm:$0xff]
                  %2512 = vst [vmem:[%s1978 + $0x850] sm:$0xff] %v2511
                  %v2513 = vld [vmem:[%s1977 + $0x2160] sm:$0xff]
                  %2514 = vst [vmem:[%s1978 + $0x858] sm:$0xff] %v2513
                  %v2515 = vld [vmem:[%s1977 + $0x2180] sm:$0xff]
                  %2516 = vst [vmem:[%s1978 + $0x860] sm:$0xff] %v2515
                  %v2517 = vld [vmem:[%s1977 + $0x21a0] sm:$0xff]
                  %2518 = vst [vmem:[%s1978 + $0x868] sm:$0xff] %v2517
                  %v2519 = vld [vmem:[%s1977 + $0x21c0] sm:$0xff]
                  %2520 = vst [vmem:[%s1978 + $0x870] sm:$0xff] %v2519
                  %v2521 = vld [vmem:[%s1977 + $0x21e0] sm:$0xff]
                  %2522 = vst [vmem:[%s1978 + $0x878] sm:$0xff] %v2521
                  %v2523 = vld [vmem:[%s1977 + $0x2200] sm:$0xff]
                  %2524 = vst [vmem:[%s1978 + $0x880] sm:$0xff] %v2523
                  %v2525 = vld [vmem:[%s1977 + $0x2220] sm:$0xff]
                  %2526 = vst [vmem:[%s1978 + $0x888] sm:$0xff] %v2525
                  %v2527 = vld [vmem:[%s1977 + $0x2240] sm:$0xff]
                  %2528 = vst [vmem:[%s1978 + $0x890] sm:$0xff] %v2527
                  %v2529 = vld [vmem:[%s1977 + $0x2260] sm:$0xff]
                  %2530 = vst [vmem:[%s1978 + $0x898] sm:$0xff] %v2529
                  %v2531 = vld [vmem:[%s1977 + $0x2280] sm:$0xff]
                  %2532 = vst [vmem:[%s1978 + $0x8a0] sm:$0xff] %v2531
                  %v2533 = vld [vmem:[%s1977 + $0x22a0] sm:$0xff]
                  %2534 = vst [vmem:[%s1978 + $0x8a8] sm:$0xff] %v2533
                  %v2535 = vld [vmem:[%s1977 + $0x22c0] sm:$0xff]
                  %2536 = vst [vmem:[%s1978 + $0x8b0] sm:$0xff] %v2535
                  %v2537 = vld [vmem:[%s1977 + $0x22e0] sm:$0xff]
                  %2538 = vst [vmem:[%s1978 + $0x8b8] sm:$0xff] %v2537
                  %v2539 = vld [vmem:[%s1977 + $0x2300] sm:$0xff]
                  %2540 = vst [vmem:[%s1978 + $0x8c0] sm:$0xff] %v2539
                  %v2541 = vld [vmem:[%s1977 + $0x2320] sm:$0xff]
                  %2542 = vst [vmem:[%s1978 + $0x8c8] sm:$0xff] %v2541
                  %v2543 = vld [vmem:[%s1977 + $0x2340] sm:$0xff]
                  %2544 = vst [vmem:[%s1978 + $0x8d0] sm:$0xff] %v2543
                  %v2545 = vld [vmem:[%s1977 + $0x2360] sm:$0xff]
                  %2546 = vst [vmem:[%s1978 + $0x8d8] sm:$0xff] %v2545
                  %v2547 = vld [vmem:[%s1977 + $0x2380] sm:$0xff]
                  %2548 = vst [vmem:[%s1978 + $0x8e0] sm:$0xff] %v2547
                  %v2549 = vld [vmem:[%s1977 + $0x23a0] sm:$0xff]
                  %2550 = vst [vmem:[%s1978 + $0x8e8] sm:$0xff] %v2549
                  %v2551 = vld [vmem:[%s1977 + $0x23c0] sm:$0xff]
                  %2552 = vst [vmem:[%s1978 + $0x8f0] sm:$0xff] %v2551
                  %v2553 = vld [vmem:[%s1977 + $0x23e0] sm:$0xff]
                  %2554 = vst [vmem:[%s1978 + $0x8f8] sm:$0xff] %v2553
                  %v2555 = vld [vmem:[%s1977 + $0x2400] sm:$0xff]
                  %2556 = vst [vmem:[%s1978 + $0x900] sm:$0xff] %v2555
                  %v2557 = vld [vmem:[%s1977 + $0x2420] sm:$0xff]
                  %2558 = vst [vmem:[%s1978 + $0x908] sm:$0xff] %v2557
                  %v2559 = vld [vmem:[%s1977 + $0x2440] sm:$0xff]
                  %2560 = vst [vmem:[%s1978 + $0x910] sm:$0xff] %v2559
                  %v2561 = vld [vmem:[%s1977 + $0x2460] sm:$0xff]
                  %2562 = vst [vmem:[%s1978 + $0x918] sm:$0xff] %v2561
                  %v2563 = vld [vmem:[%s1977 + $0x2480] sm:$0xff]
                  %2564 = vst [vmem:[%s1978 + $0x920] sm:$0xff] %v2563
                  %v2565 = vld [vmem:[%s1977 + $0x24a0] sm:$0xff]
                  %2566 = vst [vmem:[%s1978 + $0x928] sm:$0xff] %v2565
                  %v2567 = vld [vmem:[%s1977 + $0x24c0] sm:$0xff]
                  %2568 = vst [vmem:[%s1978 + $0x930] sm:$0xff] %v2567
                  %v2569 = vld [vmem:[%s1977 + $0x24e0] sm:$0xff]
                  %2570 = vst [vmem:[%s1978 + $0x938] sm:$0xff] %v2569
                  %v2571 = vld [vmem:[%s1977 + $0x2500] sm:$0xff]
                  %2572 = vst [vmem:[%s1978 + $0x940] sm:$0xff] %v2571
                  %v2573 = vld [vmem:[%s1977 + $0x2520] sm:$0xff]
                  %2574 = vst [vmem:[%s1978 + $0x948] sm:$0xff] %v2573
                  %v2575 = vld [vmem:[%s1977 + $0x2540] sm:$0xff]
                  %2576 = vst [vmem:[%s1978 + $0x950] sm:$0xff] %v2575
                  %v2577 = vld [vmem:[%s1977 + $0x2560] sm:$0xff]
                  %2578 = vst [vmem:[%s1978 + $0x958] sm:$0xff] %v2577
                  %v2579 = vld [vmem:[%s1977 + $0x2580] sm:$0xff]
                  %2580 = vst [vmem:[%s1978 + $0x960] sm:$0xff] %v2579
                  %v2581 = vld [vmem:[%s1977 + $0x25a0] sm:$0xff]
                  %2582 = vst [vmem:[%s1978 + $0x968] sm:$0xff] %v2581
                  %v2583 = vld [vmem:[%s1977 + $0x25c0] sm:$0xff]
                  %2584 = vst [vmem:[%s1978 + $0x970] sm:$0xff] %v2583
                  %v2585 = vld [vmem:[%s1977 + $0x25e0] sm:$0xff]
                  %2586 = vst [vmem:[%s1978 + $0x978] sm:$0xff] %v2585
                  %v2587 = vld [vmem:[%s1977 + $0x2600] sm:$0xff]
                  %2588 = vst [vmem:[%s1978 + $0x980] sm:$0xff] %v2587
                  %v2589 = vld [vmem:[%s1977 + $0x2620] sm:$0xff]
                  %2590 = vst [vmem:[%s1978 + $0x988] sm:$0xff] %v2589
                  %v2591 = vld [vmem:[%s1977 + $0x2640] sm:$0xff]
                  %2592 = vst [vmem:[%s1978 + $0x990] sm:$0xff] %v2591
                  %v2593 = vld [vmem:[%s1977 + $0x2660] sm:$0xff]
                  %2594 = vst [vmem:[%s1978 + $0x998] sm:$0xff] %v2593
                  %v2595 = vld [vmem:[%s1977 + $0x2680] sm:$0xff]
                  %2596 = vst [vmem:[%s1978 + $0x9a0] sm:$0xff] %v2595
                  %v2597 = vld [vmem:[%s1977 + $0x26a0] sm:$0xff]
                  %2598 = vst [vmem:[%s1978 + $0x9a8] sm:$0xff] %v2597
                  %v2599 = vld [vmem:[%s1977 + $0x26c0] sm:$0xff]
                  %2600 = vst [vmem:[%s1978 + $0x9b0] sm:$0xff] %v2599
                  %v2601 = vld [vmem:[%s1977 + $0x26e0] sm:$0xff]
                  %2602 = vst [vmem:[%s1978 + $0x9b8] sm:$0xff] %v2601
                  %v2603 = vld [vmem:[%s1977 + $0x2700] sm:$0xff]
                  %2604 = vst [vmem:[%s1978 + $0x9c0] sm:$0xff] %v2603
                  %v2605 = vld [vmem:[%s1977 + $0x2720] sm:$0xff]
                  %2606 = vst [vmem:[%s1978 + $0x9c8] sm:$0xff] %v2605
                  %v2607 = vld [vmem:[%s1977 + $0x2740] sm:$0xff]
                  %2608 = vst [vmem:[%s1978 + $0x9d0] sm:$0xff] %v2607
                  %v2609 = vld [vmem:[%s1977 + $0x2760] sm:$0xff]
                  %2610 = vst [vmem:[%s1978 + $0x9d8] sm:$0xff] %v2609
                  %v2611 = vld [vmem:[%s1977 + $0x2780] sm:$0xff]
                  %2612 = vst [vmem:[%s1978 + $0x9e0] sm:$0xff] %v2611
                  %v2613 = vld [vmem:[%s1977 + $0x27a0] sm:$0xff]
                  %2614 = vst [vmem:[%s1978 + $0x9e8] sm:$0xff] %v2613
                  %v2615 = vld [vmem:[%s1977 + $0x27c0] sm:$0xff]
                  %2616 = vst [vmem:[%s1978 + $0x9f0] sm:$0xff] %v2615
                  %v2617 = vld [vmem:[%s1977 + $0x27e0] sm:$0xff]
                  %2618 = vst [vmem:[%s1978 + $0x9f8] sm:$0xff] %v2617
                  %v2619 = vld [vmem:[%s1977 + $0x2800] sm:$0xff]
                  %2620 = vst [vmem:[%s1978 + $0xa00] sm:$0xff] %v2619
                  %v2621 = vld [vmem:[%s1977 + $0x2820] sm:$0xff]
                  %2622 = vst [vmem:[%s1978 + $0xa08] sm:$0xff] %v2621
                  %v2623 = vld [vmem:[%s1977 + $0x2840] sm:$0xff]
                  %2624 = vst [vmem:[%s1978 + $0xa10] sm:$0xff] %v2623
                  %v2625 = vld [vmem:[%s1977 + $0x2860] sm:$0xff]
                  %2626 = vst [vmem:[%s1978 + $0xa18] sm:$0xff] %v2625
                  %v2627 = vld [vmem:[%s1977 + $0x2880] sm:$0xff]
                  %2628 = vst [vmem:[%s1978 + $0xa20] sm:$0xff] %v2627
                  %v2629 = vld [vmem:[%s1977 + $0x28a0] sm:$0xff]
                  %2630 = vst [vmem:[%s1978 + $0xa28] sm:$0xff] %v2629
                  %v2631 = vld [vmem:[%s1977 + $0x28c0] sm:$0xff]
                  %2632 = vst [vmem:[%s1978 + $0xa30] sm:$0xff] %v2631
                  %v2633 = vld [vmem:[%s1977 + $0x28e0] sm:$0xff]
                  %2634 = vst [vmem:[%s1978 + $0xa38] sm:$0xff] %v2633
                  %v2635 = vld [vmem:[%s1977 + $0x2900] sm:$0xff]
                  %2636 = vst [vmem:[%s1978 + $0xa40] sm:$0xff] %v2635
                  %v2637 = vld [vmem:[%s1977 + $0x2920] sm:$0xff]
                  %2638 = vst [vmem:[%s1978 + $0xa48] sm:$0xff] %v2637
                  %v2639 = vld [vmem:[%s1977 + $0x2940] sm:$0xff]
                  %2640 = vst [vmem:[%s1978 + $0xa50] sm:$0xff] %v2639
                  %v2641 = vld [vmem:[%s1977 + $0x2960] sm:$0xff]
                  %2642 = vst [vmem:[%s1978 + $0xa58] sm:$0xff] %v2641
                  %v2643 = vld [vmem:[%s1977 + $0x2980] sm:$0xff]
                  %2644 = vst [vmem:[%s1978 + $0xa60] sm:$0xff] %v2643
                  %v2645 = vld [vmem:[%s1977 + $0x29a0] sm:$0xff]
                  %2646 = vst [vmem:[%s1978 + $0xa68] sm:$0xff] %v2645
                  %v2647 = vld [vmem:[%s1977 + $0x29c0] sm:$0xff]
                  %2648 = vst [vmem:[%s1978 + $0xa70] sm:$0xff] %v2647
                  %v2649 = vld [vmem:[%s1977 + $0x29e0] sm:$0xff]
                  %2650 = vst [vmem:[%s1978 + $0xa78] sm:$0xff] %v2649
                  %v2651 = vld [vmem:[%s1977 + $0x2a00] sm:$0xff]
                  %2652 = vst [vmem:[%s1978 + $0xa80] sm:$0xff] %v2651
                  %v2653 = vld [vmem:[%s1977 + $0x2a20] sm:$0xff]
                  %2654 = vst [vmem:[%s1978 + $0xa88] sm:$0xff] %v2653
                  %v2655 = vld [vmem:[%s1977 + $0x2a40] sm:$0xff]
                  %2656 = vst [vmem:[%s1978 + $0xa90] sm:$0xff] %v2655
                  %v2657 = vld [vmem:[%s1977 + $0x2a60] sm:$0xff]
                  %2658 = vst [vmem:[%s1978 + $0xa98] sm:$0xff] %v2657
                  %v2659 = vld [vmem:[%s1977 + $0x2a80] sm:$0xff]
                  %2660 = vst [vmem:[%s1978 + $0xaa0] sm:$0xff] %v2659
                  %v2661 = vld [vmem:[%s1977 + $0x2aa0] sm:$0xff]
                  %2662 = vst [vmem:[%s1978 + $0xaa8] sm:$0xff] %v2661
                  %v2663 = vld [vmem:[%s1977 + $0x2ac0] sm:$0xff]
                  %2664 = vst [vmem:[%s1978 + $0xab0] sm:$0xff] %v2663
                  %v2665 = vld [vmem:[%s1977 + $0x2ae0] sm:$0xff]
                  %2666 = vst [vmem:[%s1978 + $0xab8] sm:$0xff] %v2665
                  %v2667 = vld [vmem:[%s1977 + $0x2b00] sm:$0xff]
                  %2668 = vst [vmem:[%s1978 + $0xac0] sm:$0xff] %v2667
                  %v2669 = vld [vmem:[%s1977 + $0x2b20] sm:$0xff]
                  %2670 = vst [vmem:[%s1978 + $0xac8] sm:$0xff] %v2669
                  %v2671 = vld [vmem:[%s1977 + $0x2b40] sm:$0xff]
                  %2672 = vst [vmem:[%s1978 + $0xad0] sm:$0xff] %v2671
                  %v2673 = vld [vmem:[%s1977 + $0x2b60] sm:$0xff]
                  %2674 = vst [vmem:[%s1978 + $0xad8] sm:$0xff] %v2673
                  %v2675 = vld [vmem:[%s1977 + $0x2b80] sm:$0xff]
                  %2676 = vst [vmem:[%s1978 + $0xae0] sm:$0xff] %v2675
                  %v2677 = vld [vmem:[%s1977 + $0x2ba0] sm:$0xff]
                  %2678 = vst [vmem:[%s1978 + $0xae8] sm:$0xff] %v2677
                  %v2679 = vld [vmem:[%s1977 + $0x2bc0] sm:$0xff]
                  %2680 = vst [vmem:[%s1978 + $0xaf0] sm:$0xff] %v2679
                  %v2681 = vld [vmem:[%s1977 + $0x2be0] sm:$0xff]
                  %2682 = vst [vmem:[%s1978 + $0xaf8] sm:$0xff] %v2681
                  %v2683 = vld [vmem:[%s1977 + $0x2c00] sm:$0xff]
                  %2684 = vst [vmem:[%s1978 + $0xb00] sm:$0xff] %v2683
                  %v2685 = vld [vmem:[%s1977 + $0x2c20] sm:$0xff]
                  %2686 = vst [vmem:[%s1978 + $0xb08] sm:$0xff] %v2685
                  %v2687 = vld [vmem:[%s1977 + $0x2c40] sm:$0xff]
                  %2688 = vst [vmem:[%s1978 + $0xb10] sm:$0xff] %v2687
                  %v2689 = vld [vmem:[%s1977 + $0x2c60] sm:$0xff]
                  %2690 = vst [vmem:[%s1978 + $0xb18] sm:$0xff] %v2689
                  %v2691 = vld [vmem:[%s1977 + $0x2c80] sm:$0xff]
                  %2692 = vst [vmem:[%s1978 + $0xb20] sm:$0xff] %v2691
                  %v2693 = vld [vmem:[%s1977 + $0x2ca0] sm:$0xff]
                  %2694 = vst [vmem:[%s1978 + $0xb28] sm:$0xff] %v2693
                  %v2695 = vld [vmem:[%s1977 + $0x2cc0] sm:$0xff]
                  %2696 = vst [vmem:[%s1978 + $0xb30] sm:$0xff] %v2695
                  %v2697 = vld [vmem:[%s1977 + $0x2ce0] sm:$0xff]
                  %2698 = vst [vmem:[%s1978 + $0xb38] sm:$0xff] %v2697
                  %v2699 = vld [vmem:[%s1977 + $0x2d00] sm:$0xff]
                  %2700 = vst [vmem:[%s1978 + $0xb40] sm:$0xff] %v2699
                  %v2701 = vld [vmem:[%s1977 + $0x2d20] sm:$0xff]
                  %2702 = vst [vmem:[%s1978 + $0xb48] sm:$0xff] %v2701
                  %v2703 = vld [vmem:[%s1977 + $0x2d40] sm:$0xff]
                  %2704 = vst [vmem:[%s1978 + $0xb50] sm:$0xff] %v2703
                  %v2705 = vld [vmem:[%s1977 + $0x2d60] sm:$0xff]
                  %2706 = vst [vmem:[%s1978 + $0xb58] sm:$0xff] %v2705
                  %v2707 = vld [vmem:[%s1977 + $0x2d80] sm:$0xff]
                  %2708 = vst [vmem:[%s1978 + $0xb60] sm:$0xff] %v2707
                  %v2709 = vld [vmem:[%s1977 + $0x2da0] sm:$0xff]
                  %2710 = vst [vmem:[%s1978 + $0xb68] sm:$0xff] %v2709
                  %v2711 = vld [vmem:[%s1977 + $0x2dc0] sm:$0xff]
                  %2712 = vst [vmem:[%s1978 + $0xb70] sm:$0xff] %v2711
                  %v2713 = vld [vmem:[%s1977 + $0x2de0] sm:$0xff]
                  %2714 = vst [vmem:[%s1978 + $0xb78] sm:$0xff] %v2713
                  %v2715 = vld [vmem:[%s1977 + $0x2e00] sm:$0xff]
                  %2716 = vst [vmem:[%s1978 + $0xb80] sm:$0xff] %v2715
                  %v2717 = vld [vmem:[%s1977 + $0x2e20] sm:$0xff]
                  %2718 = vst [vmem:[%s1978 + $0xb88] sm:$0xff] %v2717
                  %v2719 = vld [vmem:[%s1977 + $0x2e40] sm:$0xff]
                  %2720 = vst [vmem:[%s1978 + $0xb90] sm:$0xff] %v2719
                  %v2721 = vld [vmem:[%s1977 + $0x2e60] sm:$0xff]
                  %2722 = vst [vmem:[%s1978 + $0xb98] sm:$0xff] %v2721
                  %v2723 = vld [vmem:[%s1977 + $0x2e80] sm:$0xff]
                  %2724 = vst [vmem:[%s1978 + $0xba0] sm:$0xff] %v2723
                  %v2725 = vld [vmem:[%s1977 + $0x2ea0] sm:$0xff]
                  %2726 = vst [vmem:[%s1978 + $0xba8] sm:$0xff] %v2725
                  %v2727 = vld [vmem:[%s1977 + $0x2ec0] sm:$0xff]
                  %2728 = vst [vmem:[%s1978 + $0xbb0] sm:$0xff] %v2727
                  %v2729 = vld [vmem:[%s1977 + $0x2ee0] sm:$0xff]
                  %2730 = vst [vmem:[%s1978 + $0xbb8] sm:$0xff] %v2729
                  %v2731 = vld [vmem:[%s1977 + $0x2f00] sm:$0xff]
                  %2732 = vst [vmem:[%s1978 + $0xbc0] sm:$0xff] %v2731
                  %v2733 = vld [vmem:[%s1977 + $0x2f20] sm:$0xff]
                  %2734 = vst [vmem:[%s1978 + $0xbc8] sm:$0xff] %v2733
                  %v2735 = vld [vmem:[%s1977 + $0x2f40] sm:$0xff]
                  %2736 = vst [vmem:[%s1978 + $0xbd0] sm:$0xff] %v2735
                  %v2737 = vld [vmem:[%s1977 + $0x2f60] sm:$0xff]
                  %2738 = vst [vmem:[%s1978 + $0xbd8] sm:$0xff] %v2737
                  %v2739 = vld [vmem:[%s1977 + $0x2f80] sm:$0xff]
                  %2740 = vst [vmem:[%s1978 + $0xbe0] sm:$0xff] %v2739
                  %v2741 = vld [vmem:[%s1977 + $0x2fa0] sm:$0xff]
                  %2742 = vst [vmem:[%s1978 + $0xbe8] sm:$0xff] %v2741
                  %v2743 = vld [vmem:[%s1977 + $0x2fc0] sm:$0xff]
                  %2744 = vst [vmem:[%s1978 + $0xbf0] sm:$0xff] %v2743
                  %v2745 = vld [vmem:[%s1977 + $0x2fe0] sm:$0xff]
                  %2746 = vst [vmem:[%s1978 + $0xbf8] sm:$0xff] %v2745
                  %v2747 = vld [vmem:[%s1977 + $0x3000] sm:$0xff]
                  %2748 = vst [vmem:[%s1978 + $0xc00] sm:$0xff] %v2747
                  %v2749 = vld [vmem:[%s1977 + $0x3020] sm:$0xff]
                  %2750 = vst [vmem:[%s1978 + $0xc08] sm:$0xff] %v2749
                  %v2751 = vld [vmem:[%s1977 + $0x3040] sm:$0xff]
                  %2752 = vst [vmem:[%s1978 + $0xc10] sm:$0xff] %v2751
                  %v2753 = vld [vmem:[%s1977 + $0x3060] sm:$0xff]
                  %2754 = vst [vmem:[%s1978 + $0xc18] sm:$0xff] %v2753
                  %v2755 = vld [vmem:[%s1977 + $0x3080] sm:$0xff]
                  %2756 = vst [vmem:[%s1978 + $0xc20] sm:$0xff] %v2755
                  %v2757 = vld [vmem:[%s1977 + $0x30a0] sm:$0xff]
                  %2758 = vst [vmem:[%s1978 + $0xc28] sm:$0xff] %v2757
                  %v2759 = vld [vmem:[%s1977 + $0x30c0] sm:$0xff]
                  %2760 = vst [vmem:[%s1978 + $0xc30] sm:$0xff] %v2759
                  %v2761 = vld [vmem:[%s1977 + $0x30e0] sm:$0xff]
                  %2762 = vst [vmem:[%s1978 + $0xc38] sm:$0xff] %v2761
                  %v2763 = vld [vmem:[%s1977 + $0x3100] sm:$0xff]
                  %2764 = vst [vmem:[%s1978 + $0xc40] sm:$0xff] %v2763
                  %v2765 = vld [vmem:[%s1977 + $0x3120] sm:$0xff]
                  %2766 = vst [vmem:[%s1978 + $0xc48] sm:$0xff] %v2765
                  %v2767 = vld [vmem:[%s1977 + $0x3140] sm:$0xff]
                  %2768 = vst [vmem:[%s1978 + $0xc50] sm:$0xff] %v2767
                  %v2769 = vld [vmem:[%s1977 + $0x3160] sm:$0xff]
                  %2770 = vst [vmem:[%s1978 + $0xc58] sm:$0xff] %v2769
                  %v2771 = vld [vmem:[%s1977 + $0x3180] sm:$0xff]
                  %2772 = vst [vmem:[%s1978 + $0xc60] sm:$0xff] %v2771
                  %v2773 = vld [vmem:[%s1977 + $0x31a0] sm:$0xff]
                  %2774 = vst [vmem:[%s1978 + $0xc68] sm:$0xff] %v2773
                  %v2775 = vld [vmem:[%s1977 + $0x31c0] sm:$0xff]
                  %2776 = vst [vmem:[%s1978 + $0xc70] sm:$0xff] %v2775
                  %v2777 = vld [vmem:[%s1977 + $0x31e0] sm:$0xff]
                  %2778 = vst [vmem:[%s1978 + $0xc78] sm:$0xff] %v2777
                  %v2779 = vld [vmem:[%s1977 + $0x3200] sm:$0xff]
                  %2780 = vst [vmem:[%s1978 + $0xc80] sm:$0xff] %v2779
                  %v2781 = vld [vmem:[%s1977 + $0x3220] sm:$0xff]
                  %2782 = vst [vmem:[%s1978 + $0xc88] sm:$0xff] %v2781
                  %v2783 = vld [vmem:[%s1977 + $0x3240] sm:$0xff]
                  %2784 = vst [vmem:[%s1978 + $0xc90] sm:$0xff] %v2783
                  %v2785 = vld [vmem:[%s1977 + $0x3260] sm:$0xff]
                  %2786 = vst [vmem:[%s1978 + $0xc98] sm:$0xff] %v2785
                  %v2787 = vld [vmem:[%s1977 + $0x3280] sm:$0xff]
                  %2788 = vst [vmem:[%s1978 + $0xca0] sm:$0xff] %v2787
                  %v2789 = vld [vmem:[%s1977 + $0x32a0] sm:$0xff]
                  %2790 = vst [vmem:[%s1978 + $0xca8] sm:$0xff] %v2789
                  %v2791 = vld [vmem:[%s1977 + $0x32c0] sm:$0xff]
                  %2792 = vst [vmem:[%s1978 + $0xcb0] sm:$0xff] %v2791
                  %v2793 = vld [vmem:[%s1977 + $0x32e0] sm:$0xff]
                  %2794 = vst [vmem:[%s1978 + $0xcb8] sm:$0xff] %v2793
                  %v2795 = vld [vmem:[%s1977 + $0x3300] sm:$0xff]
                  %2796 = vst [vmem:[%s1978 + $0xcc0] sm:$0xff] %v2795
                  %v2797 = vld [vmem:[%s1977 + $0x3320] sm:$0xff]
                  %2798 = vst [vmem:[%s1978 + $0xcc8] sm:$0xff] %v2797
                  %v2799 = vld [vmem:[%s1977 + $0x3340] sm:$0xff]
                  %2800 = vst [vmem:[%s1978 + $0xcd0] sm:$0xff] %v2799
                  %v2801 = vld [vmem:[%s1977 + $0x3360] sm:$0xff]
                  %2802 = vst [vmem:[%s1978 + $0xcd8] sm:$0xff] %v2801
                  %v2803 = vld [vmem:[%s1977 + $0x3380] sm:$0xff]
                  %2804 = vst [vmem:[%s1978 + $0xce0] sm:$0xff] %v2803
                  %v2805 = vld [vmem:[%s1977 + $0x33a0] sm:$0xff]
                  %2806 = vst [vmem:[%s1978 + $0xce8] sm:$0xff] %v2805
                  %v2807 = vld [vmem:[%s1977 + $0x33c0] sm:$0xff]
                  %2808 = vst [vmem:[%s1978 + $0xcf0] sm:$0xff] %v2807
                  %v2809 = vld [vmem:[%s1977 + $0x33e0] sm:$0xff]
                  %2810 = vst [vmem:[%s1978 + $0xcf8] sm:$0xff] %v2809
                  %v2811 = vld [vmem:[%s1977 + $0x3400] sm:$0xff]
                  %2812 = vst [vmem:[%s1978 + $0xd00] sm:$0xff] %v2811
                  %v2813 = vld [vmem:[%s1977 + $0x3420] sm:$0xff]
                  %2814 = vst [vmem:[%s1978 + $0xd08] sm:$0xff] %v2813
                  %v2815 = vld [vmem:[%s1977 + $0x3440] sm:$0xff]
                  %2816 = vst [vmem:[%s1978 + $0xd10] sm:$0xff] %v2815
                  %v2817 = vld [vmem:[%s1977 + $0x3460] sm:$0xff]
                  %2818 = vst [vmem:[%s1978 + $0xd18] sm:$0xff] %v2817
                  %v2819 = vld [vmem:[%s1977 + $0x3480] sm:$0xff]
                  %2820 = vst [vmem:[%s1978 + $0xd20] sm:$0xff] %v2819
                  %v2821 = vld [vmem:[%s1977 + $0x34a0] sm:$0xff]
                  %2822 = vst [vmem:[%s1978 + $0xd28] sm:$0xff] %v2821
                  %v2823 = vld [vmem:[%s1977 + $0x34c0] sm:$0xff]
                  %2824 = vst [vmem:[%s1978 + $0xd30] sm:$0xff] %v2823
                  %v2825 = vld [vmem:[%s1977 + $0x34e0] sm:$0xff]
                  %2826 = vst [vmem:[%s1978 + $0xd38] sm:$0xff] %v2825
                  %v2827 = vld [vmem:[%s1977 + $0x3500] sm:$0xff]
                  %2828 = vst [vmem:[%s1978 + $0xd40] sm:$0xff] %v2827
                  %v2829 = vld [vmem:[%s1977 + $0x3520] sm:$0xff]
                  %2830 = vst [vmem:[%s1978 + $0xd48] sm:$0xff] %v2829
                  %v2831 = vld [vmem:[%s1977 + $0x3540] sm:$0xff]
                  %2832 = vst [vmem:[%s1978 + $0xd50] sm:$0xff] %v2831
                  %v2833 = vld [vmem:[%s1977 + $0x3560] sm:$0xff]
                  %2834 = vst [vmem:[%s1978 + $0xd58] sm:$0xff] %v2833
                  %v2835 = vld [vmem:[%s1977 + $0x3580] sm:$0xff]
                  %2836 = vst [vmem:[%s1978 + $0xd60] sm:$0xff] %v2835
                  %v2837 = vld [vmem:[%s1977 + $0x35a0] sm:$0xff]
                  %2838 = vst [vmem:[%s1978 + $0xd68] sm:$0xff] %v2837
                  %v2839 = vld [vmem:[%s1977 + $0x35c0] sm:$0xff]
                  %2840 = vst [vmem:[%s1978 + $0xd70] sm:$0xff] %v2839
                  %v2841 = vld [vmem:[%s1977 + $0x35e0] sm:$0xff]
                  %2842 = vst [vmem:[%s1978 + $0xd78] sm:$0xff] %v2841
                  %v2843 = vld [vmem:[%s1977 + $0x3600] sm:$0xff]
                  %2844 = vst [vmem:[%s1978 + $0xd80] sm:$0xff] %v2843
                  %v2845 = vld [vmem:[%s1977 + $0x3620] sm:$0xff]
                  %2846 = vst [vmem:[%s1978 + $0xd88] sm:$0xff] %v2845
                  %v2847 = vld [vmem:[%s1977 + $0x3640] sm:$0xff]
                  %2848 = vst [vmem:[%s1978 + $0xd90] sm:$0xff] %v2847
                  %v2849 = vld [vmem:[%s1977 + $0x3660] sm:$0xff]
                  %2850 = vst [vmem:[%s1978 + $0xd98] sm:$0xff] %v2849
                  %s2851 = sadd.s32 1, %s1976
                  %p2852 = scmp.ge.s32.totalorder %s2851, 1
                  %s2853 = scalar_select %p2852, 0, %s2851
                  %s2854 = smul.u32 %s2853, 8
                  %s2855 = smul.u32 %s2853, 8
                  %s2856 = scalar_lea.vmem %s187, %s2854
                  %s2857 = scalar_lea.vmem %s184, %s2855 [#allocation3]
                $region67: #{dqn_forward.5} parent=61 // loop_footer
                  %s1975 = sadd.s32 1, %s1971
                $region68: #{dqn_forward.5} parent=61 // loop_footer_branch
                  %1970 = sbr.rel target = $region64
                $region69: #{dqn_forward.5} parent=61 // loop_exit
                  _
                %s2859 = ssub.s32 1, 1
                loop: start=0, step=1, limit=1
                $region70: #{dqn_forward.5} parent=61 // loop_pre_header
                  _
                $region71: #{dqn_forward.5} parent=61 // loop_header
                  %s2861 = sphi 0, %s2865
                  %p2862 = scmp.ge.s32.totalorder %s2861, 1
                  %s2866 = sphi %s1968, %s1968
                  %s2867 = sphi %s1969, %s1969
                $region72: #{dqn_forward.5} parent=61 // loop_header_branch
                  %2864 = sbr.rel (%p2862) target = $region76
                $region73: #{dqn_forward.5} parent=61 // loop_body
                  %v2868 = vld [vmem:[%s2866] sm:%s2859]
                  %2869 = vst [vmem:[%s2867] sm:%s2859] %v2868
                  %v2870 = vld [vmem:[%s2866 + $0x20] sm:%s2859]
                  %2871 = vst [vmem:[%s2867 + $0x8] sm:%s2859] %v2870
                  %v2872 = vld [vmem:[%s2866 + $0x40] sm:%s2859]
                  %2873 = vst [vmem:[%s2867 + $0x10] sm:%s2859] %v2872
                  %v2874 = vld [vmem:[%s2866 + $0x60] sm:%s2859]
                  %2875 = vst [vmem:[%s2867 + $0x18] sm:%s2859] %v2874
                  %v2876 = vld [vmem:[%s2866 + $0x80] sm:%s2859]
                  %2877 = vst [vmem:[%s2867 + $0x20] sm:%s2859] %v2876
                  %v2878 = vld [vmem:[%s2866 + $0xa0] sm:%s2859]
                  %2879 = vst [vmem:[%s2867 + $0x28] sm:%s2859] %v2878
                  %v2880 = vld [vmem:[%s2866 + $0xc0] sm:%s2859]
                  %2881 = vst [vmem:[%s2867 + $0x30] sm:%s2859] %v2880
                  %v2882 = vld [vmem:[%s2866 + $0xe0] sm:%s2859]
                  %2883 = vst [vmem:[%s2867 + $0x38] sm:%s2859] %v2882
                  %v2884 = vld [vmem:[%s2866 + $0x100] sm:%s2859]
                  %2885 = vst [vmem:[%s2867 + $0x40] sm:%s2859] %v2884
                  %v2886 = vld [vmem:[%s2866 + $0x120] sm:%s2859]
                  %2887 = vst [vmem:[%s2867 + $0x48] sm:%s2859] %v2886
                  %v2888 = vld [vmem:[%s2866 + $0x140] sm:%s2859]
                  %2889 = vst [vmem:[%s2867 + $0x50] sm:%s2859] %v2888
                  %v2890 = vld [vmem:[%s2866 + $0x160] sm:%s2859]
                  %2891 = vst [vmem:[%s2867 + $0x58] sm:%s2859] %v2890
                  %v2892 = vld [vmem:[%s2866 + $0x180] sm:%s2859]
                  %2893 = vst [vmem:[%s2867 + $0x60] sm:%s2859] %v2892
                  %v2894 = vld [vmem:[%s2866 + $0x1a0] sm:%s2859]
                  %2895 = vst [vmem:[%s2867 + $0x68] sm:%s2859] %v2894
                  %v2896 = vld [vmem:[%s2866 + $0x1c0] sm:%s2859]
                  %2897 = vst [vmem:[%s2867 + $0x70] sm:%s2859] %v2896
                  %v2898 = vld [vmem:[%s2866 + $0x1e0] sm:%s2859]
                  %2899 = vst [vmem:[%s2867 + $0x78] sm:%s2859] %v2898
                  %v2900 = vld [vmem:[%s2866 + $0x200] sm:%s2859]
                  %2901 = vst [vmem:[%s2867 + $0x80] sm:%s2859] %v2900
                  %v2902 = vld [vmem:[%s2866 + $0x220] sm:%s2859]
                  %2903 = vst [vmem:[%s2867 + $0x88] sm:%s2859] %v2902
                  %v2904 = vld [vmem:[%s2866 + $0x240] sm:%s2859]
                  %2905 = vst [vmem:[%s2867 + $0x90] sm:%s2859] %v2904
                  %v2906 = vld [vmem:[%s2866 + $0x260] sm:%s2859]
                  %2907 = vst [vmem:[%s2867 + $0x98] sm:%s2859] %v2906
                  %v2908 = vld [vmem:[%s2866 + $0x280] sm:%s2859]
                  %2909 = vst [vmem:[%s2867 + $0xa0] sm:%s2859] %v2908
                  %v2910 = vld [vmem:[%s2866 + $0x2a0] sm:%s2859]
                  %2911 = vst [vmem:[%s2867 + $0xa8] sm:%s2859] %v2910
                  %v2912 = vld [vmem:[%s2866 + $0x2c0] sm:%s2859]
                  %2913 = vst [vmem:[%s2867 + $0xb0] sm:%s2859] %v2912
                  %v2914 = vld [vmem:[%s2866 + $0x2e0] sm:%s2859]
                  %2915 = vst [vmem:[%s2867 + $0xb8] sm:%s2859] %v2914
                  %v2916 = vld [vmem:[%s2866 + $0x300] sm:%s2859]
                  %2917 = vst [vmem:[%s2867 + $0xc0] sm:%s2859] %v2916
                  %v2918 = vld [vmem:[%s2866 + $0x320] sm:%s2859]
                  %2919 = vst [vmem:[%s2867 + $0xc8] sm:%s2859] %v2918
                  %v2920 = vld [vmem:[%s2866 + $0x340] sm:%s2859]
                  %2921 = vst [vmem:[%s2867 + $0xd0] sm:%s2859] %v2920
                  %v2922 = vld [vmem:[%s2866 + $0x360] sm:%s2859]
                  %2923 = vst [vmem:[%s2867 + $0xd8] sm:%s2859] %v2922
                  %v2924 = vld [vmem:[%s2866 + $0x380] sm:%s2859]
                  %2925 = vst [vmem:[%s2867 + $0xe0] sm:%s2859] %v2924
                  %v2926 = vld [vmem:[%s2866 + $0x3a0] sm:%s2859]
                  %2927 = vst [vmem:[%s2867 + $0xe8] sm:%s2859] %v2926
                  %v2928 = vld [vmem:[%s2866 + $0x3c0] sm:%s2859]
                  %2929 = vst [vmem:[%s2867 + $0xf0] sm:%s2859] %v2928
                  %v2930 = vld [vmem:[%s2866 + $0x3e0] sm:%s2859]
                  %2931 = vst [vmem:[%s2867 + $0xf8] sm:%s2859] %v2930
                  %v2932 = vld [vmem:[%s2866 + $0x400] sm:%s2859]
                  %2933 = vst [vmem:[%s2867 + $0x100] sm:%s2859] %v2932
                  %v2934 = vld [vmem:[%s2866 + $0x420] sm:%s2859]
                  %2935 = vst [vmem:[%s2867 + $0x108] sm:%s2859] %v2934
                  %v2936 = vld [vmem:[%s2866 + $0x440] sm:%s2859]
                  %2937 = vst [vmem:[%s2867 + $0x110] sm:%s2859] %v2936
                  %v2938 = vld [vmem:[%s2866 + $0x460] sm:%s2859]
                  %2939 = vst [vmem:[%s2867 + $0x118] sm:%s2859] %v2938
                  %v2940 = vld [vmem:[%s2866 + $0x480] sm:%s2859]
                  %2941 = vst [vmem:[%s2867 + $0x120] sm:%s2859] %v2940
                  %v2942 = vld [vmem:[%s2866 + $0x4a0] sm:%s2859]
                  %2943 = vst [vmem:[%s2867 + $0x128] sm:%s2859] %v2942
                  %v2944 = vld [vmem:[%s2866 + $0x4c0] sm:%s2859]
                  %2945 = vst [vmem:[%s2867 + $0x130] sm:%s2859] %v2944
                  %v2946 = vld [vmem:[%s2866 + $0x4e0] sm:%s2859]
                  %2947 = vst [vmem:[%s2867 + $0x138] sm:%s2859] %v2946
                  %v2948 = vld [vmem:[%s2866 + $0x500] sm:%s2859]
                  %2949 = vst [vmem:[%s2867 + $0x140] sm:%s2859] %v2948
                  %v2950 = vld [vmem:[%s2866 + $0x520] sm:%s2859]
                  %2951 = vst [vmem:[%s2867 + $0x148] sm:%s2859] %v2950
                  %v2952 = vld [vmem:[%s2866 + $0x540] sm:%s2859]
                  %2953 = vst [vmem:[%s2867 + $0x150] sm:%s2859] %v2952
                  %v2954 = vld [vmem:[%s2866 + $0x560] sm:%s2859]
                  %2955 = vst [vmem:[%s2867 + $0x158] sm:%s2859] %v2954
                  %v2956 = vld [vmem:[%s2866 + $0x580] sm:%s2859]
                  %2957 = vst [vmem:[%s2867 + $0x160] sm:%s2859] %v2956
                  %v2958 = vld [vmem:[%s2866 + $0x5a0] sm:%s2859]
                  %2959 = vst [vmem:[%s2867 + $0x168] sm:%s2859] %v2958
                  %v2960 = vld [vmem:[%s2866 + $0x5c0] sm:%s2859]
                  %2961 = vst [vmem:[%s2867 + $0x170] sm:%s2859] %v2960
                  %v2962 = vld [vmem:[%s2866 + $0x5e0] sm:%s2859]
                  %2963 = vst [vmem:[%s2867 + $0x178] sm:%s2859] %v2962
                  %v2964 = vld [vmem:[%s2866 + $0x600] sm:%s2859]
                  %2965 = vst [vmem:[%s2867 + $0x180] sm:%s2859] %v2964
                  %v2966 = vld [vmem:[%s2866 + $0x620] sm:%s2859]
                  %2967 = vst [vmem:[%s2867 + $0x188] sm:%s2859] %v2966
                  %v2968 = vld [vmem:[%s2866 + $0x640] sm:%s2859]
                  %2969 = vst [vmem:[%s2867 + $0x190] sm:%s2859] %v2968
                  %v2970 = vld [vmem:[%s2866 + $0x660] sm:%s2859]
                  %2971 = vst [vmem:[%s2867 + $0x198] sm:%s2859] %v2970
                  %v2972 = vld [vmem:[%s2866 + $0x680] sm:%s2859]
                  %2973 = vst [vmem:[%s2867 + $0x1a0] sm:%s2859] %v2972
                  %v2974 = vld [vmem:[%s2866 + $0x6a0] sm:%s2859]
                  %2975 = vst [vmem:[%s2867 + $0x1a8] sm:%s2859] %v2974
                  %v2976 = vld [vmem:[%s2866 + $0x6c0] sm:%s2859]
                  %2977 = vst [vmem:[%s2867 + $0x1b0] sm:%s2859] %v2976
                  %v2978 = vld [vmem:[%s2866 + $0x6e0] sm:%s2859]
                  %2979 = vst [vmem:[%s2867 + $0x1b8] sm:%s2859] %v2978
                  %v2980 = vld [vmem:[%s2866 + $0x700] sm:%s2859]
                  %2981 = vst [vmem:[%s2867 + $0x1c0] sm:%s2859] %v2980
                  %v2982 = vld [vmem:[%s2866 + $0x720] sm:%s2859]
                  %2983 = vst [vmem:[%s2867 + $0x1c8] sm:%s2859] %v2982
                  %v2984 = vld [vmem:[%s2866 + $0x740] sm:%s2859]
                  %2985 = vst [vmem:[%s2867 + $0x1d0] sm:%s2859] %v2984
                  %v2986 = vld [vmem:[%s2866 + $0x760] sm:%s2859]
                  %2987 = vst [vmem:[%s2867 + $0x1d8] sm:%s2859] %v2986
                  %v2988 = vld [vmem:[%s2866 + $0x780] sm:%s2859]
                  %2989 = vst [vmem:[%s2867 + $0x1e0] sm:%s2859] %v2988
                  %v2990 = vld [vmem:[%s2866 + $0x7a0] sm:%s2859]
                  %2991 = vst [vmem:[%s2867 + $0x1e8] sm:%s2859] %v2990
                  %v2992 = vld [vmem:[%s2866 + $0x7c0] sm:%s2859]
                  %2993 = vst [vmem:[%s2867 + $0x1f0] sm:%s2859] %v2992
                  %v2994 = vld [vmem:[%s2866 + $0x7e0] sm:%s2859]
                  %2995 = vst [vmem:[%s2867 + $0x1f8] sm:%s2859] %v2994
                  %v2996 = vld [vmem:[%s2866 + $0x800] sm:%s2859]
                  %2997 = vst [vmem:[%s2867 + $0x200] sm:%s2859] %v2996
                  %v2998 = vld [vmem:[%s2866 + $0x820] sm:%s2859]
                  %2999 = vst [vmem:[%s2867 + $0x208] sm:%s2859] %v2998
                  %v3000 = vld [vmem:[%s2866 + $0x840] sm:%s2859]
                  %3001 = vst [vmem:[%s2867 + $0x210] sm:%s2859] %v3000
                  %v3002 = vld [vmem:[%s2866 + $0x860] sm:%s2859]
                  %3003 = vst [vmem:[%s2867 + $0x218] sm:%s2859] %v3002
                  %v3004 = vld [vmem:[%s2866 + $0x880] sm:%s2859]
                  %3005 = vst [vmem:[%s2867 + $0x220] sm:%s2859] %v3004
                  %v3006 = vld [vmem:[%s2866 + $0x8a0] sm:%s2859]
                  %3007 = vst [vmem:[%s2867 + $0x228] sm:%s2859] %v3006
                  %v3008 = vld [vmem:[%s2866 + $0x8c0] sm:%s2859]
                  %3009 = vst [vmem:[%s2867 + $0x230] sm:%s2859] %v3008
                  %v3010 = vld [vmem:[%s2866 + $0x8e0] sm:%s2859]
                  %3011 = vst [vmem:[%s2867 + $0x238] sm:%s2859] %v3010
                  %v3012 = vld [vmem:[%s2866 + $0x900] sm:%s2859]
                  %3013 = vst [vmem:[%s2867 + $0x240] sm:%s2859] %v3012
                  %v3014 = vld [vmem:[%s2866 + $0x920] sm:%s2859]
                  %3015 = vst [vmem:[%s2867 + $0x248] sm:%s2859] %v3014
                  %v3016 = vld [vmem:[%s2866 + $0x940] sm:%s2859]
                  %3017 = vst [vmem:[%s2867 + $0x250] sm:%s2859] %v3016
                  %v3018 = vld [vmem:[%s2866 + $0x960] sm:%s2859]
                  %3019 = vst [vmem:[%s2867 + $0x258] sm:%s2859] %v3018
                  %v3020 = vld [vmem:[%s2866 + $0x980] sm:%s2859]
                  %3021 = vst [vmem:[%s2867 + $0x260] sm:%s2859] %v3020
                  %v3022 = vld [vmem:[%s2866 + $0x9a0] sm:%s2859]
                  %3023 = vst [vmem:[%s2867 + $0x268] sm:%s2859] %v3022
                  %v3024 = vld [vmem:[%s2866 + $0x9c0] sm:%s2859]
                  %3025 = vst [vmem:[%s2867 + $0x270] sm:%s2859] %v3024
                  %v3026 = vld [vmem:[%s2866 + $0x9e0] sm:%s2859]
                  %3027 = vst [vmem:[%s2867 + $0x278] sm:%s2859] %v3026
                  %v3028 = vld [vmem:[%s2866 + $0xa00] sm:%s2859]
                  %3029 = vst [vmem:[%s2867 + $0x280] sm:%s2859] %v3028
                  %v3030 = vld [vmem:[%s2866 + $0xa20] sm:%s2859]
                  %3031 = vst [vmem:[%s2867 + $0x288] sm:%s2859] %v3030
                  %v3032 = vld [vmem:[%s2866 + $0xa40] sm:%s2859]
                  %3033 = vst [vmem:[%s2867 + $0x290] sm:%s2859] %v3032
                  %v3034 = vld [vmem:[%s2866 + $0xa60] sm:%s2859]
                  %3035 = vst [vmem:[%s2867 + $0x298] sm:%s2859] %v3034
                  %v3036 = vld [vmem:[%s2866 + $0xa80] sm:%s2859]
                  %3037 = vst [vmem:[%s2867 + $0x2a0] sm:%s2859] %v3036
                  %v3038 = vld [vmem:[%s2866 + $0xaa0] sm:%s2859]
                  %3039 = vst [vmem:[%s2867 + $0x2a8] sm:%s2859] %v3038
                  %v3040 = vld [vmem:[%s2866 + $0xac0] sm:%s2859]
                  %3041 = vst [vmem:[%s2867 + $0x2b0] sm:%s2859] %v3040
                  %v3042 = vld [vmem:[%s2866 + $0xae0] sm:%s2859]
                  %3043 = vst [vmem:[%s2867 + $0x2b8] sm:%s2859] %v3042
                  %v3044 = vld [vmem:[%s2866 + $0xb00] sm:%s2859]
                  %3045 = vst [vmem:[%s2867 + $0x2c0] sm:%s2859] %v3044
                  %v3046 = vld [vmem:[%s2866 + $0xb20] sm:%s2859]
                  %3047 = vst [vmem:[%s2867 + $0x2c8] sm:%s2859] %v3046
                  %v3048 = vld [vmem:[%s2866 + $0xb40] sm:%s2859]
                  %3049 = vst [vmem:[%s2867 + $0x2d0] sm:%s2859] %v3048
                  %v3050 = vld [vmem:[%s2866 + $0xb60] sm:%s2859]
                  %3051 = vst [vmem:[%s2867 + $0x2d8] sm:%s2859] %v3050
                  %v3052 = vld [vmem:[%s2866 + $0xb80] sm:%s2859]
                  %3053 = vst [vmem:[%s2867 + $0x2e0] sm:%s2859] %v3052
                  %v3054 = vld [vmem:[%s2866 + $0xba0] sm:%s2859]
                  %3055 = vst [vmem:[%s2867 + $0x2e8] sm:%s2859] %v3054
                  %v3056 = vld [vmem:[%s2866 + $0xbc0] sm:%s2859]
                  %3057 = vst [vmem:[%s2867 + $0x2f0] sm:%s2859] %v3056
                  %v3058 = vld [vmem:[%s2866 + $0xbe0] sm:%s2859]
                  %3059 = vst [vmem:[%s2867 + $0x2f8] sm:%s2859] %v3058
                  %v3060 = vld [vmem:[%s2866 + $0xc00] sm:%s2859]
                  %3061 = vst [vmem:[%s2867 + $0x300] sm:%s2859] %v3060
                  %v3062 = vld [vmem:[%s2866 + $0xc20] sm:%s2859]
                  %3063 = vst [vmem:[%s2867 + $0x308] sm:%s2859] %v3062
                  %v3064 = vld [vmem:[%s2866 + $0xc40] sm:%s2859]
                  %3065 = vst [vmem:[%s2867 + $0x310] sm:%s2859] %v3064
                  %v3066 = vld [vmem:[%s2866 + $0xc60] sm:%s2859]
                  %3067 = vst [vmem:[%s2867 + $0x318] sm:%s2859] %v3066
                  %v3068 = vld [vmem:[%s2866 + $0xc80] sm:%s2859]
                  %3069 = vst [vmem:[%s2867 + $0x320] sm:%s2859] %v3068
                  %v3070 = vld [vmem:[%s2866 + $0xca0] sm:%s2859]
                  %3071 = vst [vmem:[%s2867 + $0x328] sm:%s2859] %v3070
                  %v3072 = vld [vmem:[%s2866 + $0xcc0] sm:%s2859]
                  %3073 = vst [vmem:[%s2867 + $0x330] sm:%s2859] %v3072
                  %v3074 = vld [vmem:[%s2866 + $0xce0] sm:%s2859]
                  %3075 = vst [vmem:[%s2867 + $0x338] sm:%s2859] %v3074
                  %v3076 = vld [vmem:[%s2866 + $0xd00] sm:%s2859]
                  %3077 = vst [vmem:[%s2867 + $0x340] sm:%s2859] %v3076
                  %v3078 = vld [vmem:[%s2866 + $0xd20] sm:%s2859]
                  %3079 = vst [vmem:[%s2867 + $0x348] sm:%s2859] %v3078
                  %v3080 = vld [vmem:[%s2866 + $0xd40] sm:%s2859]
                  %3081 = vst [vmem:[%s2867 + $0x350] sm:%s2859] %v3080
                  %v3082 = vld [vmem:[%s2866 + $0xd60] sm:%s2859]
                  %3083 = vst [vmem:[%s2867 + $0x358] sm:%s2859] %v3082
                  %v3084 = vld [vmem:[%s2866 + $0xd80] sm:%s2859]
                  %3085 = vst [vmem:[%s2867 + $0x360] sm:%s2859] %v3084
                  %v3086 = vld [vmem:[%s2866 + $0xda0] sm:%s2859]
                  %3087 = vst [vmem:[%s2867 + $0x368] sm:%s2859] %v3086
                  %v3088 = vld [vmem:[%s2866 + $0xdc0] sm:%s2859]
                  %3089 = vst [vmem:[%s2867 + $0x370] sm:%s2859] %v3088
                  %v3090 = vld [vmem:[%s2866 + $0xde0] sm:%s2859]
                  %3091 = vst [vmem:[%s2867 + $0x378] sm:%s2859] %v3090
                  %v3092 = vld [vmem:[%s2866 + $0xe00] sm:%s2859]
                  %3093 = vst [vmem:[%s2867 + $0x380] sm:%s2859] %v3092
                  %v3094 = vld [vmem:[%s2866 + $0xe20] sm:%s2859]
                  %3095 = vst [vmem:[%s2867 + $0x388] sm:%s2859] %v3094
                  %v3096 = vld [vmem:[%s2866 + $0xe40] sm:%s2859]
                  %3097 = vst [vmem:[%s2867 + $0x390] sm:%s2859] %v3096
                  %v3098 = vld [vmem:[%s2866 + $0xe60] sm:%s2859]
                  %3099 = vst [vmem:[%s2867 + $0x398] sm:%s2859] %v3098
                  %v3100 = vld [vmem:[%s2866 + $0xe80] sm:%s2859]
                  %3101 = vst [vmem:[%s2867 + $0x3a0] sm:%s2859] %v3100
                  %v3102 = vld [vmem:[%s2866 + $0xea0] sm:%s2859]
                  %3103 = vst [vmem:[%s2867 + $0x3a8] sm:%s2859] %v3102
                  %v3104 = vld [vmem:[%s2866 + $0xec0] sm:%s2859]
                  %3105 = vst [vmem:[%s2867 + $0x3b0] sm:%s2859] %v3104
                  %v3106 = vld [vmem:[%s2866 + $0xee0] sm:%s2859]
                  %3107 = vst [vmem:[%s2867 + $0x3b8] sm:%s2859] %v3106
                  %v3108 = vld [vmem:[%s2866 + $0xf00] sm:%s2859]
                  %3109 = vst [vmem:[%s2867 + $0x3c0] sm:%s2859] %v3108
                  %v3110 = vld [vmem:[%s2866 + $0xf20] sm:%s2859]
                  %3111 = vst [vmem:[%s2867 + $0x3c8] sm:%s2859] %v3110
                  %v3112 = vld [vmem:[%s2866 + $0xf40] sm:%s2859]
                  %3113 = vst [vmem:[%s2867 + $0x3d0] sm:%s2859] %v3112
                  %v3114 = vld [vmem:[%s2866 + $0xf60] sm:%s2859]
                  %3115 = vst [vmem:[%s2867 + $0x3d8] sm:%s2859] %v3114
                  %v3116 = vld [vmem:[%s2866 + $0xf80] sm:%s2859]
                  %3117 = vst [vmem:[%s2867 + $0x3e0] sm:%s2859] %v3116
                  %v3118 = vld [vmem:[%s2866 + $0xfa0] sm:%s2859]
                  %3119 = vst [vmem:[%s2867 + $0x3e8] sm:%s2859] %v3118
                  %v3120 = vld [vmem:[%s2866 + $0xfc0] sm:%s2859]
                  %3121 = vst [vmem:[%s2867 + $0x3f0] sm:%s2859] %v3120
                  %v3122 = vld [vmem:[%s2866 + $0xfe0] sm:%s2859]
                  %3123 = vst [vmem:[%s2867 + $0x3f8] sm:%s2859] %v3122
                  %v3124 = vld [vmem:[%s2866 + $0x1000] sm:%s2859]
                  %3125 = vst [vmem:[%s2867 + $0x400] sm:%s2859] %v3124
                  %v3126 = vld [vmem:[%s2866 + $0x1020] sm:%s2859]
                  %3127 = vst [vmem:[%s2867 + $0x408] sm:%s2859] %v3126
                  %v3128 = vld [vmem:[%s2866 + $0x1040] sm:%s2859]
                  %3129 = vst [vmem:[%s2867 + $0x410] sm:%s2859] %v3128
                  %v3130 = vld [vmem:[%s2866 + $0x1060] sm:%s2859]
                  %3131 = vst [vmem:[%s2867 + $0x418] sm:%s2859] %v3130
                  %v3132 = vld [vmem:[%s2866 + $0x1080] sm:%s2859]
                  %3133 = vst [vmem:[%s2867 + $0x420] sm:%s2859] %v3132
                  %v3134 = vld [vmem:[%s2866 + $0x10a0] sm:%s2859]
                  %3135 = vst [vmem:[%s2867 + $0x428] sm:%s2859] %v3134
                  %v3136 = vld [vmem:[%s2866 + $0x10c0] sm:%s2859]
                  %3137 = vst [vmem:[%s2867 + $0x430] sm:%s2859] %v3136
                  %v3138 = vld [vmem:[%s2866 + $0x10e0] sm:%s2859]
                  %3139 = vst [vmem:[%s2867 + $0x438] sm:%s2859] %v3138
                  %v3140 = vld [vmem:[%s2866 + $0x1100] sm:%s2859]
                  %3141 = vst [vmem:[%s2867 + $0x440] sm:%s2859] %v3140
                  %v3142 = vld [vmem:[%s2866 + $0x1120] sm:%s2859]
                  %3143 = vst [vmem:[%s2867 + $0x448] sm:%s2859] %v3142
                  %v3144 = vld [vmem:[%s2866 + $0x1140] sm:%s2859]
                  %3145 = vst [vmem:[%s2867 + $0x450] sm:%s2859] %v3144
                  %v3146 = vld [vmem:[%s2866 + $0x1160] sm:%s2859]
                  %3147 = vst [vmem:[%s2867 + $0x458] sm:%s2859] %v3146
                  %v3148 = vld [vmem:[%s2866 + $0x1180] sm:%s2859]
                  %3149 = vst [vmem:[%s2867 + $0x460] sm:%s2859] %v3148
                  %v3150 = vld [vmem:[%s2866 + $0x11a0] sm:%s2859]
                  %3151 = vst [vmem:[%s2867 + $0x468] sm:%s2859] %v3150
                  %v3152 = vld [vmem:[%s2866 + $0x11c0] sm:%s2859]
                  %3153 = vst [vmem:[%s2867 + $0x470] sm:%s2859] %v3152
                  %v3154 = vld [vmem:[%s2866 + $0x11e0] sm:%s2859]
                  %3155 = vst [vmem:[%s2867 + $0x478] sm:%s2859] %v3154
                  %v3156 = vld [vmem:[%s2866 + $0x1200] sm:%s2859]
                  %3157 = vst [vmem:[%s2867 + $0x480] sm:%s2859] %v3156
                  %v3158 = vld [vmem:[%s2866 + $0x1220] sm:%s2859]
                  %3159 = vst [vmem:[%s2867 + $0x488] sm:%s2859] %v3158
                  %v3160 = vld [vmem:[%s2866 + $0x1240] sm:%s2859]
                  %3161 = vst [vmem:[%s2867 + $0x490] sm:%s2859] %v3160
                  %v3162 = vld [vmem:[%s2866 + $0x1260] sm:%s2859]
                  %3163 = vst [vmem:[%s2867 + $0x498] sm:%s2859] %v3162
                  %v3164 = vld [vmem:[%s2866 + $0x1280] sm:%s2859]
                  %3165 = vst [vmem:[%s2867 + $0x4a0] sm:%s2859] %v3164
                  %v3166 = vld [vmem:[%s2866 + $0x12a0] sm:%s2859]
                  %3167 = vst [vmem:[%s2867 + $0x4a8] sm:%s2859] %v3166
                  %v3168 = vld [vmem:[%s2866 + $0x12c0] sm:%s2859]
                  %3169 = vst [vmem:[%s2867 + $0x4b0] sm:%s2859] %v3168
                  %v3170 = vld [vmem:[%s2866 + $0x12e0] sm:%s2859]
                  %3171 = vst [vmem:[%s2867 + $0x4b8] sm:%s2859] %v3170
                  %v3172 = vld [vmem:[%s2866 + $0x1300] sm:%s2859]
                  %3173 = vst [vmem:[%s2867 + $0x4c0] sm:%s2859] %v3172
                  %v3174 = vld [vmem:[%s2866 + $0x1320] sm:%s2859]
                  %3175 = vst [vmem:[%s2867 + $0x4c8] sm:%s2859] %v3174
                  %v3176 = vld [vmem:[%s2866 + $0x1340] sm:%s2859]
                  %3177 = vst [vmem:[%s2867 + $0x4d0] sm:%s2859] %v3176
                  %v3178 = vld [vmem:[%s2866 + $0x1360] sm:%s2859]
                  %3179 = vst [vmem:[%s2867 + $0x4d8] sm:%s2859] %v3178
                  %v3180 = vld [vmem:[%s2866 + $0x1380] sm:%s2859]
                  %3181 = vst [vmem:[%s2867 + $0x4e0] sm:%s2859] %v3180
                  %v3182 = vld [vmem:[%s2866 + $0x13a0] sm:%s2859]
                  %3183 = vst [vmem:[%s2867 + $0x4e8] sm:%s2859] %v3182
                  %v3184 = vld [vmem:[%s2866 + $0x13c0] sm:%s2859]
                  %3185 = vst [vmem:[%s2867 + $0x4f0] sm:%s2859] %v3184
                  %v3186 = vld [vmem:[%s2866 + $0x13e0] sm:%s2859]
                  %3187 = vst [vmem:[%s2867 + $0x4f8] sm:%s2859] %v3186
                  %v3188 = vld [vmem:[%s2866 + $0x1400] sm:%s2859]
                  %3189 = vst [vmem:[%s2867 + $0x500] sm:%s2859] %v3188
                  %v3190 = vld [vmem:[%s2866 + $0x1420] sm:%s2859]
                  %3191 = vst [vmem:[%s2867 + $0x508] sm:%s2859] %v3190
                  %v3192 = vld [vmem:[%s2866 + $0x1440] sm:%s2859]
                  %3193 = vst [vmem:[%s2867 + $0x510] sm:%s2859] %v3192
                  %v3194 = vld [vmem:[%s2866 + $0x1460] sm:%s2859]
                  %3195 = vst [vmem:[%s2867 + $0x518] sm:%s2859] %v3194
                  %v3196 = vld [vmem:[%s2866 + $0x1480] sm:%s2859]
                  %3197 = vst [vmem:[%s2867 + $0x520] sm:%s2859] %v3196
                  %v3198 = vld [vmem:[%s2866 + $0x14a0] sm:%s2859]
                  %3199 = vst [vmem:[%s2867 + $0x528] sm:%s2859] %v3198
                  %v3200 = vld [vmem:[%s2866 + $0x14c0] sm:%s2859]
                  %3201 = vst [vmem:[%s2867 + $0x530] sm:%s2859] %v3200
                  %v3202 = vld [vmem:[%s2866 + $0x14e0] sm:%s2859]
                  %3203 = vst [vmem:[%s2867 + $0x538] sm:%s2859] %v3202
                  %v3204 = vld [vmem:[%s2866 + $0x1500] sm:%s2859]
                  %3205 = vst [vmem:[%s2867 + $0x540] sm:%s2859] %v3204
                  %v3206 = vld [vmem:[%s2866 + $0x1520] sm:%s2859]
                  %3207 = vst [vmem:[%s2867 + $0x548] sm:%s2859] %v3206
                  %v3208 = vld [vmem:[%s2866 + $0x1540] sm:%s2859]
                  %3209 = vst [vmem:[%s2867 + $0x550] sm:%s2859] %v3208
                  %v3210 = vld [vmem:[%s2866 + $0x1560] sm:%s2859]
                  %3211 = vst [vmem:[%s2867 + $0x558] sm:%s2859] %v3210
                  %v3212 = vld [vmem:[%s2866 + $0x1580] sm:%s2859]
                  %3213 = vst [vmem:[%s2867 + $0x560] sm:%s2859] %v3212
                  %v3214 = vld [vmem:[%s2866 + $0x15a0] sm:%s2859]
                  %3215 = vst [vmem:[%s2867 + $0x568] sm:%s2859] %v3214
                  %v3216 = vld [vmem:[%s2866 + $0x15c0] sm:%s2859]
                  %3217 = vst [vmem:[%s2867 + $0x570] sm:%s2859] %v3216
                  %v3218 = vld [vmem:[%s2866 + $0x15e0] sm:%s2859]
                  %3219 = vst [vmem:[%s2867 + $0x578] sm:%s2859] %v3218
                  %v3220 = vld [vmem:[%s2866 + $0x1600] sm:%s2859]
                  %3221 = vst [vmem:[%s2867 + $0x580] sm:%s2859] %v3220
                  %v3222 = vld [vmem:[%s2866 + $0x1620] sm:%s2859]
                  %3223 = vst [vmem:[%s2867 + $0x588] sm:%s2859] %v3222
                  %v3224 = vld [vmem:[%s2866 + $0x1640] sm:%s2859]
                  %3225 = vst [vmem:[%s2867 + $0x590] sm:%s2859] %v3224
                  %v3226 = vld [vmem:[%s2866 + $0x1660] sm:%s2859]
                  %3227 = vst [vmem:[%s2867 + $0x598] sm:%s2859] %v3226
                  %v3228 = vld [vmem:[%s2866 + $0x1680] sm:%s2859]
                  %3229 = vst [vmem:[%s2867 + $0x5a0] sm:%s2859] %v3228
                  %v3230 = vld [vmem:[%s2866 + $0x16a0] sm:%s2859]
                  %3231 = vst [vmem:[%s2867 + $0x5a8] sm:%s2859] %v3230
                  %v3232 = vld [vmem:[%s2866 + $0x16c0] sm:%s2859]
                  %3233 = vst [vmem:[%s2867 + $0x5b0] sm:%s2859] %v3232
                  %v3234 = vld [vmem:[%s2866 + $0x16e0] sm:%s2859]
                  %3235 = vst [vmem:[%s2867 + $0x5b8] sm:%s2859] %v3234
                  %v3236 = vld [vmem:[%s2866 + $0x1700] sm:%s2859]
                  %3237 = vst [vmem:[%s2867 + $0x5c0] sm:%s2859] %v3236
                  %v3238 = vld [vmem:[%s2866 + $0x1720] sm:%s2859]
                  %3239 = vst [vmem:[%s2867 + $0x5c8] sm:%s2859] %v3238
                  %v3240 = vld [vmem:[%s2866 + $0x1740] sm:%s2859]
                  %3241 = vst [vmem:[%s2867 + $0x5d0] sm:%s2859] %v3240
                  %v3242 = vld [vmem:[%s2866 + $0x1760] sm:%s2859]
                  %3243 = vst [vmem:[%s2867 + $0x5d8] sm:%s2859] %v3242
                  %v3244 = vld [vmem:[%s2866 + $0x1780] sm:%s2859]
                  %3245 = vst [vmem:[%s2867 + $0x5e0] sm:%s2859] %v3244
                  %v3246 = vld [vmem:[%s2866 + $0x17a0] sm:%s2859]
                  %3247 = vst [vmem:[%s2867 + $0x5e8] sm:%s2859] %v3246
                  %v3248 = vld [vmem:[%s2866 + $0x17c0] sm:%s2859]
                  %3249 = vst [vmem:[%s2867 + $0x5f0] sm:%s2859] %v3248
                  %v3250 = vld [vmem:[%s2866 + $0x17e0] sm:%s2859]
                  %3251 = vst [vmem:[%s2867 + $0x5f8] sm:%s2859] %v3250
                  %v3252 = vld [vmem:[%s2866 + $0x1800] sm:%s2859]
                  %3253 = vst [vmem:[%s2867 + $0x600] sm:%s2859] %v3252
                  %v3254 = vld [vmem:[%s2866 + $0x1820] sm:%s2859]
                  %3255 = vst [vmem:[%s2867 + $0x608] sm:%s2859] %v3254
                  %v3256 = vld [vmem:[%s2866 + $0x1840] sm:%s2859]
                  %3257 = vst [vmem:[%s2867 + $0x610] sm:%s2859] %v3256
                  %v3258 = vld [vmem:[%s2866 + $0x1860] sm:%s2859]
                  %3259 = vst [vmem:[%s2867 + $0x618] sm:%s2859] %v3258
                  %v3260 = vld [vmem:[%s2866 + $0x1880] sm:%s2859]
                  %3261 = vst [vmem:[%s2867 + $0x620] sm:%s2859] %v3260
                  %v3262 = vld [vmem:[%s2866 + $0x18a0] sm:%s2859]
                  %3263 = vst [vmem:[%s2867 + $0x628] sm:%s2859] %v3262
                  %v3264 = vld [vmem:[%s2866 + $0x18c0] sm:%s2859]
                  %3265 = vst [vmem:[%s2867 + $0x630] sm:%s2859] %v3264
                  %v3266 = vld [vmem:[%s2866 + $0x18e0] sm:%s2859]
                  %3267 = vst [vmem:[%s2867 + $0x638] sm:%s2859] %v3266
                  %v3268 = vld [vmem:[%s2866 + $0x1900] sm:%s2859]
                  %3269 = vst [vmem:[%s2867 + $0x640] sm:%s2859] %v3268
                  %v3270 = vld [vmem:[%s2866 + $0x1920] sm:%s2859]
                  %3271 = vst [vmem:[%s2867 + $0x648] sm:%s2859] %v3270
                  %v3272 = vld [vmem:[%s2866 + $0x1940] sm:%s2859]
                  %3273 = vst [vmem:[%s2867 + $0x650] sm:%s2859] %v3272
                  %v3274 = vld [vmem:[%s2866 + $0x1960] sm:%s2859]
                  %3275 = vst [vmem:[%s2867 + $0x658] sm:%s2859] %v3274
                  %v3276 = vld [vmem:[%s2866 + $0x1980] sm:%s2859]
                  %3277 = vst [vmem:[%s2867 + $0x660] sm:%s2859] %v3276
                  %v3278 = vld [vmem:[%s2866 + $0x19a0] sm:%s2859]
                  %3279 = vst [vmem:[%s2867 + $0x668] sm:%s2859] %v3278
                  %v3280 = vld [vmem:[%s2866 + $0x19c0] sm:%s2859]
                  %3281 = vst [vmem:[%s2867 + $0x670] sm:%s2859] %v3280
                  %v3282 = vld [vmem:[%s2866 + $0x19e0] sm:%s2859]
                  %3283 = vst [vmem:[%s2867 + $0x678] sm:%s2859] %v3282
                  %v3284 = vld [vmem:[%s2866 + $0x1a00] sm:%s2859]
                  %3285 = vst [vmem:[%s2867 + $0x680] sm:%s2859] %v3284
                  %v3286 = vld [vmem:[%s2866 + $0x1a20] sm:%s2859]
                  %3287 = vst [vmem:[%s2867 + $0x688] sm:%s2859] %v3286
                  %v3288 = vld [vmem:[%s2866 + $0x1a40] sm:%s2859]
                  %3289 = vst [vmem:[%s2867 + $0x690] sm:%s2859] %v3288
                  %v3290 = vld [vmem:[%s2866 + $0x1a60] sm:%s2859]
                  %3291 = vst [vmem:[%s2867 + $0x698] sm:%s2859] %v3290
                  %v3292 = vld [vmem:[%s2866 + $0x1a80] sm:%s2859]
                  %3293 = vst [vmem:[%s2867 + $0x6a0] sm:%s2859] %v3292
                  %v3294 = vld [vmem:[%s2866 + $0x1aa0] sm:%s2859]
                  %3295 = vst [vmem:[%s2867 + $0x6a8] sm:%s2859] %v3294
                  %v3296 = vld [vmem:[%s2866 + $0x1ac0] sm:%s2859]
                  %3297 = vst [vmem:[%s2867 + $0x6b0] sm:%s2859] %v3296
                  %v3298 = vld [vmem:[%s2866 + $0x1ae0] sm:%s2859]
                  %3299 = vst [vmem:[%s2867 + $0x6b8] sm:%s2859] %v3298
                  %v3300 = vld [vmem:[%s2866 + $0x1b00] sm:%s2859]
                  %3301 = vst [vmem:[%s2867 + $0x6c0] sm:%s2859] %v3300
                  %v3302 = vld [vmem:[%s2866 + $0x1b20] sm:%s2859]
                  %3303 = vst [vmem:[%s2867 + $0x6c8] sm:%s2859] %v3302
                  %v3304 = vld [vmem:[%s2866 + $0x1b40] sm:%s2859]
                  %3305 = vst [vmem:[%s2867 + $0x6d0] sm:%s2859] %v3304
                  %v3306 = vld [vmem:[%s2866 + $0x1b60] sm:%s2859]
                  %3307 = vst [vmem:[%s2867 + $0x6d8] sm:%s2859] %v3306
                  %v3308 = vld [vmem:[%s2866 + $0x1b80] sm:%s2859]
                  %3309 = vst [vmem:[%s2867 + $0x6e0] sm:%s2859] %v3308
                  %v3310 = vld [vmem:[%s2866 + $0x1ba0] sm:%s2859]
                  %3311 = vst [vmem:[%s2867 + $0x6e8] sm:%s2859] %v3310
                  %v3312 = vld [vmem:[%s2866 + $0x1bc0] sm:%s2859]
                  %3313 = vst [vmem:[%s2867 + $0x6f0] sm:%s2859] %v3312
                  %v3314 = vld [vmem:[%s2866 + $0x1be0] sm:%s2859]
                  %3315 = vst [vmem:[%s2867 + $0x6f8] sm:%s2859] %v3314
                  %v3316 = vld [vmem:[%s2866 + $0x1c00] sm:%s2859]
                  %3317 = vst [vmem:[%s2867 + $0x700] sm:%s2859] %v3316
                  %v3318 = vld [vmem:[%s2866 + $0x1c20] sm:%s2859]
                  %3319 = vst [vmem:[%s2867 + $0x708] sm:%s2859] %v3318
                  %v3320 = vld [vmem:[%s2866 + $0x1c40] sm:%s2859]
                  %3321 = vst [vmem:[%s2867 + $0x710] sm:%s2859] %v3320
                  %v3322 = vld [vmem:[%s2866 + $0x1c60] sm:%s2859]
                  %3323 = vst [vmem:[%s2867 + $0x718] sm:%s2859] %v3322
                  %v3324 = vld [vmem:[%s2866 + $0x1c80] sm:%s2859]
                  %3325 = vst [vmem:[%s2867 + $0x720] sm:%s2859] %v3324
                  %v3326 = vld [vmem:[%s2866 + $0x1ca0] sm:%s2859]
                  %3327 = vst [vmem:[%s2867 + $0x728] sm:%s2859] %v3326
                  %v3328 = vld [vmem:[%s2866 + $0x1cc0] sm:%s2859]
                  %3329 = vst [vmem:[%s2867 + $0x730] sm:%s2859] %v3328
                  %v3330 = vld [vmem:[%s2866 + $0x1ce0] sm:%s2859]
                  %3331 = vst [vmem:[%s2867 + $0x738] sm:%s2859] %v3330
                  %v3332 = vld [vmem:[%s2866 + $0x1d00] sm:%s2859]
                  %3333 = vst [vmem:[%s2867 + $0x740] sm:%s2859] %v3332
                  %v3334 = vld [vmem:[%s2866 + $0x1d20] sm:%s2859]
                  %3335 = vst [vmem:[%s2867 + $0x748] sm:%s2859] %v3334
                  %v3336 = vld [vmem:[%s2866 + $0x1d40] sm:%s2859]
                  %3337 = vst [vmem:[%s2867 + $0x750] sm:%s2859] %v3336
                  %v3338 = vld [vmem:[%s2866 + $0x1d60] sm:%s2859]
                  %3339 = vst [vmem:[%s2867 + $0x758] sm:%s2859] %v3338
                  %v3340 = vld [vmem:[%s2866 + $0x1d80] sm:%s2859]
                  %3341 = vst [vmem:[%s2867 + $0x760] sm:%s2859] %v3340
                  %v3342 = vld [vmem:[%s2866 + $0x1da0] sm:%s2859]
                  %3343 = vst [vmem:[%s2867 + $0x768] sm:%s2859] %v3342
                  %v3344 = vld [vmem:[%s2866 + $0x1dc0] sm:%s2859]
                  %3345 = vst [vmem:[%s2867 + $0x770] sm:%s2859] %v3344
                  %v3346 = vld [vmem:[%s2866 + $0x1de0] sm:%s2859]
                  %3347 = vst [vmem:[%s2867 + $0x778] sm:%s2859] %v3346
                  %v3348 = vld [vmem:[%s2866 + $0x1e00] sm:%s2859]
                  %3349 = vst [vmem:[%s2867 + $0x780] sm:%s2859] %v3348
                  %v3350 = vld [vmem:[%s2866 + $0x1e20] sm:%s2859]
                  %3351 = vst [vmem:[%s2867 + $0x788] sm:%s2859] %v3350
                  %v3352 = vld [vmem:[%s2866 + $0x1e40] sm:%s2859]
                  %3353 = vst [vmem:[%s2867 + $0x790] sm:%s2859] %v3352
                  %v3354 = vld [vmem:[%s2866 + $0x1e60] sm:%s2859]
                  %3355 = vst [vmem:[%s2867 + $0x798] sm:%s2859] %v3354
                  %v3356 = vld [vmem:[%s2866 + $0x1e80] sm:%s2859]
                  %3357 = vst [vmem:[%s2867 + $0x7a0] sm:%s2859] %v3356
                  %v3358 = vld [vmem:[%s2866 + $0x1ea0] sm:%s2859]
                  %3359 = vst [vmem:[%s2867 + $0x7a8] sm:%s2859] %v3358
                  %v3360 = vld [vmem:[%s2866 + $0x1ec0] sm:%s2859]
                  %3361 = vst [vmem:[%s2867 + $0x7b0] sm:%s2859] %v3360
                  %v3362 = vld [vmem:[%s2866 + $0x1ee0] sm:%s2859]
                  %3363 = vst [vmem:[%s2867 + $0x7b8] sm:%s2859] %v3362
                  %v3364 = vld [vmem:[%s2866 + $0x1f00] sm:%s2859]
                  %3365 = vst [vmem:[%s2867 + $0x7c0] sm:%s2859] %v3364
                  %v3366 = vld [vmem:[%s2866 + $0x1f20] sm:%s2859]
                  %3367 = vst [vmem:[%s2867 + $0x7c8] sm:%s2859] %v3366
                  %v3368 = vld [vmem:[%s2866 + $0x1f40] sm:%s2859]
                  %3369 = vst [vmem:[%s2867 + $0x7d0] sm:%s2859] %v3368
                  %v3370 = vld [vmem:[%s2866 + $0x1f60] sm:%s2859]
                  %3371 = vst [vmem:[%s2867 + $0x7d8] sm:%s2859] %v3370
                  %v3372 = vld [vmem:[%s2866 + $0x1f80] sm:%s2859]
                  %3373 = vst [vmem:[%s2867 + $0x7e0] sm:%s2859] %v3372
                  %v3374 = vld [vmem:[%s2866 + $0x1fa0] sm:%s2859]
                  %3375 = vst [vmem:[%s2867 + $0x7e8] sm:%s2859] %v3374
                  %v3376 = vld [vmem:[%s2866 + $0x1fc0] sm:%s2859]
                  %3377 = vst [vmem:[%s2867 + $0x7f0] sm:%s2859] %v3376
                  %v3378 = vld [vmem:[%s2866 + $0x1fe0] sm:%s2859]
                  %3379 = vst [vmem:[%s2867 + $0x7f8] sm:%s2859] %v3378
                  %v3380 = vld [vmem:[%s2866 + $0x2000] sm:%s2859]
                  %3381 = vst [vmem:[%s2867 + $0x800] sm:%s2859] %v3380
                  %v3382 = vld [vmem:[%s2866 + $0x2020] sm:%s2859]
                  %3383 = vst [vmem:[%s2867 + $0x808] sm:%s2859] %v3382
                  %v3384 = vld [vmem:[%s2866 + $0x2040] sm:%s2859]
                  %3385 = vst [vmem:[%s2867 + $0x810] sm:%s2859] %v3384
                  %v3386 = vld [vmem:[%s2866 + $0x2060] sm:%s2859]
                  %3387 = vst [vmem:[%s2867 + $0x818] sm:%s2859] %v3386
                  %v3388 = vld [vmem:[%s2866 + $0x2080] sm:%s2859]
                  %3389 = vst [vmem:[%s2867 + $0x820] sm:%s2859] %v3388
                  %v3390 = vld [vmem:[%s2866 + $0x20a0] sm:%s2859]
                  %3391 = vst [vmem:[%s2867 + $0x828] sm:%s2859] %v3390
                  %v3392 = vld [vmem:[%s2866 + $0x20c0] sm:%s2859]
                  %3393 = vst [vmem:[%s2867 + $0x830] sm:%s2859] %v3392
                  %v3394 = vld [vmem:[%s2866 + $0x20e0] sm:%s2859]
                  %3395 = vst [vmem:[%s2867 + $0x838] sm:%s2859] %v3394
                  %v3396 = vld [vmem:[%s2866 + $0x2100] sm:%s2859]
                  %3397 = vst [vmem:[%s2867 + $0x840] sm:%s2859] %v3396
                  %v3398 = vld [vmem:[%s2866 + $0x2120] sm:%s2859]
                  %3399 = vst [vmem:[%s2867 + $0x848] sm:%s2859] %v3398
                  %v3400 = vld [vmem:[%s2866 + $0x2140] sm:%s2859]
                  %3401 = vst [vmem:[%s2867 + $0x850] sm:%s2859] %v3400
                  %v3402 = vld [vmem:[%s2866 + $0x2160] sm:%s2859]
                  %3403 = vst [vmem:[%s2867 + $0x858] sm:%s2859] %v3402
                  %v3404 = vld [vmem:[%s2866 + $0x2180] sm:%s2859]
                  %3405 = vst [vmem:[%s2867 + $0x860] sm:%s2859] %v3404
                  %v3406 = vld [vmem:[%s2866 + $0x21a0] sm:%s2859]
                  %3407 = vst [vmem:[%s2867 + $0x868] sm:%s2859] %v3406
                  %v3408 = vld [vmem:[%s2866 + $0x21c0] sm:%s2859]
                  %3409 = vst [vmem:[%s2867 + $0x870] sm:%s2859] %v3408
                  %v3410 = vld [vmem:[%s2866 + $0x21e0] sm:%s2859]
                  %3411 = vst [vmem:[%s2867 + $0x878] sm:%s2859] %v3410
                  %v3412 = vld [vmem:[%s2866 + $0x2200] sm:%s2859]
                  %3413 = vst [vmem:[%s2867 + $0x880] sm:%s2859] %v3412
                  %v3414 = vld [vmem:[%s2866 + $0x2220] sm:%s2859]
                  %3415 = vst [vmem:[%s2867 + $0x888] sm:%s2859] %v3414
                  %v3416 = vld [vmem:[%s2866 + $0x2240] sm:%s2859]
                  %3417 = vst [vmem:[%s2867 + $0x890] sm:%s2859] %v3416
                  %v3418 = vld [vmem:[%s2866 + $0x2260] sm:%s2859]
                  %3419 = vst [vmem:[%s2867 + $0x898] sm:%s2859] %v3418
                  %v3420 = vld [vmem:[%s2866 + $0x2280] sm:%s2859]
                  %3421 = vst [vmem:[%s2867 + $0x8a0] sm:%s2859] %v3420
                  %v3422 = vld [vmem:[%s2866 + $0x22a0] sm:%s2859]
                  %3423 = vst [vmem:[%s2867 + $0x8a8] sm:%s2859] %v3422
                  %v3424 = vld [vmem:[%s2866 + $0x22c0] sm:%s2859]
                  %3425 = vst [vmem:[%s2867 + $0x8b0] sm:%s2859] %v3424
                  %v3426 = vld [vmem:[%s2866 + $0x22e0] sm:%s2859]
                  %3427 = vst [vmem:[%s2867 + $0x8b8] sm:%s2859] %v3426
                  %v3428 = vld [vmem:[%s2866 + $0x2300] sm:%s2859]
                  %3429 = vst [vmem:[%s2867 + $0x8c0] sm:%s2859] %v3428
                  %v3430 = vld [vmem:[%s2866 + $0x2320] sm:%s2859]
                  %3431 = vst [vmem:[%s2867 + $0x8c8] sm:%s2859] %v3430
                  %v3432 = vld [vmem:[%s2866 + $0x2340] sm:%s2859]
                  %3433 = vst [vmem:[%s2867 + $0x8d0] sm:%s2859] %v3432
                  %v3434 = vld [vmem:[%s2866 + $0x2360] sm:%s2859]
                  %3435 = vst [vmem:[%s2867 + $0x8d8] sm:%s2859] %v3434
                  %v3436 = vld [vmem:[%s2866 + $0x2380] sm:%s2859]
                  %3437 = vst [vmem:[%s2867 + $0x8e0] sm:%s2859] %v3436
                  %v3438 = vld [vmem:[%s2866 + $0x23a0] sm:%s2859]
                  %3439 = vst [vmem:[%s2867 + $0x8e8] sm:%s2859] %v3438
                  %v3440 = vld [vmem:[%s2866 + $0x23c0] sm:%s2859]
                  %3441 = vst [vmem:[%s2867 + $0x8f0] sm:%s2859] %v3440
                  %v3442 = vld [vmem:[%s2866 + $0x23e0] sm:%s2859]
                  %3443 = vst [vmem:[%s2867 + $0x8f8] sm:%s2859] %v3442
                  %v3444 = vld [vmem:[%s2866 + $0x2400] sm:%s2859]
                  %3445 = vst [vmem:[%s2867 + $0x900] sm:%s2859] %v3444
                  %v3446 = vld [vmem:[%s2866 + $0x2420] sm:%s2859]
                  %3447 = vst [vmem:[%s2867 + $0x908] sm:%s2859] %v3446
                  %v3448 = vld [vmem:[%s2866 + $0x2440] sm:%s2859]
                  %3449 = vst [vmem:[%s2867 + $0x910] sm:%s2859] %v3448
                  %v3450 = vld [vmem:[%s2866 + $0x2460] sm:%s2859]
                  %3451 = vst [vmem:[%s2867 + $0x918] sm:%s2859] %v3450
                  %v3452 = vld [vmem:[%s2866 + $0x2480] sm:%s2859]
                  %3453 = vst [vmem:[%s2867 + $0x920] sm:%s2859] %v3452
                  %v3454 = vld [vmem:[%s2866 + $0x24a0] sm:%s2859]
                  %3455 = vst [vmem:[%s2867 + $0x928] sm:%s2859] %v3454
                  %v3456 = vld [vmem:[%s2866 + $0x24c0] sm:%s2859]
                  %3457 = vst [vmem:[%s2867 + $0x930] sm:%s2859] %v3456
                  %v3458 = vld [vmem:[%s2866 + $0x24e0] sm:%s2859]
                  %3459 = vst [vmem:[%s2867 + $0x938] sm:%s2859] %v3458
                  %v3460 = vld [vmem:[%s2866 + $0x2500] sm:%s2859]
                  %3461 = vst [vmem:[%s2867 + $0x940] sm:%s2859] %v3460
                  %v3462 = vld [vmem:[%s2866 + $0x2520] sm:%s2859]
                  %3463 = vst [vmem:[%s2867 + $0x948] sm:%s2859] %v3462
                  %v3464 = vld [vmem:[%s2866 + $0x2540] sm:%s2859]
                  %3465 = vst [vmem:[%s2867 + $0x950] sm:%s2859] %v3464
                  %v3466 = vld [vmem:[%s2866 + $0x2560] sm:%s2859]
                  %3467 = vst [vmem:[%s2867 + $0x958] sm:%s2859] %v3466
                  %v3468 = vld [vmem:[%s2866 + $0x2580] sm:%s2859]
                  %3469 = vst [vmem:[%s2867 + $0x960] sm:%s2859] %v3468
                  %v3470 = vld [vmem:[%s2866 + $0x25a0] sm:%s2859]
                  %3471 = vst [vmem:[%s2867 + $0x968] sm:%s2859] %v3470
                  %v3472 = vld [vmem:[%s2866 + $0x25c0] sm:%s2859]
                  %3473 = vst [vmem:[%s2867 + $0x970] sm:%s2859] %v3472
                  %v3474 = vld [vmem:[%s2866 + $0x25e0] sm:%s2859]
                  %3475 = vst [vmem:[%s2867 + $0x978] sm:%s2859] %v3474
                  %v3476 = vld [vmem:[%s2866 + $0x2600] sm:%s2859]
                  %3477 = vst [vmem:[%s2867 + $0x980] sm:%s2859] %v3476
                  %v3478 = vld [vmem:[%s2866 + $0x2620] sm:%s2859]
                  %3479 = vst [vmem:[%s2867 + $0x988] sm:%s2859] %v3478
                  %v3480 = vld [vmem:[%s2866 + $0x2640] sm:%s2859]
                  %3481 = vst [vmem:[%s2867 + $0x990] sm:%s2859] %v3480
                  %v3482 = vld [vmem:[%s2866 + $0x2660] sm:%s2859]
                  %3483 = vst [vmem:[%s2867 + $0x998] sm:%s2859] %v3482
                  %v3484 = vld [vmem:[%s2866 + $0x2680] sm:%s2859]
                  %3485 = vst [vmem:[%s2867 + $0x9a0] sm:%s2859] %v3484
                  %v3486 = vld [vmem:[%s2866 + $0x26a0] sm:%s2859]
                  %3487 = vst [vmem:[%s2867 + $0x9a8] sm:%s2859] %v3486
                  %v3488 = vld [vmem:[%s2866 + $0x26c0] sm:%s2859]
                  %3489 = vst [vmem:[%s2867 + $0x9b0] sm:%s2859] %v3488
                  %v3490 = vld [vmem:[%s2866 + $0x26e0] sm:%s2859]
                  %3491 = vst [vmem:[%s2867 + $0x9b8] sm:%s2859] %v3490
                  %v3492 = vld [vmem:[%s2866 + $0x2700] sm:%s2859]
                  %3493 = vst [vmem:[%s2867 + $0x9c0] sm:%s2859] %v3492
                  %v3494 = vld [vmem:[%s2866 + $0x2720] sm:%s2859]
                  %3495 = vst [vmem:[%s2867 + $0x9c8] sm:%s2859] %v3494
                  %v3496 = vld [vmem:[%s2866 + $0x2740] sm:%s2859]
                  %3497 = vst [vmem:[%s2867 + $0x9d0] sm:%s2859] %v3496
                  %v3498 = vld [vmem:[%s2866 + $0x2760] sm:%s2859]
                  %3499 = vst [vmem:[%s2867 + $0x9d8] sm:%s2859] %v3498
                  %v3500 = vld [vmem:[%s2866 + $0x2780] sm:%s2859]
                  %3501 = vst [vmem:[%s2867 + $0x9e0] sm:%s2859] %v3500
                  %v3502 = vld [vmem:[%s2866 + $0x27a0] sm:%s2859]
                  %3503 = vst [vmem:[%s2867 + $0x9e8] sm:%s2859] %v3502
                  %v3504 = vld [vmem:[%s2866 + $0x27c0] sm:%s2859]
                  %3505 = vst [vmem:[%s2867 + $0x9f0] sm:%s2859] %v3504
                  %v3506 = vld [vmem:[%s2866 + $0x27e0] sm:%s2859]
                  %3507 = vst [vmem:[%s2867 + $0x9f8] sm:%s2859] %v3506
                  %v3508 = vld [vmem:[%s2866 + $0x2800] sm:%s2859]
                  %3509 = vst [vmem:[%s2867 + $0xa00] sm:%s2859] %v3508
                  %v3510 = vld [vmem:[%s2866 + $0x2820] sm:%s2859]
                  %3511 = vst [vmem:[%s2867 + $0xa08] sm:%s2859] %v3510
                  %v3512 = vld [vmem:[%s2866 + $0x2840] sm:%s2859]
                  %3513 = vst [vmem:[%s2867 + $0xa10] sm:%s2859] %v3512
                  %v3514 = vld [vmem:[%s2866 + $0x2860] sm:%s2859]
                  %3515 = vst [vmem:[%s2867 + $0xa18] sm:%s2859] %v3514
                  %v3516 = vld [vmem:[%s2866 + $0x2880] sm:%s2859]
                  %3517 = vst [vmem:[%s2867 + $0xa20] sm:%s2859] %v3516
                  %v3518 = vld [vmem:[%s2866 + $0x28a0] sm:%s2859]
                  %3519 = vst [vmem:[%s2867 + $0xa28] sm:%s2859] %v3518
                  %v3520 = vld [vmem:[%s2866 + $0x28c0] sm:%s2859]
                  %3521 = vst [vmem:[%s2867 + $0xa30] sm:%s2859] %v3520
                  %v3522 = vld [vmem:[%s2866 + $0x28e0] sm:%s2859]
                  %3523 = vst [vmem:[%s2867 + $0xa38] sm:%s2859] %v3522
                  %v3524 = vld [vmem:[%s2866 + $0x2900] sm:%s2859]
                  %3525 = vst [vmem:[%s2867 + $0xa40] sm:%s2859] %v3524
                  %v3526 = vld [vmem:[%s2866 + $0x2920] sm:%s2859]
                  %3527 = vst [vmem:[%s2867 + $0xa48] sm:%s2859] %v3526
                  %v3528 = vld [vmem:[%s2866 + $0x2940] sm:%s2859]
                  %3529 = vst [vmem:[%s2867 + $0xa50] sm:%s2859] %v3528
                  %v3530 = vld [vmem:[%s2866 + $0x2960] sm:%s2859]
                  %3531 = vst [vmem:[%s2867 + $0xa58] sm:%s2859] %v3530
                  %v3532 = vld [vmem:[%s2866 + $0x2980] sm:%s2859]
                  %3533 = vst [vmem:[%s2867 + $0xa60] sm:%s2859] %v3532
                  %v3534 = vld [vmem:[%s2866 + $0x29a0] sm:%s2859]
                  %3535 = vst [vmem:[%s2867 + $0xa68] sm:%s2859] %v3534
                  %v3536 = vld [vmem:[%s2866 + $0x29c0] sm:%s2859]
                  %3537 = vst [vmem:[%s2867 + $0xa70] sm:%s2859] %v3536
                  %v3538 = vld [vmem:[%s2866 + $0x29e0] sm:%s2859]
                  %3539 = vst [vmem:[%s2867 + $0xa78] sm:%s2859] %v3538
                  %v3540 = vld [vmem:[%s2866 + $0x2a00] sm:%s2859]
                  %3541 = vst [vmem:[%s2867 + $0xa80] sm:%s2859] %v3540
                  %v3542 = vld [vmem:[%s2866 + $0x2a20] sm:%s2859]
                  %3543 = vst [vmem:[%s2867 + $0xa88] sm:%s2859] %v3542
                  %v3544 = vld [vmem:[%s2866 + $0x2a40] sm:%s2859]
                  %3545 = vst [vmem:[%s2867 + $0xa90] sm:%s2859] %v3544
                  %v3546 = vld [vmem:[%s2866 + $0x2a60] sm:%s2859]
                  %3547 = vst [vmem:[%s2867 + $0xa98] sm:%s2859] %v3546
                  %v3548 = vld [vmem:[%s2866 + $0x2a80] sm:%s2859]
                  %3549 = vst [vmem:[%s2867 + $0xaa0] sm:%s2859] %v3548
                  %v3550 = vld [vmem:[%s2866 + $0x2aa0] sm:%s2859]
                  %3551 = vst [vmem:[%s2867 + $0xaa8] sm:%s2859] %v3550
                  %v3552 = vld [vmem:[%s2866 + $0x2ac0] sm:%s2859]
                  %3553 = vst [vmem:[%s2867 + $0xab0] sm:%s2859] %v3552
                  %v3554 = vld [vmem:[%s2866 + $0x2ae0] sm:%s2859]
                  %3555 = vst [vmem:[%s2867 + $0xab8] sm:%s2859] %v3554
                  %v3556 = vld [vmem:[%s2866 + $0x2b00] sm:%s2859]
                  %3557 = vst [vmem:[%s2867 + $0xac0] sm:%s2859] %v3556
                  %v3558 = vld [vmem:[%s2866 + $0x2b20] sm:%s2859]
                  %3559 = vst [vmem:[%s2867 + $0xac8] sm:%s2859] %v3558
                  %v3560 = vld [vmem:[%s2866 + $0x2b40] sm:%s2859]
                  %3561 = vst [vmem:[%s2867 + $0xad0] sm:%s2859] %v3560
                  %v3562 = vld [vmem:[%s2866 + $0x2b60] sm:%s2859]
                  %3563 = vst [vmem:[%s2867 + $0xad8] sm:%s2859] %v3562
                  %v3564 = vld [vmem:[%s2866 + $0x2b80] sm:%s2859]
                  %3565 = vst [vmem:[%s2867 + $0xae0] sm:%s2859] %v3564
                  %v3566 = vld [vmem:[%s2866 + $0x2ba0] sm:%s2859]
                  %3567 = vst [vmem:[%s2867 + $0xae8] sm:%s2859] %v3566
                  %v3568 = vld [vmem:[%s2866 + $0x2bc0] sm:%s2859]
                  %3569 = vst [vmem:[%s2867 + $0xaf0] sm:%s2859] %v3568
                  %v3570 = vld [vmem:[%s2866 + $0x2be0] sm:%s2859]
                  %3571 = vst [vmem:[%s2867 + $0xaf8] sm:%s2859] %v3570
                  %v3572 = vld [vmem:[%s2866 + $0x2c00] sm:%s2859]
                  %3573 = vst [vmem:[%s2867 + $0xb00] sm:%s2859] %v3572
                  %v3574 = vld [vmem:[%s2866 + $0x2c20] sm:%s2859]
                  %3575 = vst [vmem:[%s2867 + $0xb08] sm:%s2859] %v3574
                  %v3576 = vld [vmem:[%s2866 + $0x2c40] sm:%s2859]
                  %3577 = vst [vmem:[%s2867 + $0xb10] sm:%s2859] %v3576
                  %v3578 = vld [vmem:[%s2866 + $0x2c60] sm:%s2859]
                  %3579 = vst [vmem:[%s2867 + $0xb18] sm:%s2859] %v3578
                  %v3580 = vld [vmem:[%s2866 + $0x2c80] sm:%s2859]
                  %3581 = vst [vmem:[%s2867 + $0xb20] sm:%s2859] %v3580
                  %v3582 = vld [vmem:[%s2866 + $0x2ca0] sm:%s2859]
                  %3583 = vst [vmem:[%s2867 + $0xb28] sm:%s2859] %v3582
                  %v3584 = vld [vmem:[%s2866 + $0x2cc0] sm:%s2859]
                  %3585 = vst [vmem:[%s2867 + $0xb30] sm:%s2859] %v3584
                  %v3586 = vld [vmem:[%s2866 + $0x2ce0] sm:%s2859]
                  %3587 = vst [vmem:[%s2867 + $0xb38] sm:%s2859] %v3586
                  %v3588 = vld [vmem:[%s2866 + $0x2d00] sm:%s2859]
                  %3589 = vst [vmem:[%s2867 + $0xb40] sm:%s2859] %v3588
                  %v3590 = vld [vmem:[%s2866 + $0x2d20] sm:%s2859]
                  %3591 = vst [vmem:[%s2867 + $0xb48] sm:%s2859] %v3590
                  %v3592 = vld [vmem:[%s2866 + $0x2d40] sm:%s2859]
                  %3593 = vst [vmem:[%s2867 + $0xb50] sm:%s2859] %v3592
                  %v3594 = vld [vmem:[%s2866 + $0x2d60] sm:%s2859]
                  %3595 = vst [vmem:[%s2867 + $0xb58] sm:%s2859] %v3594
                  %v3596 = vld [vmem:[%s2866 + $0x2d80] sm:%s2859]
                  %3597 = vst [vmem:[%s2867 + $0xb60] sm:%s2859] %v3596
                  %v3598 = vld [vmem:[%s2866 + $0x2da0] sm:%s2859]
                  %3599 = vst [vmem:[%s2867 + $0xb68] sm:%s2859] %v3598
                  %v3600 = vld [vmem:[%s2866 + $0x2dc0] sm:%s2859]
                  %3601 = vst [vmem:[%s2867 + $0xb70] sm:%s2859] %v3600
                  %v3602 = vld [vmem:[%s2866 + $0x2de0] sm:%s2859]
                  %3603 = vst [vmem:[%s2867 + $0xb78] sm:%s2859] %v3602
                  %v3604 = vld [vmem:[%s2866 + $0x2e00] sm:%s2859]
                  %3605 = vst [vmem:[%s2867 + $0xb80] sm:%s2859] %v3604
                  %v3606 = vld [vmem:[%s2866 + $0x2e20] sm:%s2859]
                  %3607 = vst [vmem:[%s2867 + $0xb88] sm:%s2859] %v3606
                  %v3608 = vld [vmem:[%s2866 + $0x2e40] sm:%s2859]
                  %3609 = vst [vmem:[%s2867 + $0xb90] sm:%s2859] %v3608
                  %v3610 = vld [vmem:[%s2866 + $0x2e60] sm:%s2859]
                  %3611 = vst [vmem:[%s2867 + $0xb98] sm:%s2859] %v3610
                  %v3612 = vld [vmem:[%s2866 + $0x2e80] sm:%s2859]
                  %3613 = vst [vmem:[%s2867 + $0xba0] sm:%s2859] %v3612
                  %v3614 = vld [vmem:[%s2866 + $0x2ea0] sm:%s2859]
                  %3615 = vst [vmem:[%s2867 + $0xba8] sm:%s2859] %v3614
                  %v3616 = vld [vmem:[%s2866 + $0x2ec0] sm:%s2859]
                  %3617 = vst [vmem:[%s2867 + $0xbb0] sm:%s2859] %v3616
                  %v3618 = vld [vmem:[%s2866 + $0x2ee0] sm:%s2859]
                  %3619 = vst [vmem:[%s2867 + $0xbb8] sm:%s2859] %v3618
                  %v3620 = vld [vmem:[%s2866 + $0x2f00] sm:%s2859]
                  %3621 = vst [vmem:[%s2867 + $0xbc0] sm:%s2859] %v3620
                  %v3622 = vld [vmem:[%s2866 + $0x2f20] sm:%s2859]
                  %3623 = vst [vmem:[%s2867 + $0xbc8] sm:%s2859] %v3622
                  %v3624 = vld [vmem:[%s2866 + $0x2f40] sm:%s2859]
                  %3625 = vst [vmem:[%s2867 + $0xbd0] sm:%s2859] %v3624
                  %v3626 = vld [vmem:[%s2866 + $0x2f60] sm:%s2859]
                  %3627 = vst [vmem:[%s2867 + $0xbd8] sm:%s2859] %v3626
                  %v3628 = vld [vmem:[%s2866 + $0x2f80] sm:%s2859]
                  %3629 = vst [vmem:[%s2867 + $0xbe0] sm:%s2859] %v3628
                  %v3630 = vld [vmem:[%s2866 + $0x2fa0] sm:%s2859]
                  %3631 = vst [vmem:[%s2867 + $0xbe8] sm:%s2859] %v3630
                  %v3632 = vld [vmem:[%s2866 + $0x2fc0] sm:%s2859]
                  %3633 = vst [vmem:[%s2867 + $0xbf0] sm:%s2859] %v3632
                  %v3634 = vld [vmem:[%s2866 + $0x2fe0] sm:%s2859]
                  %3635 = vst [vmem:[%s2867 + $0xbf8] sm:%s2859] %v3634
                  %v3636 = vld [vmem:[%s2866 + $0x3000] sm:%s2859]
                  %3637 = vst [vmem:[%s2867 + $0xc00] sm:%s2859] %v3636
                  %v3638 = vld [vmem:[%s2866 + $0x3020] sm:%s2859]
                  %3639 = vst [vmem:[%s2867 + $0xc08] sm:%s2859] %v3638
                  %v3640 = vld [vmem:[%s2866 + $0x3040] sm:%s2859]
                  %3641 = vst [vmem:[%s2867 + $0xc10] sm:%s2859] %v3640
                  %v3642 = vld [vmem:[%s2866 + $0x3060] sm:%s2859]
                  %3643 = vst [vmem:[%s2867 + $0xc18] sm:%s2859] %v3642
                  %v3644 = vld [vmem:[%s2866 + $0x3080] sm:%s2859]
                  %3645 = vst [vmem:[%s2867 + $0xc20] sm:%s2859] %v3644
                  %v3646 = vld [vmem:[%s2866 + $0x30a0] sm:%s2859]
                  %3647 = vst [vmem:[%s2867 + $0xc28] sm:%s2859] %v3646
                  %v3648 = vld [vmem:[%s2866 + $0x30c0] sm:%s2859]
                  %3649 = vst [vmem:[%s2867 + $0xc30] sm:%s2859] %v3648
                  %v3650 = vld [vmem:[%s2866 + $0x30e0] sm:%s2859]
                  %3651 = vst [vmem:[%s2867 + $0xc38] sm:%s2859] %v3650
                  %v3652 = vld [vmem:[%s2866 + $0x3100] sm:%s2859]
                  %3653 = vst [vmem:[%s2867 + $0xc40] sm:%s2859] %v3652
                  %v3654 = vld [vmem:[%s2866 + $0x3120] sm:%s2859]
                  %3655 = vst [vmem:[%s2867 + $0xc48] sm:%s2859] %v3654
                  %v3656 = vld [vmem:[%s2866 + $0x3140] sm:%s2859]
                  %3657 = vst [vmem:[%s2867 + $0xc50] sm:%s2859] %v3656
                  %v3658 = vld [vmem:[%s2866 + $0x3160] sm:%s2859]
                  %3659 = vst [vmem:[%s2867 + $0xc58] sm:%s2859] %v3658
                  %v3660 = vld [vmem:[%s2866 + $0x3180] sm:%s2859]
                  %3661 = vst [vmem:[%s2867 + $0xc60] sm:%s2859] %v3660
                  %v3662 = vld [vmem:[%s2866 + $0x31a0] sm:%s2859]
                  %3663 = vst [vmem:[%s2867 + $0xc68] sm:%s2859] %v3662
                  %v3664 = vld [vmem:[%s2866 + $0x31c0] sm:%s2859]
                  %3665 = vst [vmem:[%s2867 + $0xc70] sm:%s2859] %v3664
                  %v3666 = vld [vmem:[%s2866 + $0x31e0] sm:%s2859]
                  %3667 = vst [vmem:[%s2867 + $0xc78] sm:%s2859] %v3666
                  %v3668 = vld [vmem:[%s2866 + $0x3200] sm:%s2859]
                  %3669 = vst [vmem:[%s2867 + $0xc80] sm:%s2859] %v3668
                  %v3670 = vld [vmem:[%s2866 + $0x3220] sm:%s2859]
                  %3671 = vst [vmem:[%s2867 + $0xc88] sm:%s2859] %v3670
                  %v3672 = vld [vmem:[%s2866 + $0x3240] sm:%s2859]
                  %3673 = vst [vmem:[%s2867 + $0xc90] sm:%s2859] %v3672
                  %v3674 = vld [vmem:[%s2866 + $0x3260] sm:%s2859]
                  %3675 = vst [vmem:[%s2867 + $0xc98] sm:%s2859] %v3674
                  %v3676 = vld [vmem:[%s2866 + $0x3280] sm:%s2859]
                  %3677 = vst [vmem:[%s2867 + $0xca0] sm:%s2859] %v3676
                  %v3678 = vld [vmem:[%s2866 + $0x32a0] sm:%s2859]
                  %3679 = vst [vmem:[%s2867 + $0xca8] sm:%s2859] %v3678
                  %v3680 = vld [vmem:[%s2866 + $0x32c0] sm:%s2859]
                  %3681 = vst [vmem:[%s2867 + $0xcb0] sm:%s2859] %v3680
                  %v3682 = vld [vmem:[%s2866 + $0x32e0] sm:%s2859]
                  %3683 = vst [vmem:[%s2867 + $0xcb8] sm:%s2859] %v3682
                  %v3684 = vld [vmem:[%s2866 + $0x3300] sm:%s2859]
                  %3685 = vst [vmem:[%s2867 + $0xcc0] sm:%s2859] %v3684
                  %v3686 = vld [vmem:[%s2866 + $0x3320] sm:%s2859]
                  %3687 = vst [vmem:[%s2867 + $0xcc8] sm:%s2859] %v3686
                  %v3688 = vld [vmem:[%s2866 + $0x3340] sm:%s2859]
                  %3689 = vst [vmem:[%s2867 + $0xcd0] sm:%s2859] %v3688
                  %v3690 = vld [vmem:[%s2866 + $0x3360] sm:%s2859]
                  %3691 = vst [vmem:[%s2867 + $0xcd8] sm:%s2859] %v3690
                  %v3692 = vld [vmem:[%s2866 + $0x3380] sm:%s2859]
                  %3693 = vst [vmem:[%s2867 + $0xce0] sm:%s2859] %v3692
                  %v3694 = vld [vmem:[%s2866 + $0x33a0] sm:%s2859]
                  %3695 = vst [vmem:[%s2867 + $0xce8] sm:%s2859] %v3694
                  %v3696 = vld [vmem:[%s2866 + $0x33c0] sm:%s2859]
                  %3697 = vst [vmem:[%s2867 + $0xcf0] sm:%s2859] %v3696
                  %v3698 = vld [vmem:[%s2866 + $0x33e0] sm:%s2859]
                  %3699 = vst [vmem:[%s2867 + $0xcf8] sm:%s2859] %v3698
                  %v3700 = vld [vmem:[%s2866 + $0x3400] sm:%s2859]
                  %3701 = vst [vmem:[%s2867 + $0xd00] sm:%s2859] %v3700
                  %v3702 = vld [vmem:[%s2866 + $0x3420] sm:%s2859]
                  %3703 = vst [vmem:[%s2867 + $0xd08] sm:%s2859] %v3702
                  %v3704 = vld [vmem:[%s2866 + $0x3440] sm:%s2859]
                  %3705 = vst [vmem:[%s2867 + $0xd10] sm:%s2859] %v3704
                  %v3706 = vld [vmem:[%s2866 + $0x3460] sm:%s2859]
                  %3707 = vst [vmem:[%s2867 + $0xd18] sm:%s2859] %v3706
                  %v3708 = vld [vmem:[%s2866 + $0x3480] sm:%s2859]
                  %3709 = vst [vmem:[%s2867 + $0xd20] sm:%s2859] %v3708
                  %v3710 = vld [vmem:[%s2866 + $0x34a0] sm:%s2859]
                  %3711 = vst [vmem:[%s2867 + $0xd28] sm:%s2859] %v3710
                  %v3712 = vld [vmem:[%s2866 + $0x34c0] sm:%s2859]
                  %3713 = vst [vmem:[%s2867 + $0xd30] sm:%s2859] %v3712
                  %v3714 = vld [vmem:[%s2866 + $0x34e0] sm:%s2859]
                  %3715 = vst [vmem:[%s2867 + $0xd38] sm:%s2859] %v3714
                  %v3716 = vld [vmem:[%s2866 + $0x3500] sm:%s2859]
                  %3717 = vst [vmem:[%s2867 + $0xd40] sm:%s2859] %v3716
                  %v3718 = vld [vmem:[%s2866 + $0x3520] sm:%s2859]
                  %3719 = vst [vmem:[%s2867 + $0xd48] sm:%s2859] %v3718
                  %v3720 = vld [vmem:[%s2866 + $0x3540] sm:%s2859]
                  %3721 = vst [vmem:[%s2867 + $0xd50] sm:%s2859] %v3720
                  %v3722 = vld [vmem:[%s2866 + $0x3560] sm:%s2859]
                  %3723 = vst [vmem:[%s2867 + $0xd58] sm:%s2859] %v3722
                  %v3724 = vld [vmem:[%s2866 + $0x3580] sm:%s2859]
                  %3725 = vst [vmem:[%s2867 + $0xd60] sm:%s2859] %v3724
                  %v3726 = vld [vmem:[%s2866 + $0x35a0] sm:%s2859]
                  %3727 = vst [vmem:[%s2867 + $0xd68] sm:%s2859] %v3726
                  %v3728 = vld [vmem:[%s2866 + $0x35c0] sm:%s2859]
                  %3729 = vst [vmem:[%s2867 + $0xd70] sm:%s2859] %v3728
                  %v3730 = vld [vmem:[%s2866 + $0x35e0] sm:%s2859]
                  %3731 = vst [vmem:[%s2867 + $0xd78] sm:%s2859] %v3730
                  %v3732 = vld [vmem:[%s2866 + $0x3600] sm:%s2859]
                  %3733 = vst [vmem:[%s2867 + $0xd80] sm:%s2859] %v3732
                  %v3734 = vld [vmem:[%s2866 + $0x3620] sm:%s2859]
                  %3735 = vst [vmem:[%s2867 + $0xd88] sm:%s2859] %v3734
                  %v3736 = vld [vmem:[%s2866 + $0x3640] sm:%s2859]
                  %3737 = vst [vmem:[%s2867 + $0xd90] sm:%s2859] %v3736
                  %v3738 = vld [vmem:[%s2866 + $0x3660] sm:%s2859]
                  %3739 = vst [vmem:[%s2867 + $0xd98] sm:%s2859] %v3738
                $region74: #{dqn_forward.5} parent=61 // loop_footer
                  %s2865 = sadd.s32 1, %s2861
                $region75: #{dqn_forward.5} parent=61 // loop_footer_branch
                  %2860 = sbr.rel target = $region71
                $region76: #{dqn_forward.5} parent=61 // loop_exit
                  _
              $region62: #{dqn_forward.5} parent=35 // pred_fallthru
                _
            $region36: #{dqn_forward.5} parent=31 // pred_fallthru
              _
            // Predicated region
            $region37: #{dqn_forward.5} parent=31 // pred_check
              _
            $region38: #{dqn_forward.5} parent=31 // pred_check_branch
              %193 = sbr.rel target = $region40
            $region39: #{dqn_forward.5} parent=31 // pred_region
              %s195 = ssub.s32 256, 1
              loop: start=0, step=1, limit=1
              $region41: #{dqn_forward.5} parent=39 // loop_pre_header
                _
              $region42: #{dqn_forward.5} parent=39 // loop_header
                %s197 = sphi 0, %s201
                %p198 = scmp.ge.s32.totalorder %s197, 1
                %s202 = sphi %s187, %s187
                %s203 = sphi %s184, %s184
              $region43: #{dqn_forward.5} parent=39 // loop_header_branch
                %200 = sbr.rel (%p198) target = $region47
              $region44: #{dqn_forward.5} parent=39 // loop_body
                %v204 = vld [vmem:[%s202] sm:%s195]
                %205 = vst [vmem:[%s203] sm:%s195] %v204
                %v206 = vld [vmem:[%s202 + $0x20] sm:%s195]
                %207 = vst [vmem:[%s203 + $0x8] sm:%s195] %v206
                %v208 = vld [vmem:[%s202 + $0x40] sm:%s195]
                %209 = vst [vmem:[%s203 + $0x10] sm:%s195] %v208
                %v210 = vld [vmem:[%s202 + $0x60] sm:%s195]
                %211 = vst [vmem:[%s203 + $0x18] sm:%s195] %v210
                %v212 = vld [vmem:[%s202 + $0x80] sm:%s195]
                %213 = vst [vmem:[%s203 + $0x20] sm:%s195] %v212
                %v214 = vld [vmem:[%s202 + $0xa0] sm:%s195]
                %215 = vst [vmem:[%s203 + $0x28] sm:%s195] %v214
                %v216 = vld [vmem:[%s202 + $0xc0] sm:%s195]
                %217 = vst [vmem:[%s203 + $0x30] sm:%s195] %v216
                %v218 = vld [vmem:[%s202 + $0xe0] sm:%s195]
                %219 = vst [vmem:[%s203 + $0x38] sm:%s195] %v218
                %v220 = vld [vmem:[%s202 + $0x100] sm:%s195]
                %221 = vst [vmem:[%s203 + $0x40] sm:%s195] %v220
                %v222 = vld [vmem:[%s202 + $0x120] sm:%s195]
                %223 = vst [vmem:[%s203 + $0x48] sm:%s195] %v222
                %v224 = vld [vmem:[%s202 + $0x140] sm:%s195]
                %225 = vst [vmem:[%s203 + $0x50] sm:%s195] %v224
                %v226 = vld [vmem:[%s202 + $0x160] sm:%s195]
                %227 = vst [vmem:[%s203 + $0x58] sm:%s195] %v226
                %v228 = vld [vmem:[%s202 + $0x180] sm:%s195]
                %229 = vst [vmem:[%s203 + $0x60] sm:%s195] %v228
                %v230 = vld [vmem:[%s202 + $0x1a0] sm:%s195]
                %231 = vst [vmem:[%s203 + $0x68] sm:%s195] %v230
                %v232 = vld [vmem:[%s202 + $0x1c0] sm:%s195]
                %233 = vst [vmem:[%s203 + $0x70] sm:%s195] %v232
                %v234 = vld [vmem:[%s202 + $0x1e0] sm:%s195]
                %235 = vst [vmem:[%s203 + $0x78] sm:%s195] %v234
                %v236 = vld [vmem:[%s202 + $0x200] sm:%s195]
                %237 = vst [vmem:[%s203 + $0x80] sm:%s195] %v236
                %v238 = vld [vmem:[%s202 + $0x220] sm:%s195]
                %239 = vst [vmem:[%s203 + $0x88] sm:%s195] %v238
                %v240 = vld [vmem:[%s202 + $0x240] sm:%s195]
                %241 = vst [vmem:[%s203 + $0x90] sm:%s195] %v240
                %v242 = vld [vmem:[%s202 + $0x260] sm:%s195]
                %243 = vst [vmem:[%s203 + $0x98] sm:%s195] %v242
                %v244 = vld [vmem:[%s202 + $0x280] sm:%s195]
                %245 = vst [vmem:[%s203 + $0xa0] sm:%s195] %v244
                %v246 = vld [vmem:[%s202 + $0x2a0] sm:%s195]
                %247 = vst [vmem:[%s203 + $0xa8] sm:%s195] %v246
                %v248 = vld [vmem:[%s202 + $0x2c0] sm:%s195]
                %249 = vst [vmem:[%s203 + $0xb0] sm:%s195] %v248
                %v250 = vld [vmem:[%s202 + $0x2e0] sm:%s195]
                %251 = vst [vmem:[%s203 + $0xb8] sm:%s195] %v250
                %v252 = vld [vmem:[%s202 + $0x300] sm:%s195]
                %253 = vst [vmem:[%s203 + $0xc0] sm:%s195] %v252
                %v254 = vld [vmem:[%s202 + $0x320] sm:%s195]
                %255 = vst [vmem:[%s203 + $0xc8] sm:%s195] %v254
                %v256 = vld [vmem:[%s202 + $0x340] sm:%s195]
                %257 = vst [vmem:[%s203 + $0xd0] sm:%s195] %v256
                %v258 = vld [vmem:[%s202 + $0x360] sm:%s195]
                %259 = vst [vmem:[%s203 + $0xd8] sm:%s195] %v258
                %v260 = vld [vmem:[%s202 + $0x380] sm:%s195]
                %261 = vst [vmem:[%s203 + $0xe0] sm:%s195] %v260
                %v262 = vld [vmem:[%s202 + $0x3a0] sm:%s195]
                %263 = vst [vmem:[%s203 + $0xe8] sm:%s195] %v262
                %v264 = vld [vmem:[%s202 + $0x3c0] sm:%s195]
                %265 = vst [vmem:[%s203 + $0xf0] sm:%s195] %v264
                %v266 = vld [vmem:[%s202 + $0x3e0] sm:%s195]
                %267 = vst [vmem:[%s203 + $0xf8] sm:%s195] %v266
                %v268 = vld [vmem:[%s202 + $0x400] sm:%s195]
                %269 = vst [vmem:[%s203 + $0x100] sm:%s195] %v268
                %v270 = vld [vmem:[%s202 + $0x420] sm:%s195]
                %271 = vst [vmem:[%s203 + $0x108] sm:%s195] %v270
                %v272 = vld [vmem:[%s202 + $0x440] sm:%s195]
                %273 = vst [vmem:[%s203 + $0x110] sm:%s195] %v272
                %v274 = vld [vmem:[%s202 + $0x460] sm:%s195]
                %275 = vst [vmem:[%s203 + $0x118] sm:%s195] %v274
                %v276 = vld [vmem:[%s202 + $0x480] sm:%s195]
                %277 = vst [vmem:[%s203 + $0x120] sm:%s195] %v276
                %v278 = vld [vmem:[%s202 + $0x4a0] sm:%s195]
                %279 = vst [vmem:[%s203 + $0x128] sm:%s195] %v278
                %v280 = vld [vmem:[%s202 + $0x4c0] sm:%s195]
                %281 = vst [vmem:[%s203 + $0x130] sm:%s195] %v280
                %v282 = vld [vmem:[%s202 + $0x4e0] sm:%s195]
                %283 = vst [vmem:[%s203 + $0x138] sm:%s195] %v282
                %v284 = vld [vmem:[%s202 + $0x500] sm:%s195]
                %285 = vst [vmem:[%s203 + $0x140] sm:%s195] %v284
                %v286 = vld [vmem:[%s202 + $0x520] sm:%s195]
                %287 = vst [vmem:[%s203 + $0x148] sm:%s195] %v286
                %v288 = vld [vmem:[%s202 + $0x540] sm:%s195]
                %289 = vst [vmem:[%s203 + $0x150] sm:%s195] %v288
                %v290 = vld [vmem:[%s202 + $0x560] sm:%s195]
                %291 = vst [vmem:[%s203 + $0x158] sm:%s195] %v290
                %v292 = vld [vmem:[%s202 + $0x580] sm:%s195]
                %293 = vst [vmem:[%s203 + $0x160] sm:%s195] %v292
                %v294 = vld [vmem:[%s202 + $0x5a0] sm:%s195]
                %295 = vst [vmem:[%s203 + $0x168] sm:%s195] %v294
                %v296 = vld [vmem:[%s202 + $0x5c0] sm:%s195]
                %297 = vst [vmem:[%s203 + $0x170] sm:%s195] %v296
                %v298 = vld [vmem:[%s202 + $0x5e0] sm:%s195]
                %299 = vst [vmem:[%s203 + $0x178] sm:%s195] %v298
                %v300 = vld [vmem:[%s202 + $0x600] sm:%s195]
                %301 = vst [vmem:[%s203 + $0x180] sm:%s195] %v300
                %v302 = vld [vmem:[%s202 + $0x620] sm:%s195]
                %303 = vst [vmem:[%s203 + $0x188] sm:%s195] %v302
                %v304 = vld [vmem:[%s202 + $0x640] sm:%s195]
                %305 = vst [vmem:[%s203 + $0x190] sm:%s195] %v304
                %v306 = vld [vmem:[%s202 + $0x660] sm:%s195]
                %307 = vst [vmem:[%s203 + $0x198] sm:%s195] %v306
                %v308 = vld [vmem:[%s202 + $0x680] sm:%s195]
                %309 = vst [vmem:[%s203 + $0x1a0] sm:%s195] %v308
                %v310 = vld [vmem:[%s202 + $0x6a0] sm:%s195]
                %311 = vst [vmem:[%s203 + $0x1a8] sm:%s195] %v310
                %v312 = vld [vmem:[%s202 + $0x6c0] sm:%s195]
                %313 = vst [vmem:[%s203 + $0x1b0] sm:%s195] %v312
                %v314 = vld [vmem:[%s202 + $0x6e0] sm:%s195]
                %315 = vst [vmem:[%s203 + $0x1b8] sm:%s195] %v314
                %v316 = vld [vmem:[%s202 + $0x700] sm:%s195]
                %317 = vst [vmem:[%s203 + $0x1c0] sm:%s195] %v316
                %v318 = vld [vmem:[%s202 + $0x720] sm:%s195]
                %319 = vst [vmem:[%s203 + $0x1c8] sm:%s195] %v318
                %v320 = vld [vmem:[%s202 + $0x740] sm:%s195]
                %321 = vst [vmem:[%s203 + $0x1d0] sm:%s195] %v320
                %v322 = vld [vmem:[%s202 + $0x760] sm:%s195]
                %323 = vst [vmem:[%s203 + $0x1d8] sm:%s195] %v322
                %v324 = vld [vmem:[%s202 + $0x780] sm:%s195]
                %325 = vst [vmem:[%s203 + $0x1e0] sm:%s195] %v324
                %v326 = vld [vmem:[%s202 + $0x7a0] sm:%s195]
                %327 = vst [vmem:[%s203 + $0x1e8] sm:%s195] %v326
                %v328 = vld [vmem:[%s202 + $0x7c0] sm:%s195]
                %329 = vst [vmem:[%s203 + $0x1f0] sm:%s195] %v328
                %v330 = vld [vmem:[%s202 + $0x7e0] sm:%s195]
                %331 = vst [vmem:[%s203 + $0x1f8] sm:%s195] %v330
                %v332 = vld [vmem:[%s202 + $0x800] sm:%s195]
                %333 = vst [vmem:[%s203 + $0x200] sm:%s195] %v332
                %v334 = vld [vmem:[%s202 + $0x820] sm:%s195]
                %335 = vst [vmem:[%s203 + $0x208] sm:%s195] %v334
                %v336 = vld [vmem:[%s202 + $0x840] sm:%s195]
                %337 = vst [vmem:[%s203 + $0x210] sm:%s195] %v336
                %v338 = vld [vmem:[%s202 + $0x860] sm:%s195]
                %339 = vst [vmem:[%s203 + $0x218] sm:%s195] %v338
                %v340 = vld [vmem:[%s202 + $0x880] sm:%s195]
                %341 = vst [vmem:[%s203 + $0x220] sm:%s195] %v340
                %v342 = vld [vmem:[%s202 + $0x8a0] sm:%s195]
                %343 = vst [vmem:[%s203 + $0x228] sm:%s195] %v342
                %v344 = vld [vmem:[%s202 + $0x8c0] sm:%s195]
                %345 = vst [vmem:[%s203 + $0x230] sm:%s195] %v344
                %v346 = vld [vmem:[%s202 + $0x8e0] sm:%s195]
                %347 = vst [vmem:[%s203 + $0x238] sm:%s195] %v346
                %v348 = vld [vmem:[%s202 + $0x900] sm:%s195]
                %349 = vst [vmem:[%s203 + $0x240] sm:%s195] %v348
                %v350 = vld [vmem:[%s202 + $0x920] sm:%s195]
                %351 = vst [vmem:[%s203 + $0x248] sm:%s195] %v350
                %v352 = vld [vmem:[%s202 + $0x940] sm:%s195]
                %353 = vst [vmem:[%s203 + $0x250] sm:%s195] %v352
                %v354 = vld [vmem:[%s202 + $0x960] sm:%s195]
                %355 = vst [vmem:[%s203 + $0x258] sm:%s195] %v354
                %v356 = vld [vmem:[%s202 + $0x980] sm:%s195]
                %357 = vst [vmem:[%s203 + $0x260] sm:%s195] %v356
                %v358 = vld [vmem:[%s202 + $0x9a0] sm:%s195]
                %359 = vst [vmem:[%s203 + $0x268] sm:%s195] %v358
                %v360 = vld [vmem:[%s202 + $0x9c0] sm:%s195]
                %361 = vst [vmem:[%s203 + $0x270] sm:%s195] %v360
                %v362 = vld [vmem:[%s202 + $0x9e0] sm:%s195]
                %363 = vst [vmem:[%s203 + $0x278] sm:%s195] %v362
                %v364 = vld [vmem:[%s202 + $0xa00] sm:%s195]
                %365 = vst [vmem:[%s203 + $0x280] sm:%s195] %v364
                %v366 = vld [vmem:[%s202 + $0xa20] sm:%s195]
                %367 = vst [vmem:[%s203 + $0x288] sm:%s195] %v366
                %v368 = vld [vmem:[%s202 + $0xa40] sm:%s195]
                %369 = vst [vmem:[%s203 + $0x290] sm:%s195] %v368
                %v370 = vld [vmem:[%s202 + $0xa60] sm:%s195]
                %371 = vst [vmem:[%s203 + $0x298] sm:%s195] %v370
                %v372 = vld [vmem:[%s202 + $0xa80] sm:%s195]
                %373 = vst [vmem:[%s203 + $0x2a0] sm:%s195] %v372
                %v374 = vld [vmem:[%s202 + $0xaa0] sm:%s195]
                %375 = vst [vmem:[%s203 + $0x2a8] sm:%s195] %v374
                %v376 = vld [vmem:[%s202 + $0xac0] sm:%s195]
                %377 = vst [vmem:[%s203 + $0x2b0] sm:%s195] %v376
                %v378 = vld [vmem:[%s202 + $0xae0] sm:%s195]
                %379 = vst [vmem:[%s203 + $0x2b8] sm:%s195] %v378
                %v380 = vld [vmem:[%s202 + $0xb00] sm:%s195]
                %381 = vst [vmem:[%s203 + $0x2c0] sm:%s195] %v380
                %v382 = vld [vmem:[%s202 + $0xb20] sm:%s195]
                %383 = vst [vmem:[%s203 + $0x2c8] sm:%s195] %v382
                %v384 = vld [vmem:[%s202 + $0xb40] sm:%s195]
                %385 = vst [vmem:[%s203 + $0x2d0] sm:%s195] %v384
                %v386 = vld [vmem:[%s202 + $0xb60] sm:%s195]
                %387 = vst [vmem:[%s203 + $0x2d8] sm:%s195] %v386
                %v388 = vld [vmem:[%s202 + $0xb80] sm:%s195]
                %389 = vst [vmem:[%s203 + $0x2e0] sm:%s195] %v388
                %v390 = vld [vmem:[%s202 + $0xba0] sm:%s195]
                %391 = vst [vmem:[%s203 + $0x2e8] sm:%s195] %v390
                %v392 = vld [vmem:[%s202 + $0xbc0] sm:%s195]
                %393 = vst [vmem:[%s203 + $0x2f0] sm:%s195] %v392
                %v394 = vld [vmem:[%s202 + $0xbe0] sm:%s195]
                %395 = vst [vmem:[%s203 + $0x2f8] sm:%s195] %v394
                %v396 = vld [vmem:[%s202 + $0xc00] sm:%s195]
                %397 = vst [vmem:[%s203 + $0x300] sm:%s195] %v396
                %v398 = vld [vmem:[%s202 + $0xc20] sm:%s195]
                %399 = vst [vmem:[%s203 + $0x308] sm:%s195] %v398
                %v400 = vld [vmem:[%s202 + $0xc40] sm:%s195]
                %401 = vst [vmem:[%s203 + $0x310] sm:%s195] %v400
                %v402 = vld [vmem:[%s202 + $0xc60] sm:%s195]
                %403 = vst [vmem:[%s203 + $0x318] sm:%s195] %v402
                %v404 = vld [vmem:[%s202 + $0xc80] sm:%s195]
                %405 = vst [vmem:[%s203 + $0x320] sm:%s195] %v404
                %v406 = vld [vmem:[%s202 + $0xca0] sm:%s195]
                %407 = vst [vmem:[%s203 + $0x328] sm:%s195] %v406
                %v408 = vld [vmem:[%s202 + $0xcc0] sm:%s195]
                %409 = vst [vmem:[%s203 + $0x330] sm:%s195] %v408
                %v410 = vld [vmem:[%s202 + $0xce0] sm:%s195]
                %411 = vst [vmem:[%s203 + $0x338] sm:%s195] %v410
                %v412 = vld [vmem:[%s202 + $0xd00] sm:%s195]
                %413 = vst [vmem:[%s203 + $0x340] sm:%s195] %v412
                %v414 = vld [vmem:[%s202 + $0xd20] sm:%s195]
                %415 = vst [vmem:[%s203 + $0x348] sm:%s195] %v414
                %v416 = vld [vmem:[%s202 + $0xd40] sm:%s195]
                %417 = vst [vmem:[%s203 + $0x350] sm:%s195] %v416
                %v418 = vld [vmem:[%s202 + $0xd60] sm:%s195]
                %419 = vst [vmem:[%s203 + $0x358] sm:%s195] %v418
                %v420 = vld [vmem:[%s202 + $0xd80] sm:%s195]
                %421 = vst [vmem:[%s203 + $0x360] sm:%s195] %v420
                %v422 = vld [vmem:[%s202 + $0xda0] sm:%s195]
                %423 = vst [vmem:[%s203 + $0x368] sm:%s195] %v422
                %v424 = vld [vmem:[%s202 + $0xdc0] sm:%s195]
                %425 = vst [vmem:[%s203 + $0x370] sm:%s195] %v424
                %v426 = vld [vmem:[%s202 + $0xde0] sm:%s195]
                %427 = vst [vmem:[%s203 + $0x378] sm:%s195] %v426
                %v428 = vld [vmem:[%s202 + $0xe00] sm:%s195]
                %429 = vst [vmem:[%s203 + $0x380] sm:%s195] %v428
                %v430 = vld [vmem:[%s202 + $0xe20] sm:%s195]
                %431 = vst [vmem:[%s203 + $0x388] sm:%s195] %v430
                %v432 = vld [vmem:[%s202 + $0xe40] sm:%s195]
                %433 = vst [vmem:[%s203 + $0x390] sm:%s195] %v432
                %v434 = vld [vmem:[%s202 + $0xe60] sm:%s195]
                %435 = vst [vmem:[%s203 + $0x398] sm:%s195] %v434
                %v436 = vld [vmem:[%s202 + $0xe80] sm:%s195]
                %437 = vst [vmem:[%s203 + $0x3a0] sm:%s195] %v436
                %v438 = vld [vmem:[%s202 + $0xea0] sm:%s195]
                %439 = vst [vmem:[%s203 + $0x3a8] sm:%s195] %v438
                %v440 = vld [vmem:[%s202 + $0xec0] sm:%s195]
                %441 = vst [vmem:[%s203 + $0x3b0] sm:%s195] %v440
                %v442 = vld [vmem:[%s202 + $0xee0] sm:%s195]
                %443 = vst [vmem:[%s203 + $0x3b8] sm:%s195] %v442
                %v444 = vld [vmem:[%s202 + $0xf00] sm:%s195]
                %445 = vst [vmem:[%s203 + $0x3c0] sm:%s195] %v444
                %v446 = vld [vmem:[%s202 + $0xf20] sm:%s195]
                %447 = vst [vmem:[%s203 + $0x3c8] sm:%s195] %v446
                %v448 = vld [vmem:[%s202 + $0xf40] sm:%s195]
                %449 = vst [vmem:[%s203 + $0x3d0] sm:%s195] %v448
                %v450 = vld [vmem:[%s202 + $0xf60] sm:%s195]
                %451 = vst [vmem:[%s203 + $0x3d8] sm:%s195] %v450
                %v452 = vld [vmem:[%s202 + $0xf80] sm:%s195]
                %453 = vst [vmem:[%s203 + $0x3e0] sm:%s195] %v452
                %v454 = vld [vmem:[%s202 + $0xfa0] sm:%s195]
                %455 = vst [vmem:[%s203 + $0x3e8] sm:%s195] %v454
                %v456 = vld [vmem:[%s202 + $0xfc0] sm:%s195]
                %457 = vst [vmem:[%s203 + $0x3f0] sm:%s195] %v456
                %v458 = vld [vmem:[%s202 + $0xfe0] sm:%s195]
                %459 = vst [vmem:[%s203 + $0x3f8] sm:%s195] %v458
                %v460 = vld [vmem:[%s202 + $0x1000] sm:%s195]
                %461 = vst [vmem:[%s203 + $0x400] sm:%s195] %v460
                %v462 = vld [vmem:[%s202 + $0x1020] sm:%s195]
                %463 = vst [vmem:[%s203 + $0x408] sm:%s195] %v462
                %v464 = vld [vmem:[%s202 + $0x1040] sm:%s195]
                %465 = vst [vmem:[%s203 + $0x410] sm:%s195] %v464
                %v466 = vld [vmem:[%s202 + $0x1060] sm:%s195]
                %467 = vst [vmem:[%s203 + $0x418] sm:%s195] %v466
                %v468 = vld [vmem:[%s202 + $0x1080] sm:%s195]
                %469 = vst [vmem:[%s203 + $0x420] sm:%s195] %v468
                %v470 = vld [vmem:[%s202 + $0x10a0] sm:%s195]
                %471 = vst [vmem:[%s203 + $0x428] sm:%s195] %v470
                %v472 = vld [vmem:[%s202 + $0x10c0] sm:%s195]
                %473 = vst [vmem:[%s203 + $0x430] sm:%s195] %v472
                %v474 = vld [vmem:[%s202 + $0x10e0] sm:%s195]
                %475 = vst [vmem:[%s203 + $0x438] sm:%s195] %v474
                %v476 = vld [vmem:[%s202 + $0x1100] sm:%s195]
                %477 = vst [vmem:[%s203 + $0x440] sm:%s195] %v476
                %v478 = vld [vmem:[%s202 + $0x1120] sm:%s195]
                %479 = vst [vmem:[%s203 + $0x448] sm:%s195] %v478
                %v480 = vld [vmem:[%s202 + $0x1140] sm:%s195]
                %481 = vst [vmem:[%s203 + $0x450] sm:%s195] %v480
                %v482 = vld [vmem:[%s202 + $0x1160] sm:%s195]
                %483 = vst [vmem:[%s203 + $0x458] sm:%s195] %v482
                %v484 = vld [vmem:[%s202 + $0x1180] sm:%s195]
                %485 = vst [vmem:[%s203 + $0x460] sm:%s195] %v484
                %v486 = vld [vmem:[%s202 + $0x11a0] sm:%s195]
                %487 = vst [vmem:[%s203 + $0x468] sm:%s195] %v486
                %v488 = vld [vmem:[%s202 + $0x11c0] sm:%s195]
                %489 = vst [vmem:[%s203 + $0x470] sm:%s195] %v488
                %v490 = vld [vmem:[%s202 + $0x11e0] sm:%s195]
                %491 = vst [vmem:[%s203 + $0x478] sm:%s195] %v490
                %v492 = vld [vmem:[%s202 + $0x1200] sm:%s195]
                %493 = vst [vmem:[%s203 + $0x480] sm:%s195] %v492
                %v494 = vld [vmem:[%s202 + $0x1220] sm:%s195]
                %495 = vst [vmem:[%s203 + $0x488] sm:%s195] %v494
                %v496 = vld [vmem:[%s202 + $0x1240] sm:%s195]
                %497 = vst [vmem:[%s203 + $0x490] sm:%s195] %v496
                %v498 = vld [vmem:[%s202 + $0x1260] sm:%s195]
                %499 = vst [vmem:[%s203 + $0x498] sm:%s195] %v498
                %v500 = vld [vmem:[%s202 + $0x1280] sm:%s195]
                %501 = vst [vmem:[%s203 + $0x4a0] sm:%s195] %v500
                %v502 = vld [vmem:[%s202 + $0x12a0] sm:%s195]
                %503 = vst [vmem:[%s203 + $0x4a8] sm:%s195] %v502
                %v504 = vld [vmem:[%s202 + $0x12c0] sm:%s195]
                %505 = vst [vmem:[%s203 + $0x4b0] sm:%s195] %v504
                %v506 = vld [vmem:[%s202 + $0x12e0] sm:%s195]
                %507 = vst [vmem:[%s203 + $0x4b8] sm:%s195] %v506
                %v508 = vld [vmem:[%s202 + $0x1300] sm:%s195]
                %509 = vst [vmem:[%s203 + $0x4c0] sm:%s195] %v508
                %v510 = vld [vmem:[%s202 + $0x1320] sm:%s195]
                %511 = vst [vmem:[%s203 + $0x4c8] sm:%s195] %v510
                %v512 = vld [vmem:[%s202 + $0x1340] sm:%s195]
                %513 = vst [vmem:[%s203 + $0x4d0] sm:%s195] %v512
                %v514 = vld [vmem:[%s202 + $0x1360] sm:%s195]
                %515 = vst [vmem:[%s203 + $0x4d8] sm:%s195] %v514
                %v516 = vld [vmem:[%s202 + $0x1380] sm:%s195]
                %517 = vst [vmem:[%s203 + $0x4e0] sm:%s195] %v516
                %v518 = vld [vmem:[%s202 + $0x13a0] sm:%s195]
                %519 = vst [vmem:[%s203 + $0x4e8] sm:%s195] %v518
                %v520 = vld [vmem:[%s202 + $0x13c0] sm:%s195]
                %521 = vst [vmem:[%s203 + $0x4f0] sm:%s195] %v520
                %v522 = vld [vmem:[%s202 + $0x13e0] sm:%s195]
                %523 = vst [vmem:[%s203 + $0x4f8] sm:%s195] %v522
                %v524 = vld [vmem:[%s202 + $0x1400] sm:%s195]
                %525 = vst [vmem:[%s203 + $0x500] sm:%s195] %v524
                %v526 = vld [vmem:[%s202 + $0x1420] sm:%s195]
                %527 = vst [vmem:[%s203 + $0x508] sm:%s195] %v526
                %v528 = vld [vmem:[%s202 + $0x1440] sm:%s195]
                %529 = vst [vmem:[%s203 + $0x510] sm:%s195] %v528
                %v530 = vld [vmem:[%s202 + $0x1460] sm:%s195]
                %531 = vst [vmem:[%s203 + $0x518] sm:%s195] %v530
                %v532 = vld [vmem:[%s202 + $0x1480] sm:%s195]
                %533 = vst [vmem:[%s203 + $0x520] sm:%s195] %v532
                %v534 = vld [vmem:[%s202 + $0x14a0] sm:%s195]
                %535 = vst [vmem:[%s203 + $0x528] sm:%s195] %v534
                %v536 = vld [vmem:[%s202 + $0x14c0] sm:%s195]
                %537 = vst [vmem:[%s203 + $0x530] sm:%s195] %v536
                %v538 = vld [vmem:[%s202 + $0x14e0] sm:%s195]
                %539 = vst [vmem:[%s203 + $0x538] sm:%s195] %v538
                %v540 = vld [vmem:[%s202 + $0x1500] sm:%s195]
                %541 = vst [vmem:[%s203 + $0x540] sm:%s195] %v540
                %v542 = vld [vmem:[%s202 + $0x1520] sm:%s195]
                %543 = vst [vmem:[%s203 + $0x548] sm:%s195] %v542
                %v544 = vld [vmem:[%s202 + $0x1540] sm:%s195]
                %545 = vst [vmem:[%s203 + $0x550] sm:%s195] %v544
                %v546 = vld [vmem:[%s202 + $0x1560] sm:%s195]
                %547 = vst [vmem:[%s203 + $0x558] sm:%s195] %v546
                %v548 = vld [vmem:[%s202 + $0x1580] sm:%s195]
                %549 = vst [vmem:[%s203 + $0x560] sm:%s195] %v548
                %v550 = vld [vmem:[%s202 + $0x15a0] sm:%s195]
                %551 = vst [vmem:[%s203 + $0x568] sm:%s195] %v550
                %v552 = vld [vmem:[%s202 + $0x15c0] sm:%s195]
                %553 = vst [vmem:[%s203 + $0x570] sm:%s195] %v552
                %v554 = vld [vmem:[%s202 + $0x15e0] sm:%s195]
                %555 = vst [vmem:[%s203 + $0x578] sm:%s195] %v554
                %v556 = vld [vmem:[%s202 + $0x1600] sm:%s195]
                %557 = vst [vmem:[%s203 + $0x580] sm:%s195] %v556
                %v558 = vld [vmem:[%s202 + $0x1620] sm:%s195]
                %559 = vst [vmem:[%s203 + $0x588] sm:%s195] %v558
                %v560 = vld [vmem:[%s202 + $0x1640] sm:%s195]
                %561 = vst [vmem:[%s203 + $0x590] sm:%s195] %v560
                %v562 = vld [vmem:[%s202 + $0x1660] sm:%s195]
                %563 = vst [vmem:[%s203 + $0x598] sm:%s195] %v562
                %v564 = vld [vmem:[%s202 + $0x1680] sm:%s195]
                %565 = vst [vmem:[%s203 + $0x5a0] sm:%s195] %v564
                %v566 = vld [vmem:[%s202 + $0x16a0] sm:%s195]
                %567 = vst [vmem:[%s203 + $0x5a8] sm:%s195] %v566
                %v568 = vld [vmem:[%s202 + $0x16c0] sm:%s195]
                %569 = vst [vmem:[%s203 + $0x5b0] sm:%s195] %v568
                %v570 = vld [vmem:[%s202 + $0x16e0] sm:%s195]
                %571 = vst [vmem:[%s203 + $0x5b8] sm:%s195] %v570
                %v572 = vld [vmem:[%s202 + $0x1700] sm:%s195]
                %573 = vst [vmem:[%s203 + $0x5c0] sm:%s195] %v572
                %v574 = vld [vmem:[%s202 + $0x1720] sm:%s195]
                %575 = vst [vmem:[%s203 + $0x5c8] sm:%s195] %v574
                %v576 = vld [vmem:[%s202 + $0x1740] sm:%s195]
                %577 = vst [vmem:[%s203 + $0x5d0] sm:%s195] %v576
                %v578 = vld [vmem:[%s202 + $0x1760] sm:%s195]
                %579 = vst [vmem:[%s203 + $0x5d8] sm:%s195] %v578
                %v580 = vld [vmem:[%s202 + $0x1780] sm:%s195]
                %581 = vst [vmem:[%s203 + $0x5e0] sm:%s195] %v580
                %v582 = vld [vmem:[%s202 + $0x17a0] sm:%s195]
                %583 = vst [vmem:[%s203 + $0x5e8] sm:%s195] %v582
                %v584 = vld [vmem:[%s202 + $0x17c0] sm:%s195]
                %585 = vst [vmem:[%s203 + $0x5f0] sm:%s195] %v584
                %v586 = vld [vmem:[%s202 + $0x17e0] sm:%s195]
                %587 = vst [vmem:[%s203 + $0x5f8] sm:%s195] %v586
                %v588 = vld [vmem:[%s202 + $0x1800] sm:%s195]
                %589 = vst [vmem:[%s203 + $0x600] sm:%s195] %v588
                %v590 = vld [vmem:[%s202 + $0x1820] sm:%s195]
                %591 = vst [vmem:[%s203 + $0x608] sm:%s195] %v590
                %v592 = vld [vmem:[%s202 + $0x1840] sm:%s195]
                %593 = vst [vmem:[%s203 + $0x610] sm:%s195] %v592
                %v594 = vld [vmem:[%s202 + $0x1860] sm:%s195]
                %595 = vst [vmem:[%s203 + $0x618] sm:%s195] %v594
                %v596 = vld [vmem:[%s202 + $0x1880] sm:%s195]
                %597 = vst [vmem:[%s203 + $0x620] sm:%s195] %v596
                %v598 = vld [vmem:[%s202 + $0x18a0] sm:%s195]
                %599 = vst [vmem:[%s203 + $0x628] sm:%s195] %v598
                %v600 = vld [vmem:[%s202 + $0x18c0] sm:%s195]
                %601 = vst [vmem:[%s203 + $0x630] sm:%s195] %v600
                %v602 = vld [vmem:[%s202 + $0x18e0] sm:%s195]
                %603 = vst [vmem:[%s203 + $0x638] sm:%s195] %v602
                %v604 = vld [vmem:[%s202 + $0x1900] sm:%s195]
                %605 = vst [vmem:[%s203 + $0x640] sm:%s195] %v604
                %v606 = vld [vmem:[%s202 + $0x1920] sm:%s195]
                %607 = vst [vmem:[%s203 + $0x648] sm:%s195] %v606
                %v608 = vld [vmem:[%s202 + $0x1940] sm:%s195]
                %609 = vst [vmem:[%s203 + $0x650] sm:%s195] %v608
                %v610 = vld [vmem:[%s202 + $0x1960] sm:%s195]
                %611 = vst [vmem:[%s203 + $0x658] sm:%s195] %v610
                %v612 = vld [vmem:[%s202 + $0x1980] sm:%s195]
                %613 = vst [vmem:[%s203 + $0x660] sm:%s195] %v612
                %v614 = vld [vmem:[%s202 + $0x19a0] sm:%s195]
                %615 = vst [vmem:[%s203 + $0x668] sm:%s195] %v614
                %v616 = vld [vmem:[%s202 + $0x19c0] sm:%s195]
                %617 = vst [vmem:[%s203 + $0x670] sm:%s195] %v616
                %v618 = vld [vmem:[%s202 + $0x19e0] sm:%s195]
                %619 = vst [vmem:[%s203 + $0x678] sm:%s195] %v618
                %v620 = vld [vmem:[%s202 + $0x1a00] sm:%s195]
                %621 = vst [vmem:[%s203 + $0x680] sm:%s195] %v620
                %v622 = vld [vmem:[%s202 + $0x1a20] sm:%s195]
                %623 = vst [vmem:[%s203 + $0x688] sm:%s195] %v622
                %v624 = vld [vmem:[%s202 + $0x1a40] sm:%s195]
                %625 = vst [vmem:[%s203 + $0x690] sm:%s195] %v624
                %v626 = vld [vmem:[%s202 + $0x1a60] sm:%s195]
                %627 = vst [vmem:[%s203 + $0x698] sm:%s195] %v626
                %v628 = vld [vmem:[%s202 + $0x1a80] sm:%s195]
                %629 = vst [vmem:[%s203 + $0x6a0] sm:%s195] %v628
                %v630 = vld [vmem:[%s202 + $0x1aa0] sm:%s195]
                %631 = vst [vmem:[%s203 + $0x6a8] sm:%s195] %v630
                %v632 = vld [vmem:[%s202 + $0x1ac0] sm:%s195]
                %633 = vst [vmem:[%s203 + $0x6b0] sm:%s195] %v632
                %v634 = vld [vmem:[%s202 + $0x1ae0] sm:%s195]
                %635 = vst [vmem:[%s203 + $0x6b8] sm:%s195] %v634
                %v636 = vld [vmem:[%s202 + $0x1b00] sm:%s195]
                %637 = vst [vmem:[%s203 + $0x6c0] sm:%s195] %v636
                %v638 = vld [vmem:[%s202 + $0x1b20] sm:%s195]
                %639 = vst [vmem:[%s203 + $0x6c8] sm:%s195] %v638
                %v640 = vld [vmem:[%s202 + $0x1b40] sm:%s195]
                %641 = vst [vmem:[%s203 + $0x6d0] sm:%s195] %v640
                %v642 = vld [vmem:[%s202 + $0x1b60] sm:%s195]
                %643 = vst [vmem:[%s203 + $0x6d8] sm:%s195] %v642
                %v644 = vld [vmem:[%s202 + $0x1b80] sm:%s195]
                %645 = vst [vmem:[%s203 + $0x6e0] sm:%s195] %v644
                %v646 = vld [vmem:[%s202 + $0x1ba0] sm:%s195]
                %647 = vst [vmem:[%s203 + $0x6e8] sm:%s195] %v646
                %v648 = vld [vmem:[%s202 + $0x1bc0] sm:%s195]
                %649 = vst [vmem:[%s203 + $0x6f0] sm:%s195] %v648
                %v650 = vld [vmem:[%s202 + $0x1be0] sm:%s195]
                %651 = vst [vmem:[%s203 + $0x6f8] sm:%s195] %v650
                %v652 = vld [vmem:[%s202 + $0x1c00] sm:%s195]
                %653 = vst [vmem:[%s203 + $0x700] sm:%s195] %v652
                %v654 = vld [vmem:[%s202 + $0x1c20] sm:%s195]
                %655 = vst [vmem:[%s203 + $0x708] sm:%s195] %v654
                %v656 = vld [vmem:[%s202 + $0x1c40] sm:%s195]
                %657 = vst [vmem:[%s203 + $0x710] sm:%s195] %v656
                %v658 = vld [vmem:[%s202 + $0x1c60] sm:%s195]
                %659 = vst [vmem:[%s203 + $0x718] sm:%s195] %v658
                %v660 = vld [vmem:[%s202 + $0x1c80] sm:%s195]
                %661 = vst [vmem:[%s203 + $0x720] sm:%s195] %v660
                %v662 = vld [vmem:[%s202 + $0x1ca0] sm:%s195]
                %663 = vst [vmem:[%s203 + $0x728] sm:%s195] %v662
                %v664 = vld [vmem:[%s202 + $0x1cc0] sm:%s195]
                %665 = vst [vmem:[%s203 + $0x730] sm:%s195] %v664
                %v666 = vld [vmem:[%s202 + $0x1ce0] sm:%s195]
                %667 = vst [vmem:[%s203 + $0x738] sm:%s195] %v666
                %v668 = vld [vmem:[%s202 + $0x1d00] sm:%s195]
                %669 = vst [vmem:[%s203 + $0x740] sm:%s195] %v668
                %v670 = vld [vmem:[%s202 + $0x1d20] sm:%s195]
                %671 = vst [vmem:[%s203 + $0x748] sm:%s195] %v670
                %v672 = vld [vmem:[%s202 + $0x1d40] sm:%s195]
                %673 = vst [vmem:[%s203 + $0x750] sm:%s195] %v672
                %v674 = vld [vmem:[%s202 + $0x1d60] sm:%s195]
                %675 = vst [vmem:[%s203 + $0x758] sm:%s195] %v674
                %v676 = vld [vmem:[%s202 + $0x1d80] sm:%s195]
                %677 = vst [vmem:[%s203 + $0x760] sm:%s195] %v676
                %v678 = vld [vmem:[%s202 + $0x1da0] sm:%s195]
                %679 = vst [vmem:[%s203 + $0x768] sm:%s195] %v678
                %v680 = vld [vmem:[%s202 + $0x1dc0] sm:%s195]
                %681 = vst [vmem:[%s203 + $0x770] sm:%s195] %v680
                %v682 = vld [vmem:[%s202 + $0x1de0] sm:%s195]
                %683 = vst [vmem:[%s203 + $0x778] sm:%s195] %v682
                %v684 = vld [vmem:[%s202 + $0x1e00] sm:%s195]
                %685 = vst [vmem:[%s203 + $0x780] sm:%s195] %v684
                %v686 = vld [vmem:[%s202 + $0x1e20] sm:%s195]
                %687 = vst [vmem:[%s203 + $0x788] sm:%s195] %v686
                %v688 = vld [vmem:[%s202 + $0x1e40] sm:%s195]
                %689 = vst [vmem:[%s203 + $0x790] sm:%s195] %v688
                %v690 = vld [vmem:[%s202 + $0x1e60] sm:%s195]
                %691 = vst [vmem:[%s203 + $0x798] sm:%s195] %v690
                %v692 = vld [vmem:[%s202 + $0x1e80] sm:%s195]
                %693 = vst [vmem:[%s203 + $0x7a0] sm:%s195] %v692
                %v694 = vld [vmem:[%s202 + $0x1ea0] sm:%s195]
                %695 = vst [vmem:[%s203 + $0x7a8] sm:%s195] %v694
                %v696 = vld [vmem:[%s202 + $0x1ec0] sm:%s195]
                %697 = vst [vmem:[%s203 + $0x7b0] sm:%s195] %v696
                %v698 = vld [vmem:[%s202 + $0x1ee0] sm:%s195]
                %699 = vst [vmem:[%s203 + $0x7b8] sm:%s195] %v698
                %v700 = vld [vmem:[%s202 + $0x1f00] sm:%s195]
                %701 = vst [vmem:[%s203 + $0x7c0] sm:%s195] %v700
                %v702 = vld [vmem:[%s202 + $0x1f20] sm:%s195]
                %703 = vst [vmem:[%s203 + $0x7c8] sm:%s195] %v702
                %v704 = vld [vmem:[%s202 + $0x1f40] sm:%s195]
                %705 = vst [vmem:[%s203 + $0x7d0] sm:%s195] %v704
                %v706 = vld [vmem:[%s202 + $0x1f60] sm:%s195]
                %707 = vst [vmem:[%s203 + $0x7d8] sm:%s195] %v706
                %v708 = vld [vmem:[%s202 + $0x1f80] sm:%s195]
                %709 = vst [vmem:[%s203 + $0x7e0] sm:%s195] %v708
                %v710 = vld [vmem:[%s202 + $0x1fa0] sm:%s195]
                %711 = vst [vmem:[%s203 + $0x7e8] sm:%s195] %v710
                %v712 = vld [vmem:[%s202 + $0x1fc0] sm:%s195]
                %713 = vst [vmem:[%s203 + $0x7f0] sm:%s195] %v712
                %v714 = vld [vmem:[%s202 + $0x1fe0] sm:%s195]
                %715 = vst [vmem:[%s203 + $0x7f8] sm:%s195] %v714
                %v716 = vld [vmem:[%s202 + $0x2000] sm:%s195]
                %717 = vst [vmem:[%s203 + $0x800] sm:%s195] %v716
                %v718 = vld [vmem:[%s202 + $0x2020] sm:%s195]
                %719 = vst [vmem:[%s203 + $0x808] sm:%s195] %v718
                %v720 = vld [vmem:[%s202 + $0x2040] sm:%s195]
                %721 = vst [vmem:[%s203 + $0x810] sm:%s195] %v720
                %v722 = vld [vmem:[%s202 + $0x2060] sm:%s195]
                %723 = vst [vmem:[%s203 + $0x818] sm:%s195] %v722
                %v724 = vld [vmem:[%s202 + $0x2080] sm:%s195]
                %725 = vst [vmem:[%s203 + $0x820] sm:%s195] %v724
                %v726 = vld [vmem:[%s202 + $0x20a0] sm:%s195]
                %727 = vst [vmem:[%s203 + $0x828] sm:%s195] %v726
                %v728 = vld [vmem:[%s202 + $0x20c0] sm:%s195]
                %729 = vst [vmem:[%s203 + $0x830] sm:%s195] %v728
                %v730 = vld [vmem:[%s202 + $0x20e0] sm:%s195]
                %731 = vst [vmem:[%s203 + $0x838] sm:%s195] %v730
                %v732 = vld [vmem:[%s202 + $0x2100] sm:%s195]
                %733 = vst [vmem:[%s203 + $0x840] sm:%s195] %v732
                %v734 = vld [vmem:[%s202 + $0x2120] sm:%s195]
                %735 = vst [vmem:[%s203 + $0x848] sm:%s195] %v734
                %v736 = vld [vmem:[%s202 + $0x2140] sm:%s195]
                %737 = vst [vmem:[%s203 + $0x850] sm:%s195] %v736
                %v738 = vld [vmem:[%s202 + $0x2160] sm:%s195]
                %739 = vst [vmem:[%s203 + $0x858] sm:%s195] %v738
                %v740 = vld [vmem:[%s202 + $0x2180] sm:%s195]
                %741 = vst [vmem:[%s203 + $0x860] sm:%s195] %v740
                %v742 = vld [vmem:[%s202 + $0x21a0] sm:%s195]
                %743 = vst [vmem:[%s203 + $0x868] sm:%s195] %v742
                %v744 = vld [vmem:[%s202 + $0x21c0] sm:%s195]
                %745 = vst [vmem:[%s203 + $0x870] sm:%s195] %v744
                %v746 = vld [vmem:[%s202 + $0x21e0] sm:%s195]
                %747 = vst [vmem:[%s203 + $0x878] sm:%s195] %v746
                %v748 = vld [vmem:[%s202 + $0x2200] sm:%s195]
                %749 = vst [vmem:[%s203 + $0x880] sm:%s195] %v748
                %v750 = vld [vmem:[%s202 + $0x2220] sm:%s195]
                %751 = vst [vmem:[%s203 + $0x888] sm:%s195] %v750
                %v752 = vld [vmem:[%s202 + $0x2240] sm:%s195]
                %753 = vst [vmem:[%s203 + $0x890] sm:%s195] %v752
                %v754 = vld [vmem:[%s202 + $0x2260] sm:%s195]
                %755 = vst [vmem:[%s203 + $0x898] sm:%s195] %v754
                %v756 = vld [vmem:[%s202 + $0x2280] sm:%s195]
                %757 = vst [vmem:[%s203 + $0x8a0] sm:%s195] %v756
                %v758 = vld [vmem:[%s202 + $0x22a0] sm:%s195]
                %759 = vst [vmem:[%s203 + $0x8a8] sm:%s195] %v758
                %v760 = vld [vmem:[%s202 + $0x22c0] sm:%s195]
                %761 = vst [vmem:[%s203 + $0x8b0] sm:%s195] %v760
                %v762 = vld [vmem:[%s202 + $0x22e0] sm:%s195]
                %763 = vst [vmem:[%s203 + $0x8b8] sm:%s195] %v762
                %v764 = vld [vmem:[%s202 + $0x2300] sm:%s195]
                %765 = vst [vmem:[%s203 + $0x8c0] sm:%s195] %v764
                %v766 = vld [vmem:[%s202 + $0x2320] sm:%s195]
                %767 = vst [vmem:[%s203 + $0x8c8] sm:%s195] %v766
                %v768 = vld [vmem:[%s202 + $0x2340] sm:%s195]
                %769 = vst [vmem:[%s203 + $0x8d0] sm:%s195] %v768
                %v770 = vld [vmem:[%s202 + $0x2360] sm:%s195]
                %771 = vst [vmem:[%s203 + $0x8d8] sm:%s195] %v770
                %v772 = vld [vmem:[%s202 + $0x2380] sm:%s195]
                %773 = vst [vmem:[%s203 + $0x8e0] sm:%s195] %v772
                %v774 = vld [vmem:[%s202 + $0x23a0] sm:%s195]
                %775 = vst [vmem:[%s203 + $0x8e8] sm:%s195] %v774
                %v776 = vld [vmem:[%s202 + $0x23c0] sm:%s195]
                %777 = vst [vmem:[%s203 + $0x8f0] sm:%s195] %v776
                %v778 = vld [vmem:[%s202 + $0x23e0] sm:%s195]
                %779 = vst [vmem:[%s203 + $0x8f8] sm:%s195] %v778
                %v780 = vld [vmem:[%s202 + $0x2400] sm:%s195]
                %781 = vst [vmem:[%s203 + $0x900] sm:%s195] %v780
                %v782 = vld [vmem:[%s202 + $0x2420] sm:%s195]
                %783 = vst [vmem:[%s203 + $0x908] sm:%s195] %v782
                %v784 = vld [vmem:[%s202 + $0x2440] sm:%s195]
                %785 = vst [vmem:[%s203 + $0x910] sm:%s195] %v784
                %v786 = vld [vmem:[%s202 + $0x2460] sm:%s195]
                %787 = vst [vmem:[%s203 + $0x918] sm:%s195] %v786
                %v788 = vld [vmem:[%s202 + $0x2480] sm:%s195]
                %789 = vst [vmem:[%s203 + $0x920] sm:%s195] %v788
                %v790 = vld [vmem:[%s202 + $0x24a0] sm:%s195]
                %791 = vst [vmem:[%s203 + $0x928] sm:%s195] %v790
                %v792 = vld [vmem:[%s202 + $0x24c0] sm:%s195]
                %793 = vst [vmem:[%s203 + $0x930] sm:%s195] %v792
                %v794 = vld [vmem:[%s202 + $0x24e0] sm:%s195]
                %795 = vst [vmem:[%s203 + $0x938] sm:%s195] %v794
                %v796 = vld [vmem:[%s202 + $0x2500] sm:%s195]
                %797 = vst [vmem:[%s203 + $0x940] sm:%s195] %v796
                %v798 = vld [vmem:[%s202 + $0x2520] sm:%s195]
                %799 = vst [vmem:[%s203 + $0x948] sm:%s195] %v798
                %v800 = vld [vmem:[%s202 + $0x2540] sm:%s195]
                %801 = vst [vmem:[%s203 + $0x950] sm:%s195] %v800
                %v802 = vld [vmem:[%s202 + $0x2560] sm:%s195]
                %803 = vst [vmem:[%s203 + $0x958] sm:%s195] %v802
                %v804 = vld [vmem:[%s202 + $0x2580] sm:%s195]
                %805 = vst [vmem:[%s203 + $0x960] sm:%s195] %v804
                %v806 = vld [vmem:[%s202 + $0x25a0] sm:%s195]
                %807 = vst [vmem:[%s203 + $0x968] sm:%s195] %v806
                %v808 = vld [vmem:[%s202 + $0x25c0] sm:%s195]
                %809 = vst [vmem:[%s203 + $0x970] sm:%s195] %v808
                %v810 = vld [vmem:[%s202 + $0x25e0] sm:%s195]
                %811 = vst [vmem:[%s203 + $0x978] sm:%s195] %v810
                %v812 = vld [vmem:[%s202 + $0x2600] sm:%s195]
                %813 = vst [vmem:[%s203 + $0x980] sm:%s195] %v812
                %v814 = vld [vmem:[%s202 + $0x2620] sm:%s195]
                %815 = vst [vmem:[%s203 + $0x988] sm:%s195] %v814
                %v816 = vld [vmem:[%s202 + $0x2640] sm:%s195]
                %817 = vst [vmem:[%s203 + $0x990] sm:%s195] %v816
                %v818 = vld [vmem:[%s202 + $0x2660] sm:%s195]
                %819 = vst [vmem:[%s203 + $0x998] sm:%s195] %v818
                %v820 = vld [vmem:[%s202 + $0x2680] sm:%s195]
                %821 = vst [vmem:[%s203 + $0x9a0] sm:%s195] %v820
                %v822 = vld [vmem:[%s202 + $0x26a0] sm:%s195]
                %823 = vst [vmem:[%s203 + $0x9a8] sm:%s195] %v822
                %v824 = vld [vmem:[%s202 + $0x26c0] sm:%s195]
                %825 = vst [vmem:[%s203 + $0x9b0] sm:%s195] %v824
                %v826 = vld [vmem:[%s202 + $0x26e0] sm:%s195]
                %827 = vst [vmem:[%s203 + $0x9b8] sm:%s195] %v826
                %v828 = vld [vmem:[%s202 + $0x2700] sm:%s195]
                %829 = vst [vmem:[%s203 + $0x9c0] sm:%s195] %v828
                %v830 = vld [vmem:[%s202 + $0x2720] sm:%s195]
                %831 = vst [vmem:[%s203 + $0x9c8] sm:%s195] %v830
                %v832 = vld [vmem:[%s202 + $0x2740] sm:%s195]
                %833 = vst [vmem:[%s203 + $0x9d0] sm:%s195] %v832
                %v834 = vld [vmem:[%s202 + $0x2760] sm:%s195]
                %835 = vst [vmem:[%s203 + $0x9d8] sm:%s195] %v834
                %v836 = vld [vmem:[%s202 + $0x2780] sm:%s195]
                %837 = vst [vmem:[%s203 + $0x9e0] sm:%s195] %v836
                %v838 = vld [vmem:[%s202 + $0x27a0] sm:%s195]
                %839 = vst [vmem:[%s203 + $0x9e8] sm:%s195] %v838
                %v840 = vld [vmem:[%s202 + $0x27c0] sm:%s195]
                %841 = vst [vmem:[%s203 + $0x9f0] sm:%s195] %v840
                %v842 = vld [vmem:[%s202 + $0x27e0] sm:%s195]
                %843 = vst [vmem:[%s203 + $0x9f8] sm:%s195] %v842
                %v844 = vld [vmem:[%s202 + $0x2800] sm:%s195]
                %845 = vst [vmem:[%s203 + $0xa00] sm:%s195] %v844
                %v846 = vld [vmem:[%s202 + $0x2820] sm:%s195]
                %847 = vst [vmem:[%s203 + $0xa08] sm:%s195] %v846
                %v848 = vld [vmem:[%s202 + $0x2840] sm:%s195]
                %849 = vst [vmem:[%s203 + $0xa10] sm:%s195] %v848
                %v850 = vld [vmem:[%s202 + $0x2860] sm:%s195]
                %851 = vst [vmem:[%s203 + $0xa18] sm:%s195] %v850
                %v852 = vld [vmem:[%s202 + $0x2880] sm:%s195]
                %853 = vst [vmem:[%s203 + $0xa20] sm:%s195] %v852
                %v854 = vld [vmem:[%s202 + $0x28a0] sm:%s195]
                %855 = vst [vmem:[%s203 + $0xa28] sm:%s195] %v854
                %v856 = vld [vmem:[%s202 + $0x28c0] sm:%s195]
                %857 = vst [vmem:[%s203 + $0xa30] sm:%s195] %v856
                %v858 = vld [vmem:[%s202 + $0x28e0] sm:%s195]
                %859 = vst [vmem:[%s203 + $0xa38] sm:%s195] %v858
                %v860 = vld [vmem:[%s202 + $0x2900] sm:%s195]
                %861 = vst [vmem:[%s203 + $0xa40] sm:%s195] %v860
                %v862 = vld [vmem:[%s202 + $0x2920] sm:%s195]
                %863 = vst [vmem:[%s203 + $0xa48] sm:%s195] %v862
                %v864 = vld [vmem:[%s202 + $0x2940] sm:%s195]
                %865 = vst [vmem:[%s203 + $0xa50] sm:%s195] %v864
                %v866 = vld [vmem:[%s202 + $0x2960] sm:%s195]
                %867 = vst [vmem:[%s203 + $0xa58] sm:%s195] %v866
                %v868 = vld [vmem:[%s202 + $0x2980] sm:%s195]
                %869 = vst [vmem:[%s203 + $0xa60] sm:%s195] %v868
                %v870 = vld [vmem:[%s202 + $0x29a0] sm:%s195]
                %871 = vst [vmem:[%s203 + $0xa68] sm:%s195] %v870
                %v872 = vld [vmem:[%s202 + $0x29c0] sm:%s195]
                %873 = vst [vmem:[%s203 + $0xa70] sm:%s195] %v872
                %v874 = vld [vmem:[%s202 + $0x29e0] sm:%s195]
                %875 = vst [vmem:[%s203 + $0xa78] sm:%s195] %v874
                %v876 = vld [vmem:[%s202 + $0x2a00] sm:%s195]
                %877 = vst [vmem:[%s203 + $0xa80] sm:%s195] %v876
                %v878 = vld [vmem:[%s202 + $0x2a20] sm:%s195]
                %879 = vst [vmem:[%s203 + $0xa88] sm:%s195] %v878
                %v880 = vld [vmem:[%s202 + $0x2a40] sm:%s195]
                %881 = vst [vmem:[%s203 + $0xa90] sm:%s195] %v880
                %v882 = vld [vmem:[%s202 + $0x2a60] sm:%s195]
                %883 = vst [vmem:[%s203 + $0xa98] sm:%s195] %v882
                %v884 = vld [vmem:[%s202 + $0x2a80] sm:%s195]
                %885 = vst [vmem:[%s203 + $0xaa0] sm:%s195] %v884
                %v886 = vld [vmem:[%s202 + $0x2aa0] sm:%s195]
                %887 = vst [vmem:[%s203 + $0xaa8] sm:%s195] %v886
                %v888 = vld [vmem:[%s202 + $0x2ac0] sm:%s195]
                %889 = vst [vmem:[%s203 + $0xab0] sm:%s195] %v888
                %v890 = vld [vmem:[%s202 + $0x2ae0] sm:%s195]
                %891 = vst [vmem:[%s203 + $0xab8] sm:%s195] %v890
                %v892 = vld [vmem:[%s202 + $0x2b00] sm:%s195]
                %893 = vst [vmem:[%s203 + $0xac0] sm:%s195] %v892
                %v894 = vld [vmem:[%s202 + $0x2b20] sm:%s195]
                %895 = vst [vmem:[%s203 + $0xac8] sm:%s195] %v894
                %v896 = vld [vmem:[%s202 + $0x2b40] sm:%s195]
                %897 = vst [vmem:[%s203 + $0xad0] sm:%s195] %v896
                %v898 = vld [vmem:[%s202 + $0x2b60] sm:%s195]
                %899 = vst [vmem:[%s203 + $0xad8] sm:%s195] %v898
                %v900 = vld [vmem:[%s202 + $0x2b80] sm:%s195]
                %901 = vst [vmem:[%s203 + $0xae0] sm:%s195] %v900
                %v902 = vld [vmem:[%s202 + $0x2ba0] sm:%s195]
                %903 = vst [vmem:[%s203 + $0xae8] sm:%s195] %v902
                %v904 = vld [vmem:[%s202 + $0x2bc0] sm:%s195]
                %905 = vst [vmem:[%s203 + $0xaf0] sm:%s195] %v904
                %v906 = vld [vmem:[%s202 + $0x2be0] sm:%s195]
                %907 = vst [vmem:[%s203 + $0xaf8] sm:%s195] %v906
                %v908 = vld [vmem:[%s202 + $0x2c00] sm:%s195]
                %909 = vst [vmem:[%s203 + $0xb00] sm:%s195] %v908
                %v910 = vld [vmem:[%s202 + $0x2c20] sm:%s195]
                %911 = vst [vmem:[%s203 + $0xb08] sm:%s195] %v910
                %v912 = vld [vmem:[%s202 + $0x2c40] sm:%s195]
                %913 = vst [vmem:[%s203 + $0xb10] sm:%s195] %v912
                %v914 = vld [vmem:[%s202 + $0x2c60] sm:%s195]
                %915 = vst [vmem:[%s203 + $0xb18] sm:%s195] %v914
                %v916 = vld [vmem:[%s202 + $0x2c80] sm:%s195]
                %917 = vst [vmem:[%s203 + $0xb20] sm:%s195] %v916
                %v918 = vld [vmem:[%s202 + $0x2ca0] sm:%s195]
                %919 = vst [vmem:[%s203 + $0xb28] sm:%s195] %v918
                %v920 = vld [vmem:[%s202 + $0x2cc0] sm:%s195]
                %921 = vst [vmem:[%s203 + $0xb30] sm:%s195] %v920
                %v922 = vld [vmem:[%s202 + $0x2ce0] sm:%s195]
                %923 = vst [vmem:[%s203 + $0xb38] sm:%s195] %v922
                %v924 = vld [vmem:[%s202 + $0x2d00] sm:%s195]
                %925 = vst [vmem:[%s203 + $0xb40] sm:%s195] %v924
                %v926 = vld [vmem:[%s202 + $0x2d20] sm:%s195]
                %927 = vst [vmem:[%s203 + $0xb48] sm:%s195] %v926
                %v928 = vld [vmem:[%s202 + $0x2d40] sm:%s195]
                %929 = vst [vmem:[%s203 + $0xb50] sm:%s195] %v928
                %v930 = vld [vmem:[%s202 + $0x2d60] sm:%s195]
                %931 = vst [vmem:[%s203 + $0xb58] sm:%s195] %v930
                %v932 = vld [vmem:[%s202 + $0x2d80] sm:%s195]
                %933 = vst [vmem:[%s203 + $0xb60] sm:%s195] %v932
                %v934 = vld [vmem:[%s202 + $0x2da0] sm:%s195]
                %935 = vst [vmem:[%s203 + $0xb68] sm:%s195] %v934
                %v936 = vld [vmem:[%s202 + $0x2dc0] sm:%s195]
                %937 = vst [vmem:[%s203 + $0xb70] sm:%s195] %v936
                %v938 = vld [vmem:[%s202 + $0x2de0] sm:%s195]
                %939 = vst [vmem:[%s203 + $0xb78] sm:%s195] %v938
                %v940 = vld [vmem:[%s202 + $0x2e00] sm:%s195]
                %941 = vst [vmem:[%s203 + $0xb80] sm:%s195] %v940
                %v942 = vld [vmem:[%s202 + $0x2e20] sm:%s195]
                %943 = vst [vmem:[%s203 + $0xb88] sm:%s195] %v942
                %v944 = vld [vmem:[%s202 + $0x2e40] sm:%s195]
                %945 = vst [vmem:[%s203 + $0xb90] sm:%s195] %v944
                %v946 = vld [vmem:[%s202 + $0x2e60] sm:%s195]
                %947 = vst [vmem:[%s203 + $0xb98] sm:%s195] %v946
                %v948 = vld [vmem:[%s202 + $0x2e80] sm:%s195]
                %949 = vst [vmem:[%s203 + $0xba0] sm:%s195] %v948
                %v950 = vld [vmem:[%s202 + $0x2ea0] sm:%s195]
                %951 = vst [vmem:[%s203 + $0xba8] sm:%s195] %v950
                %v952 = vld [vmem:[%s202 + $0x2ec0] sm:%s195]
                %953 = vst [vmem:[%s203 + $0xbb0] sm:%s195] %v952
                %v954 = vld [vmem:[%s202 + $0x2ee0] sm:%s195]
                %955 = vst [vmem:[%s203 + $0xbb8] sm:%s195] %v954
                %v956 = vld [vmem:[%s202 + $0x2f00] sm:%s195]
                %957 = vst [vmem:[%s203 + $0xbc0] sm:%s195] %v956
                %v958 = vld [vmem:[%s202 + $0x2f20] sm:%s195]
                %959 = vst [vmem:[%s203 + $0xbc8] sm:%s195] %v958
                %v960 = vld [vmem:[%s202 + $0x2f40] sm:%s195]
                %961 = vst [vmem:[%s203 + $0xbd0] sm:%s195] %v960
                %v962 = vld [vmem:[%s202 + $0x2f60] sm:%s195]
                %963 = vst [vmem:[%s203 + $0xbd8] sm:%s195] %v962
                %v964 = vld [vmem:[%s202 + $0x2f80] sm:%s195]
                %965 = vst [vmem:[%s203 + $0xbe0] sm:%s195] %v964
                %v966 = vld [vmem:[%s202 + $0x2fa0] sm:%s195]
                %967 = vst [vmem:[%s203 + $0xbe8] sm:%s195] %v966
                %v968 = vld [vmem:[%s202 + $0x2fc0] sm:%s195]
                %969 = vst [vmem:[%s203 + $0xbf0] sm:%s195] %v968
                %v970 = vld [vmem:[%s202 + $0x2fe0] sm:%s195]
                %971 = vst [vmem:[%s203 + $0xbf8] sm:%s195] %v970
                %v972 = vld [vmem:[%s202 + $0x3000] sm:%s195]
                %973 = vst [vmem:[%s203 + $0xc00] sm:%s195] %v972
                %v974 = vld [vmem:[%s202 + $0x3020] sm:%s195]
                %975 = vst [vmem:[%s203 + $0xc08] sm:%s195] %v974
                %v976 = vld [vmem:[%s202 + $0x3040] sm:%s195]
                %977 = vst [vmem:[%s203 + $0xc10] sm:%s195] %v976
                %v978 = vld [vmem:[%s202 + $0x3060] sm:%s195]
                %979 = vst [vmem:[%s203 + $0xc18] sm:%s195] %v978
                %v980 = vld [vmem:[%s202 + $0x3080] sm:%s195]
                %981 = vst [vmem:[%s203 + $0xc20] sm:%s195] %v980
                %v982 = vld [vmem:[%s202 + $0x30a0] sm:%s195]
                %983 = vst [vmem:[%s203 + $0xc28] sm:%s195] %v982
                %v984 = vld [vmem:[%s202 + $0x30c0] sm:%s195]
                %985 = vst [vmem:[%s203 + $0xc30] sm:%s195] %v984
                %v986 = vld [vmem:[%s202 + $0x30e0] sm:%s195]
                %987 = vst [vmem:[%s203 + $0xc38] sm:%s195] %v986
                %v988 = vld [vmem:[%s202 + $0x3100] sm:%s195]
                %989 = vst [vmem:[%s203 + $0xc40] sm:%s195] %v988
                %v990 = vld [vmem:[%s202 + $0x3120] sm:%s195]
                %991 = vst [vmem:[%s203 + $0xc48] sm:%s195] %v990
                %v992 = vld [vmem:[%s202 + $0x3140] sm:%s195]
                %993 = vst [vmem:[%s203 + $0xc50] sm:%s195] %v992
                %v994 = vld [vmem:[%s202 + $0x3160] sm:%s195]
                %995 = vst [vmem:[%s203 + $0xc58] sm:%s195] %v994
                %v996 = vld [vmem:[%s202 + $0x3180] sm:%s195]
                %997 = vst [vmem:[%s203 + $0xc60] sm:%s195] %v996
                %v998 = vld [vmem:[%s202 + $0x31a0] sm:%s195]
                %999 = vst [vmem:[%s203 + $0xc68] sm:%s195] %v998
                %v1000 = vld [vmem:[%s202 + $0x31c0] sm:%s195]
                %1001 = vst [vmem:[%s203 + $0xc70] sm:%s195] %v1000
                %v1002 = vld [vmem:[%s202 + $0x31e0] sm:%s195]
                %1003 = vst [vmem:[%s203 + $0xc78] sm:%s195] %v1002
                %v1004 = vld [vmem:[%s202 + $0x3200] sm:%s195]
                %1005 = vst [vmem:[%s203 + $0xc80] sm:%s195] %v1004
                %v1006 = vld [vmem:[%s202 + $0x3220] sm:%s195]
                %1007 = vst [vmem:[%s203 + $0xc88] sm:%s195] %v1006
                %v1008 = vld [vmem:[%s202 + $0x3240] sm:%s195]
                %1009 = vst [vmem:[%s203 + $0xc90] sm:%s195] %v1008
                %v1010 = vld [vmem:[%s202 + $0x3260] sm:%s195]
                %1011 = vst [vmem:[%s203 + $0xc98] sm:%s195] %v1010
                %v1012 = vld [vmem:[%s202 + $0x3280] sm:%s195]
                %1013 = vst [vmem:[%s203 + $0xca0] sm:%s195] %v1012
                %v1014 = vld [vmem:[%s202 + $0x32a0] sm:%s195]
                %1015 = vst [vmem:[%s203 + $0xca8] sm:%s195] %v1014
                %v1016 = vld [vmem:[%s202 + $0x32c0] sm:%s195]
                %1017 = vst [vmem:[%s203 + $0xcb0] sm:%s195] %v1016
                %v1018 = vld [vmem:[%s202 + $0x32e0] sm:%s195]
                %1019 = vst [vmem:[%s203 + $0xcb8] sm:%s195] %v1018
                %v1020 = vld [vmem:[%s202 + $0x3300] sm:%s195]
                %1021 = vst [vmem:[%s203 + $0xcc0] sm:%s195] %v1020
                %v1022 = vld [vmem:[%s202 + $0x3320] sm:%s195]
                %1023 = vst [vmem:[%s203 + $0xcc8] sm:%s195] %v1022
                %v1024 = vld [vmem:[%s202 + $0x3340] sm:%s195]
                %1025 = vst [vmem:[%s203 + $0xcd0] sm:%s195] %v1024
                %v1026 = vld [vmem:[%s202 + $0x3360] sm:%s195]
                %1027 = vst [vmem:[%s203 + $0xcd8] sm:%s195] %v1026
                %v1028 = vld [vmem:[%s202 + $0x3380] sm:%s195]
                %1029 = vst [vmem:[%s203 + $0xce0] sm:%s195] %v1028
                %v1030 = vld [vmem:[%s202 + $0x33a0] sm:%s195]
                %1031 = vst [vmem:[%s203 + $0xce8] sm:%s195] %v1030
                %v1032 = vld [vmem:[%s202 + $0x33c0] sm:%s195]
                %1033 = vst [vmem:[%s203 + $0xcf0] sm:%s195] %v1032
                %v1034 = vld [vmem:[%s202 + $0x33e0] sm:%s195]
                %1035 = vst [vmem:[%s203 + $0xcf8] sm:%s195] %v1034
                %v1036 = vld [vmem:[%s202 + $0x3400] sm:%s195]
                %1037 = vst [vmem:[%s203 + $0xd00] sm:%s195] %v1036
                %v1038 = vld [vmem:[%s202 + $0x3420] sm:%s195]
                %1039 = vst [vmem:[%s203 + $0xd08] sm:%s195] %v1038
                %v1040 = vld [vmem:[%s202 + $0x3440] sm:%s195]
                %1041 = vst [vmem:[%s203 + $0xd10] sm:%s195] %v1040
                %v1042 = vld [vmem:[%s202 + $0x3460] sm:%s195]
                %1043 = vst [vmem:[%s203 + $0xd18] sm:%s195] %v1042
                %v1044 = vld [vmem:[%s202 + $0x3480] sm:%s195]
                %1045 = vst [vmem:[%s203 + $0xd20] sm:%s195] %v1044
                %v1046 = vld [vmem:[%s202 + $0x34a0] sm:%s195]
                %1047 = vst [vmem:[%s203 + $0xd28] sm:%s195] %v1046
                %v1048 = vld [vmem:[%s202 + $0x34c0] sm:%s195]
                %1049 = vst [vmem:[%s203 + $0xd30] sm:%s195] %v1048
                %v1050 = vld [vmem:[%s202 + $0x34e0] sm:%s195]
                %1051 = vst [vmem:[%s203 + $0xd38] sm:%s195] %v1050
                %v1052 = vld [vmem:[%s202 + $0x3500] sm:%s195]
                %1053 = vst [vmem:[%s203 + $0xd40] sm:%s195] %v1052
                %v1054 = vld [vmem:[%s202 + $0x3520] sm:%s195]
                %1055 = vst [vmem:[%s203 + $0xd48] sm:%s195] %v1054
                %v1056 = vld [vmem:[%s202 + $0x3540] sm:%s195]
                %1057 = vst [vmem:[%s203 + $0xd50] sm:%s195] %v1056
                %v1058 = vld [vmem:[%s202 + $0x3560] sm:%s195]
                %1059 = vst [vmem:[%s203 + $0xd58] sm:%s195] %v1058
                %v1060 = vld [vmem:[%s202 + $0x3580] sm:%s195]
                %1061 = vst [vmem:[%s203 + $0xd60] sm:%s195] %v1060
                %v1062 = vld [vmem:[%s202 + $0x35a0] sm:%s195]
                %1063 = vst [vmem:[%s203 + $0xd68] sm:%s195] %v1062
                %v1064 = vld [vmem:[%s202 + $0x35c0] sm:%s195]
                %1065 = vst [vmem:[%s203 + $0xd70] sm:%s195] %v1064
                %v1066 = vld [vmem:[%s202 + $0x35e0] sm:%s195]
                %1067 = vst [vmem:[%s203 + $0xd78] sm:%s195] %v1066
                %v1068 = vld [vmem:[%s202 + $0x3600] sm:%s195]
                %1069 = vst [vmem:[%s203 + $0xd80] sm:%s195] %v1068
                %v1070 = vld [vmem:[%s202 + $0x3620] sm:%s195]
                %1071 = vst [vmem:[%s203 + $0xd88] sm:%s195] %v1070
                %v1072 = vld [vmem:[%s202 + $0x3640] sm:%s195]
                %1073 = vst [vmem:[%s203 + $0xd90] sm:%s195] %v1072
                %v1074 = vld [vmem:[%s202 + $0x3660] sm:%s195]
                %1075 = vst [vmem:[%s203 + $0xd98] sm:%s195] %v1074
              $region45: #{dqn_forward.5} parent=39 // loop_footer
                %s201 = sadd.s32 1, %s197
              $region46: #{dqn_forward.5} parent=39 // loop_footer_branch
                %196 = sbr.rel target = $region42
              $region47: #{dqn_forward.5} parent=39 // loop_exit
                _
            $region40: #{dqn_forward.5} parent=31 // pred_fallthru
              _
          $region32: #{dqn_forward.5} parent=27 // pred_fallthru
            _
          %3740 = vnop
        $region28: #{dqn_forward.5} parent=23 // pred_fallthru
          _
        // Predicated region
        $region77: #{dqn_forward.5} parent=23 // pred_check
          %p3741 = pneg %p79
        $region78: #{dqn_forward.5} parent=23 // pred_check_branch
          %3743 = sbr.rel (%p3741) target = $region80
        $region79: #{dqn_forward.5} parent=23 // pred_region
          %s3744 = smul.u32 2, %s12
          %p3745 = scmp.lt.s32.totalorder %s3744, 7
          %s3746 = scalar_select %p3745, %s3744, 7
          %s3747 = scalar_lea.vmem %s2, %s3746
          %s3748 = smul.u32 2, %s12
        $region80: #{dqn_forward.5} parent=23 // pred_fallthru
          _
        // Predicated region
        $region81: #{dqn_forward.5} parent=23 // pred_check
          %p3749 = pneg %p105
        $region82: #{dqn_forward.5} parent=23 // pred_check_branch
          %3751 = sbr.rel (%p3749) target = $region84
        $region83: #{dqn_forward.5} parent=23 // pred_region
          %s3752 = smul.u32 32, %s12
          %p3753 = scmp.lt.s32.totalorder %s3752, 127
          %s3754 = scalar_select %p3753, %s3752, 127
          %s3755 = smul.addr %s3754, 4
          %s3756 = scalar_lea.vmem %s3, %s3755
          %s3757 = smul.u32 32, %s12
        $region84: #{dqn_forward.5} parent=23 // pred_fallthru
          _
      $region24: #{dqn_forward.5} parent=5 // pred_fallthru
        _
      %p3758 = scmp.le.s32.totalorder 1, %s12
      %p3759 = scmp.lt.s32.totalorder %s12, 5
      %p3760 = pnand %p3758, %p3759
      %p3761 = pneg %p3760
      // Predicated region
      $region85: #{dqn_forward.5} parent=5 // pred_check
        _
      $region86: #{dqn_forward.5} parent=5 // pred_check_branch
        %3763 = sbr.rel (%p3760) target = $region88
      $region87: #{dqn_forward.5} parent=5 // pred_region
        %s3764 = ssub.s32 %s12, 1
        %s3765 = sand.u32 %s46, 1
        %s3766 = sand.u32 %s46, 1
        %s3767 = smul.addr %s3766, 3488
        %s3768 = scalar_lea.vmem [#allocation3], %s3767
        // Predicated region
        $region89: #{dqn_forward.5} parent=87 // pred_check
          %p3769 = pneg %p59
        $region90: #{dqn_forward.5} parent=87 // pred_check_branch
          %3771 = sbr.rel (%p3769) target = $region92
        $region91: #{dqn_forward.5} parent=87 // pred_region
          _
        $region92: #{dqn_forward.5} parent=87 // pred_fallthru
          _
        %p3772 = pneg %p33
        %p3773 = pneg %p30
        %s3774 = sand.u32 %s46, 1
        %s3775 = sand.u32 %s46, 1
        %s3776 = smul.addr %s3775, 3488
        %s3777 = scalar_lea.vmem [#allocation3], %s3776
        %p3778 = pneg %p59
        %p3779 = pneg %p56
        %s3780 = smul.u32 2, %s17
        %p3781 = scmp.lt.s32.totalorder %s3780, 7
        %s3782 = scalar_select %p3781, %s3780, 7
        %s3783 = scalar_lea.vmem %s2, %s3782
        %p3784 = pneg %p85
        %p3785 = pneg %p82
        %s3786 = smul.u32 32, %s17
        %p3787 = scmp.lt.s32.totalorder %s3786, 127
        %s3788 = scalar_select %p3787, %s3786, 127
        %s3789 = smul.addr %s3788, 4
        %s3790 = scalar_lea.vmem %s3, %s3789
        %p3791 = pneg %p111
        %p3792 = pneg %p108
        %p3793 = pneg %p132
        %p3794 = pneg %p129
        %p3795 = pneg %p153
        %p3796 = pneg %p150
        %s3797 = smul.u32 2, %s17
        %s3798 = smul.u32 2, %s17
        %p3799 = scmp.lt.s32.totalorder %s3798, 7
        %s3800 = scalar_select %p3799, %s3798, 7
        %s3801 = scalar_lea.vmem %s2, %s3800
        %s3802 = smul.u32 2, %s17
        %s3803 = smul.u32 32, %s17
        %p3804 = scmp.lt.s32.totalorder %s3803, 127
        %s3805 = scalar_select %p3804, %s3803, 127
        %s3806 = smul.addr %s3805, 4
        %s3807 = scalar_lea.vmem %s3, %s3806
        %s3808 = smul.u32 32, %s17
        %p3810 = scmp.eq.s32.totalorder %s17, 0
        // Predicated region
        $region93: #{dqn_forward.5} parent=87 // pred_check
          %p3811 = pneg %p3810
        $region94: #{dqn_forward.5} parent=87 // pred_check_branch
          %3813 = sbr.rel (%p3811) target = $region96
        $region95: #{dqn_forward.5} parent=87 // pred_region
          %3814 = vst [vmem:[#allocation2] sm:$0x3] 0.0
        $region96: #{dqn_forward.5} parent=87 // pred_fallthru
          _
        %v3815 = vld [vmem:[%s0] sm:$0xff]
        %v3816 = vld [vmem:[%s0 + $0x8] sm:$0xff]
        %v3817 = vld [vmem:[%s0 + $0x10] sm:$0xff]
        %v3818 = vld [vmem:[%s0 + $0x18] sm:$0xff]
        %v3819 = vld [vmem:[%s0 + $0x20] sm:$0xff]
        %v3820 = vld [vmem:[%s0 + $0x28] sm:$0xff]
        %v3821 = vld [vmem:[%s0 + $0x30] sm:$0xff]
        %3829 = vst [vmem:[#allocation1] ss:$4 sm:$0xff] %v3815
        %s3830 = scalar_lea.vmem [#allocation1], 32
        %3831 = vst [vmem:[%s3830] ss:$4 sm:$0xff] %v3816
        %v3832 = vld.sshfl [vmem:[#allocation1] sm:$0xff pattern:$0x73625140]
        %v3833 = vld.sshfl [vmem:[#allocation1 + $0x8] sm:$0xff pattern:$0x73625140]
        %v3834 = vld.sshfl [vmem:[#allocation1 + $0x10] sm:$0xff pattern:$0x73625140]
        %v3835 = vld.sshfl [vmem:[#allocation1 + $0x18] sm:$0xff pattern:$0x73625140]
        %v3836 = vld.sshfl [vmem:[#allocation1 + $0x20] sm:$0xff pattern:$0x73625140]
        %v3837 = vld.sshfl [vmem:[#allocation1 + $0x28] sm:$0xff pattern:$0x73625140]
        %v3838 = vld.sshfl [vmem:[#allocation1 + $0x30] sm:$0xff pattern:$0x73625140]
        %v3839 = vld.sshfl [vmem:[#allocation1 + $0x38] sm:$0xff pattern:$0x73625140]
        %3840 = vst [vmem:[#allocation1] ss:$4 sm:$0xff] %v3817
        %3841 = vst [vmem:[%s3830] ss:$4 sm:$0xff] %v3818
        %v3842 = vld.sshfl [vmem:[#allocation1] sm:$0xff pattern:$0x73625140]
        %v3843 = vld.sshfl [vmem:[#allocation1 + $0x8] sm:$0xff pattern:$0x73625140]
        %v3844 = vld.sshfl [vmem:[#allocation1 + $0x10] sm:$0xff pattern:$0x73625140]
        %v3845 = vld.sshfl [vmem:[#allocation1 + $0x18] sm:$0xff pattern:$0x73625140]
        %v3846 = vld.sshfl [vmem:[#allocation1 + $0x20] sm:$0xff pattern:$0x73625140]
        %v3847 = vld.sshfl [vmem:[#allocation1 + $0x28] sm:$0xff pattern:$0x73625140]
        %v3848 = vld.sshfl [vmem:[#allocation1 + $0x30] sm:$0xff pattern:$0x73625140]
        %v3849 = vld.sshfl [vmem:[#allocation1 + $0x38] sm:$0xff pattern:$0x73625140]
        %3850 = vst [vmem:[#allocation1] ss:$4 sm:$0xff] %v3819
        %3851 = vst [vmem:[%s3830] ss:$4 sm:$0xff] %v3820
        %v3852 = vld.sshfl [vmem:[#allocation1] sm:$0xff pattern:$0x73625140]
        %v3853 = vld.sshfl [vmem:[#allocation1 + $0x8] sm:$0xff pattern:$0x73625140]
        %v3854 = vld.sshfl [vmem:[#allocation1 + $0x10] sm:$0xff pattern:$0x73625140]
        %v3855 = vld.sshfl [vmem:[#allocation1 + $0x18] sm:$0xff pattern:$0x73625140]
        %v3856 = vld.sshfl [vmem:[#allocation1 + $0x20] sm:$0xff pattern:$0x73625140]
        %v3857 = vld.sshfl [vmem:[#allocation1 + $0x28] sm:$0xff pattern:$0x73625140]
        %v3858 = vld.sshfl [vmem:[#allocation1 + $0x30] sm:$0xff pattern:$0x73625140]
        %v3859 = vld.sshfl [vmem:[#allocation1 + $0x38] sm:$0xff pattern:$0x73625140]
        %3860 = vst [vmem:[#allocation1] ss:$4 sm:$0xff] %v3821
        %v3861 = vld.sshfl [vmem:[#allocation1] sm:$0xff pattern:$0x73625140]
        %v3862 = vld.sshfl [vmem:[#allocation1 + $0x8] sm:$0xff pattern:$0x73625140]
        %v3863 = vld.sshfl [vmem:[#allocation1 + $0x10] sm:$0xff pattern:$0x73625140]
        %v3864 = vld.sshfl [vmem:[#allocation1 + $0x18] sm:$0xff pattern:$0x73625140]
        %v3893 = vpack.c.bf16 %v3832, %v3832
        %v3894 = vpack.c.bf16 %v3833, %v3833
        %v3895 = vpack.c.bf16 %v3834, %v3834
        %v3896 = vpack.c.bf16 %v3835, %v3835
        %v3897 = vpack.c.bf16 %v3836, %v3836
        %v3898 = vpack.c.bf16 %v3837, %v3837
        %v3899 = vpack.c.bf16 %v3838, %v3838
        %v3900 = vpack.c.bf16 %v3839, %v3839
        %v3901 = vpack.c.bf16 %v3842, %v3842
        %v3902 = vpack.c.bf16 %v3843, %v3843
        %v3903 = vpack.c.bf16 %v3844, %v3844
        %v3904 = vpack.c.bf16 %v3845, %v3845
        %v3905 = vpack.c.bf16 %v3846, %v3846
        %v3906 = vpack.c.bf16 %v3847, %v3847
        %v3907 = vpack.c.bf16 %v3848, %v3848
        %v3908 = vpack.c.bf16 %v3849, %v3849
        %v3909 = vpack.c.bf16 %v3852, %v3852
        %v3910 = vpack.c.bf16 %v3853, %v3853
        %v3911 = vpack.c.bf16 %v3854, %v3854
        %v3912 = vpack.c.bf16 %v3855, %v3855
        %v3913 = vpack.c.bf16 %v3856, %v3856
        %v3914 = vpack.c.bf16 %v3857, %v3857
        %v3915 = vpack.c.bf16 %v3858, %v3858
        %v3916 = vpack.c.bf16 %v3859, %v3859
        %v3917 = vpack.c.bf16 %v3861, %v3861
        %v3918 = vpack.c.bf16 %v3862, %v3862
        %v3919 = vpack.c.bf16 %v3863, %v3863
        %v3920 = vpack.c.bf16 %v3864, %v3864
        %v3921 = vld [vmem:[%s3768] sm:$0xff]
        %v3922 = vld [vmem:[%s3768 + $0x8] sm:$0xff]
        %v3923 = vld [vmem:[%s3768 + $0x10] sm:$0xff]
        %v3924 = vld [vmem:[%s3768 + $0x18] sm:$0xff]
        %v3925 = vld [vmem:[%s3768 + $0x20] sm:$0xff]
        %v3926 = vld [vmem:[%s3768 + $0x28] sm:$0xff]
        %v3927 = vld [vmem:[%s3768 + $0x30] sm:$0xff]
        %v3928 = vld [vmem:[%s3768 + $0x38] sm:$0xff]
        %v3929 = vld [vmem:[%s3768 + $0x40] sm:$0xff]
        %v3930 = vld [vmem:[%s3768 + $0x48] sm:$0xff]
        %v3931 = vld [vmem:[%s3768 + $0x50] sm:$0xff]
        %v3932 = vld [vmem:[%s3768 + $0x58] sm:$0xff]
        %v3933 = vld [vmem:[%s3768 + $0x60] sm:$0xff]
        %v3934 = vld [vmem:[%s3768 + $0x68] sm:$0xff]
        %v3935 = vld [vmem:[%s3768 + $0x70] sm:$0xff]
        %v3936 = vld [vmem:[%s3768 + $0x78] sm:$0xff]
        %v3937 = vld [vmem:[%s3768 + $0x80] sm:$0xff]
        %v3938 = vld [vmem:[%s3768 + $0x88] sm:$0xff]
        %v3939 = vld [vmem:[%s3768 + $0x90] sm:$0xff]
        %v3940 = vld [vmem:[%s3768 + $0x98] sm:$0xff]
        %v3941 = vld [vmem:[%s3768 + $0xa0] sm:$0xff]
        %v3942 = vld [vmem:[%s3768 + $0xa8] sm:$0xff]
        %v3943 = vld [vmem:[%s3768 + $0xb0] sm:$0xff]
        %v3944 = vld [vmem:[%s3768 + $0xb8] sm:$0xff]
        %v3945 = vld [vmem:[%s3768 + $0xc0] sm:$0xff]
        %v3946 = vld [vmem:[%s3768 + $0xc8] sm:$0xff]
        %v3947 = vld [vmem:[%s3768 + $0xd0] sm:$0xff]
        %v3948 = vld [vmem:[%s3768 + $0xd8] sm:$0xff]
        %v3949 = vld [vmem:[%s3768 + $0xe0] sm:$0xff]
        %v3950 = vld [vmem:[%s3768 + $0xe8] sm:$0xff]
        %v3951 = vld [vmem:[%s3768 + $0xf0] sm:$0xff]
        %v3952 = vld [vmem:[%s3768 + $0xf8] sm:$0xff]
        %v3953 = vld [vmem:[%s3768 + $0x100] sm:$0xff]
        %v3954 = vld [vmem:[%s3768 + $0x108] sm:$0xff]
        %v3955 = vld [vmem:[%s3768 + $0x110] sm:$0xff]
        %v3956 = vld [vmem:[%s3768 + $0x118] sm:$0xff]
        %v3957 = vld [vmem:[%s3768 + $0x120] sm:$0xff]
        %v3958 = vld [vmem:[%s3768 + $0x128] sm:$0xff]
        %v3959 = vld [vmem:[%s3768 + $0x130] sm:$0xff]
        %v3960 = vld [vmem:[%s3768 + $0x138] sm:$0xff]
        %v3961 = vld [vmem:[%s3768 + $0x140] sm:$0xff]
        %v3962 = vld [vmem:[%s3768 + $0x148] sm:$0xff]
        %v3963 = vld [vmem:[%s3768 + $0x150] sm:$0xff]
        %v3964 = vld [vmem:[%s3768 + $0x158] sm:$0xff]
        %v3965 = vld [vmem:[%s3768 + $0x160] sm:$0xff]
        %v3966 = vld [vmem:[%s3768 + $0x168] sm:$0xff]
        %v3967 = vld [vmem:[%s3768 + $0x170] sm:$0xff]
        %v3968 = vld [vmem:[%s3768 + $0x178] sm:$0xff]
        %v3969 = vld [vmem:[%s3768 + $0x180] sm:$0xff]
        %v3970 = vld [vmem:[%s3768 + $0x188] sm:$0xff]
        %v3971 = vld [vmem:[%s3768 + $0x190] sm:$0xff]
        %v3972 = vld [vmem:[%s3768 + $0x198] sm:$0xff]
        %v3973 = vld [vmem:[%s3768 + $0x1a0] sm:$0xff]
        %v3974 = vld [vmem:[%s3768 + $0x1a8] sm:$0xff]
        %v3975 = vld [vmem:[%s3768 + $0x1b0] sm:$0xff]
        %v3976 = vld [vmem:[%s3768 + $0x1b8] sm:$0xff]
        %v3977 = vld [vmem:[%s3768 + $0x1c0] sm:$0xff]
        %v3978 = vld [vmem:[%s3768 + $0x1c8] sm:$0xff]
        %v3979 = vld [vmem:[%s3768 + $0x1d0] sm:$0xff]
        %v3980 = vld [vmem:[%s3768 + $0x1d8] sm:$0xff]
        %v3981 = vld [vmem:[%s3768 + $0x1e0] sm:$0xff]
        %v3982 = vld [vmem:[%s3768 + $0x1e8] sm:$0xff]
        %v3983 = vld [vmem:[%s3768 + $0x1f0] sm:$0xff]
        %v3984 = vld [vmem:[%s3768 + $0x1f8] sm:$0xff]
        %v3985 = vld [vmem:[%s3768 + $0x200] sm:$0xff]
        %v3986 = vld [vmem:[%s3768 + $0x208] sm:$0xff]
        %v3987 = vld [vmem:[%s3768 + $0x210] sm:$0xff]
        %v3988 = vld [vmem:[%s3768 + $0x218] sm:$0xff]
        %v3989 = vld [vmem:[%s3768 + $0x220] sm:$0xff]
        %v3990 = vld [vmem:[%s3768 + $0x228] sm:$0xff]
        %v3991 = vld [vmem:[%s3768 + $0x230] sm:$0xff]
        %v3992 = vld [vmem:[%s3768 + $0x238] sm:$0xff]
        %v3993 = vld [vmem:[%s3768 + $0x240] sm:$0xff]
        %v3994 = vld [vmem:[%s3768 + $0x248] sm:$0xff]
        %v3995 = vld [vmem:[%s3768 + $0x250] sm:$0xff]
        %v3996 = vld [vmem:[%s3768 + $0x258] sm:$0xff]
        %v3997 = vld [vmem:[%s3768 + $0x260] sm:$0xff]
        %v3998 = vld [vmem:[%s3768 + $0x268] sm:$0xff]
        %v3999 = vld [vmem:[%s3768 + $0x270] sm:$0xff]
        %v4000 = vld [vmem:[%s3768 + $0x278] sm:$0xff]
        %v4001 = vld [vmem:[%s3768 + $0x280] sm:$0xff]
        %v4002 = vld [vmem:[%s3768 + $0x288] sm:$0xff]
        %v4003 = vld [vmem:[%s3768 + $0x290] sm:$0xff]
        %v4004 = vld [vmem:[%s3768 + $0x298] sm:$0xff]
        %v4005 = vld [vmem:[%s3768 + $0x2a0] sm:$0xff]
        %v4006 = vld [vmem:[%s3768 + $0x2a8] sm:$0xff]
        %v4007 = vld [vmem:[%s3768 + $0x2b0] sm:$0xff]
        %v4008 = vld [vmem:[%s3768 + $0x2b8] sm:$0xff]
        %v4009 = vld [vmem:[%s3768 + $0x2c0] sm:$0xff]
        %v4010 = vld [vmem:[%s3768 + $0x2c8] sm:$0xff]
        %v4011 = vld [vmem:[%s3768 + $0x2d0] sm:$0xff]
        %v4012 = vld [vmem:[%s3768 + $0x2d8] sm:$0xff]
        %v4013 = vld [vmem:[%s3768 + $0x2e0] sm:$0xff]
        %v4014 = vld [vmem:[%s3768 + $0x2e8] sm:$0xff]
        %v4015 = vld [vmem:[%s3768 + $0x2f0] sm:$0xff]
        %v4016 = vld [vmem:[%s3768 + $0x2f8] sm:$0xff]
        %v4017 = vld [vmem:[%s3768 + $0x300] sm:$0xff]
        %v4018 = vld [vmem:[%s3768 + $0x308] sm:$0xff]
        %v4019 = vld [vmem:[%s3768 + $0x310] sm:$0xff]
        %v4020 = vld [vmem:[%s3768 + $0x318] sm:$0xff]
        %v4021 = vld [vmem:[%s3768 + $0x320] sm:$0xff]
        %v4022 = vld [vmem:[%s3768 + $0x328] sm:$0xff]
        %v4023 = vld [vmem:[%s3768 + $0x330] sm:$0xff]
        %v4024 = vld [vmem:[%s3768 + $0x338] sm:$0xff]
        %v4025 = vld [vmem:[%s3768 + $0x340] sm:$0xff]
        %v4026 = vld [vmem:[%s3768 + $0x348] sm:$0xff]
        %v4027 = vld [vmem:[%s3768 + $0x350] sm:$0xff]
        %v4028 = vld [vmem:[%s3768 + $0x358] sm:$0xff]
        %v4029 = vld [vmem:[%s3768 + $0x360] sm:$0xff]
        %v4030 = vld [vmem:[%s3768 + $0x368] sm:$0xff]
        %v4031 = vld [vmem:[%s3768 + $0x370] sm:$0xff]
        %v4032 = vld [vmem:[%s3768 + $0x378] sm:$0xff]
        %v4033 = vld [vmem:[%s3768 + $0x380] sm:$0xff]
        %v4034 = vld [vmem:[%s3768 + $0x388] sm:$0xff]
        %v4035 = vld [vmem:[%s3768 + $0x390] sm:$0xff]
        %v4036 = vld [vmem:[%s3768 + $0x398] sm:$0xff]
        %v4037 = vld [vmem:[%s3768 + $0x3a0] sm:$0xff]
        %v4038 = vld [vmem:[%s3768 + $0x3a8] sm:$0xff]
        %v4039 = vld [vmem:[%s3768 + $0x3b0] sm:$0xff]
        %v4040 = vld [vmem:[%s3768 + $0x3b8] sm:$0xff]
        %v4041 = vld [vmem:[%s3768 + $0x3c0] sm:$0xff]
        %v4042 = vld [vmem:[%s3768 + $0x3c8] sm:$0xff]
        %v4043 = vld [vmem:[%s3768 + $0x3d0] sm:$0xff]
        %v4044 = vld [vmem:[%s3768 + $0x3d8] sm:$0xff]
        %v4045 = vld [vmem:[%s3768 + $0x3e0] sm:$0xff]
        %v4046 = vld [vmem:[%s3768 + $0x3e8] sm:$0xff]
        %v4047 = vld [vmem:[%s3768 + $0x3f0] sm:$0xff]
        %v4048 = vld [vmem:[%s3768 + $0x3f8] sm:$0xff]
        %v4049 = vld [vmem:[%s3768 + $0x400] sm:$0xff]
        %v4050 = vld [vmem:[%s3768 + $0x408] sm:$0xff]
        %v4051 = vld [vmem:[%s3768 + $0x410] sm:$0xff]
        %v4052 = vld [vmem:[%s3768 + $0x418] sm:$0xff]
        %v4053 = vld [vmem:[%s3768 + $0x420] sm:$0xff]
        %v4054 = vld [vmem:[%s3768 + $0x428] sm:$0xff]
        %v4055 = vld [vmem:[%s3768 + $0x430] sm:$0xff]
        %v4056 = vld [vmem:[%s3768 + $0x438] sm:$0xff]
        %v4057 = vld [vmem:[%s3768 + $0x440] sm:$0xff]
        %v4058 = vld [vmem:[%s3768 + $0x448] sm:$0xff]
        %v4059 = vld [vmem:[%s3768 + $0x450] sm:$0xff]
        %v4060 = vld [vmem:[%s3768 + $0x458] sm:$0xff]
        %v4061 = vld [vmem:[%s3768 + $0x460] sm:$0xff]
        %v4062 = vld [vmem:[%s3768 + $0x468] sm:$0xff]
        %v4063 = vld [vmem:[%s3768 + $0x470] sm:$0xff]
        %v4064 = vld [vmem:[%s3768 + $0x478] sm:$0xff]
        %v4065 = vld [vmem:[%s3768 + $0x480] sm:$0xff]
        %v4066 = vld [vmem:[%s3768 + $0x488] sm:$0xff]
        %v4067 = vld [vmem:[%s3768 + $0x490] sm:$0xff]
        %v4068 = vld [vmem:[%s3768 + $0x498] sm:$0xff]
        %v4069 = vld [vmem:[%s3768 + $0x4a0] sm:$0xff]
        %v4070 = vld [vmem:[%s3768 + $0x4a8] sm:$0xff]
        %v4071 = vld [vmem:[%s3768 + $0x4b0] sm:$0xff]
        %v4072 = vld [vmem:[%s3768 + $0x4b8] sm:$0xff]
        %v4073 = vld [vmem:[%s3768 + $0x4c0] sm:$0xff]
        %v4074 = vld [vmem:[%s3768 + $0x4c8] sm:$0xff]
        %v4075 = vld [vmem:[%s3768 + $0x4d0] sm:$0xff]
        %v4076 = vld [vmem:[%s3768 + $0x4d8] sm:$0xff]
        %v4077 = vld [vmem:[%s3768 + $0x4e0] sm:$0xff]
        %v4078 = vld [vmem:[%s3768 + $0x4e8] sm:$0xff]
        %v4079 = vld [vmem:[%s3768 + $0x4f0] sm:$0xff]
        %v4080 = vld [vmem:[%s3768 + $0x4f8] sm:$0xff]
        %v4081 = vld [vmem:[%s3768 + $0x500] sm:$0xff]
        %v4082 = vld [vmem:[%s3768 + $0x508] sm:$0xff]
        %v4083 = vld [vmem:[%s3768 + $0x510] sm:$0xff]
        %v4084 = vld [vmem:[%s3768 + $0x518] sm:$0xff]
        %v4085 = vld [vmem:[%s3768 + $0x520] sm:$0xff]
        %v4086 = vld [vmem:[%s3768 + $0x528] sm:$0xff]
        %v4087 = vld [vmem:[%s3768 + $0x530] sm:$0xff]
        %v4088 = vld [vmem:[%s3768 + $0x538] sm:$0xff]
        %v4089 = vld [vmem:[%s3768 + $0x540] sm:$0xff]
        %v4090 = vld [vmem:[%s3768 + $0x548] sm:$0xff]
        %v4091 = vld [vmem:[%s3768 + $0x550] sm:$0xff]
        %v4092 = vld [vmem:[%s3768 + $0x558] sm:$0xff]
        %v4093 = vld [vmem:[%s3768 + $0x560] sm:$0xff]
        %v4094 = vld [vmem:[%s3768 + $0x568] sm:$0xff]
        %v4095 = vld [vmem:[%s3768 + $0x570] sm:$0xff]
        %v4096 = vld [vmem:[%s3768 + $0x578] sm:$0xff]
        %v4097 = vld [vmem:[%s3768 + $0x580] sm:$0xff]
        %v4098 = vld [vmem:[%s3768 + $0x588] sm:$0xff]
        %v4099 = vld [vmem:[%s3768 + $0x590] sm:$0xff]
        %v4100 = vld [vmem:[%s3768 + $0x598] sm:$0xff]
        %v4101 = vld [vmem:[%s3768 + $0x5a0] sm:$0xff]
        %v4102 = vld [vmem:[%s3768 + $0x5a8] sm:$0xff]
        %v4103 = vld [vmem:[%s3768 + $0x5b0] sm:$0xff]
        %v4104 = vld [vmem:[%s3768 + $0x5b8] sm:$0xff]
        %v4105 = vld [vmem:[%s3768 + $0x5c0] sm:$0xff]
        %v4106 = vld [vmem:[%s3768 + $0x5c8] sm:$0xff]
        %v4107 = vld [vmem:[%s3768 + $0x5d0] sm:$0xff]
        %v4108 = vld [vmem:[%s3768 + $0x5d8] sm:$0xff]
        %v4109 = vld [vmem:[%s3768 + $0x5e0] sm:$0xff]
        %v4110 = vld [vmem:[%s3768 + $0x5e8] sm:$0xff]
        %v4111 = vld [vmem:[%s3768 + $0x5f0] sm:$0xff]
        %v4112 = vld [vmem:[%s3768 + $0x5f8] sm:$0xff]
        %v4113 = vld [vmem:[%s3768 + $0x600] sm:$0xff]
        %v4114 = vld [vmem:[%s3768 + $0x608] sm:$0xff]
        %v4115 = vld [vmem:[%s3768 + $0x610] sm:$0xff]
        %v4116 = vld [vmem:[%s3768 + $0x618] sm:$0xff]
        %v4117 = vld [vmem:[%s3768 + $0x620] sm:$0xff]
        %v4118 = vld [vmem:[%s3768 + $0x628] sm:$0xff]
        %v4119 = vld [vmem:[%s3768 + $0x630] sm:$0xff]
        %v4120 = vld [vmem:[%s3768 + $0x638] sm:$0xff]
        %v4121 = vld [vmem:[%s3768 + $0x640] sm:$0xff]
        %v4122 = vld [vmem:[%s3768 + $0x648] sm:$0xff]
        %v4123 = vld [vmem:[%s3768 + $0x650] sm:$0xff]
        %v4124 = vld [vmem:[%s3768 + $0x658] sm:$0xff]
        %v4125 = vld [vmem:[%s3768 + $0x660] sm:$0xff]
        %v4126 = vld [vmem:[%s3768 + $0x668] sm:$0xff]
        %v4127 = vld [vmem:[%s3768 + $0x670] sm:$0xff]
        %v4128 = vld [vmem:[%s3768 + $0x678] sm:$0xff]
        %v4129 = vld [vmem:[%s3768 + $0x680] sm:$0xff]
        %v4130 = vld [vmem:[%s3768 + $0x688] sm:$0xff]
        %v4131 = vld [vmem:[%s3768 + $0x690] sm:$0xff]
        %v4132 = vld [vmem:[%s3768 + $0x698] sm:$0xff]
        %v4133 = vld [vmem:[%s3768 + $0x6a0] sm:$0xff]
        %v4134 = vld [vmem:[%s3768 + $0x6a8] sm:$0xff]
        %v4135 = vld [vmem:[%s3768 + $0x6b0] sm:$0xff]
        %v4136 = vld [vmem:[%s3768 + $0x6b8] sm:$0xff]
        %v4137 = vld [vmem:[%s3768 + $0x6c0] sm:$0xff]
        %v4138 = vld [vmem:[%s3768 + $0x6c8] sm:$0xff]
        %v4139 = vld [vmem:[%s3768 + $0x6d0] sm:$0xff]
        %v4140 = vld [vmem:[%s3768 + $0x6d8] sm:$0xff]
        %v4141 = vld [vmem:[%s3768 + $0x6e0] sm:$0xff]
        %v4142 = vld [vmem:[%s3768 + $0x6e8] sm:$0xff]
        %v4143 = vld [vmem:[%s3768 + $0x6f0] sm:$0xff]
        %v4144 = vld [vmem:[%s3768 + $0x6f8] sm:$0xff]
        %v4145 = vld [vmem:[%s3768 + $0x700] sm:$0xff]
        %v4146 = vld [vmem:[%s3768 + $0x708] sm:$0xff]
        %v4147 = vld [vmem:[%s3768 + $0x710] sm:$0xff]
        %v4148 = vld [vmem:[%s3768 + $0x718] sm:$0xff]
        %v4149 = vld [vmem:[%s3768 + $0x720] sm:$0xff]
        %v4150 = vld [vmem:[%s3768 + $0x728] sm:$0xff]
        %v4151 = vld [vmem:[%s3768 + $0x730] sm:$0xff]
        %v4152 = vld [vmem:[%s3768 + $0x738] sm:$0xff]
        %v4153 = vld [vmem:[%s3768 + $0x740] sm:$0xff]
        %v4154 = vld [vmem:[%s3768 + $0x748] sm:$0xff]
        %v4155 = vld [vmem:[%s3768 + $0x750] sm:$0xff]
        %v4156 = vld [vmem:[%s3768 + $0x758] sm:$0xff]
        %v4157 = vld [vmem:[%s3768 + $0x760] sm:$0xff]
        %v4158 = vld [vmem:[%s3768 + $0x768] sm:$0xff]
        %v4159 = vld [vmem:[%s3768 + $0x770] sm:$0xff]
        %v4160 = vld [vmem:[%s3768 + $0x778] sm:$0xff]
        %v4161 = vld [vmem:[%s3768 + $0x780] sm:$0xff]
        %v4162 = vld [vmem:[%s3768 + $0x788] sm:$0xff]
        %v4163 = vld [vmem:[%s3768 + $0x790] sm:$0xff]
        %v4164 = vld [vmem:[%s3768 + $0x798] sm:$0xff]
        %v4165 = vld [vmem:[%s3768 + $0x7a0] sm:$0xff]
        %v4166 = vld [vmem:[%s3768 + $0x7a8] sm:$0xff]
        %v4167 = vld [vmem:[%s3768 + $0x7b0] sm:$0xff]
        %v4168 = vld [vmem:[%s3768 + $0x7b8] sm:$0xff]
        %v4169 = vld [vmem:[%s3768 + $0x7c0] sm:$0xff]
        %v4170 = vld [vmem:[%s3768 + $0x7c8] sm:$0xff]
        %v4171 = vld [vmem:[%s3768 + $0x7d0] sm:$0xff]
        %v4172 = vld [vmem:[%s3768 + $0x7d8] sm:$0xff]
        %v4173 = vld [vmem:[%s3768 + $0x7e0] sm:$0xff]
        %v4174 = vld [vmem:[%s3768 + $0x7e8] sm:$0xff]
        %v4175 = vld [vmem:[%s3768 + $0x7f0] sm:$0xff]
        %v4176 = vld [vmem:[%s3768 + $0x7f8] sm:$0xff]
        %v4177 = vld [vmem:[%s3768 + $0x800] sm:$0xff]
        %v4178 = vld [vmem:[%s3768 + $0x808] sm:$0xff]
        %v4179 = vld [vmem:[%s3768 + $0x810] sm:$0xff]
        %v4180 = vld [vmem:[%s3768 + $0x818] sm:$0xff]
        %v4181 = vld [vmem:[%s3768 + $0x820] sm:$0xff]
        %v4182 = vld [vmem:[%s3768 + $0x828] sm:$0xff]
        %v4183 = vld [vmem:[%s3768 + $0x830] sm:$0xff]
        %v4184 = vld [vmem:[%s3768 + $0x838] sm:$0xff]
        %v4185 = vld [vmem:[%s3768 + $0x840] sm:$0xff]
        %v4186 = vld [vmem:[%s3768 + $0x848] sm:$0xff]
        %v4187 = vld [vmem:[%s3768 + $0x850] sm:$0xff]
        %v4188 = vld [vmem:[%s3768 + $0x858] sm:$0xff]
        %v4189 = vld [vmem:[%s3768 + $0x860] sm:$0xff]
        %v4190 = vld [vmem:[%s3768 + $0x868] sm:$0xff]
        %v4191 = vld [vmem:[%s3768 + $0x870] sm:$0xff]
        %v4192 = vld [vmem:[%s3768 + $0x878] sm:$0xff]
        %v4193 = vld [vmem:[%s3768 + $0x880] sm:$0xff]
        %v4194 = vld [vmem:[%s3768 + $0x888] sm:$0xff]
        %v4195 = vld [vmem:[%s3768 + $0x890] sm:$0xff]
        %v4196 = vld [vmem:[%s3768 + $0x898] sm:$0xff]
        %v4197 = vld [vmem:[%s3768 + $0x8a0] sm:$0xff]
        %v4198 = vld [vmem:[%s3768 + $0x8a8] sm:$0xff]
        %v4199 = vld [vmem:[%s3768 + $0x8b0] sm:$0xff]
        %v4200 = vld [vmem:[%s3768 + $0x8b8] sm:$0xff]
        %v4201 = vld [vmem:[%s3768 + $0x8c0] sm:$0xff]
        %v4202 = vld [vmem:[%s3768 + $0x8c8] sm:$0xff]
        %v4203 = vld [vmem:[%s3768 + $0x8d0] sm:$0xff]
        %v4204 = vld [vmem:[%s3768 + $0x8d8] sm:$0xff]
        %v4205 = vld [vmem:[%s3768 + $0x8e0] sm:$0xff]
        %v4206 = vld [vmem:[%s3768 + $0x8e8] sm:$0xff]
        %v4207 = vld [vmem:[%s3768 + $0x8f0] sm:$0xff]
        %v4208 = vld [vmem:[%s3768 + $0x8f8] sm:$0xff]
        %v4209 = vld [vmem:[%s3768 + $0x900] sm:$0xff]
        %v4210 = vld [vmem:[%s3768 + $0x908] sm:$0xff]
        %v4211 = vld [vmem:[%s3768 + $0x910] sm:$0xff]
        %v4212 = vld [vmem:[%s3768 + $0x918] sm:$0xff]
        %v4213 = vld [vmem:[%s3768 + $0x920] sm:$0xff]
        %v4214 = vld [vmem:[%s3768 + $0x928] sm:$0xff]
        %v4215 = vld [vmem:[%s3768 + $0x930] sm:$0xff]
        %v4216 = vld [vmem:[%s3768 + $0x938] sm:$0xff]
        %v4217 = vld [vmem:[%s3768 + $0x940] sm:$0xff]
        %v4218 = vld [vmem:[%s3768 + $0x948] sm:$0xff]
        %v4219 = vld [vmem:[%s3768 + $0x950] sm:$0xff]
        %v4220 = vld [vmem:[%s3768 + $0x958] sm:$0xff]
        %v4221 = vld [vmem:[%s3768 + $0x960] sm:$0xff]
        %v4222 = vld [vmem:[%s3768 + $0x968] sm:$0xff]
        %v4223 = vld [vmem:[%s3768 + $0x970] sm:$0xff]
        %v4224 = vld [vmem:[%s3768 + $0x978] sm:$0xff]
        %v4225 = vld [vmem:[%s3768 + $0x980] sm:$0xff]
        %v4226 = vld [vmem:[%s3768 + $0x988] sm:$0xff]
        %v4227 = vld [vmem:[%s3768 + $0x990] sm:$0xff]
        %v4228 = vld [vmem:[%s3768 + $0x998] sm:$0xff]
        %v4229 = vld [vmem:[%s3768 + $0x9a0] sm:$0xff]
        %v4230 = vld [vmem:[%s3768 + $0x9a8] sm:$0xff]
        %v4231 = vld [vmem:[%s3768 + $0x9b0] sm:$0xff]
        %v4232 = vld [vmem:[%s3768 + $0x9b8] sm:$0xff]
        %v4233 = vld [vmem:[%s3768 + $0x9c0] sm:$0xff]
        %v4234 = vld [vmem:[%s3768 + $0x9c8] sm:$0xff]
        %v4235 = vld [vmem:[%s3768 + $0x9d0] sm:$0xff]
        %v4236 = vld [vmem:[%s3768 + $0x9d8] sm:$0xff]
        %v4237 = vld [vmem:[%s3768 + $0x9e0] sm:$0xff]
        %v4238 = vld [vmem:[%s3768 + $0x9e8] sm:$0xff]
        %v4239 = vld [vmem:[%s3768 + $0x9f0] sm:$0xff]
        %v4240 = vld [vmem:[%s3768 + $0x9f8] sm:$0xff]
        %v4241 = vld [vmem:[%s3768 + $0xa00] sm:$0xff]
        %v4242 = vld [vmem:[%s3768 + $0xa08] sm:$0xff]
        %v4243 = vld [vmem:[%s3768 + $0xa10] sm:$0xff]
        %v4244 = vld [vmem:[%s3768 + $0xa18] sm:$0xff]
        %v4245 = vld [vmem:[%s3768 + $0xa20] sm:$0xff]
        %v4246 = vld [vmem:[%s3768 + $0xa28] sm:$0xff]
        %v4247 = vld [vmem:[%s3768 + $0xa30] sm:$0xff]
        %v4248 = vld [vmem:[%s3768 + $0xa38] sm:$0xff]
        %v4249 = vld [vmem:[%s3768 + $0xa40] sm:$0xff]
        %v4250 = vld [vmem:[%s3768 + $0xa48] sm:$0xff]
        %v4251 = vld [vmem:[%s3768 + $0xa50] sm:$0xff]
        %v4252 = vld [vmem:[%s3768 + $0xa58] sm:$0xff]
        %v4253 = vld [vmem:[%s3768 + $0xa60] sm:$0xff]
        %v4254 = vld [vmem:[%s3768 + $0xa68] sm:$0xff]
        %v4255 = vld [vmem:[%s3768 + $0xa70] sm:$0xff]
        %v4256 = vld [vmem:[%s3768 + $0xa78] sm:$0xff]
        %v4257 = vld [vmem:[%s3768 + $0xa80] sm:$0xff]
        %v4258 = vld [vmem:[%s3768 + $0xa88] sm:$0xff]
        %v4259 = vld [vmem:[%s3768 + $0xa90] sm:$0xff]
        %v4260 = vld [vmem:[%s3768 + $0xa98] sm:$0xff]
        %v4261 = vld [vmem:[%s3768 + $0xaa0] sm:$0xff]
        %v4262 = vld [vmem:[%s3768 + $0xaa8] sm:$0xff]
        %v4263 = vld [vmem:[%s3768 + $0xab0] sm:$0xff]
        %v4264 = vld [vmem:[%s3768 + $0xab8] sm:$0xff]
        %v4265 = vld [vmem:[%s3768 + $0xac0] sm:$0xff]
        %v4266 = vld [vmem:[%s3768 + $0xac8] sm:$0xff]
        %v4267 = vld [vmem:[%s3768 + $0xad0] sm:$0xff]
        %v4268 = vld [vmem:[%s3768 + $0xad8] sm:$0xff]
        %v4269 = vld [vmem:[%s3768 + $0xae0] sm:$0xff]
        %v4270 = vld [vmem:[%s3768 + $0xae8] sm:$0xff]
        %v4271 = vld [vmem:[%s3768 + $0xaf0] sm:$0xff]
        %v4272 = vld [vmem:[%s3768 + $0xaf8] sm:$0xff]
        %v4273 = vld [vmem:[%s3768 + $0xb00] sm:$0xff]
        %v4274 = vld [vmem:[%s3768 + $0xb08] sm:$0xff]
        %v4275 = vld [vmem:[%s3768 + $0xb10] sm:$0xff]
        %v4276 = vld [vmem:[%s3768 + $0xb18] sm:$0xff]
        %v4277 = vld [vmem:[%s3768 + $0xb20] sm:$0xff]
        %v4278 = vld [vmem:[%s3768 + $0xb28] sm:$0xff]
        %v4279 = vld [vmem:[%s3768 + $0xb30] sm:$0xff]
        %v4280 = vld [vmem:[%s3768 + $0xb38] sm:$0xff]
        %v4281 = vld [vmem:[%s3768 + $0xb40] sm:$0xff]
        %v4282 = vld [vmem:[%s3768 + $0xb48] sm:$0xff]
        %v4283 = vld [vmem:[%s3768 + $0xb50] sm:$0xff]
        %v4284 = vld [vmem:[%s3768 + $0xb58] sm:$0xff]
        %v4285 = vld [vmem:[%s3768 + $0xb60] sm:$0xff]
        %v4286 = vld [vmem:[%s3768 + $0xb68] sm:$0xff]
        %v4287 = vld [vmem:[%s3768 + $0xb70] sm:$0xff]
        %v4288 = vld [vmem:[%s3768 + $0xb78] sm:$0xff]
        %v4289 = vld [vmem:[%s3768 + $0xb80] sm:$0xff]
        %v4290 = vld [vmem:[%s3768 + $0xb88] sm:$0xff]
        %v4291 = vld [vmem:[%s3768 + $0xb90] sm:$0xff]
        %v4292 = vld [vmem:[%s3768 + $0xb98] sm:$0xff]
        %v4293 = vld [vmem:[%s3768 + $0xba0] sm:$0xff]
        %v4294 = vld [vmem:[%s3768 + $0xba8] sm:$0xff]
        %v4295 = vld [vmem:[%s3768 + $0xbb0] sm:$0xff]
        %v4296 = vld [vmem:[%s3768 + $0xbb8] sm:$0xff]
        %v4297 = vld [vmem:[%s3768 + $0xbc0] sm:$0xff]
        %v4298 = vld [vmem:[%s3768 + $0xbc8] sm:$0xff]
        %v4299 = vld [vmem:[%s3768 + $0xbd0] sm:$0xff]
        %v4300 = vld [vmem:[%s3768 + $0xbd8] sm:$0xff]
        %v4301 = vld [vmem:[%s3768 + $0xbe0] sm:$0xff]
        %v4302 = vld [vmem:[%s3768 + $0xbe8] sm:$0xff]
        %v4303 = vld [vmem:[%s3768 + $0xbf0] sm:$0xff]
        %v4304 = vld [vmem:[%s3768 + $0xbf8] sm:$0xff]
        %v4305 = vld [vmem:[%s3768 + $0xc00] sm:$0xff]
        %v4306 = vld [vmem:[%s3768 + $0xc08] sm:$0xff]
        %v4307 = vld [vmem:[%s3768 + $0xc10] sm:$0xff]
        %v4308 = vld [vmem:[%s3768 + $0xc18] sm:$0xff]
        %v4309 = vld [vmem:[%s3768 + $0xc20] sm:$0xff]
        %v4310 = vld [vmem:[%s3768 + $0xc28] sm:$0xff]
        %v4311 = vld [vmem:[%s3768 + $0xc30] sm:$0xff]
        %v4312 = vld [vmem:[%s3768 + $0xc38] sm:$0xff]
        %v4313 = vld [vmem:[%s3768 + $0xc40] sm:$0xff]
        %v4314 = vld [vmem:[%s3768 + $0xc48] sm:$0xff]
        %v4315 = vld [vmem:[%s3768 + $0xc50] sm:$0xff]
        %v4316 = vld [vmem:[%s3768 + $0xc58] sm:$0xff]
        %v4317 = vld [vmem:[%s3768 + $0xc60] sm:$0xff]
        %v4318 = vld [vmem:[%s3768 + $0xc68] sm:$0xff]
        %v4319 = vld [vmem:[%s3768 + $0xc70] sm:$0xff]
        %v4320 = vld [vmem:[%s3768 + $0xc78] sm:$0xff]
        %v4321 = vld [vmem:[%s3768 + $0xc80] sm:$0xff]
        %v4322 = vld [vmem:[%s3768 + $0xc88] sm:$0xff]
        %v4323 = vld [vmem:[%s3768 + $0xc90] sm:$0xff]
        %v4324 = vld [vmem:[%s3768 + $0xc98] sm:$0xff]
        %v4325 = vld [vmem:[%s3768 + $0xca0] sm:$0xff]
        %v4326 = vld [vmem:[%s3768 + $0xca8] sm:$0xff]
        %v4327 = vld [vmem:[%s3768 + $0xcb0] sm:$0xff]
        %v4328 = vld [vmem:[%s3768 + $0xcb8] sm:$0xff]
        %v4329 = vld [vmem:[%s3768 + $0xcc0] sm:$0xff]
        %v4330 = vld [vmem:[%s3768 + $0xcc8] sm:$0xff]
        %v4331 = vld [vmem:[%s3768 + $0xcd0] sm:$0xff]
        %v4332 = vld [vmem:[%s3768 + $0xcd8] sm:$0xff]
        %v4333 = vld [vmem:[%s3768 + $0xce0] sm:$0xff]
        %v4334 = vld [vmem:[%s3768 + $0xce8] sm:$0xff]
        %v4335 = vld [vmem:[%s3768 + $0xcf0] sm:$0xff]
        %v4336 = vld [vmem:[%s3768 + $0xcf8] sm:$0xff]
        %v4337 = vld [vmem:[%s3768 + $0xd00] sm:$0xff]
        %v4338 = vld [vmem:[%s3768 + $0xd08] sm:$0xff]
        %v4339 = vld [vmem:[%s3768 + $0xd10] sm:$0xff]
        %v4340 = vld [vmem:[%s3768 + $0xd18] sm:$0xff]
        %v4341 = vld [vmem:[%s3768 + $0xd20] sm:$0xff]
        %v4342 = vld [vmem:[%s3768 + $0xd28] sm:$0xff]
        %v4343 = vld [vmem:[%s3768 + $0xd30] sm:$0xff]
        %v4344 = vld [vmem:[%s3768 + $0xd38] sm:$0xff]
        %v4345 = vld [vmem:[%s3768 + $0xd40] sm:$0xff]
        %v4346 = vld [vmem:[%s3768 + $0xd48] sm:$0xff]
        %v4347 = vld [vmem:[%s3768 + $0xd50] sm:$0xff]
        %v4348 = vld [vmem:[%s3768 + $0xd58] sm:$0xff]
        %v4349 = vld [vmem:[%s3768 + $0xd60] sm:$0xff]
        %v4350 = vld [vmem:[%s3768 + $0xd68] sm:$0xff]
        %v4351 = vld [vmem:[%s3768 + $0xd70] sm:$0xff]
        %v4352 = vld [vmem:[%s3768 + $0xd78] sm:$0xff]
        %v4353 = vld [vmem:[%s3768 + $0xd80] sm:$0xff]
        %v4354 = vld [vmem:[%s3768 + $0xd88] sm:$0xff]
        %v4355 = vld [vmem:[%s3768 + $0xd90] sm:$0xff]
        %v4356 = vld [vmem:[%s3768 + $0xd98] sm:$0xff]
        %v4357 = vld [vmem:[%s3801] sm:$0x3]
        %v4359 = vperm.slane %v4357, 0
        %v4360 = vperm.slane %v4357, 1
        %v4799 = vunpack.c.l.b16 %v3921
        %v4800 = vunpack.c.h.b16 %v3921
        %v4801 = vunpack.c.l.b16 %v3922
        %v4802 = vunpack.c.h.b16 %v3922
        %v4803 = vunpack.c.l.b16 %v3923
        %v4804 = vunpack.c.h.b16 %v3923
        %v4805 = vunpack.c.l.b16 %v3924
        %v4806 = vunpack.c.h.b16 %v3924
        %v4807 = vunpack.c.l.b16 %v3925
        %v4808 = vunpack.c.h.b16 %v3925
        %v4809 = vunpack.c.l.b16 %v3926
        %v4810 = vunpack.c.h.b16 %v3926
        %v4811 = vunpack.c.l.b16 %v3927
        %v4812 = vunpack.c.h.b16 %v3927
        %v4813 = vunpack.c.l.b16 %v3928
        %v4814 = vunpack.c.h.b16 %v3928
        %v4815 = vunpack.c.l.b16 %v3929
        %v4816 = vunpack.c.h.b16 %v3929
        %v4817 = vunpack.c.l.b16 %v3930
        %v4818 = vunpack.c.h.b16 %v3930
        %v4819 = vunpack.c.l.b16 %v3931
        %v4820 = vunpack.c.h.b16 %v3931
        %v4821 = vunpack.c.l.b16 %v3932
        %v4822 = vunpack.c.h.b16 %v3932
        %v4823 = vunpack.c.l.b16 %v3933
        %v4824 = vunpack.c.h.b16 %v3933
        %v4825 = vunpack.c.l.b16 %v3934
        %v4826 = vunpack.c.h.b16 %v3934
        %v4827 = vunpack.c.l.b16 %v3935
        %v4828 = vunpack.c.h.b16 %v3935
        %v4829 = vunpack.c.l.b16 %v3936
        %v4830 = vunpack.c.h.b16 %v3936
        %v4831 = vunpack.c.l.b16 %v3937
        %v4832 = vunpack.c.h.b16 %v3937
        %v4833 = vunpack.c.l.b16 %v3938
        %v4834 = vunpack.c.h.b16 %v3938
        %v4835 = vunpack.c.l.b16 %v3939
        %v4836 = vunpack.c.h.b16 %v3939
        %v4837 = vunpack.c.l.b16 %v3940
        %v4838 = vunpack.c.h.b16 %v3940
        %v4839 = vunpack.c.l.b16 %v3941
        %v4840 = vunpack.c.h.b16 %v3941
        %v4841 = vunpack.c.l.b16 %v3942
        %v4842 = vunpack.c.h.b16 %v3942
        %v4843 = vunpack.c.l.b16 %v3943
        %v4844 = vunpack.c.h.b16 %v3943
        %v4845 = vunpack.c.l.b16 %v3944
        %v4846 = vunpack.c.h.b16 %v3944
        %v4847 = vunpack.c.l.b16 %v3945
        %v4848 = vunpack.c.h.b16 %v3945
        %v4849 = vunpack.c.l.b16 %v3946
        %v4850 = vunpack.c.h.b16 %v3946
        %v4851 = vunpack.c.l.b16 %v3947
        %v4852 = vunpack.c.h.b16 %v3947
        %v4853 = vunpack.c.l.b16 %v3948
        %v4854 = vunpack.c.h.b16 %v3948
        %v4855 = vunpack.c.l.b16 %v3949
        %v4856 = vunpack.c.h.b16 %v3949
        %v4857 = vunpack.c.l.b16 %v3950
        %v4858 = vunpack.c.h.b16 %v3950
        %v4859 = vunpack.c.l.b16 %v3951
        %v4860 = vunpack.c.h.b16 %v3951
        %v4861 = vunpack.c.l.b16 %v3952
        %v4862 = vunpack.c.h.b16 %v3952
        %v4863 = vunpack.c.l.b16 %v3953
        %v4864 = vunpack.c.h.b16 %v3953
        %v4865 = vunpack.c.l.b16 %v3954
        %v4866 = vunpack.c.h.b16 %v3954
        %v4867 = vunpack.c.l.b16 %v3955
        %v4868 = vunpack.c.h.b16 %v3955
        %v4869 = vunpack.c.l.b16 %v3956
        %v4870 = vunpack.c.h.b16 %v3956
        %v4871 = vunpack.c.l.b16 %v3957
        %v4872 = vunpack.c.h.b16 %v3957
        %v4873 = vunpack.c.l.b16 %v3958
        %v4874 = vunpack.c.h.b16 %v3958
        %v4875 = vunpack.c.l.b16 %v3959
        %v4876 = vunpack.c.h.b16 %v3959
        %v4877 = vunpack.c.l.b16 %v3960
        %v4878 = vunpack.c.h.b16 %v3960
        %v4879 = vunpack.c.l.b16 %v3961
        %v4880 = vunpack.c.h.b16 %v3961
        %v4881 = vunpack.c.l.b16 %v3962
        %v4882 = vunpack.c.h.b16 %v3962
        %v4883 = vunpack.c.l.b16 %v3963
        %v4884 = vunpack.c.h.b16 %v3963
        %v4885 = vunpack.c.l.b16 %v3964
        %v4886 = vunpack.c.h.b16 %v3964
        %v4887 = vunpack.c.l.b16 %v3965
        %v4888 = vunpack.c.h.b16 %v3965
        %v4889 = vunpack.c.l.b16 %v3966
        %v4890 = vunpack.c.h.b16 %v3966
        %v4891 = vunpack.c.l.b16 %v3967
        %v4892 = vunpack.c.h.b16 %v3967
        %v4893 = vunpack.c.l.b16 %v3968
        %v4894 = vunpack.c.h.b16 %v3968
        %v4895 = vunpack.c.l.b16 %v3969
        %v4896 = vunpack.c.h.b16 %v3969
        %v4897 = vunpack.c.l.b16 %v3970
        %v4898 = vunpack.c.h.b16 %v3970
        %v4899 = vunpack.c.l.b16 %v3971
        %v4900 = vunpack.c.h.b16 %v3971
        %v4901 = vunpack.c.l.b16 %v3972
        %v4902 = vunpack.c.h.b16 %v3972
        %v4903 = vunpack.c.l.b16 %v3973
        %v4904 = vunpack.c.h.b16 %v3973
        %v4905 = vunpack.c.l.b16 %v3974
        %v4906 = vunpack.c.h.b16 %v3974
        %v4907 = vunpack.c.l.b16 %v3975
        %v4908 = vunpack.c.h.b16 %v3975
        %v4909 = vunpack.c.l.b16 %v3976
        %v4910 = vunpack.c.h.b16 %v3976
        %v4911 = vunpack.c.l.b16 %v3977
        %v4912 = vunpack.c.h.b16 %v3977
        %v4913 = vunpack.c.l.b16 %v3978
        %v4914 = vunpack.c.h.b16 %v3978
        %v4915 = vunpack.c.l.b16 %v3979
        %v4916 = vunpack.c.h.b16 %v3979
        %v4917 = vunpack.c.l.b16 %v3980
        %v4918 = vunpack.c.h.b16 %v3980
        %v4919 = vunpack.c.l.b16 %v3981
        %v4920 = vunpack.c.h.b16 %v3981
        %v4921 = vunpack.c.l.b16 %v3982
        %v4922 = vunpack.c.h.b16 %v3982
        %v4923 = vunpack.c.l.b16 %v3983
        %v4924 = vunpack.c.h.b16 %v3983
        %v4925 = vunpack.c.l.b16 %v3984
        %v4926 = vunpack.c.h.b16 %v3984
        %v4927 = vunpack.c.l.b16 %v3985
        %v4928 = vunpack.c.h.b16 %v3985
        %v4929 = vunpack.c.l.b16 %v3986
        %v4930 = vunpack.c.h.b16 %v3986
        %v4931 = vunpack.c.l.b16 %v3987
        %v4932 = vunpack.c.h.b16 %v3987
        %v4933 = vunpack.c.l.b16 %v3988
        %v4934 = vunpack.c.h.b16 %v3988
        %v4935 = vunpack.c.l.b16 %v3989
        %v4936 = vunpack.c.h.b16 %v3989
        %v4937 = vunpack.c.l.b16 %v3990
        %v4938 = vunpack.c.h.b16 %v3990
        %v4939 = vunpack.c.l.b16 %v3991
        %v4940 = vunpack.c.h.b16 %v3991
        %v4941 = vunpack.c.l.b16 %v3992
        %v4942 = vunpack.c.h.b16 %v3992
        %v4943 = vunpack.c.l.b16 %v3993
        %v4944 = vunpack.c.h.b16 %v3993
        %v4945 = vunpack.c.l.b16 %v3994
        %v4946 = vunpack.c.h.b16 %v3994
        %v4947 = vunpack.c.l.b16 %v3995
        %v4948 = vunpack.c.h.b16 %v3995
        %v4949 = vunpack.c.l.b16 %v3996
        %v4950 = vunpack.c.h.b16 %v3996
        %v4951 = vunpack.c.l.b16 %v3997
        %v4952 = vunpack.c.h.b16 %v3997
        %v4953 = vunpack.c.l.b16 %v3998
        %v4954 = vunpack.c.h.b16 %v3998
        %v4955 = vunpack.c.l.b16 %v3999
        %v4956 = vunpack.c.h.b16 %v3999
        %v4957 = vunpack.c.l.b16 %v4000
        %v4958 = vunpack.c.h.b16 %v4000
        %v4959 = vunpack.c.l.b16 %v4001
        %v4960 = vunpack.c.h.b16 %v4001
        %v4961 = vunpack.c.l.b16 %v4002
        %v4962 = vunpack.c.h.b16 %v4002
        %v4963 = vunpack.c.l.b16 %v4003
        %v4964 = vunpack.c.h.b16 %v4003
        %v4965 = vunpack.c.l.b16 %v4004
        %v4966 = vunpack.c.h.b16 %v4004
        %v4967 = vunpack.c.l.b16 %v4005
        %v4968 = vunpack.c.h.b16 %v4005
        %v4969 = vunpack.c.l.b16 %v4006
        %v4970 = vunpack.c.h.b16 %v4006
        %v4971 = vunpack.c.l.b16 %v4007
        %v4972 = vunpack.c.h.b16 %v4007
        %v4973 = vunpack.c.l.b16 %v4008
        %v4974 = vunpack.c.h.b16 %v4008
        %v4975 = vunpack.c.l.b16 %v4009
        %v4976 = vunpack.c.h.b16 %v4009
        %v4977 = vunpack.c.l.b16 %v4010
        %v4978 = vunpack.c.h.b16 %v4010
        %v4979 = vunpack.c.l.b16 %v4011
        %v4980 = vunpack.c.h.b16 %v4011
        %v4981 = vunpack.c.l.b16 %v4012
        %v4982 = vunpack.c.h.b16 %v4012
        %v4983 = vunpack.c.l.b16 %v4013
        %v4984 = vunpack.c.h.b16 %v4013
        %v4985 = vunpack.c.l.b16 %v4014
        %v4986 = vunpack.c.h.b16 %v4014
        %v4987 = vunpack.c.l.b16 %v4015
        %v4988 = vunpack.c.h.b16 %v4015
        %v4989 = vunpack.c.l.b16 %v4016
        %v4990 = vunpack.c.h.b16 %v4016
        %v4991 = vunpack.c.l.b16 %v4017
        %v4992 = vunpack.c.h.b16 %v4017
        %v4993 = vunpack.c.l.b16 %v4018
        %v4994 = vunpack.c.h.b16 %v4018
        %v4995 = vunpack.c.l.b16 %v4019
        %v4996 = vunpack.c.h.b16 %v4019
        %v4997 = vunpack.c.l.b16 %v4020
        %v4998 = vunpack.c.h.b16 %v4020
        %v4999 = vunpack.c.l.b16 %v4021
        %v5000 = vunpack.c.h.b16 %v4021
        %v5001 = vunpack.c.l.b16 %v4022
        %v5002 = vunpack.c.h.b16 %v4022
        %v5003 = vunpack.c.l.b16 %v4023
        %v5004 = vunpack.c.h.b16 %v4023
        %v5005 = vunpack.c.l.b16 %v4024
        %v5006 = vunpack.c.h.b16 %v4024
        %v5007 = vunpack.c.l.b16 %v4025
        %v5008 = vunpack.c.h.b16 %v4025
        %v5009 = vunpack.c.l.b16 %v4026
        %v5010 = vunpack.c.h.b16 %v4026
        %v5011 = vunpack.c.l.b16 %v4027
        %v5012 = vunpack.c.h.b16 %v4027
        %v5013 = vunpack.c.l.b16 %v4028
        %v5014 = vunpack.c.h.b16 %v4028
        %v5015 = vunpack.c.l.b16 %v4029
        %v5016 = vunpack.c.h.b16 %v4029
        %v5017 = vunpack.c.l.b16 %v4030
        %v5018 = vunpack.c.h.b16 %v4030
        %v5019 = vunpack.c.l.b16 %v4031
        %v5020 = vunpack.c.h.b16 %v4031
        %v5021 = vunpack.c.l.b16 %v4032
        %v5022 = vunpack.c.h.b16 %v4032
        %v5023 = vunpack.c.l.b16 %v4033
        %v5024 = vunpack.c.h.b16 %v4033
        %v5025 = vunpack.c.l.b16 %v4034
        %v5026 = vunpack.c.h.b16 %v4034
        %v5027 = vunpack.c.l.b16 %v4035
        %v5028 = vunpack.c.h.b16 %v4035
        %v5029 = vunpack.c.l.b16 %v4036
        %v5030 = vunpack.c.h.b16 %v4036
        %v5031 = vunpack.c.l.b16 %v4037
        %v5032 = vunpack.c.h.b16 %v4037
        %v5033 = vunpack.c.l.b16 %v4038
        %v5034 = vunpack.c.h.b16 %v4038
        %v5035 = vunpack.c.l.b16 %v4039
        %v5036 = vunpack.c.h.b16 %v4039
        %v5037 = vunpack.c.l.b16 %v4040
        %v5038 = vunpack.c.h.b16 %v4040
        %v5039 = vunpack.c.l.b16 %v4041
        %v5040 = vunpack.c.h.b16 %v4041
        %v5041 = vunpack.c.l.b16 %v4042
        %v5042 = vunpack.c.h.b16 %v4042
        %v5043 = vunpack.c.l.b16 %v4043
        %v5044 = vunpack.c.h.b16 %v4043
        %v5045 = vunpack.c.l.b16 %v4044
        %v5046 = vunpack.c.h.b16 %v4044
        %v5047 = vunpack.c.l.b16 %v4045
        %v5048 = vunpack.c.h.b16 %v4045
        %v5049 = vunpack.c.l.b16 %v4046
        %v5050 = vunpack.c.h.b16 %v4046
        %v5051 = vunpack.c.l.b16 %v4047
        %v5052 = vunpack.c.h.b16 %v4047
        %v5053 = vunpack.c.l.b16 %v4048
        %v5054 = vunpack.c.h.b16 %v4048
        %v5055 = vunpack.c.l.b16 %v4049
        %v5056 = vunpack.c.h.b16 %v4049
        %v5057 = vunpack.c.l.b16 %v4050
        %v5058 = vunpack.c.h.b16 %v4050
        %v5059 = vunpack.c.l.b16 %v4051
        %v5060 = vunpack.c.h.b16 %v4051
        %v5061 = vunpack.c.l.b16 %v4052
        %v5062 = vunpack.c.h.b16 %v4052
        %v5063 = vunpack.c.l.b16 %v4053
        %v5064 = vunpack.c.h.b16 %v4053
        %v5065 = vunpack.c.l.b16 %v4054
        %v5066 = vunpack.c.h.b16 %v4054
        %v5067 = vunpack.c.l.b16 %v4055
        %v5068 = vunpack.c.h.b16 %v4055
        %v5069 = vunpack.c.l.b16 %v4056
        %v5070 = vunpack.c.h.b16 %v4056
        %v5071 = vunpack.c.l.b16 %v4057
        %v5072 = vunpack.c.h.b16 %v4057
        %v5073 = vunpack.c.l.b16 %v4058
        %v5074 = vunpack.c.h.b16 %v4058
        %v5075 = vunpack.c.l.b16 %v4059
        %v5076 = vunpack.c.h.b16 %v4059
        %v5077 = vunpack.c.l.b16 %v4060
        %v5078 = vunpack.c.h.b16 %v4060
        %v5079 = vunpack.c.l.b16 %v4061
        %v5080 = vunpack.c.h.b16 %v4061
        %v5081 = vunpack.c.l.b16 %v4062
        %v5082 = vunpack.c.h.b16 %v4062
        %v5083 = vunpack.c.l.b16 %v4063
        %v5084 = vunpack.c.h.b16 %v4063
        %v5085 = vunpack.c.l.b16 %v4064
        %v5086 = vunpack.c.h.b16 %v4064
        %v5087 = vunpack.c.l.b16 %v4065
        %v5088 = vunpack.c.h.b16 %v4065
        %v5089 = vunpack.c.l.b16 %v4066
        %v5090 = vunpack.c.h.b16 %v4066
        %v5091 = vunpack.c.l.b16 %v4067
        %v5092 = vunpack.c.h.b16 %v4067
        %v5093 = vunpack.c.l.b16 %v4068
        %v5094 = vunpack.c.h.b16 %v4068
        %v5095 = vunpack.c.l.b16 %v4069
        %v5096 = vunpack.c.h.b16 %v4069
        %v5097 = vunpack.c.l.b16 %v4070
        %v5098 = vunpack.c.h.b16 %v4070
        %v5099 = vunpack.c.l.b16 %v4071
        %v5100 = vunpack.c.h.b16 %v4071
        %v5101 = vunpack.c.l.b16 %v4072
        %v5102 = vunpack.c.h.b16 %v4072
        %v5103 = vunpack.c.l.b16 %v4073
        %v5104 = vunpack.c.h.b16 %v4073
        %v5105 = vunpack.c.l.b16 %v4074
        %v5106 = vunpack.c.h.b16 %v4074
        %v5107 = vunpack.c.l.b16 %v4075
        %v5108 = vunpack.c.h.b16 %v4075
        %v5109 = vunpack.c.l.b16 %v4076
        %v5110 = vunpack.c.h.b16 %v4076
        %v5111 = vunpack.c.l.b16 %v4077
        %v5112 = vunpack.c.h.b16 %v4077
        %v5113 = vunpack.c.l.b16 %v4078
        %v5114 = vunpack.c.h.b16 %v4078
        %v5115 = vunpack.c.l.b16 %v4079
        %v5116 = vunpack.c.h.b16 %v4079
        %v5117 = vunpack.c.l.b16 %v4080
        %v5118 = vunpack.c.h.b16 %v4080
        %v5119 = vunpack.c.l.b16 %v4081
        %v5120 = vunpack.c.h.b16 %v4081
        %v5121 = vunpack.c.l.b16 %v4082
        %v5122 = vunpack.c.h.b16 %v4082
        %v5123 = vunpack.c.l.b16 %v4083
        %v5124 = vunpack.c.h.b16 %v4083
        %v5125 = vunpack.c.l.b16 %v4084
        %v5126 = vunpack.c.h.b16 %v4084
        %v5127 = vunpack.c.l.b16 %v4085
        %v5128 = vunpack.c.h.b16 %v4085
        %v5129 = vunpack.c.l.b16 %v4086
        %v5130 = vunpack.c.h.b16 %v4086
        %v5131 = vunpack.c.l.b16 %v4087
        %v5132 = vunpack.c.h.b16 %v4087
        %v5133 = vunpack.c.l.b16 %v4088
        %v5134 = vunpack.c.h.b16 %v4088
        %v5135 = vunpack.c.l.b16 %v4089
        %v5136 = vunpack.c.h.b16 %v4089
        %v5137 = vunpack.c.l.b16 %v4090
        %v5138 = vunpack.c.h.b16 %v4090
        %v5139 = vunpack.c.l.b16 %v4091
        %v5140 = vunpack.c.h.b16 %v4091
        %v5141 = vunpack.c.l.b16 %v4092
        %v5142 = vunpack.c.h.b16 %v4092
        %v5143 = vunpack.c.l.b16 %v4093
        %v5144 = vunpack.c.h.b16 %v4093
        %v5145 = vunpack.c.l.b16 %v4094
        %v5146 = vunpack.c.h.b16 %v4094
        %v5147 = vunpack.c.l.b16 %v4095
        %v5148 = vunpack.c.h.b16 %v4095
        %v5149 = vunpack.c.l.b16 %v4096
        %v5150 = vunpack.c.h.b16 %v4096
        %v5151 = vunpack.c.l.b16 %v4097
        %v5152 = vunpack.c.h.b16 %v4097
        %v5153 = vunpack.c.l.b16 %v4098
        %v5154 = vunpack.c.h.b16 %v4098
        %v5155 = vunpack.c.l.b16 %v4099
        %v5156 = vunpack.c.h.b16 %v4099
        %v5157 = vunpack.c.l.b16 %v4100
        %v5158 = vunpack.c.h.b16 %v4100
        %v5159 = vunpack.c.l.b16 %v4101
        %v5160 = vunpack.c.h.b16 %v4101
        %v5161 = vunpack.c.l.b16 %v4102
        %v5162 = vunpack.c.h.b16 %v4102
        %v5163 = vunpack.c.l.b16 %v4103
        %v5164 = vunpack.c.h.b16 %v4103
        %v5165 = vunpack.c.l.b16 %v4104
        %v5166 = vunpack.c.h.b16 %v4104
        %v5167 = vunpack.c.l.b16 %v4105
        %v5168 = vunpack.c.h.b16 %v4105
        %v5169 = vunpack.c.l.b16 %v4106
        %v5170 = vunpack.c.h.b16 %v4106
        %v5171 = vunpack.c.l.b16 %v4107
        %v5172 = vunpack.c.h.b16 %v4107
        %v5173 = vunpack.c.l.b16 %v4108
        %v5174 = vunpack.c.h.b16 %v4108
        %v5175 = vunpack.c.l.b16 %v4109
        %v5176 = vunpack.c.h.b16 %v4109
        %v5177 = vunpack.c.l.b16 %v4110
        %v5178 = vunpack.c.h.b16 %v4110
        %v5179 = vunpack.c.l.b16 %v4111
        %v5180 = vunpack.c.h.b16 %v4111
        %v5181 = vunpack.c.l.b16 %v4112
        %v5182 = vunpack.c.h.b16 %v4112
        %v5183 = vunpack.c.l.b16 %v4113
        %v5184 = vunpack.c.h.b16 %v4113
        %v5185 = vunpack.c.l.b16 %v4114
        %v5186 = vunpack.c.h.b16 %v4114
        %v5187 = vunpack.c.l.b16 %v4115
        %v5188 = vunpack.c.h.b16 %v4115
        %v5189 = vunpack.c.l.b16 %v4116
        %v5190 = vunpack.c.h.b16 %v4116
        %v5191 = vunpack.c.l.b16 %v4117
        %v5192 = vunpack.c.h.b16 %v4117
        %v5193 = vunpack.c.l.b16 %v4118
        %v5194 = vunpack.c.h.b16 %v4118
        %v5195 = vunpack.c.l.b16 %v4119
        %v5196 = vunpack.c.h.b16 %v4119
        %v5197 = vunpack.c.l.b16 %v4120
        %v5198 = vunpack.c.h.b16 %v4120
        %v5199 = vunpack.c.l.b16 %v4121
        %v5200 = vunpack.c.h.b16 %v4121
        %v5201 = vunpack.c.l.b16 %v4122
        %v5202 = vunpack.c.h.b16 %v4122
        %v5203 = vunpack.c.l.b16 %v4123
        %v5204 = vunpack.c.h.b16 %v4123
        %v5205 = vunpack.c.l.b16 %v4124
        %v5206 = vunpack.c.h.b16 %v4124
        %v5207 = vunpack.c.l.b16 %v4125
        %v5208 = vunpack.c.h.b16 %v4125
        %v5209 = vunpack.c.l.b16 %v4126
        %v5210 = vunpack.c.h.b16 %v4126
        %v5211 = vunpack.c.l.b16 %v4127
        %v5212 = vunpack.c.h.b16 %v4127
        %v5213 = vunpack.c.l.b16 %v4128
        %v5214 = vunpack.c.h.b16 %v4128
        %v5215 = vunpack.c.l.b16 %v4129
        %v5216 = vunpack.c.h.b16 %v4129
        %v5217 = vunpack.c.l.b16 %v4130
        %v5218 = vunpack.c.h.b16 %v4130
        %v5219 = vunpack.c.l.b16 %v4131
        %v5220 = vunpack.c.h.b16 %v4131
        %v5221 = vunpack.c.l.b16 %v4132
        %v5222 = vunpack.c.h.b16 %v4132
        %v5223 = vunpack.c.l.b16 %v4133
        %v5224 = vunpack.c.h.b16 %v4133
        %v5225 = vunpack.c.l.b16 %v4134
        %v5226 = vunpack.c.h.b16 %v4134
        %v5227 = vunpack.c.l.b16 %v4135
        %v5228 = vunpack.c.h.b16 %v4135
        %v5229 = vunpack.c.l.b16 %v4136
        %v5230 = vunpack.c.h.b16 %v4136
        %v5231 = vunpack.c.l.b16 %v4137
        %v5232 = vunpack.c.h.b16 %v4137
        %v5233 = vunpack.c.l.b16 %v4138
        %v5234 = vunpack.c.h.b16 %v4138
        %v5235 = vunpack.c.l.b16 %v4139
        %v5236 = vunpack.c.h.b16 %v4139
        %v5237 = vunpack.c.l.b16 %v4140
        %v5238 = vunpack.c.h.b16 %v4140
        %v5239 = vunpack.c.l.b16 %v4141
        %v5240 = vunpack.c.h.b16 %v4141
        %v5241 = vunpack.c.l.b16 %v4142
        %v5242 = vunpack.c.h.b16 %v4142
        %v5243 = vunpack.c.l.b16 %v4143
        %v5244 = vunpack.c.h.b16 %v4143
        %v5245 = vunpack.c.l.b16 %v4144
        %v5246 = vunpack.c.h.b16 %v4144
        %v5247 = vunpack.c.l.b16 %v4145
        %v5248 = vunpack.c.h.b16 %v4145
        %v5249 = vunpack.c.l.b16 %v4146
        %v5250 = vunpack.c.h.b16 %v4146
        %v5251 = vunpack.c.l.b16 %v4147
        %v5252 = vunpack.c.h.b16 %v4147
        %v5253 = vunpack.c.l.b16 %v4148
        %v5254 = vunpack.c.h.b16 %v4148
        %v5255 = vunpack.c.l.b16 %v4149
        %v5256 = vunpack.c.h.b16 %v4149
        %v5257 = vunpack.c.l.b16 %v4150
        %v5258 = vunpack.c.h.b16 %v4150
        %v5259 = vunpack.c.l.b16 %v4151
        %v5260 = vunpack.c.h.b16 %v4151
        %v5261 = vunpack.c.l.b16 %v4152
        %v5262 = vunpack.c.h.b16 %v4152
        %v5263 = vunpack.c.l.b16 %v4153
        %v5264 = vunpack.c.h.b16 %v4153
        %v5265 = vunpack.c.l.b16 %v4154
        %v5266 = vunpack.c.h.b16 %v4154
        %v5267 = vunpack.c.l.b16 %v4155
        %v5268 = vunpack.c.h.b16 %v4155
        %v5269 = vunpack.c.l.b16 %v4156
        %v5270 = vunpack.c.h.b16 %v4156
        %v5271 = vunpack.c.l.b16 %v4157
        %v5272 = vunpack.c.h.b16 %v4157
        %v5273 = vunpack.c.l.b16 %v4158
        %v5274 = vunpack.c.h.b16 %v4158
        %v5275 = vunpack.c.l.b16 %v4159
        %v5276 = vunpack.c.h.b16 %v4159
        %v5277 = vunpack.c.l.b16 %v4160
        %v5278 = vunpack.c.h.b16 %v4160
        %v5279 = vunpack.c.l.b16 %v4161
        %v5280 = vunpack.c.h.b16 %v4161
        %v5281 = vunpack.c.l.b16 %v4162
        %v5282 = vunpack.c.h.b16 %v4162
        %v5283 = vunpack.c.l.b16 %v4163
        %v5284 = vunpack.c.h.b16 %v4163
        %v5285 = vunpack.c.l.b16 %v4164
        %v5286 = vunpack.c.h.b16 %v4164
        %v5287 = vunpack.c.l.b16 %v4165
        %v5288 = vunpack.c.h.b16 %v4165
        %v5289 = vunpack.c.l.b16 %v4166
        %v5290 = vunpack.c.h.b16 %v4166
        %v5291 = vunpack.c.l.b16 %v4167
        %v5292 = vunpack.c.h.b16 %v4167
        %v5293 = vunpack.c.l.b16 %v4168
        %v5294 = vunpack.c.h.b16 %v4168
        %v5295 = vunpack.c.l.b16 %v4169
        %v5296 = vunpack.c.h.b16 %v4169
        %v5297 = vunpack.c.l.b16 %v4170
        %v5298 = vunpack.c.h.b16 %v4170
        %v5299 = vunpack.c.l.b16 %v4171
        %v5300 = vunpack.c.h.b16 %v4171
        %v5301 = vunpack.c.l.b16 %v4172
        %v5302 = vunpack.c.h.b16 %v4172
        %v5303 = vunpack.c.l.b16 %v4173
        %v5304 = vunpack.c.h.b16 %v4173
        %v5305 = vunpack.c.l.b16 %v4174
        %v5306 = vunpack.c.h.b16 %v4174
        %v5307 = vunpack.c.l.b16 %v4175
        %v5308 = vunpack.c.h.b16 %v4175
        %v5309 = vunpack.c.l.b16 %v4176
        %v5310 = vunpack.c.h.b16 %v4176
        %v5311 = vunpack.c.l.b16 %v4177
        %v5312 = vunpack.c.h.b16 %v4177
        %v5313 = vunpack.c.l.b16 %v4178
        %v5314 = vunpack.c.h.b16 %v4178
        %v5315 = vunpack.c.l.b16 %v4179
        %v5316 = vunpack.c.h.b16 %v4179
        %v5317 = vunpack.c.l.b16 %v4180
        %v5318 = vunpack.c.h.b16 %v4180
        %v5319 = vunpack.c.l.b16 %v4181
        %v5320 = vunpack.c.h.b16 %v4181
        %v5321 = vunpack.c.l.b16 %v4182
        %v5322 = vunpack.c.h.b16 %v4182
        %v5323 = vunpack.c.l.b16 %v4183
        %v5324 = vunpack.c.h.b16 %v4183
        %v5325 = vunpack.c.l.b16 %v4184
        %v5326 = vunpack.c.h.b16 %v4184
        %v5327 = vunpack.c.l.b16 %v4185
        %v5328 = vunpack.c.h.b16 %v4185
        %v5329 = vunpack.c.l.b16 %v4186
        %v5330 = vunpack.c.h.b16 %v4186
        %v5331 = vunpack.c.l.b16 %v4187
        %v5332 = vunpack.c.h.b16 %v4187
        %v5333 = vunpack.c.l.b16 %v4188
        %v5334 = vunpack.c.h.b16 %v4188
        %v5335 = vunpack.c.l.b16 %v4189
        %v5336 = vunpack.c.h.b16 %v4189
        %v5337 = vunpack.c.l.b16 %v4190
        %v5338 = vunpack.c.h.b16 %v4190
        %v5339 = vunpack.c.l.b16 %v4191
        %v5340 = vunpack.c.h.b16 %v4191
        %v5341 = vunpack.c.l.b16 %v4192
        %v5342 = vunpack.c.h.b16 %v4192
        %v5343 = vunpack.c.l.b16 %v4193
        %v5344 = vunpack.c.h.b16 %v4193
        %v5345 = vunpack.c.l.b16 %v4194
        %v5346 = vunpack.c.h.b16 %v4194
        %v5347 = vunpack.c.l.b16 %v4195
        %v5348 = vunpack.c.h.b16 %v4195
        %v5349 = vunpack.c.l.b16 %v4196
        %v5350 = vunpack.c.h.b16 %v4196
        %v5351 = vunpack.c.l.b16 %v4197
        %v5352 = vunpack.c.h.b16 %v4197
        %v5353 = vunpack.c.l.b16 %v4198
        %v5354 = vunpack.c.h.b16 %v4198
        %v5355 = vunpack.c.l.b16 %v4199
        %v5356 = vunpack.c.h.b16 %v4199
        %v5357 = vunpack.c.l.b16 %v4200
        %v5358 = vunpack.c.h.b16 %v4200
        %v5359 = vunpack.c.l.b16 %v4201
        %v5360 = vunpack.c.h.b16 %v4201
        %v5361 = vunpack.c.l.b16 %v4202
        %v5362 = vunpack.c.h.b16 %v4202
        %v5363 = vunpack.c.l.b16 %v4203
        %v5364 = vunpack.c.h.b16 %v4203
        %v5365 = vunpack.c.l.b16 %v4204
        %v5366 = vunpack.c.h.b16 %v4204
        %v5367 = vunpack.c.l.b16 %v4205
        %v5368 = vunpack.c.h.b16 %v4205
        %v5369 = vunpack.c.l.b16 %v4206
        %v5370 = vunpack.c.h.b16 %v4206
        %v5371 = vunpack.c.l.b16 %v4207
        %v5372 = vunpack.c.h.b16 %v4207
        %v5373 = vunpack.c.l.b16 %v4208
        %v5374 = vunpack.c.h.b16 %v4208
        %v5375 = vunpack.c.l.b16 %v4209
        %v5376 = vunpack.c.h.b16 %v4209
        %v5377 = vunpack.c.l.b16 %v4210
        %v5378 = vunpack.c.h.b16 %v4210
        %v5379 = vunpack.c.l.b16 %v4211
        %v5380 = vunpack.c.h.b16 %v4211
        %v5381 = vunpack.c.l.b16 %v4212
        %v5382 = vunpack.c.h.b16 %v4212
        %v5383 = vunpack.c.l.b16 %v4213
        %v5384 = vunpack.c.h.b16 %v4213
        %v5385 = vunpack.c.l.b16 %v4214
        %v5386 = vunpack.c.h.b16 %v4214
        %v5387 = vunpack.c.l.b16 %v4215
        %v5388 = vunpack.c.h.b16 %v4215
        %v5389 = vunpack.c.l.b16 %v4216
        %v5390 = vunpack.c.h.b16 %v4216
        %v5391 = vunpack.c.l.b16 %v4217
        %v5392 = vunpack.c.h.b16 %v4217
        %v5393 = vunpack.c.l.b16 %v4218
        %v5394 = vunpack.c.h.b16 %v4218
        %v5395 = vunpack.c.l.b16 %v4219
        %v5396 = vunpack.c.h.b16 %v4219
        %v5397 = vunpack.c.l.b16 %v4220
        %v5398 = vunpack.c.h.b16 %v4220
        %v5399 = vunpack.c.l.b16 %v4221
        %v5400 = vunpack.c.h.b16 %v4221
        %v5401 = vunpack.c.l.b16 %v4222
        %v5402 = vunpack.c.h.b16 %v4222
        %v5403 = vunpack.c.l.b16 %v4223
        %v5404 = vunpack.c.h.b16 %v4223
        %v5405 = vunpack.c.l.b16 %v4224
        %v5406 = vunpack.c.h.b16 %v4224
        %v5407 = vunpack.c.l.b16 %v4225
        %v5408 = vunpack.c.h.b16 %v4225
        %v5409 = vunpack.c.l.b16 %v4226
        %v5410 = vunpack.c.h.b16 %v4226
        %v5411 = vunpack.c.l.b16 %v4227
        %v5412 = vunpack.c.h.b16 %v4227
        %v5413 = vunpack.c.l.b16 %v4228
        %v5414 = vunpack.c.h.b16 %v4228
        %v5415 = vunpack.c.l.b16 %v4229
        %v5416 = vunpack.c.h.b16 %v4229
        %v5417 = vunpack.c.l.b16 %v4230
        %v5418 = vunpack.c.h.b16 %v4230
        %v5419 = vunpack.c.l.b16 %v4231
        %v5420 = vunpack.c.h.b16 %v4231
        %v5421 = vunpack.c.l.b16 %v4232
        %v5422 = vunpack.c.h.b16 %v4232
        %v5423 = vunpack.c.l.b16 %v4233
        %v5424 = vunpack.c.h.b16 %v4233
        %v5425 = vunpack.c.l.b16 %v4234
        %v5426 = vunpack.c.h.b16 %v4234
        %v5427 = vunpack.c.l.b16 %v4235
        %v5428 = vunpack.c.h.b16 %v4235
        %v5429 = vunpack.c.l.b16 %v4236
        %v5430 = vunpack.c.h.b16 %v4236
        %v5431 = vunpack.c.l.b16 %v4237
        %v5432 = vunpack.c.h.b16 %v4237
        %v5433 = vunpack.c.l.b16 %v4238
        %v5434 = vunpack.c.h.b16 %v4238
        %v5435 = vunpack.c.l.b16 %v4239
        %v5436 = vunpack.c.h.b16 %v4239
        %v5437 = vunpack.c.l.b16 %v4240
        %v5438 = vunpack.c.h.b16 %v4240
        %v5439 = vunpack.c.l.b16 %v4241
        %v5440 = vunpack.c.h.b16 %v4241
        %v5441 = vunpack.c.l.b16 %v4242
        %v5442 = vunpack.c.h.b16 %v4242
        %v5443 = vunpack.c.l.b16 %v4243
        %v5444 = vunpack.c.h.b16 %v4243
        %v5445 = vunpack.c.l.b16 %v4244
        %v5446 = vunpack.c.h.b16 %v4244
        %v5447 = vunpack.c.l.b16 %v4245
        %v5448 = vunpack.c.h.b16 %v4245
        %v5449 = vunpack.c.l.b16 %v4246
        %v5450 = vunpack.c.h.b16 %v4246
        %v5451 = vunpack.c.l.b16 %v4247
        %v5452 = vunpack.c.h.b16 %v4247
        %v5453 = vunpack.c.l.b16 %v4248
        %v5454 = vunpack.c.h.b16 %v4248
        %v5455 = vunpack.c.l.b16 %v4249
        %v5456 = vunpack.c.h.b16 %v4249
        %v5457 = vunpack.c.l.b16 %v4250
        %v5458 = vunpack.c.h.b16 %v4250
        %v5459 = vunpack.c.l.b16 %v4251
        %v5460 = vunpack.c.h.b16 %v4251
        %v5461 = vunpack.c.l.b16 %v4252
        %v5462 = vunpack.c.h.b16 %v4252
        %v5463 = vunpack.c.l.b16 %v4253
        %v5464 = vunpack.c.h.b16 %v4253
        %v5465 = vunpack.c.l.b16 %v4254
        %v5466 = vunpack.c.h.b16 %v4254
        %v5467 = vunpack.c.l.b16 %v4255
        %v5468 = vunpack.c.h.b16 %v4255
        %v5469 = vunpack.c.l.b16 %v4256
        %v5470 = vunpack.c.h.b16 %v4256
        %v5471 = vunpack.c.l.b16 %v4257
        %v5472 = vunpack.c.h.b16 %v4257
        %v5473 = vunpack.c.l.b16 %v4258
        %v5474 = vunpack.c.h.b16 %v4258
        %v5475 = vunpack.c.l.b16 %v4259
        %v5476 = vunpack.c.h.b16 %v4259
        %v5477 = vunpack.c.l.b16 %v4260
        %v5478 = vunpack.c.h.b16 %v4260
        %v5479 = vunpack.c.l.b16 %v4261
        %v5480 = vunpack.c.h.b16 %v4261
        %v5481 = vunpack.c.l.b16 %v4262
        %v5482 = vunpack.c.h.b16 %v4262
        %v5483 = vunpack.c.l.b16 %v4263
        %v5484 = vunpack.c.h.b16 %v4263
        %v5485 = vunpack.c.l.b16 %v4264
        %v5486 = vunpack.c.h.b16 %v4264
        %v5487 = vunpack.c.l.b16 %v4265
        %v5488 = vunpack.c.h.b16 %v4265
        %v5489 = vunpack.c.l.b16 %v4266
        %v5490 = vunpack.c.h.b16 %v4266
        %v5491 = vunpack.c.l.b16 %v4267
        %v5492 = vunpack.c.h.b16 %v4267
        %v5493 = vunpack.c.l.b16 %v4268
        %v5494 = vunpack.c.h.b16 %v4268
        %v5495 = vunpack.c.l.b16 %v4269
        %v5496 = vunpack.c.h.b16 %v4269
        %v5497 = vunpack.c.l.b16 %v4270
        %v5498 = vunpack.c.h.b16 %v4270
        %v5499 = vunpack.c.l.b16 %v4271
        %v5500 = vunpack.c.h.b16 %v4271
        %v5501 = vunpack.c.l.b16 %v4272
        %v5502 = vunpack.c.h.b16 %v4272
        %v5503 = vunpack.c.l.b16 %v4273
        %v5504 = vunpack.c.h.b16 %v4273
        %v5505 = vunpack.c.l.b16 %v4274
        %v5506 = vunpack.c.h.b16 %v4274
        %v5507 = vunpack.c.l.b16 %v4275
        %v5508 = vunpack.c.h.b16 %v4275
        %v5509 = vunpack.c.l.b16 %v4276
        %v5510 = vunpack.c.h.b16 %v4276
        %v5511 = vunpack.c.l.b16 %v4277
        %v5512 = vunpack.c.h.b16 %v4277
        %v5513 = vunpack.c.l.b16 %v4278
        %v5514 = vunpack.c.h.b16 %v4278
        %v5515 = vunpack.c.l.b16 %v4279
        %v5516 = vunpack.c.h.b16 %v4279
        %v5517 = vunpack.c.l.b16 %v4280
        %v5518 = vunpack.c.h.b16 %v4280
        %v5519 = vunpack.c.l.b16 %v4281
        %v5520 = vunpack.c.h.b16 %v4281
        %v5521 = vunpack.c.l.b16 %v4282
        %v5522 = vunpack.c.h.b16 %v4282
        %v5523 = vunpack.c.l.b16 %v4283
        %v5524 = vunpack.c.h.b16 %v4283
        %v5525 = vunpack.c.l.b16 %v4284
        %v5526 = vunpack.c.h.b16 %v4284
        %v5527 = vunpack.c.l.b16 %v4285
        %v5528 = vunpack.c.h.b16 %v4285
        %v5529 = vunpack.c.l.b16 %v4286
        %v5530 = vunpack.c.h.b16 %v4286
        %v5531 = vunpack.c.l.b16 %v4287
        %v5532 = vunpack.c.h.b16 %v4287
        %v5533 = vunpack.c.l.b16 %v4288
        %v5534 = vunpack.c.h.b16 %v4288
        %v5535 = vunpack.c.l.b16 %v4289
        %v5536 = vunpack.c.h.b16 %v4289
        %v5537 = vunpack.c.l.b16 %v4290
        %v5538 = vunpack.c.h.b16 %v4290
        %v5539 = vunpack.c.l.b16 %v4291
        %v5540 = vunpack.c.h.b16 %v4291
        %v5541 = vunpack.c.l.b16 %v4292
        %v5542 = vunpack.c.h.b16 %v4292
        %v5543 = vunpack.c.l.b16 %v4293
        %v5544 = vunpack.c.h.b16 %v4293
        %v5545 = vunpack.c.l.b16 %v4294
        %v5546 = vunpack.c.h.b16 %v4294
        %v5547 = vunpack.c.l.b16 %v4295
        %v5548 = vunpack.c.h.b16 %v4295
        %v5549 = vunpack.c.l.b16 %v4296
        %v5550 = vunpack.c.h.b16 %v4296
        %v5551 = vunpack.c.l.b16 %v4297
        %v5552 = vunpack.c.h.b16 %v4297
        %v5553 = vunpack.c.l.b16 %v4298
        %v5554 = vunpack.c.h.b16 %v4298
        %v5555 = vunpack.c.l.b16 %v4299
        %v5556 = vunpack.c.h.b16 %v4299
        %v5557 = vunpack.c.l.b16 %v4300
        %v5558 = vunpack.c.h.b16 %v4300
        %v5559 = vunpack.c.l.b16 %v4301
        %v5560 = vunpack.c.h.b16 %v4301
        %v5561 = vunpack.c.l.b16 %v4302
        %v5562 = vunpack.c.h.b16 %v4302
        %v5563 = vunpack.c.l.b16 %v4303
        %v5564 = vunpack.c.h.b16 %v4303
        %v5565 = vunpack.c.l.b16 %v4304
        %v5566 = vunpack.c.h.b16 %v4304
        %v5567 = vunpack.c.l.b16 %v4305
        %v5568 = vunpack.c.h.b16 %v4305
        %v5569 = vunpack.c.l.b16 %v4306
        %v5570 = vunpack.c.h.b16 %v4306
        %v5571 = vunpack.c.l.b16 %v4307
        %v5572 = vunpack.c.h.b16 %v4307
        %v5573 = vunpack.c.l.b16 %v4308
        %v5574 = vunpack.c.h.b16 %v4308
        %v5575 = vunpack.c.l.b16 %v4309
        %v5576 = vunpack.c.h.b16 %v4309
        %v5577 = vunpack.c.l.b16 %v4310
        %v5578 = vunpack.c.h.b16 %v4310
        %v5579 = vunpack.c.l.b16 %v4311
        %v5580 = vunpack.c.h.b16 %v4311
        %v5581 = vunpack.c.l.b16 %v4312
        %v5582 = vunpack.c.h.b16 %v4312
        %v5583 = vunpack.c.l.b16 %v4313
        %v5584 = vunpack.c.h.b16 %v4313
        %v5585 = vunpack.c.l.b16 %v4314
        %v5586 = vunpack.c.h.b16 %v4314
        %v5587 = vunpack.c.l.b16 %v4315
        %v5588 = vunpack.c.h.b16 %v4315
        %v5589 = vunpack.c.l.b16 %v4316
        %v5590 = vunpack.c.h.b16 %v4316
        %v5591 = vunpack.c.l.b16 %v4317
        %v5592 = vunpack.c.h.b16 %v4317
        %v5593 = vunpack.c.l.b16 %v4318
        %v5594 = vunpack.c.h.b16 %v4318
        %v5595 = vunpack.c.l.b16 %v4319
        %v5596 = vunpack.c.h.b16 %v4319
        %v5597 = vunpack.c.l.b16 %v4320
        %v5598 = vunpack.c.h.b16 %v4320
        %v5599 = vunpack.c.l.b16 %v4321
        %v5600 = vunpack.c.h.b16 %v4321
        %v5601 = vunpack.c.l.b16 %v4322
        %v5602 = vunpack.c.h.b16 %v4322
        %v5603 = vunpack.c.l.b16 %v4323
        %v5604 = vunpack.c.h.b16 %v4323
        %v5605 = vunpack.c.l.b16 %v4324
        %v5606 = vunpack.c.h.b16 %v4324
        %v5607 = vunpack.c.l.b16 %v4325
        %v5608 = vunpack.c.h.b16 %v4325
        %v5609 = vunpack.c.l.b16 %v4326
        %v5610 = vunpack.c.h.b16 %v4326
        %v5611 = vunpack.c.l.b16 %v4327
        %v5612 = vunpack.c.h.b16 %v4327
        %v5613 = vunpack.c.l.b16 %v4328
        %v5614 = vunpack.c.h.b16 %v4328
        %v5615 = vunpack.c.l.b16 %v4329
        %v5616 = vunpack.c.h.b16 %v4329
        %v5617 = vunpack.c.l.b16 %v4330
        %v5618 = vunpack.c.h.b16 %v4330
        %v5619 = vunpack.c.l.b16 %v4331
        %v5620 = vunpack.c.h.b16 %v4331
        %v5621 = vunpack.c.l.b16 %v4332
        %v5622 = vunpack.c.h.b16 %v4332
        %v5623 = vunpack.c.l.b16 %v4333
        %v5624 = vunpack.c.h.b16 %v4333
        %v5625 = vunpack.c.l.b16 %v4334
        %v5626 = vunpack.c.h.b16 %v4334
        %v5627 = vunpack.c.l.b16 %v4335
        %v5628 = vunpack.c.h.b16 %v4335
        %v5629 = vunpack.c.l.b16 %v4336
        %v5630 = vunpack.c.h.b16 %v4336
        %v5631 = vunpack.c.l.b16 %v4337
        %v5632 = vunpack.c.h.b16 %v4337
        %v5633 = vunpack.c.l.b16 %v4338
        %v5634 = vunpack.c.h.b16 %v4338
        %v5635 = vunpack.c.l.b16 %v4339
        %v5636 = vunpack.c.h.b16 %v4339
        %v5637 = vunpack.c.l.b16 %v4340
        %v5638 = vunpack.c.h.b16 %v4340
        %v5639 = vunpack.c.l.b16 %v4341
        %v5640 = vunpack.c.h.b16 %v4341
        %v5641 = vunpack.c.l.b16 %v4342
        %v5642 = vunpack.c.h.b16 %v4342
        %v5643 = vunpack.c.l.b16 %v4343
        %v5644 = vunpack.c.h.b16 %v4343
        %v5645 = vunpack.c.l.b16 %v4344
        %v5646 = vunpack.c.h.b16 %v4344
        %v5647 = vunpack.c.l.b16 %v4345
        %v5648 = vunpack.c.h.b16 %v4345
        %v5649 = vunpack.c.l.b16 %v4346
        %v5650 = vunpack.c.h.b16 %v4346
        %v5651 = vunpack.c.l.b16 %v4347
        %v5652 = vunpack.c.h.b16 %v4347
        %v5653 = vunpack.c.l.b16 %v4348
        %v5654 = vunpack.c.h.b16 %v4348
        %v5655 = vunpack.c.l.b16 %v4349
        %v5656 = vunpack.c.h.b16 %v4349
        %v5657 = vunpack.c.l.b16 %v4350
        %v5658 = vunpack.c.h.b16 %v4350
        %v5659 = vunpack.c.l.b16 %v4351
        %v5660 = vunpack.c.h.b16 %v4351
        %v5661 = vunpack.c.l.b16 %v4352
        %v5662 = vunpack.c.h.b16 %v4352
        %v5663 = vunpack.c.l.b16 %v4353
        %v5664 = vunpack.c.h.b16 %v4353
        %v5665 = vunpack.c.l.b16 %v4354
        %v5666 = vunpack.c.h.b16 %v4354
        %v5667 = vunpack.c.l.b16 %v4355
        %v5668 = vunpack.c.h.b16 %v4355
        %v5669 = vunpack.c.l.b16 %v4356
        %v5670 = vunpack.c.h.b16 %v4356
        %v5671 = vpack.c.b16 %v4801, %v4799
        %v5672 = vpack.c.b16 %v4802, %v4800
        %v5673 = vpack.c.b16 %v4805, %v4803
        %v5674 = vpack.c.b16 %v4806, %v4804
        %v5675 = vpack.c.b16 %v4809, %v4807
        %v5676 = vpack.c.b16 %v4810, %v4808
        %v5677 = vpack.c.b16 %v4813, %v4811
        %v5678 = vpack.c.b16 %v4814, %v4812
        %v5679 = vpack.c.b16 %v4817, %v4815
        %v5680 = vpack.c.b16 %v4818, %v4816
        %v5681 = vpack.c.b16 %v4821, %v4819
        %v5682 = vpack.c.b16 %v4822, %v4820
        %v5683 = vpack.c.b16 %v4825, %v4823
        %v5684 = vpack.c.b16 %v4826, %v4824
        %v5685 = vpack.c.b16 %v4829, %v4827
        %v5686 = vpack.c.b16 %v4830, %v4828
        %v5687 = vpack.c.b16 %v4833, %v4831
        %v5688 = vpack.c.b16 %v4834, %v4832
        %v5689 = vpack.c.b16 %v4837, %v4835
        %v5690 = vpack.c.b16 %v4838, %v4836
        %v5691 = vpack.c.b16 %v4841, %v4839
        %v5692 = vpack.c.b16 %v4842, %v4840
        %v5693 = vpack.c.b16 %v4845, %v4843
        %v5694 = vpack.c.b16 %v4846, %v4844
        %v5695 = vpack.c.b16 %v4849, %v4847
        %v5696 = vpack.c.b16 %v4850, %v4848
        %v5697 = vpack.c.b16 %v4853, %v4851
        %v5698 = vpack.c.b16 %v4854, %v4852
        %v5699 = vpack.c.b16 %v4857, %v4855
        %v5700 = vpack.c.b16 %v4858, %v4856
        %v5701 = vpack.c.b16 %v4861, %v4859
        %v5702 = vpack.c.b16 %v4862, %v4860
        %v5703 = vpack.c.b16 %v4865, %v4863
        %v5704 = vpack.c.b16 %v4866, %v4864
        %v5705 = vpack.c.b16 %v4869, %v4867
        %v5706 = vpack.c.b16 %v4870, %v4868
        %v5707 = vpack.c.b16 %v4873, %v4871
        %v5708 = vpack.c.b16 %v4874, %v4872
        %v5709 = vpack.c.b16 %v4877, %v4875
        %v5710 = vpack.c.b16 %v4878, %v4876
        %v5711 = vpack.c.b16 %v4881, %v4879
        %v5712 = vpack.c.b16 %v4882, %v4880
        %v5713 = vpack.c.b16 %v4885, %v4883
        %v5714 = vpack.c.b16 %v4886, %v4884
        %v5715 = vpack.c.b16 %v4889, %v4887
        %v5716 = vpack.c.b16 %v4890, %v4888
        %v5717 = vpack.c.b16 %v4893, %v4891
        %v5718 = vpack.c.b16 %v4894, %v4892
        %v5719 = vpack.c.b16 %v4897, %v4895
        %v5720 = vpack.c.b16 %v4898, %v4896
        %v5721 = vpack.c.b16 %v4901, %v4899
        %v5722 = vpack.c.b16 %v4902, %v4900
        %v5723 = vpack.c.b16 %v4905, %v4903
        %v5724 = vpack.c.b16 %v4906, %v4904
        %v5725 = vpack.c.b16 %v4909, %v4907
        %v5726 = vpack.c.b16 %v4910, %v4908
        %v5727 = vpack.c.b16 %v4913, %v4911
        %v5728 = vpack.c.b16 %v4914, %v4912
        %v5729 = vpack.c.b16 %v4917, %v4915
        %v5730 = vpack.c.b16 %v4918, %v4916
        %v5731 = vpack.c.b16 %v4921, %v4919
        %v5732 = vpack.c.b16 %v4922, %v4920
        %v5733 = vpack.c.b16 %v4925, %v4923
        %v5734 = vpack.c.b16 %v4926, %v4924
        %v5735 = vpack.c.b16 %v4929, %v4927
        %v5736 = vpack.c.b16 %v4930, %v4928
        %v5737 = vpack.c.b16 %v4933, %v4931
        %v5738 = vpack.c.b16 %v4934, %v4932
        %v5739 = vpack.c.b16 %v4937, %v4935
        %v5740 = vpack.c.b16 %v4938, %v4936
        %v5741 = vpack.c.b16 %v4941, %v4939
        %v5742 = vpack.c.b16 %v4942, %v4940
        %v5743 = vpack.c.b16 %v4945, %v4943
        %v5744 = vpack.c.b16 %v4946, %v4944
        %v5745 = vpack.c.b16 %v4949, %v4947
        %v5746 = vpack.c.b16 %v4950, %v4948
        %v5747 = vpack.c.b16 %v4953, %v4951
        %v5748 = vpack.c.b16 %v4954, %v4952
        %v5749 = vpack.c.b16 %v4957, %v4955
        %v5750 = vpack.c.b16 %v4958, %v4956
        %v5751 = vpack.c.b16 %v4961, %v4959
        %v5752 = vpack.c.b16 %v4962, %v4960
        %v5753 = vpack.c.b16 %v4965, %v4963
        %v5754 = vpack.c.b16 %v4966, %v4964
        %v5755 = vpack.c.b16 %v4969, %v4967
        %v5756 = vpack.c.b16 %v4970, %v4968
        %v5757 = vpack.c.b16 %v4973, %v4971
        %v5758 = vpack.c.b16 %v4974, %v4972
        %v5759 = vpack.c.b16 %v4977, %v4975
        %v5760 = vpack.c.b16 %v4978, %v4976
        %v5761 = vpack.c.b16 %v4981, %v4979
        %v5762 = vpack.c.b16 %v4982, %v4980
        %v5763 = vpack.c.b16 %v4985, %v4983
        %v5764 = vpack.c.b16 %v4986, %v4984
        %v5765 = vpack.c.b16 %v4989, %v4987
        %v5766 = vpack.c.b16 %v4990, %v4988
        %v5767 = vpack.c.b16 %v4993, %v4991
        %v5768 = vpack.c.b16 %v4994, %v4992
        %v5769 = vpack.c.b16 %v4997, %v4995
        %v5770 = vpack.c.b16 %v4998, %v4996
        %v5771 = vpack.c.b16 %v5001, %v4999
        %v5772 = vpack.c.b16 %v5002, %v5000
        %v5773 = vpack.c.b16 %v5005, %v5003
        %v5774 = vpack.c.b16 %v5006, %v5004
        %v5775 = vpack.c.b16 %v5009, %v5007
        %v5776 = vpack.c.b16 %v5010, %v5008
        %v5777 = vpack.c.b16 %v5013, %v5011
        %v5778 = vpack.c.b16 %v5014, %v5012
        %v5779 = vpack.c.b16 %v5017, %v5015
        %v5780 = vpack.c.b16 %v5018, %v5016
        %v5781 = vpack.c.b16 %v5021, %v5019
        %v5782 = vpack.c.b16 %v5022, %v5020
        %v5783 = vpack.c.b16 %v5025, %v5023
        %v5784 = vpack.c.b16 %v5026, %v5024
        %v5785 = vpack.c.b16 %v5029, %v5027
        %v5786 = vpack.c.b16 %v5030, %v5028
        %v5787 = vpack.c.b16 %v5033, %v5031
        %v5788 = vpack.c.b16 %v5034, %v5032
        %v5789 = vpack.c.b16 %v5037, %v5035
        %v5790 = vpack.c.b16 %v5038, %v5036
        %v5791 = vpack.c.b16 %v5041, %v5039
        %v5792 = vpack.c.b16 %v5042, %v5040
        %v5793 = vpack.c.b16 %v5045, %v5043
        %v5794 = vpack.c.b16 %v5046, %v5044
        %v5795 = vpack.c.b16 %v5049, %v5047
        %v5796 = vpack.c.b16 %v5050, %v5048
        %v5797 = vpack.c.b16 %v5053, %v5051
        %v5798 = vpack.c.b16 %v5054, %v5052
        %v5799 = vpack.c.b16 %v5057, %v5055
        %v5800 = vpack.c.b16 %v5058, %v5056
        %v5801 = vpack.c.b16 %v5061, %v5059
        %v5802 = vpack.c.b16 %v5062, %v5060
        %v5803 = vpack.c.b16 %v5065, %v5063
        %v5804 = vpack.c.b16 %v5066, %v5064
        %v5805 = vpack.c.b16 %v5069, %v5067
        %v5806 = vpack.c.b16 %v5070, %v5068
        %v5807 = vpack.c.b16 %v5073, %v5071
        %v5808 = vpack.c.b16 %v5074, %v5072
        %v5809 = vpack.c.b16 %v5077, %v5075
        %v5810 = vpack.c.b16 %v5078, %v5076
        %v5811 = vpack.c.b16 %v5081, %v5079
        %v5812 = vpack.c.b16 %v5082, %v5080
        %v5813 = vpack.c.b16 %v5085, %v5083
        %v5814 = vpack.c.b16 %v5086, %v5084
        %v5815 = vpack.c.b16 %v5089, %v5087
        %v5816 = vpack.c.b16 %v5090, %v5088
        %v5817 = vpack.c.b16 %v5093, %v5091
        %v5818 = vpack.c.b16 %v5094, %v5092
        %v5819 = vpack.c.b16 %v5097, %v5095
        %v5820 = vpack.c.b16 %v5098, %v5096
        %v5821 = vpack.c.b16 %v5101, %v5099
        %v5822 = vpack.c.b16 %v5102, %v5100
        %v5823 = vpack.c.b16 %v5105, %v5103
        %v5824 = vpack.c.b16 %v5106, %v5104
        %v5825 = vpack.c.b16 %v5109, %v5107
        %v5826 = vpack.c.b16 %v5110, %v5108
        %v5827 = vpack.c.b16 %v5113, %v5111
        %v5828 = vpack.c.b16 %v5114, %v5112
        %v5829 = vpack.c.b16 %v5117, %v5115
        %v5830 = vpack.c.b16 %v5118, %v5116
        %v5831 = vpack.c.b16 %v5121, %v5119
        %v5832 = vpack.c.b16 %v5122, %v5120
        %v5833 = vpack.c.b16 %v5125, %v5123
        %v5834 = vpack.c.b16 %v5126, %v5124
        %v5835 = vpack.c.b16 %v5129, %v5127
        %v5836 = vpack.c.b16 %v5130, %v5128
        %v5837 = vpack.c.b16 %v5133, %v5131
        %v5838 = vpack.c.b16 %v5134, %v5132
        %v5839 = vpack.c.b16 %v5137, %v5135
        %v5840 = vpack.c.b16 %v5138, %v5136
        %v5841 = vpack.c.b16 %v5141, %v5139
        %v5842 = vpack.c.b16 %v5142, %v5140
        %v5843 = vpack.c.b16 %v5145, %v5143
        %v5844 = vpack.c.b16 %v5146, %v5144
        %v5845 = vpack.c.b16 %v5149, %v5147
        %v5846 = vpack.c.b16 %v5150, %v5148
        %v5847 = vpack.c.b16 %v5153, %v5151
        %v5848 = vpack.c.b16 %v5154, %v5152
        %v5849 = vpack.c.b16 %v5157, %v5155
        %v5850 = vpack.c.b16 %v5158, %v5156
        %v5851 = vpack.c.b16 %v5161, %v5159
        %v5852 = vpack.c.b16 %v5162, %v5160
        %v5853 = vpack.c.b16 %v5165, %v5163
        %v5854 = vpack.c.b16 %v5166, %v5164
        %v5855 = vpack.c.b16 %v5169, %v5167
        %v5856 = vpack.c.b16 %v5170, %v5168
        %v5857 = vpack.c.b16 %v5173, %v5171
        %v5858 = vpack.c.b16 %v5174, %v5172
        %v5859 = vpack.c.b16 %v5177, %v5175
        %v5860 = vpack.c.b16 %v5178, %v5176
        %v5861 = vpack.c.b16 %v5181, %v5179
        %v5862 = vpack.c.b16 %v5182, %v5180
        %v5863 = vpack.c.b16 %v5185, %v5183
        %v5864 = vpack.c.b16 %v5186, %v5184
        %v5865 = vpack.c.b16 %v5189, %v5187
        %v5866 = vpack.c.b16 %v5190, %v5188
        %v5867 = vpack.c.b16 %v5193, %v5191
        %v5868 = vpack.c.b16 %v5194, %v5192
        %v5869 = vpack.c.b16 %v5197, %v5195
        %v5870 = vpack.c.b16 %v5198, %v5196
        %v5871 = vpack.c.b16 %v5201, %v5199
        %v5872 = vpack.c.b16 %v5202, %v5200
        %v5873 = vpack.c.b16 %v5205, %v5203
        %v5874 = vpack.c.b16 %v5206, %v5204
        %v5875 = vpack.c.b16 %v5209, %v5207
        %v5876 = vpack.c.b16 %v5210, %v5208
        %v5877 = vpack.c.b16 %v5213, %v5211
        %v5878 = vpack.c.b16 %v5214, %v5212
        %v5879 = vpack.c.b16 %v5217, %v5215
        %v5880 = vpack.c.b16 %v5218, %v5216
        %v5881 = vpack.c.b16 %v5221, %v5219
        %v5882 = vpack.c.b16 %v5222, %v5220
        %v5883 = vpack.c.b16 %v5225, %v5223
        %v5884 = vpack.c.b16 %v5226, %v5224
        %v5885 = vpack.c.b16 %v5229, %v5227
        %v5886 = vpack.c.b16 %v5230, %v5228
        %v5887 = vpack.c.b16 %v5233, %v5231
        %v5888 = vpack.c.b16 %v5234, %v5232
        %v5889 = vpack.c.b16 %v5237, %v5235
        %v5890 = vpack.c.b16 %v5238, %v5236
        %v5891 = vpack.c.b16 %v5241, %v5239
        %v5892 = vpack.c.b16 %v5242, %v5240
        %v5893 = vpack.c.b16 %v5245, %v5243
        %v5894 = vpack.c.b16 %v5246, %v5244
        %v5895 = vpack.c.b16 %v5249, %v5247
        %v5896 = vpack.c.b16 %v5250, %v5248
        %v5897 = vpack.c.b16 %v5253, %v5251
        %v5898 = vpack.c.b16 %v5254, %v5252
        %v5899 = vpack.c.b16 %v5257, %v5255
        %v5900 = vpack.c.b16 %v5258, %v5256
        %v5901 = vpack.c.b16 %v5261, %v5259
        %v5902 = vpack.c.b16 %v5262, %v5260
        %v5903 = vpack.c.b16 %v5265, %v5263
        %v5904 = vpack.c.b16 %v5266, %v5264
        %v5905 = vpack.c.b16 %v5269, %v5267
        %v5906 = vpack.c.b16 %v5270, %v5268
        %v5907 = vpack.c.b16 %v5273, %v5271
        %v5908 = vpack.c.b16 %v5274, %v5272
        %v5909 = vpack.c.b16 %v5277, %v5275
        %v5910 = vpack.c.b16 %v5278, %v5276
        %v5911 = vpack.c.b16 %v5281, %v5279
        %v5912 = vpack.c.b16 %v5282, %v5280
        %v5913 = vpack.c.b16 %v5285, %v5283
        %v5914 = vpack.c.b16 %v5286, %v5284
        %v5915 = vpack.c.b16 %v5289, %v5287
        %v5916 = vpack.c.b16 %v5290, %v5288
        %v5917 = vpack.c.b16 %v5293, %v5291
        %v5918 = vpack.c.b16 %v5294, %v5292
        %v5919 = vpack.c.b16 %v5297, %v5295
        %v5920 = vpack.c.b16 %v5298, %v5296
        %v5921 = vpack.c.b16 %v5301, %v5299
        %v5922 = vpack.c.b16 %v5302, %v5300
        %v5923 = vpack.c.b16 %v5305, %v5303
        %v5924 = vpack.c.b16 %v5306, %v5304
        %v5925 = vpack.c.b16 %v5309, %v5307
        %v5926 = vpack.c.b16 %v5310, %v5308
        %v5927 = vpack.c.b16 %v5313, %v5311
        %v5928 = vpack.c.b16 %v5314, %v5312
        %v5929 = vpack.c.b16 %v5317, %v5315
        %v5930 = vpack.c.b16 %v5318, %v5316
        %v5931 = vpack.c.b16 %v5321, %v5319
        %v5932 = vpack.c.b16 %v5322, %v5320
        %v5933 = vpack.c.b16 %v5325, %v5323
        %v5934 = vpack.c.b16 %v5326, %v5324
        %v5935 = vpack.c.b16 %v5329, %v5327
        %v5936 = vpack.c.b16 %v5330, %v5328
        %v5937 = vpack.c.b16 %v5333, %v5331
        %v5938 = vpack.c.b16 %v5334, %v5332
        %v5939 = vpack.c.b16 %v5337, %v5335
        %v5940 = vpack.c.b16 %v5338, %v5336
        %v5941 = vpack.c.b16 %v5341, %v5339
        %v5942 = vpack.c.b16 %v5342, %v5340
        %v5943 = vpack.c.b16 %v5345, %v5343
        %v5944 = vpack.c.b16 %v5346, %v5344
        %v5945 = vpack.c.b16 %v5349, %v5347
        %v5946 = vpack.c.b16 %v5350, %v5348
        %v5947 = vpack.c.b16 %v5353, %v5351
        %v5948 = vpack.c.b16 %v5354, %v5352
        %v5949 = vpack.c.b16 %v5357, %v5355
        %v5950 = vpack.c.b16 %v5358, %v5356
        %v5951 = vpack.c.b16 %v5361, %v5359
        %v5952 = vpack.c.b16 %v5362, %v5360
        %v5953 = vpack.c.b16 %v5365, %v5363
        %v5954 = vpack.c.b16 %v5366, %v5364
        %v5955 = vpack.c.b16 %v5369, %v5367
        %v5956 = vpack.c.b16 %v5370, %v5368
        %v5957 = vpack.c.b16 %v5373, %v5371
        %v5958 = vpack.c.b16 %v5374, %v5372
        %v5959 = vpack.c.b16 %v5377, %v5375
        %v5960 = vpack.c.b16 %v5378, %v5376
        %v5961 = vpack.c.b16 %v5381, %v5379
        %v5962 = vpack.c.b16 %v5382, %v5380
        %v5963 = vpack.c.b16 %v5385, %v5383
        %v5964 = vpack.c.b16 %v5386, %v5384
        %v5965 = vpack.c.b16 %v5389, %v5387
        %v5966 = vpack.c.b16 %v5390, %v5388
        %v5967 = vpack.c.b16 %v5393, %v5391
        %v5968 = vpack.c.b16 %v5394, %v5392
        %v5969 = vpack.c.b16 %v5397, %v5395
        %v5970 = vpack.c.b16 %v5398, %v5396
        %v5971 = vpack.c.b16 %v5401, %v5399
        %v5972 = vpack.c.b16 %v5402, %v5400
        %v5973 = vpack.c.b16 %v5405, %v5403
        %v5974 = vpack.c.b16 %v5406, %v5404
        %v5975 = vpack.c.b16 %v5409, %v5407
        %v5976 = vpack.c.b16 %v5410, %v5408
        %v5977 = vpack.c.b16 %v5413, %v5411
        %v5978 = vpack.c.b16 %v5414, %v5412
        %v5979 = vpack.c.b16 %v5417, %v5415
        %v5980 = vpack.c.b16 %v5418, %v5416
        %v5981 = vpack.c.b16 %v5421, %v5419
        %v5982 = vpack.c.b16 %v5422, %v5420
        %v5983 = vpack.c.b16 %v5425, %v5423
        %v5984 = vpack.c.b16 %v5426, %v5424
        %v5985 = vpack.c.b16 %v5429, %v5427
        %v5986 = vpack.c.b16 %v5430, %v5428
        %v5987 = vpack.c.b16 %v5433, %v5431
        %v5988 = vpack.c.b16 %v5434, %v5432
        %v5989 = vpack.c.b16 %v5437, %v5435
        %v5990 = vpack.c.b16 %v5438, %v5436
        %v5991 = vpack.c.b16 %v5441, %v5439
        %v5992 = vpack.c.b16 %v5442, %v5440
        %v5993 = vpack.c.b16 %v5445, %v5443
        %v5994 = vpack.c.b16 %v5446, %v5444
        %v5995 = vpack.c.b16 %v5449, %v5447
        %v5996 = vpack.c.b16 %v5450, %v5448
        %v5997 = vpack.c.b16 %v5453, %v5451
        %v5998 = vpack.c.b16 %v5454, %v5452
        %v5999 = vpack.c.b16 %v5457, %v5455
        %v6000 = vpack.c.b16 %v5458, %v5456
        %v6001 = vpack.c.b16 %v5461, %v5459
        %v6002 = vpack.c.b16 %v5462, %v5460
        %v6003 = vpack.c.b16 %v5465, %v5463
        %v6004 = vpack.c.b16 %v5466, %v5464
        %v6005 = vpack.c.b16 %v5469, %v5467
        %v6006 = vpack.c.b16 %v5470, %v5468
        %v6007 = vpack.c.b16 %v5473, %v5471
        %v6008 = vpack.c.b16 %v5474, %v5472
        %v6009 = vpack.c.b16 %v5477, %v5475
        %v6010 = vpack.c.b16 %v5478, %v5476
        %v6011 = vpack.c.b16 %v5481, %v5479
        %v6012 = vpack.c.b16 %v5482, %v5480
        %v6013 = vpack.c.b16 %v5485, %v5483
        %v6014 = vpack.c.b16 %v5486, %v5484
        %v6015 = vpack.c.b16 %v5489, %v5487
        %v6016 = vpack.c.b16 %v5490, %v5488
        %v6017 = vpack.c.b16 %v5493, %v5491
        %v6018 = vpack.c.b16 %v5494, %v5492
        %v6019 = vpack.c.b16 %v5497, %v5495
        %v6020 = vpack.c.b16 %v5498, %v5496
        %v6021 = vpack.c.b16 %v5501, %v5499
        %v6022 = vpack.c.b16 %v5502, %v5500
        %v6023 = vpack.c.b16 %v5505, %v5503
        %v6024 = vpack.c.b16 %v5506, %v5504
        %v6025 = vpack.c.b16 %v5509, %v5507
        %v6026 = vpack.c.b16 %v5510, %v5508
        %v6027 = vpack.c.b16 %v5513, %v5511
        %v6028 = vpack.c.b16 %v5514, %v5512
        %v6029 = vpack.c.b16 %v5517, %v5515
        %v6030 = vpack.c.b16 %v5518, %v5516
        %v6031 = vpack.c.b16 %v5521, %v5519
        %v6032 = vpack.c.b16 %v5522, %v5520
        %v6033 = vpack.c.b16 %v5525, %v5523
        %v6034 = vpack.c.b16 %v5526, %v5524
        %v6035 = vpack.c.b16 %v5529, %v5527
        %v6036 = vpack.c.b16 %v5530, %v5528
        %v6037 = vpack.c.b16 %v5533, %v5531
        %v6038 = vpack.c.b16 %v5534, %v5532
        %v6039 = vpack.c.b16 %v5537, %v5535
        %v6040 = vpack.c.b16 %v5538, %v5536
        %v6041 = vpack.c.b16 %v5541, %v5539
        %v6042 = vpack.c.b16 %v5542, %v5540
        %v6043 = vpack.c.b16 %v5545, %v5543
        %v6044 = vpack.c.b16 %v5546, %v5544
        %v6045 = vpack.c.b16 %v5549, %v5547
        %v6046 = vpack.c.b16 %v5550, %v5548
        %v6047 = vpack.c.b16 %v5553, %v5551
        %v6048 = vpack.c.b16 %v5554, %v5552
        %v6049 = vpack.c.b16 %v5557, %v5555
        %v6050 = vpack.c.b16 %v5558, %v5556
        %v6051 = vpack.c.b16 %v5561, %v5559
        %v6052 = vpack.c.b16 %v5562, %v5560
        %v6053 = vpack.c.b16 %v5565, %v5563
        %v6054 = vpack.c.b16 %v5566, %v5564
        %v6055 = vpack.c.b16 %v5569, %v5567
        %v6056 = vpack.c.b16 %v5570, %v5568
        %v6057 = vpack.c.b16 %v5573, %v5571
        %v6058 = vpack.c.b16 %v5574, %v5572
        %v6059 = vpack.c.b16 %v5577, %v5575
        %v6060 = vpack.c.b16 %v5578, %v5576
        %v6061 = vpack.c.b16 %v5581, %v5579
        %v6062 = vpack.c.b16 %v5582, %v5580
        %v6063 = vpack.c.b16 %v5585, %v5583
        %v6064 = vpack.c.b16 %v5586, %v5584
        %v6065 = vpack.c.b16 %v5589, %v5587
        %v6066 = vpack.c.b16 %v5590, %v5588
        %v6067 = vpack.c.b16 %v5593, %v5591
        %v6068 = vpack.c.b16 %v5594, %v5592
        %v6069 = vpack.c.b16 %v5597, %v5595
        %v6070 = vpack.c.b16 %v5598, %v5596
        %v6071 = vpack.c.b16 %v5601, %v5599
        %v6072 = vpack.c.b16 %v5602, %v5600
        %v6073 = vpack.c.b16 %v5605, %v5603
        %v6074 = vpack.c.b16 %v5606, %v5604
        %v6075 = vpack.c.b16 %v5609, %v5607
        %v6076 = vpack.c.b16 %v5610, %v5608
        %v6077 = vpack.c.b16 %v5613, %v5611
        %v6078 = vpack.c.b16 %v5614, %v5612
        %v6079 = vpack.c.b16 %v5617, %v5615
        %v6080 = vpack.c.b16 %v5618, %v5616
        %v6081 = vpack.c.b16 %v5621, %v5619
        %v6082 = vpack.c.b16 %v5622, %v5620
        %v6083 = vpack.c.b16 %v5625, %v5623
        %v6084 = vpack.c.b16 %v5626, %v5624
        %v6085 = vpack.c.b16 %v5629, %v5627
        %v6086 = vpack.c.b16 %v5630, %v5628
        %v6087 = vpack.c.b16 %v5633, %v5631
        %v6088 = vpack.c.b16 %v5634, %v5632
        %v6089 = vpack.c.b16 %v5637, %v5635
        %v6090 = vpack.c.b16 %v5638, %v5636
        %v6091 = vpack.c.b16 %v5641, %v5639
        %v6092 = vpack.c.b16 %v5642, %v5640
        %v6093 = vpack.c.b16 %v5645, %v5643
        %v6094 = vpack.c.b16 %v5646, %v5644
        %v6095 = vpack.c.b16 %v5649, %v5647
        %v6096 = vpack.c.b16 %v5650, %v5648
        %v6097 = vpack.c.b16 %v5653, %v5651
        %v6098 = vpack.c.b16 %v5654, %v5652
        %v6099 = vpack.c.b16 %v5657, %v5655
        %v6100 = vpack.c.b16 %v5658, %v5656
        %v6101 = vpack.c.b16 %v5661, %v5659
        %v6102 = vpack.c.b16 %v5662, %v5660
        %v6103 = vpack.c.b16 %v5665, %v5663
        %v6104 = vpack.c.b16 %v5666, %v5664
        %v6105 = vpack.c.b16 %v5669, %v5667
        %v6106 = vpack.c.b16 %v5670, %v5668
        %vm6543 = vcmask 261120
        %v6545 = vsel %vm6543, %v3920, 0
        %6547 = vmatpush.bf16.msra.mxu0 %v5685
        %6548 = vmatpush.bf16.msra.mxu0 %v5683
        %6549 = vmatpush.bf16.msra.mxu0 %v5681
        %6550 = vmatpush.bf16.msra.mxu0 %v5679
        %6551 = vmatpush.bf16.msra.mxu0 %v5677
        %6552 = vmatpush.bf16.msra.mxu0 %v5675
        %6553 = vmatpush.bf16.msra.mxu0 %v5673
        %6554 = vmatpush.bf16.msra.mxu0 %v5671
        %6555 = vmatmul.bf16.gmra.mxu0 %v3893
        %v6556 = vpop.f32.mrf.mxu0
        %v6557 = vadd.f32 %v4359, %v6556
        %v6558 = vpop.f32.mrf.mxu0
        %6559 = vdwg.mxu0
        %6560 = vmatpush.bf16.msra.mxu0 %v5701
        %6561 = vmatpush.bf16.msra.mxu0 %v5699
        %6562 = vmatpush.bf16.msra.mxu0 %v5697
        %6563 = vmatpush.bf16.msra.mxu0 %v5695
        %6564 = vmatpush.bf16.msra.mxu0 %v5693
        %6565 = vmatpush.bf16.msra.mxu0 %v5691
        %6566 = vmatpush.bf16.msra.mxu0 %v5689
        %6567 = vmatpush.bf16.msra.mxu0 %v5687
        %6568 = vmatmul.bf16.gmra.mxu0 %v3894
        %v6569 = vpop.f32.mrf.mxu0
        %v6570 = vadd.f32 %v6557, %v6569
        %v6571 = vpop.f32.mrf.mxu0
        %6572 = vdwg.mxu0
        %6573 = vmatpush.bf16.msra.mxu0 %v5717
        %6574 = vmatpush.bf16.msra.mxu0 %v5715
        %6575 = vmatpush.bf16.msra.mxu0 %v5713
        %6576 = vmatpush.bf16.msra.mxu0 %v5711
        %6577 = vmatpush.bf16.msra.mxu0 %v5709
        %6578 = vmatpush.bf16.msra.mxu0 %v5707
        %6579 = vmatpush.bf16.msra.mxu0 %v5705
        %6580 = vmatpush.bf16.msra.mxu0 %v5703
        %6581 = vmatmul.bf16.gmra.mxu0 %v3895
        %v6582 = vpop.f32.mrf.mxu0
        %v6583 = vadd.f32 %v6570, %v6582
        %v6584 = vpop.f32.mrf.mxu0
        %6585 = vdwg.mxu0
        %6586 = vmatpush.bf16.msra.mxu0 %v5733
        %6587 = vmatpush.bf16.msra.mxu0 %v5731
        %6588 = vmatpush.bf16.msra.mxu0 %v5729
        %6589 = vmatpush.bf16.msra.mxu0 %v5727
        %6590 = vmatpush.bf16.msra.mxu0 %v5725
        %6591 = vmatpush.bf16.msra.mxu0 %v5723
        %6592 = vmatpush.bf16.msra.mxu0 %v5721
        %6593 = vmatpush.bf16.msra.mxu0 %v5719
        %6594 = vmatmul.bf16.gmra.mxu0 %v3896
        %v6595 = vpop.f32.mrf.mxu0
        %v6596 = vadd.f32 %v6583, %v6595
        %v6597 = vpop.f32.mrf.mxu0
        %6598 = vdwg.mxu0
        %6599 = vmatpush.bf16.msra.mxu0 %v5749
        %6600 = vmatpush.bf16.msra.mxu0 %v5747
        %6601 = vmatpush.bf16.msra.mxu0 %v5745
        %6602 = vmatpush.bf16.msra.mxu0 %v5743
        %6603 = vmatpush.bf16.msra.mxu0 %v5741
        %6604 = vmatpush.bf16.msra.mxu0 %v5739
        %6605 = vmatpush.bf16.msra.mxu0 %v5737
        %6606 = vmatpush.bf16.msra.mxu0 %v5735
        %6607 = vmatmul.bf16.gmra.mxu0 %v3897
        %v6608 = vpop.f32.mrf.mxu0
        %v6609 = vadd.f32 %v6596, %v6608
        %v6610 = vpop.f32.mrf.mxu0
        %6611 = vdwg.mxu0
        %6612 = vmatpush.bf16.msra.mxu0 %v5765
        %6613 = vmatpush.bf16.msra.mxu0 %v5763
        %6614 = vmatpush.bf16.msra.mxu0 %v5761
        %6615 = vmatpush.bf16.msra.mxu0 %v5759
        %6616 = vmatpush.bf16.msra.mxu0 %v5757
        %6617 = vmatpush.bf16.msra.mxu0 %v5755
        %6618 = vmatpush.bf16.msra.mxu0 %v5753
        %6619 = vmatpush.bf16.msra.mxu0 %v5751
        %6620 = vmatmul.bf16.gmra.mxu0 %v3898
        %v6621 = vpop.f32.mrf.mxu0
        %v6622 = vadd.f32 %v6609, %v6621
        %v6623 = vpop.f32.mrf.mxu0
        %6624 = vdwg.mxu0
        %6625 = vmatpush.bf16.msra.mxu0 %v5781
        %6626 = vmatpush.bf16.msra.mxu0 %v5779
        %6627 = vmatpush.bf16.msra.mxu0 %v5777
        %6628 = vmatpush.bf16.msra.mxu0 %v5775
        %6629 = vmatpush.bf16.msra.mxu0 %v5773
        %6630 = vmatpush.bf16.msra.mxu0 %v5771
        %6631 = vmatpush.bf16.msra.mxu0 %v5769
        %6632 = vmatpush.bf16.msra.mxu0 %v5767
        %6633 = vmatmul.bf16.gmra.mxu0 %v3899
        %v6634 = vpop.f32.mrf.mxu0
        %v6635 = vadd.f32 %v6622, %v6634
        %v6636 = vpop.f32.mrf.mxu0
        %6637 = vdwg.mxu0
        %6638 = vmatpush.bf16.msra.mxu0 %v5797
        %6639 = vmatpush.bf16.msra.mxu0 %v5795
        %6640 = vmatpush.bf16.msra.mxu0 %v5793
        %6641 = vmatpush.bf16.msra.mxu0 %v5791
        %6642 = vmatpush.bf16.msra.mxu0 %v5789
        %6643 = vmatpush.bf16.msra.mxu0 %v5787
        %6644 = vmatpush.bf16.msra.mxu0 %v5785
        %6645 = vmatpush.bf16.msra.mxu0 %v5783
        %6646 = vmatmul.bf16.gmra.mxu0 %v3900
        %v6647 = vpop.f32.mrf.mxu0
        %v6648 = vadd.f32 %v6635, %v6647
        %v6649 = vpop.f32.mrf.mxu0
        %6650 = vdwg.mxu0
        %6651 = vmatpush.bf16.msra.mxu0 %v5813
        %6652 = vmatpush.bf16.msra.mxu0 %v5811
        %6653 = vmatpush.bf16.msra.mxu0 %v5809
        %6654 = vmatpush.bf16.msra.mxu0 %v5807
        %6655 = vmatpush.bf16.msra.mxu0 %v5805
        %6656 = vmatpush.bf16.msra.mxu0 %v5803
        %6657 = vmatpush.bf16.msra.mxu0 %v5801
        %6658 = vmatpush.bf16.msra.mxu0 %v5799
        %6659 = vmatmul.bf16.gmra.mxu0 %v3901
        %v6660 = vpop.f32.mrf.mxu0
        %v6661 = vadd.f32 %v6648, %v6660
        %v6662 = vpop.f32.mrf.mxu0
        %6663 = vdwg.mxu0
        %6664 = vmatpush.bf16.msra.mxu0 %v5829
        %6665 = vmatpush.bf16.msra.mxu0 %v5827
        %6666 = vmatpush.bf16.msra.mxu0 %v5825
        %6667 = vmatpush.bf16.msra.mxu0 %v5823
        %6668 = vmatpush.bf16.msra.mxu0 %v5821
        %6669 = vmatpush.bf16.msra.mxu0 %v5819
        %6670 = vmatpush.bf16.msra.mxu0 %v5817
        %6671 = vmatpush.bf16.msra.mxu0 %v5815
        %6672 = vmatmul.bf16.gmra.mxu0 %v3902
        %v6673 = vpop.f32.mrf.mxu0
        %v6674 = vadd.f32 %v6661, %v6673
        %v6675 = vpop.f32.mrf.mxu0
        %6676 = vdwg.mxu0
        %6677 = vmatpush.bf16.msra.mxu0 %v5845
        %6678 = vmatpush.bf16.msra.mxu0 %v5843
        %6679 = vmatpush.bf16.msra.mxu0 %v5841
        %6680 = vmatpush.bf16.msra.mxu0 %v5839
        %6681 = vmatpush.bf16.msra.mxu0 %v5837
        %6682 = vmatpush.bf16.msra.mxu0 %v5835
        %6683 = vmatpush.bf16.msra.mxu0 %v5833
        %6684 = vmatpush.bf16.msra.mxu0 %v5831
        %6685 = vmatmul.bf16.gmra.mxu0 %v3903
        %v6686 = vpop.f32.mrf.mxu0
        %v6687 = vadd.f32 %v6674, %v6686
        %v6688 = vpop.f32.mrf.mxu0
        %6689 = vdwg.mxu0
        %6690 = vmatpush.bf16.msra.mxu0 %v5861
        %6691 = vmatpush.bf16.msra.mxu0 %v5859
        %6692 = vmatpush.bf16.msra.mxu0 %v5857
        %6693 = vmatpush.bf16.msra.mxu0 %v5855
        %6694 = vmatpush.bf16.msra.mxu0 %v5853
        %6695 = vmatpush.bf16.msra.mxu0 %v5851
        %6696 = vmatpush.bf16.msra.mxu0 %v5849
        %6697 = vmatpush.bf16.msra.mxu0 %v5847
        %6698 = vmatmul.bf16.gmra.mxu0 %v3904
        %v6699 = vpop.f32.mrf.mxu0
        %v6700 = vadd.f32 %v6687, %v6699
        %v6701 = vpop.f32.mrf.mxu0
        %6702 = vdwg.mxu0
        %6703 = vmatpush.bf16.msra.mxu0 %v5877
        %6704 = vmatpush.bf16.msra.mxu0 %v5875
        %6705 = vmatpush.bf16.msra.mxu0 %v5873
        %6706 = vmatpush.bf16.msra.mxu0 %v5871
        %6707 = vmatpush.bf16.msra.mxu0 %v5869
        %6708 = vmatpush.bf16.msra.mxu0 %v5867
        %6709 = vmatpush.bf16.msra.mxu0 %v5865
        %6710 = vmatpush.bf16.msra.mxu0 %v5863
        %6711 = vmatmul.bf16.gmra.mxu0 %v3905
        %v6712 = vpop.f32.mrf.mxu0
        %v6713 = vadd.f32 %v6700, %v6712
        %v6714 = vpop.f32.mrf.mxu0
        %6715 = vdwg.mxu0
        %6716 = vmatpush.bf16.msra.mxu0 %v5893
        %6717 = vmatpush.bf16.msra.mxu0 %v5891
        %6718 = vmatpush.bf16.msra.mxu0 %v5889
        %6719 = vmatpush.bf16.msra.mxu0 %v5887
        %6720 = vmatpush.bf16.msra.mxu0 %v5885
        %6721 = vmatpush.bf16.msra.mxu0 %v5883
        %6722 = vmatpush.bf16.msra.mxu0 %v5881
        %6723 = vmatpush.bf16.msra.mxu0 %v5879
        %6724 = vmatmul.bf16.gmra.mxu0 %v3906
        %v6725 = vpop.f32.mrf.mxu0
        %v6726 = vadd.f32 %v6713, %v6725
        %v6727 = vpop.f32.mrf.mxu0
        %6728 = vdwg.mxu0
        %6729 = vmatpush.bf16.msra.mxu0 %v5909
        %6730 = vmatpush.bf16.msra.mxu0 %v5907
        %6731 = vmatpush.bf16.msra.mxu0 %v5905
        %6732 = vmatpush.bf16.msra.mxu0 %v5903
        %6733 = vmatpush.bf16.msra.mxu0 %v5901
        %6734 = vmatpush.bf16.msra.mxu0 %v5899
        %6735 = vmatpush.bf16.msra.mxu0 %v5897
        %6736 = vmatpush.bf16.msra.mxu0 %v5895
        %6737 = vmatmul.bf16.gmra.mxu0 %v3907
        %v6738 = vpop.f32.mrf.mxu0
        %v6739 = vadd.f32 %v6726, %v6738
        %v6740 = vpop.f32.mrf.mxu0
        %6741 = vdwg.mxu0
        %6742 = vmatpush.bf16.msra.mxu0 %v5925
        %6743 = vmatpush.bf16.msra.mxu0 %v5923
        %6744 = vmatpush.bf16.msra.mxu0 %v5921
        %6745 = vmatpush.bf16.msra.mxu0 %v5919
        %6746 = vmatpush.bf16.msra.mxu0 %v5917
        %6747 = vmatpush.bf16.msra.mxu0 %v5915
        %6748 = vmatpush.bf16.msra.mxu0 %v5913
        %6749 = vmatpush.bf16.msra.mxu0 %v5911
        %6750 = vmatmul.bf16.gmra.mxu0 %v3908
        %v6751 = vpop.f32.mrf.mxu0
        %v6752 = vadd.f32 %v6739, %v6751
        %v6753 = vpop.f32.mrf.mxu0
        %6754 = vdwg.mxu0
        %6755 = vmatpush.bf16.msra.mxu0 %v5941
        %6756 = vmatpush.bf16.msra.mxu0 %v5939
        %6757 = vmatpush.bf16.msra.mxu0 %v5937
        %6758 = vmatpush.bf16.msra.mxu0 %v5935
        %6759 = vmatpush.bf16.msra.mxu0 %v5933
        %6760 = vmatpush.bf16.msra.mxu0 %v5931
        %6761 = vmatpush.bf16.msra.mxu0 %v5929
        %6762 = vmatpush.bf16.msra.mxu0 %v5927
        %6763 = vmatmul.bf16.gmra.mxu0 %v3909
        %v6764 = vpop.f32.mrf.mxu0
        %v6765 = vadd.f32 %v6752, %v6764
        %v6766 = vpop.f32.mrf.mxu0
        %6767 = vdwg.mxu0
        %6768 = vmatpush.bf16.msra.mxu0 %v5957
        %6769 = vmatpush.bf16.msra.mxu0 %v5955
        %6770 = vmatpush.bf16.msra.mxu0 %v5953
        %6771 = vmatpush.bf16.msra.mxu0 %v5951
        %6772 = vmatpush.bf16.msra.mxu0 %v5949
        %6773 = vmatpush.bf16.msra.mxu0 %v5947
        %6774 = vmatpush.bf16.msra.mxu0 %v5945
        %6775 = vmatpush.bf16.msra.mxu0 %v5943
        %6776 = vmatmul.bf16.gmra.mxu0 %v3910
        %v6777 = vpop.f32.mrf.mxu0
        %v6778 = vadd.f32 %v6765, %v6777
        %v6779 = vpop.f32.mrf.mxu0
        %6780 = vdwg.mxu0
        %6781 = vmatpush.bf16.msra.mxu0 %v5973
        %6782 = vmatpush.bf16.msra.mxu0 %v5971
        %6783 = vmatpush.bf16.msra.mxu0 %v5969
        %6784 = vmatpush.bf16.msra.mxu0 %v5967
        %6785 = vmatpush.bf16.msra.mxu0 %v5965
        %6786 = vmatpush.bf16.msra.mxu0 %v5963
        %6787 = vmatpush.bf16.msra.mxu0 %v5961
        %6788 = vmatpush.bf16.msra.mxu0 %v5959
        %6789 = vmatmul.bf16.gmra.mxu0 %v3911
        %v6790 = vpop.f32.mrf.mxu0
        %v6791 = vadd.f32 %v6778, %v6790
        %v6792 = vpop.f32.mrf.mxu0
        %6793 = vdwg.mxu0
        %6794 = vmatpush.bf16.msra.mxu0 %v5989
        %6795 = vmatpush.bf16.msra.mxu0 %v5987
        %6796 = vmatpush.bf16.msra.mxu0 %v5985
        %6797 = vmatpush.bf16.msra.mxu0 %v5983
        %6798 = vmatpush.bf16.msra.mxu0 %v5981
        %6799 = vmatpush.bf16.msra.mxu0 %v5979
        %6800 = vmatpush.bf16.msra.mxu0 %v5977
        %6801 = vmatpush.bf16.msra.mxu0 %v5975
        %6802 = vmatmul.bf16.gmra.mxu0 %v3912
        %v6803 = vpop.f32.mrf.mxu0
        %v6804 = vadd.f32 %v6791, %v6803
        %v6805 = vpop.f32.mrf.mxu0
        %6806 = vdwg.mxu0
        %6807 = vmatpush.bf16.msra.mxu0 %v6005
        %6808 = vmatpush.bf16.msra.mxu0 %v6003
        %6809 = vmatpush.bf16.msra.mxu0 %v6001
        %6810 = vmatpush.bf16.msra.mxu0 %v5999
        %6811 = vmatpush.bf16.msra.mxu0 %v5997
        %6812 = vmatpush.bf16.msra.mxu0 %v5995
        %6813 = vmatpush.bf16.msra.mxu0 %v5993
        %6814 = vmatpush.bf16.msra.mxu0 %v5991
        %6815 = vmatmul.bf16.gmra.mxu0 %v3913
        %v6816 = vpop.f32.mrf.mxu0
        %v6817 = vadd.f32 %v6804, %v6816
        %v6818 = vpop.f32.mrf.mxu0
        %6819 = vdwg.mxu0
        %6820 = vmatpush.bf16.msra.mxu0 %v6021
        %6821 = vmatpush.bf16.msra.mxu0 %v6019
        %6822 = vmatpush.bf16.msra.mxu0 %v6017
        %6823 = vmatpush.bf16.msra.mxu0 %v6015
        %6824 = vmatpush.bf16.msra.mxu0 %v6013
        %6825 = vmatpush.bf16.msra.mxu0 %v6011
        %6826 = vmatpush.bf16.msra.mxu0 %v6009
        %6827 = vmatpush.bf16.msra.mxu0 %v6007
        %6828 = vmatmul.bf16.gmra.mxu0 %v3914
        %v6829 = vpop.f32.mrf.mxu0
        %v6830 = vadd.f32 %v6817, %v6829
        %v6831 = vpop.f32.mrf.mxu0
        %6832 = vdwg.mxu0
        %6833 = vmatpush.bf16.msra.mxu0 %v6037
        %6834 = vmatpush.bf16.msra.mxu0 %v6035
        %6835 = vmatpush.bf16.msra.mxu0 %v6033
        %6836 = vmatpush.bf16.msra.mxu0 %v6031
        %6837 = vmatpush.bf16.msra.mxu0 %v6029
        %6838 = vmatpush.bf16.msra.mxu0 %v6027
        %6839 = vmatpush.bf16.msra.mxu0 %v6025
        %6840 = vmatpush.bf16.msra.mxu0 %v6023
        %6841 = vmatmul.bf16.gmra.mxu0 %v3915
        %v6842 = vpop.f32.mrf.mxu0
        %v6843 = vadd.f32 %v6830, %v6842
        %v6844 = vpop.f32.mrf.mxu0
        %6845 = vdwg.mxu0
        %6846 = vmatpush.bf16.msra.mxu0 %v6053
        %6847 = vmatpush.bf16.msra.mxu0 %v6051
        %6848 = vmatpush.bf16.msra.mxu0 %v6049
        %6849 = vmatpush.bf16.msra.mxu0 %v6047
        %6850 = vmatpush.bf16.msra.mxu0 %v6045
        %6851 = vmatpush.bf16.msra.mxu0 %v6043
        %6852 = vmatpush.bf16.msra.mxu0 %v6041
        %6853 = vmatpush.bf16.msra.mxu0 %v6039
        %6854 = vmatmul.bf16.gmra.mxu0 %v3916
        %v6855 = vpop.f32.mrf.mxu0
        %v6856 = vadd.f32 %v6843, %v6855
        %v6857 = vpop.f32.mrf.mxu0
        %6858 = vdwg.mxu0
        %6859 = vmatpush.bf16.msra.mxu0 %v6069
        %6860 = vmatpush.bf16.msra.mxu0 %v6067
        %6861 = vmatpush.bf16.msra.mxu0 %v6065
        %6862 = vmatpush.bf16.msra.mxu0 %v6063
        %6863 = vmatpush.bf16.msra.mxu0 %v6061
        %6864 = vmatpush.bf16.msra.mxu0 %v6059
        %6865 = vmatpush.bf16.msra.mxu0 %v6057
        %6866 = vmatpush.bf16.msra.mxu0 %v6055
        %6867 = vmatmul.bf16.gmra.mxu0 %v3917
        %v6868 = vpop.f32.mrf.mxu0
        %v6869 = vadd.f32 %v6856, %v6868
        %v6870 = vpop.f32.mrf.mxu0
        %6871 = vdwg.mxu0
        %6872 = vmatpush.bf16.msra.mxu0 %v6085
        %6873 = vmatpush.bf16.msra.mxu0 %v6083
        %6874 = vmatpush.bf16.msra.mxu0 %v6081
        %6875 = vmatpush.bf16.msra.mxu0 %v6079
        %6876 = vmatpush.bf16.msra.mxu0 %v6077
        %6877 = vmatpush.bf16.msra.mxu0 %v6075
        %6878 = vmatpush.bf16.msra.mxu0 %v6073
        %6879 = vmatpush.bf16.msra.mxu0 %v6071
        %6880 = vmatmul.bf16.gmra.mxu0 %v3918
        %v6881 = vpop.f32.mrf.mxu0
        %v6882 = vadd.f32 %v6869, %v6881
        %v6883 = vpop.f32.mrf.mxu0
        %6884 = vdwg.mxu0
        %6885 = vmatpush.bf16.msra.mxu0 %v6101
        %6886 = vmatpush.bf16.msra.mxu0 %v6099
        %6887 = vmatpush.bf16.msra.mxu0 %v6097
        %6888 = vmatpush.bf16.msra.mxu0 %v6095
        %6889 = vmatpush.bf16.msra.mxu0 %v6093
        %6890 = vmatpush.bf16.msra.mxu0 %v6091
        %6891 = vmatpush.bf16.msra.mxu0 %v6089
        %6892 = vmatpush.bf16.msra.mxu0 %v6087
        %6893 = vmatmul.bf16.gmra.mxu0 %v3919
        %v6894 = vpop.f32.mrf.mxu0
        %v6895 = vadd.f32 %v6882, %v6894
        %v6896 = vpop.f32.mrf.mxu0
        %6897 = vdwg.mxu0
        %6898 = vmatpush.bf16.msra.mxu0 0
        %6899 = vmatpush.bf16.msra.mxu0 0
        %6900 = vmatpush.bf16.msra.mxu0 0
        %6901 = vmatpush.bf16.msra.mxu0 0
        %6902 = vmatpush.bf16.msra.mxu0 0
        %6903 = vmatpush.bf16.msra.mxu0 0
        %6904 = vmatpush.bf16.msra.mxu0 %v6105
        %6905 = vmatpush.bf16.msra.mxu0 %v6103
        %6906 = vmatmul.bf16.gmra.mxu0 %v6545
        %v6907 = vpop.f32.mrf.mxu0
        %v6908 = vadd.f32 %v6895, %v6907
        %v6909 = vpop.f32.mrf.mxu0
        %6910 = vdwg.mxu0
        %6911 = vmatpush.bf16.msra.mxu0 %v5686
        %6912 = vmatpush.bf16.msra.mxu0 %v5684
        %6913 = vmatpush.bf16.msra.mxu0 %v5682
        %6914 = vmatpush.bf16.msra.mxu0 %v5680
        %6915 = vmatpush.bf16.msra.mxu0 %v5678
        %6916 = vmatpush.bf16.msra.mxu0 %v5676
        %6917 = vmatpush.bf16.msra.mxu0 %v5674
        %6918 = vmatpush.bf16.msra.mxu0 %v5672
        %6919 = vmatmul.bf16.gmra.mxu0 %v3893
        %v6920 = vpop.f32.mrf.mxu0
        %v6921 = vadd.f32 %v4360, %v6920
        %v6922 = vpop.f32.mrf.mxu0
        %6923 = vdwg.mxu0
        %6924 = vmatpush.bf16.msra.mxu0 %v5702
        %6925 = vmatpush.bf16.msra.mxu0 %v5700
        %6926 = vmatpush.bf16.msra.mxu0 %v5698
        %6927 = vmatpush.bf16.msra.mxu0 %v5696
        %6928 = vmatpush.bf16.msra.mxu0 %v5694
        %6929 = vmatpush.bf16.msra.mxu0 %v5692
        %6930 = vmatpush.bf16.msra.mxu0 %v5690
        %6931 = vmatpush.bf16.msra.mxu0 %v5688
        %6932 = vmatmul.bf16.gmra.mxu0 %v3894
        %v6933 = vpop.f32.mrf.mxu0
        %v6934 = vadd.f32 %v6921, %v6933
        %v6935 = vpop.f32.mrf.mxu0
        %6936 = vdwg.mxu0
        %6937 = vmatpush.bf16.msra.mxu0 %v5718
        %6938 = vmatpush.bf16.msra.mxu0 %v5716
        %6939 = vmatpush.bf16.msra.mxu0 %v5714
        %6940 = vmatpush.bf16.msra.mxu0 %v5712
        %6941 = vmatpush.bf16.msra.mxu0 %v5710
        %6942 = vmatpush.bf16.msra.mxu0 %v5708
        %6943 = vmatpush.bf16.msra.mxu0 %v5706
        %6944 = vmatpush.bf16.msra.mxu0 %v5704
        %6945 = vmatmul.bf16.gmra.mxu0 %v3895
        %v6946 = vpop.f32.mrf.mxu0
        %v6947 = vadd.f32 %v6934, %v6946
        %v6948 = vpop.f32.mrf.mxu0
        %6949 = vdwg.mxu0
        %6950 = vmatpush.bf16.msra.mxu0 %v5734
        %6951 = vmatpush.bf16.msra.mxu0 %v5732
        %6952 = vmatpush.bf16.msra.mxu0 %v5730
        %6953 = vmatpush.bf16.msra.mxu0 %v5728
        %6954 = vmatpush.bf16.msra.mxu0 %v5726
        %6955 = vmatpush.bf16.msra.mxu0 %v5724
        %6956 = vmatpush.bf16.msra.mxu0 %v5722
        %6957 = vmatpush.bf16.msra.mxu0 %v5720
        %6958 = vmatmul.bf16.gmra.mxu0 %v3896
        %v6959 = vpop.f32.mrf.mxu0
        %v6960 = vadd.f32 %v6947, %v6959
        %v6961 = vpop.f32.mrf.mxu0
        %6962 = vdwg.mxu0
        %6963 = vmatpush.bf16.msra.mxu0 %v5750
        %6964 = vmatpush.bf16.msra.mxu0 %v5748
        %6965 = vmatpush.bf16.msra.mxu0 %v5746
        %6966 = vmatpush.bf16.msra.mxu0 %v5744
        %6967 = vmatpush.bf16.msra.mxu0 %v5742
        %6968 = vmatpush.bf16.msra.mxu0 %v5740
        %6969 = vmatpush.bf16.msra.mxu0 %v5738
        %6970 = vmatpush.bf16.msra.mxu0 %v5736
        %6971 = vmatmul.bf16.gmra.mxu0 %v3897
        %v6972 = vpop.f32.mrf.mxu0
        %v6973 = vadd.f32 %v6960, %v6972
        %v6974 = vpop.f32.mrf.mxu0
        %6975 = vdwg.mxu0
        %6976 = vmatpush.bf16.msra.mxu0 %v5766
        %6977 = vmatpush.bf16.msra.mxu0 %v5764
        %6978 = vmatpush.bf16.msra.mxu0 %v5762
        %6979 = vmatpush.bf16.msra.mxu0 %v5760
        %6980 = vmatpush.bf16.msra.mxu0 %v5758
        %6981 = vmatpush.bf16.msra.mxu0 %v5756
        %6982 = vmatpush.bf16.msra.mxu0 %v5754
        %6983 = vmatpush.bf16.msra.mxu0 %v5752
        %6984 = vmatmul.bf16.gmra.mxu0 %v3898
        %v6985 = vpop.f32.mrf.mxu0
        %v6986 = vadd.f32 %v6973, %v6985
        %v6987 = vpop.f32.mrf.mxu0
        %6988 = vdwg.mxu0
        %6989 = vmatpush.bf16.msra.mxu0 %v5782
        %6990 = vmatpush.bf16.msra.mxu0 %v5780
        %6991 = vmatpush.bf16.msra.mxu0 %v5778
        %6992 = vmatpush.bf16.msra.mxu0 %v5776
        %6993 = vmatpush.bf16.msra.mxu0 %v5774
        %6994 = vmatpush.bf16.msra.mxu0 %v5772
        %6995 = vmatpush.bf16.msra.mxu0 %v5770
        %6996 = vmatpush.bf16.msra.mxu0 %v5768
        %6997 = vmatmul.bf16.gmra.mxu0 %v3899
        %v6998 = vpop.f32.mrf.mxu0
        %v6999 = vadd.f32 %v6986, %v6998
        %v7000 = vpop.f32.mrf.mxu0
        %7001 = vdwg.mxu0
        %7002 = vmatpush.bf16.msra.mxu0 %v5798
        %7003 = vmatpush.bf16.msra.mxu0 %v5796
        %7004 = vmatpush.bf16.msra.mxu0 %v5794
        %7005 = vmatpush.bf16.msra.mxu0 %v5792
        %7006 = vmatpush.bf16.msra.mxu0 %v5790
        %7007 = vmatpush.bf16.msra.mxu0 %v5788
        %7008 = vmatpush.bf16.msra.mxu0 %v5786
        %7009 = vmatpush.bf16.msra.mxu0 %v5784
        %7010 = vmatmul.bf16.gmra.mxu0 %v3900
        %v7011 = vpop.f32.mrf.mxu0
        %v7012 = vadd.f32 %v6999, %v7011
        %v7013 = vpop.f32.mrf.mxu0
        %7014 = vdwg.mxu0
        %7015 = vmatpush.bf16.msra.mxu0 %v5814
        %7016 = vmatpush.bf16.msra.mxu0 %v5812
        %7017 = vmatpush.bf16.msra.mxu0 %v5810
        %7018 = vmatpush.bf16.msra.mxu0 %v5808
        %7019 = vmatpush.bf16.msra.mxu0 %v5806
        %7020 = vmatpush.bf16.msra.mxu0 %v5804
        %7021 = vmatpush.bf16.msra.mxu0 %v5802
        %7022 = vmatpush.bf16.msra.mxu0 %v5800
        %7023 = vmatmul.bf16.gmra.mxu0 %v3901
        %v7024 = vpop.f32.mrf.mxu0
        %v7025 = vadd.f32 %v7012, %v7024
        %v7026 = vpop.f32.mrf.mxu0
        %7027 = vdwg.mxu0
        %7028 = vmatpush.bf16.msra.mxu0 %v5830
        %7029 = vmatpush.bf16.msra.mxu0 %v5828
        %7030 = vmatpush.bf16.msra.mxu0 %v5826
        %7031 = vmatpush.bf16.msra.mxu0 %v5824
        %7032 = vmatpush.bf16.msra.mxu0 %v5822
        %7033 = vmatpush.bf16.msra.mxu0 %v5820
        %7034 = vmatpush.bf16.msra.mxu0 %v5818
        %7035 = vmatpush.bf16.msra.mxu0 %v5816
        %7036 = vmatmul.bf16.gmra.mxu0 %v3902
        %v7037 = vpop.f32.mrf.mxu0
        %v7038 = vadd.f32 %v7025, %v7037
        %v7039 = vpop.f32.mrf.mxu0
        %7040 = vdwg.mxu0
        %7041 = vmatpush.bf16.msra.mxu0 %v5846
        %7042 = vmatpush.bf16.msra.mxu0 %v5844
        %7043 = vmatpush.bf16.msra.mxu0 %v5842
        %7044 = vmatpush.bf16.msra.mxu0 %v5840
        %7045 = vmatpush.bf16.msra.mxu0 %v5838
        %7046 = vmatpush.bf16.msra.mxu0 %v5836
        %7047 = vmatpush.bf16.msra.mxu0 %v5834
        %7048 = vmatpush.bf16.msra.mxu0 %v5832
        %7049 = vmatmul.bf16.gmra.mxu0 %v3903
        %v7050 = vpop.f32.mrf.mxu0
        %v7051 = vadd.f32 %v7038, %v7050
        %v7052 = vpop.f32.mrf.mxu0
        %7053 = vdwg.mxu0
        %7054 = vmatpush.bf16.msra.mxu0 %v5862
        %7055 = vmatpush.bf16.msra.mxu0 %v5860
        %7056 = vmatpush.bf16.msra.mxu0 %v5858
        %7057 = vmatpush.bf16.msra.mxu0 %v5856
        %7058 = vmatpush.bf16.msra.mxu0 %v5854
        %7059 = vmatpush.bf16.msra.mxu0 %v5852
        %7060 = vmatpush.bf16.msra.mxu0 %v5850
        %7061 = vmatpush.bf16.msra.mxu0 %v5848
        %7062 = vmatmul.bf16.gmra.mxu0 %v3904
        %v7063 = vpop.f32.mrf.mxu0
        %v7064 = vadd.f32 %v7051, %v7063
        %v7065 = vpop.f32.mrf.mxu0
        %7066 = vdwg.mxu0
        %7067 = vmatpush.bf16.msra.mxu0 %v5878
        %7068 = vmatpush.bf16.msra.mxu0 %v5876
        %7069 = vmatpush.bf16.msra.mxu0 %v5874
        %7070 = vmatpush.bf16.msra.mxu0 %v5872
        %7071 = vmatpush.bf16.msra.mxu0 %v5870
        %7072 = vmatpush.bf16.msra.mxu0 %v5868
        %7073 = vmatpush.bf16.msra.mxu0 %v5866
        %7074 = vmatpush.bf16.msra.mxu0 %v5864
        %7075 = vmatmul.bf16.gmra.mxu0 %v3905
        %v7076 = vpop.f32.mrf.mxu0
        %v7077 = vadd.f32 %v7064, %v7076
        %v7078 = vpop.f32.mrf.mxu0
        %7079 = vdwg.mxu0
        %7080 = vmatpush.bf16.msra.mxu0 %v5894
        %7081 = vmatpush.bf16.msra.mxu0 %v5892
        %7082 = vmatpush.bf16.msra.mxu0 %v5890
        %7083 = vmatpush.bf16.msra.mxu0 %v5888
        %7084 = vmatpush.bf16.msra.mxu0 %v5886
        %7085 = vmatpush.bf16.msra.mxu0 %v5884
        %7086 = vmatpush.bf16.msra.mxu0 %v5882
        %7087 = vmatpush.bf16.msra.mxu0 %v5880
        %7088 = vmatmul.bf16.gmra.mxu0 %v3906
        %v7089 = vpop.f32.mrf.mxu0
        %v7090 = vadd.f32 %v7077, %v7089
        %v7091 = vpop.f32.mrf.mxu0
        %7092 = vdwg.mxu0
        %7093 = vmatpush.bf16.msra.mxu0 %v5910
        %7094 = vmatpush.bf16.msra.mxu0 %v5908
        %7095 = vmatpush.bf16.msra.mxu0 %v5906
        %7096 = vmatpush.bf16.msra.mxu0 %v5904
        %7097 = vmatpush.bf16.msra.mxu0 %v5902
        %7098 = vmatpush.bf16.msra.mxu0 %v5900
        %7099 = vmatpush.bf16.msra.mxu0 %v5898
        %7100 = vmatpush.bf16.msra.mxu0 %v5896
        %7101 = vmatmul.bf16.gmra.mxu0 %v3907
        %v7102 = vpop.f32.mrf.mxu0
        %v7103 = vadd.f32 %v7090, %v7102
        %v7104 = vpop.f32.mrf.mxu0
        %7105 = vdwg.mxu0
        %7106 = vmatpush.bf16.msra.mxu0 %v5926
        %7107 = vmatpush.bf16.msra.mxu0 %v5924
        %7108 = vmatpush.bf16.msra.mxu0 %v5922
        %7109 = vmatpush.bf16.msra.mxu0 %v5920
        %7110 = vmatpush.bf16.msra.mxu0 %v5918
        %7111 = vmatpush.bf16.msra.mxu0 %v5916
        %7112 = vmatpush.bf16.msra.mxu0 %v5914
        %7113 = vmatpush.bf16.msra.mxu0 %v5912
        %7114 = vmatmul.bf16.gmra.mxu0 %v3908
        %v7115 = vpop.f32.mrf.mxu0
        %v7116 = vadd.f32 %v7103, %v7115
        %v7117 = vpop.f32.mrf.mxu0
        %7118 = vdwg.mxu0
        %7119 = vmatpush.bf16.msra.mxu0 %v5942
        %7120 = vmatpush.bf16.msra.mxu0 %v5940
        %7121 = vmatpush.bf16.msra.mxu0 %v5938
        %7122 = vmatpush.bf16.msra.mxu0 %v5936
        %7123 = vmatpush.bf16.msra.mxu0 %v5934
        %7124 = vmatpush.bf16.msra.mxu0 %v5932
        %7125 = vmatpush.bf16.msra.mxu0 %v5930
        %7126 = vmatpush.bf16.msra.mxu0 %v5928
        %7127 = vmatmul.bf16.gmra.mxu0 %v3909
        %v7128 = vpop.f32.mrf.mxu0
        %v7129 = vadd.f32 %v7116, %v7128
        %v7130 = vpop.f32.mrf.mxu0
        %7131 = vdwg.mxu0
        %7132 = vmatpush.bf16.msra.mxu0 %v5958
        %7133 = vmatpush.bf16.msra.mxu0 %v5956
        %7134 = vmatpush.bf16.msra.mxu0 %v5954
        %7135 = vmatpush.bf16.msra.mxu0 %v5952
        %7136 = vmatpush.bf16.msra.mxu0 %v5950
        %7137 = vmatpush.bf16.msra.mxu0 %v5948
        %7138 = vmatpush.bf16.msra.mxu0 %v5946
        %7139 = vmatpush.bf16.msra.mxu0 %v5944
        %7140 = vmatmul.bf16.gmra.mxu0 %v3910
        %v7141 = vpop.f32.mrf.mxu0
        %v7142 = vadd.f32 %v7129, %v7141
        %v7143 = vpop.f32.mrf.mxu0
        %7144 = vdwg.mxu0
        %7145 = vmatpush.bf16.msra.mxu0 %v5974
        %7146 = vmatpush.bf16.msra.mxu0 %v5972
        %7147 = vmatpush.bf16.msra.mxu0 %v5970
        %7148 = vmatpush.bf16.msra.mxu0 %v5968
        %7149 = vmatpush.bf16.msra.mxu0 %v5966
        %7150 = vmatpush.bf16.msra.mxu0 %v5964
        %7151 = vmatpush.bf16.msra.mxu0 %v5962
        %7152 = vmatpush.bf16.msra.mxu0 %v5960
        %7153 = vmatmul.bf16.gmra.mxu0 %v3911
        %v7154 = vpop.f32.mrf.mxu0
        %v7155 = vadd.f32 %v7142, %v7154
        %v7156 = vpop.f32.mrf.mxu0
        %7157 = vdwg.mxu0
        %7158 = vmatpush.bf16.msra.mxu0 %v5990
        %7159 = vmatpush.bf16.msra.mxu0 %v5988
        %7160 = vmatpush.bf16.msra.mxu0 %v5986
        %7161 = vmatpush.bf16.msra.mxu0 %v5984
        %7162 = vmatpush.bf16.msra.mxu0 %v5982
        %7163 = vmatpush.bf16.msra.mxu0 %v5980
        %7164 = vmatpush.bf16.msra.mxu0 %v5978
        %7165 = vmatpush.bf16.msra.mxu0 %v5976
        %7166 = vmatmul.bf16.gmra.mxu0 %v3912
        %v7167 = vpop.f32.mrf.mxu0
        %v7168 = vadd.f32 %v7155, %v7167
        %v7169 = vpop.f32.mrf.mxu0
        %7170 = vdwg.mxu0
        %7171 = vmatpush.bf16.msra.mxu0 %v6006
        %7172 = vmatpush.bf16.msra.mxu0 %v6004
        %7173 = vmatpush.bf16.msra.mxu0 %v6002
        %7174 = vmatpush.bf16.msra.mxu0 %v6000
        %7175 = vmatpush.bf16.msra.mxu0 %v5998
        %7176 = vmatpush.bf16.msra.mxu0 %v5996
        %7177 = vmatpush.bf16.msra.mxu0 %v5994
        %7178 = vmatpush.bf16.msra.mxu0 %v5992
        %7179 = vmatmul.bf16.gmra.mxu0 %v3913
        %v7180 = vpop.f32.mrf.mxu0
        %v7181 = vadd.f32 %v7168, %v7180
        %v7182 = vpop.f32.mrf.mxu0
        %7183 = vdwg.mxu0
        %7184 = vmatpush.bf16.msra.mxu0 %v6022
        %7185 = vmatpush.bf16.msra.mxu0 %v6020
        %7186 = vmatpush.bf16.msra.mxu0 %v6018
        %7187 = vmatpush.bf16.msra.mxu0 %v6016
        %7188 = vmatpush.bf16.msra.mxu0 %v6014
        %7189 = vmatpush.bf16.msra.mxu0 %v6012
        %7190 = vmatpush.bf16.msra.mxu0 %v6010
        %7191 = vmatpush.bf16.msra.mxu0 %v6008
        %7192 = vmatmul.bf16.gmra.mxu0 %v3914
        %v7193 = vpop.f32.mrf.mxu0
        %v7194 = vadd.f32 %v7181, %v7193
        %v7195 = vpop.f32.mrf.mxu0
        %7196 = vdwg.mxu0
        %7197 = vmatpush.bf16.msra.mxu0 %v6038
        %7198 = vmatpush.bf16.msra.mxu0 %v6036
        %7199 = vmatpush.bf16.msra.mxu0 %v6034
        %7200 = vmatpush.bf16.msra.mxu0 %v6032
        %7201 = vmatpush.bf16.msra.mxu0 %v6030
        %7202 = vmatpush.bf16.msra.mxu0 %v6028
        %7203 = vmatpush.bf16.msra.mxu0 %v6026
        %7204 = vmatpush.bf16.msra.mxu0 %v6024
        %7205 = vmatmul.bf16.gmra.mxu0 %v3915
        %v7206 = vpop.f32.mrf.mxu0
        %v7207 = vadd.f32 %v7194, %v7206
        %v7208 = vpop.f32.mrf.mxu0
        %7209 = vdwg.mxu0
        %7210 = vmatpush.bf16.msra.mxu0 %v6054
        %7211 = vmatpush.bf16.msra.mxu0 %v6052
        %7212 = vmatpush.bf16.msra.mxu0 %v6050
        %7213 = vmatpush.bf16.msra.mxu0 %v6048
        %7214 = vmatpush.bf16.msra.mxu0 %v6046
        %7215 = vmatpush.bf16.msra.mxu0 %v6044
        %7216 = vmatpush.bf16.msra.mxu0 %v6042
        %7217 = vmatpush.bf16.msra.mxu0 %v6040
        %7218 = vmatmul.bf16.gmra.mxu0 %v3916
        %v7219 = vpop.f32.mrf.mxu0
        %v7220 = vadd.f32 %v7207, %v7219
        %v7221 = vpop.f32.mrf.mxu0
        %7222 = vdwg.mxu0
        %7223 = vmatpush.bf16.msra.mxu0 %v6070
        %7224 = vmatpush.bf16.msra.mxu0 %v6068
        %7225 = vmatpush.bf16.msra.mxu0 %v6066
        %7226 = vmatpush.bf16.msra.mxu0 %v6064
        %7227 = vmatpush.bf16.msra.mxu0 %v6062
        %7228 = vmatpush.bf16.msra.mxu0 %v6060
        %7229 = vmatpush.bf16.msra.mxu0 %v6058
        %7230 = vmatpush.bf16.msra.mxu0 %v6056
        %7231 = vmatmul.bf16.gmra.mxu0 %v3917
        %v7232 = vpop.f32.mrf.mxu0
        %v7233 = vadd.f32 %v7220, %v7232
        %v7234 = vpop.f32.mrf.mxu0
        %7235 = vdwg.mxu0
        %7236 = vmatpush.bf16.msra.mxu0 %v6086
        %7237 = vmatpush.bf16.msra.mxu0 %v6084
        %7238 = vmatpush.bf16.msra.mxu0 %v6082
        %7239 = vmatpush.bf16.msra.mxu0 %v6080
        %7240 = vmatpush.bf16.msra.mxu0 %v6078
        %7241 = vmatpush.bf16.msra.mxu0 %v6076
        %7242 = vmatpush.bf16.msra.mxu0 %v6074
        %7243 = vmatpush.bf16.msra.mxu0 %v6072
        %7244 = vmatmul.bf16.gmra.mxu0 %v3918
        %v7245 = vpop.f32.mrf.mxu0
        %v7246 = vadd.f32 %v7233, %v7245
        %v7247 = vpop.f32.mrf.mxu0
        %7248 = vdwg.mxu0
        %7249 = vmatpush.bf16.msra.mxu0 %v6102
        %7250 = vmatpush.bf16.msra.mxu0 %v6100
        %7251 = vmatpush.bf16.msra.mxu0 %v6098
        %7252 = vmatpush.bf16.msra.mxu0 %v6096
        %7253 = vmatpush.bf16.msra.mxu0 %v6094
        %7254 = vmatpush.bf16.msra.mxu0 %v6092
        %7255 = vmatpush.bf16.msra.mxu0 %v6090
        %7256 = vmatpush.bf16.msra.mxu0 %v6088
        %7257 = vmatmul.bf16.gmra.mxu0 %v3919
        %v7258 = vpop.f32.mrf.mxu0
        %v7259 = vadd.f32 %v7246, %v7258
        %v7260 = vpop.f32.mrf.mxu0
        %7261 = vdwg.mxu0
        %7262 = vmatpush.bf16.msra.mxu0 0
        %7263 = vmatpush.bf16.msra.mxu0 0
        %7264 = vmatpush.bf16.msra.mxu0 0
        %7265 = vmatpush.bf16.msra.mxu0 0
        %7266 = vmatpush.bf16.msra.mxu0 0
        %7267 = vmatpush.bf16.msra.mxu0 0
        %7268 = vmatpush.bf16.msra.mxu0 %v6106
        %7269 = vmatpush.bf16.msra.mxu0 %v6104
        %7270 = vmatmul.bf16.gmra.mxu0 %v6545
        %v7271 = vpop.f32.mrf.mxu0
        %v7272 = vadd.f32 %v7259, %v7271
        %v7273 = vpop.f32.mrf.mxu0
        %7274 = vdwg.mxu0
        %vm7275 = vcmp.gt.f32.partialorder %v6908, 0.0
        %vm7276 = vcmp.gt.f32.partialorder %v7272, 0.0
        %v7277 = vmin.f32 %v6908, 0.0
        %v7278 = vmin.f32 %v7272, 0.0
        %v7279 = vmul.f32 %v7277, 1.442695
        %v7280 = vpow.pop %v7279
        %v7281 = vmul.f32 %v7278, 1.442695
        %v7282 = vpow.pop %v7281
        %v7283 = vsub.f32 %v7280, 1.0
        %v7284 = vsub.f32 %v7282, 1.0
        %v7285 = vsel %vm7275, %v6908, %v7283
        %v7286 = vsel %vm7276, %v7272, %v7284
        %v7287 = vld [vmem:[#allocation2] sm:$0x3]
        %v7288 = vpack.c.bf16 %v7285, %v7285
        %v7289 = vpack.c.bf16 %v7286, %v7286
        %v7290 = vld [vmem:[%s3807] sm:$0xf]
        %v7291 = vld [vmem:[%s3807 + $0x4] sm:$0xf]
        %v7292 = vld [vmem:[%s3807 + $0x8] sm:$0xf]
        %v7293 = vld [vmem:[%s3807 + $0xc] sm:$0xf]
        %v7294 = vld [vmem:[%s3807 + $0x10] sm:$0xf]
        %v7295 = vld [vmem:[%s3807 + $0x14] sm:$0xf]
        %v7296 = vld [vmem:[%s3807 + $0x18] sm:$0xf]
        %v7297 = vld [vmem:[%s3807 + $0x1c] sm:$0xf]
        %v7298 = vld [vmem:[%s3807 + $0x20] sm:$0xf]
        %v7299 = vld [vmem:[%s3807 + $0x24] sm:$0xf]
        %v7300 = vld [vmem:[%s3807 + $0x28] sm:$0xf]
        %v7301 = vld [vmem:[%s3807 + $0x2c] sm:$0xf]
        %v7302 = vld [vmem:[%s3807 + $0x30] sm:$0xf]
        %v7303 = vld [vmem:[%s3807 + $0x34] sm:$0xf]
        %v7304 = vld [vmem:[%s3807 + $0x38] sm:$0xf]
        %v7305 = vld [vmem:[%s3807 + $0x3c] sm:$0xf]
        %v7306 = vld [vmem:[%s3807 + $0x40] sm:$0xf]
        %v7307 = vld [vmem:[%s3807 + $0x44] sm:$0xf]
        %v7308 = vld [vmem:[%s3807 + $0x48] sm:$0xf]
        %v7309 = vld [vmem:[%s3807 + $0x4c] sm:$0xf]
        %v7310 = vld [vmem:[%s3807 + $0x50] sm:$0xf]
        %v7311 = vld [vmem:[%s3807 + $0x54] sm:$0xf]
        %v7312 = vld [vmem:[%s3807 + $0x58] sm:$0xf]
        %v7313 = vld [vmem:[%s3807 + $0x5c] sm:$0xf]
        %v7314 = vld [vmem:[%s3807 + $0x60] sm:$0xf]
        %v7315 = vld [vmem:[%s3807 + $0x64] sm:$0xf]
        %v7316 = vld [vmem:[%s3807 + $0x68] sm:$0xf]
        %v7317 = vld [vmem:[%s3807 + $0x6c] sm:$0xf]
        %v7318 = vld [vmem:[%s3807 + $0x70] sm:$0xf]
        %v7319 = vld [vmem:[%s3807 + $0x74] sm:$0xf]
        %v7320 = vld [vmem:[%s3807 + $0x78] sm:$0xf]
        %v7321 = vld [vmem:[%s3807 + $0x7c] sm:$0xf]
        %v7354 = vunpack.c.l.b16 %v7290
        %v7355 = vunpack.c.l.b16 %v7291
        %v7356 = vunpack.c.l.b16 %v7292
        %v7357 = vunpack.c.l.b16 %v7293
        %v7358 = vunpack.c.l.b16 %v7294
        %v7359 = vunpack.c.l.b16 %v7295
        %v7360 = vunpack.c.l.b16 %v7296
        %v7361 = vunpack.c.l.b16 %v7297
        %v7362 = vunpack.c.l.b16 %v7298
        %v7363 = vunpack.c.l.b16 %v7299
        %v7364 = vunpack.c.l.b16 %v7300
        %v7365 = vunpack.c.l.b16 %v7301
        %v7366 = vunpack.c.l.b16 %v7302
        %v7367 = vunpack.c.l.b16 %v7303
        %v7368 = vunpack.c.l.b16 %v7304
        %v7369 = vunpack.c.l.b16 %v7305
        %v7370 = vunpack.c.l.b16 %v7306
        %v7371 = vunpack.c.l.b16 %v7307
        %v7372 = vunpack.c.l.b16 %v7308
        %v7373 = vunpack.c.l.b16 %v7309
        %v7374 = vunpack.c.l.b16 %v7310
        %v7375 = vunpack.c.l.b16 %v7311
        %v7376 = vunpack.c.l.b16 %v7312
        %v7377 = vunpack.c.l.b16 %v7313
        %v7378 = vunpack.c.l.b16 %v7314
        %v7379 = vunpack.c.l.b16 %v7315
        %v7380 = vunpack.c.l.b16 %v7316
        %v7381 = vunpack.c.l.b16 %v7317
        %v7382 = vunpack.c.l.b16 %v7318
        %v7383 = vunpack.c.l.b16 %v7319
        %v7384 = vunpack.c.l.b16 %v7320
        %v7385 = vunpack.c.l.b16 %v7321
        %v7386 = vpack.c.b16 %v7355, %v7354
        %v7387 = vpack.c.b16 %v7357, %v7356
        %v7388 = vpack.c.b16 %v7359, %v7358
        %v7389 = vpack.c.b16 %v7361, %v7360
        %v7390 = vpack.c.b16 %v7363, %v7362
        %v7391 = vpack.c.b16 %v7365, %v7364
        %v7392 = vpack.c.b16 %v7367, %v7366
        %v7393 = vpack.c.b16 %v7369, %v7368
        %v7394 = vpack.c.b16 %v7371, %v7370
        %v7395 = vpack.c.b16 %v7373, %v7372
        %v7396 = vpack.c.b16 %v7375, %v7374
        %v7397 = vpack.c.b16 %v7377, %v7376
        %v7398 = vpack.c.b16 %v7379, %v7378
        %v7399 = vpack.c.b16 %v7381, %v7380
        %v7400 = vpack.c.b16 %v7383, %v7382
        %v7401 = vpack.c.b16 %v7385, %v7384
        %7418 = vmatpush.bf16.msra.mxu0 %v7393
        %7419 = vmatpush.bf16.msra.mxu0 %v7392
        %7420 = vmatpush.bf16.msra.mxu0 %v7391
        %7421 = vmatpush.bf16.msra.mxu0 %v7390
        %7422 = vmatpush.bf16.msra.mxu0 %v7389
        %7423 = vmatpush.bf16.msra.mxu0 %v7388
        %7424 = vmatpush.bf16.msra.mxu0 %v7387
        %7425 = vmatpush.bf16.msra.mxu0 %v7386
        %7426 = vmatmul.bf16.gmra.mxu0 %v7288
        %v7427 = vpop.f32.mrf.mxu0
        %v7428 = vadd.f32 0.0, %v7427
        %v7429 = vpop.f32.mrf.mxu0
        %7430 = vdwg.mxu0
        %7431 = vmatpush.bf16.msra.mxu0 %v7401
        %7432 = vmatpush.bf16.msra.mxu0 %v7400
        %7433 = vmatpush.bf16.msra.mxu0 %v7399
        %7434 = vmatpush.bf16.msra.mxu0 %v7398
        %7435 = vmatpush.bf16.msra.mxu0 %v7397
        %7436 = vmatpush.bf16.msra.mxu0 %v7396
        %7437 = vmatpush.bf16.msra.mxu0 %v7395
        %7438 = vmatpush.bf16.msra.mxu0 %v7394
        %7439 = vmatmul.bf16.gmra.mxu0 %v7289
        %v7440 = vpop.f32.mrf.mxu0
        %v7441 = vadd.f32 %v7428, %v7440
        %v7442 = vpop.f32.mrf.mxu0
        %7443 = vdwg.mxu0
        %v7444 = vadd.f32 %v7287, %v7441
        %7445 = vst [vmem:[#allocation2] sm:$0x3] %v7444
        %p7446 = scmp.eq.s32.totalorder %s17, 3
        // Predicated region
        $region97: #{dqn_forward.5} parent=87 // pred_check
          %p7447 = pneg %p7446
        $region98: #{dqn_forward.5} parent=87 // pred_check_branch
          %7449 = sbr.rel (%p7447) target = $region100
        $region99: #{dqn_forward.5} parent=87 // pred_region
          %v7450 = vld [vmem:[#allocation2] sm:$0x3]
          %v7451 = vld [vmem:[%s4] sm:$0x1]
          %v7453 = vperm.slane %v7451, 0
          %v7455 = vadd.f32 %v7450, %v7453
          %7456 = vst [vmem:[#allocation4] sm:$0x3] %v7455
        $region100: #{dqn_forward.5} parent=87 // pred_fallthru
          _
        // Predicated region
        $region101: #{dqn_forward.5} parent=87 // pred_check
          %p7457 = pneg %p150
        $region102: #{dqn_forward.5} parent=87 // pred_check_branch
          %7459 = sbr.rel (%p7457) target = $region104
        $region103: #{dqn_forward.5} parent=87 // pred_region
          %7461 = vsyncadd [#allocation5], 0
          %s7463 = sshll.u32 [#allocation4], 4
          %s7464 = int_to_ptr.vmem [resolvable:$true] %s7463
          %s7465 = sshll.u32 %s5, 4
          %s7466 = int_to_ptr.hbm [resolvable:$true] %s7465
          %7468 = dma.vmem_to_hbm [thread:$0]  %s7464, 32, %s7466, [#allocation5]
        $region104: #{dqn_forward.5} parent=87 // pred_fallthru
          _
        // Predicated region
        $region105: #{dqn_forward.5} parent=87 // pred_check
          %p7469 = pneg %p150
        $region106: #{dqn_forward.5} parent=87 // pred_check_branch
          %7471 = sbr.rel (%p7469) target = $region108
        $region107: #{dqn_forward.5} parent=87 // pred_region
          %7473 = dma.done [#allocation5], 32
        $region108: #{dqn_forward.5} parent=87 // pred_fallthru
          _
      $region88: #{dqn_forward.5} parent=5 // pred_fallthru
        _
      %p7474 = scmp.le.s32.totalorder 2, %s12
      // Predicated region
      $region109: #{dqn_forward.5} parent=5 // pred_check
        %p7475 = pneg %p7474
      $region110: #{dqn_forward.5} parent=5 // pred_check_branch
        %7477 = sbr.rel (%p7475) target = $region112
      $region111: #{dqn_forward.5} parent=5 // pred_region
        %s7478 = ssub.s32 %s12, 2
      $region112: #{dqn_forward.5} parent=5 // pred_fallthru
        _
    $region6: #{dqn_forward.5} parent=1 // loop_footer
      %s16 = sadd.s32 1, %s12
    $region7: #{dqn_forward.5} parent=1 // loop_footer_branch
      %11 = sbr.rel target = $region3
    $region8: #{dqn_forward.5} parent=1 // loop_exit
      _
    %7479 = vsyncpa [#allocation5], 1
    %s7480 = scalar_lea.sflag [#allocation5], 1
    %7481 = vsyncpa %s7480, 1

</llo_original>
